<compile_context>
chip_gen: v5e
topology: v5e:2x2
jax: 0.10.0
libtpu: 0.0.40
codegen_flags: <defaults>
</compile_context>

<pallas_src>
import jax
import jax.numpy as jnp
from jax.experimental import pallas as pl
from jax.experimental.pallas import tpu as pltpu

# ---- synthetic T5_CONFIG (small but lane-friendly) ----
D_MODEL = 128
NUM_HEADS = 4
D_KV = 32
INNER = NUM_HEADS * D_KV          # 128
D_FF = 256
EPS = 1e-6
NUM_LAYERS = 2
VOCAB_SIZE = 512
REL_NUM_BUCKETS = 32
REL_MAX_DISTANCE = 128


# ---------------------------------------------------------------------------
# Fused encoder kernel: one (batch b, layer l) grid step per invocation.
# ---------------------------------------------------------------------------
def t5_encoder_kernel(x_ref, mask_ref, pb_ref,
                      wqkv_ref, wo_ref, wi_ref, wff_ref, lnf_ref,
                      out_ref):
    l = pl.program_id(1)
    n_layers = pl.num_programs(1)

    # Layer 0: load the embedding block into the VMEM-resident hidden state.
    @pl.when(l == 0)
    def _():
        out_ref[...] = x_ref[...]

    x = out_ref[...]                                            # (S, D) f32, resident

    # ---- self_attn_layer_norm (RMSNorm); its weight is pre-folded into wqkv ----
    xn = (x * jax.lax.rsqrt(jnp.mean(x * x, axis=-1, keepdims=True) + EPS)
          ).astype(jnp.bfloat16)

    # ---- fused QKV projection: ONE (S, D) x (D, 3*INNER) MXU pass (bf16 in, f32 acc) ----
    qkv = jnp.dot(xn, wqkv_ref[...], preferred_element_type=jnp.float32)    # (S, 3*INNER)

    # ---- single relayout to head-major: (S, 3H, Dk) -> (3H, S, Dk) ----
    seq = qkv.shape[0]
    qkv_t = jnp.swapaxes(
        qkv.astype(jnp.bfloat16).reshape(seq, 3 * NUM_HEADS, D_KV), 0, 1)   # (3H, S, Dk)
    q = qkv_t[:NUM_HEADS]                                       # (H, S, Dk) bf16
    k = qkv_t[NUM_HEADS:2 * NUM_HEADS]
    v = qkv_t[2 * NUM_HEADS:]

    # ---- additive key mask built in-kernel from compact (1, S) 0/1 mask ----
    neg = ((1.0 - mask_ref[...]) * -10000.0)[None, :, :]        # (1, 1, S) f32

    # ---- T5 attention: no 1/sqrt(dk), additive position bias, batched over heads ----
    s = jnp.einsum('hqd,hkd->hqk', q, k,
                   preferred_element_type=jnp.float32)          # (H, S, S) f32
    s = s + pb_ref[...].astype(jnp.float32) + neg
    m = jnp.max(s, axis=-1, keepdims=True)
    p = jnp.exp(s - m)
    p = p * pl.reciprocal(jnp.sum(p, axis=-1, keepdims=True), approx=True)
    ctx = jnp.einsum('hqk,hkd->hqd', p.astype(jnp.bfloat16), v,
                     preferred_element_type=jnp.float32)        # (H, S, Dk) f32

    # ---- head merge accumulated through the MXU (no lane concatenate) ----
    ctx_b = ctx.astype(jnp.bfloat16)
    attn = jnp.dot(ctx_b[0], wo_ref[0], preferred_element_type=jnp.float32)
    for h in range(1, NUM_HEADS):
        attn = attn + jnp.dot(ctx_b[h], wo_ref[h],
                              preferred_element_type=jnp.float32)           # (S, D)
    h1 = x + attn                                               # residual (dropout == identity)

    # ---- ff_layer_norm (RMSNorm); its weight is pre-folded into wi ----
    hn = (h1 * jax.lax.rsqrt(jnp.mean(h1 * h1, axis=-1, keepdims=True) + EPS)
          ).astype(jnp.bfloat16)

    # ---- feed forward: wi -> ReLU -> wo, + residual ----
    ff = jnp.dot(hn, wi_ref[...], preferred_element_type=jnp.float32)
    ff = jnp.maximum(ff, 0.0).astype(jnp.bfloat16)
    ff = jnp.dot(ff, wff_ref[...], preferred_element_type=jnp.float32)
    h2 = h1 + ff

    @pl.when(l < n_layers - 1)
    def _():
        out_ref[...] = h2                                       # stays in VMEM (same block idx)

    @pl.when(l == n_layers - 1)                                 # final_layer_norm folded in
    def _():
        var = jnp.mean(h2 * h2, axis=-1, keepdims=True)
        out_ref[...] = h2 * jax.lax.rsqrt(var + EPS) * lnf_ref[...]


# ---------------------------------------------------------------------------
# Host-side parameter prep and wrappers
# ---------------------------------------------------------------------------
def prepare_encoder_params(params):
    """Fold RMSNorm scales into the following matmul weights (W' = ln[:,None]*W), fuse
    Q/K/V into one wide weight, reshape wo per-head for the MXU-accumulated head merge,
    stack all layers on a leading L axis and cast matmul weights to bf16."""
    wqkv, wo, wi, wff = [], [], [], []
    for blk in params["blocks"]:
        ln1 = blk["ln1"].reshape(D_MODEL, 1)
        ln2 = blk["ln2"].reshape(D_MODEL, 1)
        wqkv.append((ln1 * jnp.concatenate([blk["wq"], blk["wk"], blk["wv"]], axis=1)
                     ).astype(jnp.bfloat16))
        wo.append(blk["wo"].reshape(NUM_HEADS, D_KV, D_MODEL).astype(jnp.bfloat16))
        wi.append((ln2 * blk["wi"]).astype(jnp.bfloat16))
        wff.append(blk["wff"].astype(jnp.bfloat16))
    return {
        "embed": params["embed"],
        "rel_attn_bias": params["rel_attn_bias"],
        "ln_f": params["ln_f"],
        "wqkv": jnp.stack(wqkv),   # (L, D, 3*INNER) bf16
        "wo": jnp.stack(wo),       # (L, H, Dk, D)   bf16
        "wi": jnp.stack(wi),       # (L, D, D_FF)    bf16
        "wff": jnp.stack(wff),     # (L, D_FF, D)    bf16
    }


def t5_relative_position_bias(rel_emb, seq_len):
    # TODO(synk): MultiHeadAttention internals were not provided; this uses the standard
    # bidirectional T5 relative-position bucketing (num_buckets=32, max_distance=128),
    # computed in plain JAX (data-dependent gather).
    ctx_pos = jnp.arange(seq_len)[:, None]
    mem_pos = jnp.arange(seq_len)[None, :]
    rel = mem_pos - ctx_pos
    nb = REL_NUM_BUCKETS // 2
    bucket = jnp.where(rel > 0, nb, 0)
    n = jnp.abs(rel)
    max_exact = nb // 2
    is_small = n < max_exact
    large = max_exact + (
        jnp.log(jnp.maximum(n, 1).astype(jnp.float32) / max_exact)
        / jnp.log(REL_MAX_DISTANCE / max_exact) * (nb - max_exact)
    ).astype(jnp.int32)
    large = jnp.minimum(large, nb - 1)
    bucket = bucket + jnp.where(is_small, n, large)
    bias = jnp.take(rel_emb, bucket, axis=0)                    # (S, S, H)
    return jnp.transpose(bias, (2, 0, 1))[None]                 # (1, H, S, S)


def t5_encoder(input_ids, attention_mask, prep):
    """Full encoder forward: embedding (plain JAX gather) + one fused Pallas call."""
    B, S = input_ids.shape
    hidden = jnp.take(prep["embed"], input_ids, axis=0)         # (B, S, D) f32
    if attention_mask is None:
        attention_mask = jnp.ones((B, S), jnp.float32)
    mask = attention_mask.astype(jnp.float32)

    pb = t5_relative_position_bias(prep["rel_attn_bias"], S)[0]  # (H, S, S) f32, once per fwd

    # Pad S to a lane-dense multiple of 128; padded keys are masked out via -10000.
    S_pad = ((S + 127) // 128) * 128
    if S_pad != S:
        hidden = jnp.pad(hidden, ((0, 0), (0, S_pad - S), (0, 0)))
        mask = jnp.pad(mask, ((0, 0), (0, S_pad - S)))
        pb = jnp.pad(pb, ((0, 0), (0, S_pad - S), (0, S_pad - S)))
    mask3 = mask.reshape(B, 1, S_pad)
    pb_bf = pb.astype(jnp.bfloat16)                              # bf16 pb: half the DMA

    L = prep["wqkv"].shape[0]
    out = pl.pallas_call(
        t5_encoder_kernel,
        out_shape=jax.ShapeDtypeStruct((B, S_pad, D_MODEL), jnp.float32),
        grid_spec=pltpu.PrefetchScalarGridSpec(
            num_scalar_prefetch=0,
            grid=(B, L),                                         # (batch parallel, layer arbitrary)
            in_specs=[
                pl.BlockSpec((None, S_pad, D_MODEL), lambda b, l: (b, 0, 0)),      # embeddings
                pl.BlockSpec((None, 1, S_pad), lambda b, l: (b, 0, 0)),            # 0/1 key mask
                pl.BlockSpec((NUM_HEADS, S_pad, S_pad), lambda b, l: (0, 0, 0)),   # pos bias bf16
                pl.BlockSpec((None, D_MODEL, 3 * INNER), lambda b, l: (l, 0, 0)),  # wqkv (ln1 folded)
                pl.BlockSpec((None, NUM_HEADS, D_KV, D_MODEL),
                             lambda b, l: (l, 0, 0, 0)),                           # wo per head
                pl.BlockSpec((None, D_MODEL, D_FF), lambda b, l: (l, 0, 0)),       # wi (ln2 folded)
                pl.BlockSpec((None, D_FF, D_MODEL), lambda b, l: (l, 0, 0)),       # wff
                pl.BlockSpec((1, D_MODEL), lambda b, l: (0, 0)),                   # final ln weight
            ],
            out_specs=pl.BlockSpec((None, S_pad, D_MODEL), lambda b, l: (b, 0, 0)),
        ),
        compiler_params=pltpu.CompilerParams(
            dimension_semantics=("parallel", "arbitrary"),
            vmem_limit_bytes=32 * 1024 * 1024,
        ),
    )(hidden, mask3, pb_bf,
      prep["wqkv"], prep["wo"], prep["wi"], prep["wff"], prep["ln_f"])
    return out[:, :S] if S_pad != S else out


# ---------------------------------------------------------------------------
# Pure-JAX reference (original un-folded math, mirroring the bf16 matmul convention)
# ---------------------------------------------------------------------------
def _block_reference(x, p, mask01, pb):
    B, S, _ = x.shape
    xn = (x * jax.lax.rsqrt(jnp.mean(x * x, -1, keepdims=True) + EPS) * p["ln1"]
          ).astype(jnp.bfloat16)

    def proj(w):
        t = jnp.einsum('bsd,de->bse', xn, w.astype(jnp.bfloat16),
                       preferred_element_type=jnp.float32)
        return t.reshape(B, S, NUM_HEADS, D_KV).transpose(0, 2, 1, 3).astype(jnp.bfloat16)

    q, k, v = proj(p["wq"]), proj(p["wk"]), proj(p["wv"])
    neg = ((1.0 - mask01) * -10000.0)[:, None, None, :]
    s = jnp.einsum('bhqd,bhkd->bhqk', q, k, preferred_element_type=jnp.float32) + pb + neg
    pr = jax.nn.softmax(s, axis=-1)
    ctx = jnp.einsum('bhqk,bhkd->bhqd', pr.astype(jnp.bfloat16), v,
                     preferred_element_type=jnp.float32)
    ctx = ctx.transpose(0, 2, 1, 3).reshape(B, S, INNER).astype(jnp.bfloat16)
    h1 = x + jnp.einsum('bsd,de->bse', ctx, p["wo"].astype(jnp.bfloat16),
                        preferred_element_type=jnp.float32)
    hn = (h1 * jax.lax.rsqrt(jnp.mean(h1 * h1, -1, keepdims=True) + EPS) * p["ln2"]
          ).astype(jnp.bfloat16)
    ff = jnp.maximum(jnp.einsum('bsd,df->bsf', hn, p["wi"].astype(jnp.bfloat16),
                                preferred_element_type=jnp.float32), 0.0)
    ff = jnp.einsum('bsf,fd->bsd', ff.astype(jnp.bfloat16), p["wff"].astype(jnp.bfloat16),
                    preferred_element_type=jnp.float32)
    return h1 + ff


def _encoder_reference(input_ids, attention_mask, params):
    x = jnp.take(params["embed"], input_ids, axis=0)
    pb = t5_relative_position_bias(params["rel_attn_bias"], input_ids.shape[1])
    m = attention_mask.astype(jnp.float32)
    for p in params["blocks"]:
        x = _block_reference(x, p, m, pb)
    return x * jax.lax.rsqrt(jnp.mean(x * x, -1, keepdims=True) + EPS) * params["ln_f"]


def init_params(key):
    keys = jax.random.split(key, 2 + NUM_LAYERS)
    params = {
        "embed": jax.random.normal(keys[0], (VOCAB_SIZE, D_MODEL), jnp.float32),
        "rel_attn_bias": 0.1 * jax.random.normal(keys[1], (REL_NUM_BUCKETS, NUM_HEADS),
                                                 jnp.float32),
        "ln_f": jnp.ones((1, D_MODEL), jnp.float32),
        "blocks": [],
    }
    scale = 0.05
    for i in range(NUM_LAYERS):
        ks = jax.random.split(keys[2 + i], 6)
        params["blocks"].append({
            "ln1": jnp.ones((D_MODEL,), jnp.float32),     # T5 LayerNorm init (ones)
            "wq": scale * jax.random.normal(ks[0], (D_MODEL, INNER), jnp.float32),
            "wk": scale * jax.random.normal(ks[1], (D_MODEL, INNER), jnp.float32),
            "wv": scale * jax.random.normal(ks[2], (D_MODEL, INNER), jnp.float32),
            "wo": scale * jax.random.normal(ks[3], (INNER, D_MODEL), jnp.float32),
            "ln2": jnp.ones((D_MODEL,), jnp.float32),
            "wi": scale * jax.random.normal(ks[4], (D_MODEL, D_FF), jnp.float32),
            "wff": scale * jax.random.normal(ks[5], (D_FF, D_MODEL), jnp.float32),
        })
    return params


if __name__ == "__main__":
    B, S = 2, 128
    key = jax.random.PRNGKey(0)
    k_ids, k_params = jax.random.split(key)

    input_ids = jax.random.randint(k_ids, (B, S), 0, VOCAB_SIZE, dtype=jnp.int32)
    attention_mask = jnp.ones((B, S), jnp.float32).at[1, S - 32:].set(0.0)  # pad batch 1
    params = init_params(k_params)
    prep = prepare_encoder_params(params)

    out = jax.block_until_ready(t5_encoder(input_ids, attention_mask, prep))
    assert out.shape == (B, S, D_MODEL)

    ref = jax.block_until_ready(_encoder_reference(input_ids, attention_mask, params))
    max_diff = float(jnp.max(jnp.abs(out - ref)))
    assert jnp.allclose(out, ref, atol=2e-2, rtol=2e-2), f"mismatch vs reference: {max_diff}"

    print("KERNEL_OK")
</pallas_src>

<mosaic_0001>
module attributes {stable_mosaic.version = 11 : i64} {
  func.func @t5_encoder_kernel(%arg0: i32, %arg1: i32, %arg2: memref<1x128x128xf32, #tpu.memory_space<vmem>>, %arg3: memref<1x1x128xf32, #tpu.memory_space<vmem>>, %arg4: memref<4x128x128xbf16, #tpu.memory_space<vmem>>, %arg5: memref<1x128x384xbf16, #tpu.memory_space<vmem>>, %arg6: memref<1x4x32x128xbf16, #tpu.memory_space<vmem>>, %arg7: memref<1x128x256xbf16, #tpu.memory_space<vmem>>, %arg8: memref<1x256x128xbf16, #tpu.memory_space<vmem>>, %arg9: memref<1x128xf32, #tpu.memory_space<vmem>>, %arg10: memref<1x128x128xf32, #tpu.memory_space<vmem>>) attributes {dimension_semantics = [#tpu.dimension_semantics<parallel>, #tpu.dimension_semantics<arbitrary>], iteration_bounds = array<i64: 2, 2>, scalar_prefetch = 0 : i64, scratch_operands = 0 : i64, tpu.core_type = #tpu.core_type<tc>, window_params = [{transform_indices = @transform_0, window_bounds = array<i64: 1, 128, 128>}, {transform_indices = @transform_1, window_bounds = array<i64: 1, 1, 128>}, {pipeline_mode = #tpu.pipeline_mode<synchronous>, transform_indices = @transform_2, window_bounds = array<i64: 4, 128, 128>}, {transform_indices = @transform_3, window_bounds = array<i64: 1, 128, 384>}, {transform_indices = @transform_4, window_bounds = array<i64: 1, 4, 32, 128>}, {transform_indices = @transform_5, window_bounds = array<i64: 1, 128, 256>}, {transform_indices = @transform_6, window_bounds = array<i64: 1, 256, 128>}, {pipeline_mode = #tpu.pipeline_mode<synchronous>, transform_indices = @transform_7, window_bounds = array<i64: 1, 128>}, {transform_indices = @transform_8, window_bounds = array<i64: 1, 128, 128>}]} {
    %c0_i32 = arith.constant 0 : i32
    %0 = arith.cmpi eq, %arg1, %c0_i32 : i32
    %1 = arith.extui %0 : i1 to i32
    %c0_i32_0 = arith.constant 0 : i32
    %2 = arith.cmpi ne, %1, %c0_i32_0 : i32
    scf.if %2 {
      %c0_53 = arith.constant 0 : index
      %c0_54 = arith.constant 0 : index
      %c0_55 = arith.constant 0 : index
      %102 = vector.load %arg2[%c0_53, %c0_54, %c0_55] : memref<1x128x128xf32, #tpu.memory_space<vmem>>, vector<1x128x128xf32>
      %103 = vector.shape_cast %102 : vector<1x128x128xf32> to vector<128x128xf32>
      %c0_56 = arith.constant 0 : index
      %c0_57 = arith.constant 0 : index
      %c0_58 = arith.constant 0 : index
      %104 = vector.load %arg10[%c0_56, %c0_57, %c0_58] : memref<1x128x128xf32, #tpu.memory_space<vmem>>, vector<1x128x128xf32>
      %105 = vector.shape_cast %104 : vector<1x128x128xf32> to vector<128x128xf32>
      %106 = vector.shape_cast %103 : vector<128x128xf32> to vector<1x128x128xf32>
      tpu.vector_store %arg10[%c0_56, %c0_57, %c0_58], %106 {strides = array<i32>} : memref<1x128x128xf32, #tpu.memory_space<vmem>>, vector<1x128x128xf32>,
    } else {
    }
    %c0 = arith.constant 0 : index
    %c0_1 = arith.constant 0 : index
    %c0_2 = arith.constant 0 : index
    %3 = vector.load %arg10[%c0, %c0_1, %c0_2] : memref<1x128x128xf32, #tpu.memory_space<vmem>>, vector<1x128x128xf32>
    %4 = vector.shape_cast %3 : vector<1x128x128xf32> to vector<128x128xf32>
    %5 = arith.mulf %4, %4 : vector<128x128xf32>
    %cst = arith.constant dense<0.000000e+00> : vector<128xf32>
    %6 = vector.multi_reduction <add>, %5, %cst [1] : vector<128x128xf32> to vector<128xf32>
    %7 = vector.shape_cast %6 : vector<128xf32> to vector<128x1xf32>
    %cst_3 = arith.constant 1.280000e+02 : f32
    %8 = vector.broadcast %cst_3 : f32 to vector<128x1xf32>
    %9 = arith.divf %7, %8 : vector<128x1xf32>
    %cst_4 = arith.constant 9.99999997E-7 : f32
    %10 = vector.broadcast %cst_4 : f32 to vector<128x1xf32>
    %11 = arith.addf %9, %10 : vector<128x1xf32>
    %12 = math.rsqrt %11 : vector<128x1xf32>
    %13 = vector.broadcast %12 : vector<128x1xf32> to vector<128x128xf32>
    %14 = arith.mulf %4, %13 : vector<128x128xf32>
    %15 = arith.truncf %14 : vector<128x128xf32> to vector<128x128xbf16>
    %c0_5 = arith.constant 0 : index
    %c0_6 = arith.constant 0 : index
    %c0_7 = arith.constant 0 : index
    %16 = vector.load %arg5[%c0_5, %c0_6, %c0_7] : memref<1x128x384xbf16, #tpu.memory_space<vmem>>, vector<1x128x384xbf16>
    %17 = vector.shape_cast %16 : vector<1x128x384xbf16> to vector<128x384xbf16>
    %cst_8 = arith.constant dense<0.000000e+00> : vector<128x384xf32>
    %18 = tpu.matmul %15, %17, %cst_8 {dimension_numbers = #tpu.dot_dimension_numbers<[1], [0], [0], [1], [0, 0, 1, 1], [], []>} : vector<128x128xbf16>, vector<128x384xbf16>, vector<128x384xf32> -> vector<128x384xf32>
    %19 = arith.truncf %18 : vector<128x384xf32> to vector<128x384xbf16>
    %20 = vector.shape_cast %19 : vector<128x384xbf16> to vector<128x12x32xbf16>
    %21 = tpu.transpose %20, [1, 0, 2] : vector<128x12x32xbf16> -> vector<12x128x32xbf16>
    %22 = vector.extract_strided_slice %21 {offsets = [0, 0, 0], sizes = [4, 128, 32], strides = [1, 1, 1]} : vector<12x128x32xbf16> to vector<4x128x32xbf16>
    %23 = vector.extract_strided_slice %21 {offsets = [4, 0, 0], sizes = [4, 128, 32], strides = [1, 1, 1]} : vector<12x128x32xbf16> to vector<4x128x32xbf16>
    %24 = vector.extract_strided_slice %21 {offsets = [8, 0, 0], sizes = [4, 128, 32], strides = [1, 1, 1]} : vector<12x128x32xbf16> to vector<4x128x32xbf16>
    %c0_9 = arith.constant 0 : index
    %c0_10 = arith.constant 0 : index
    %c0_11 = arith.constant 0 : index
    %25 = vector.load %arg3[%c0_9, %c0_10, %c0_11] : memref<1x1x128xf32, #tpu.memory_space<vmem>>, vector<1x1x128xf32>
    %26 = vector.shape_cast %25 : vector<1x1x128xf32> to vector<1x128xf32>
    %cst_12 = arith.constant 1.000000e+00 : f32
    %27 = vector.broadcast %cst_12 : f32 to vector<1x128xf32>
    %28 = arith.subf %27, %26 : vector<1x128xf32>
    %cst_13 = arith.constant -1.000000e+04 : f32
    %29 = vector.broadcast %cst_13 : f32 to vector<1x128xf32>
    %30 = arith.mulf %28, %29 : vector<1x128xf32>
    %31 = vector.shape_cast %30 : vector<1x128xf32> to vector<1x1x128xf32>
    "tpu.trace_start"() <{level = 10 : i32, message = "hqd,hkd->hqk"}> : () -> ()
    %cst_14 = arith.constant dense<0.000000e+00> : vector<4x128x128xf32>
    %32 = tpu.matmul %22, %23, %cst_14 {dimension_numbers = #tpu.dot_dimension_numbers<[2], [2], [1], [1], [0, 0, 0, 1, 1, 1], [0], [0]>} : vector<4x128x32xbf16>, vector<4x128x32xbf16>, vector<4x128x128xf32> -> vector<4x128x128xf32>
    "tpu.trace_stop"() : () -> ()
    %c0_15 = arith.constant 0 : index
    %c0_16 = arith.constant 0 : index
    %c0_17 = arith.constant 0 : index
    %33 = vector.load %arg4[%c0_15, %c0_16, %c0_17] : memref<4x128x128xbf16, #tpu.memory_space<vmem>>, vector<4x128x128xbf16>
    %34 = arith.extf %33 : vector<4x128x128xbf16> to vector<4x128x128xf32>
    %35 = arith.addf %32, %34 : vector<4x128x128xf32>
    %36 = vector.broadcast %31 : vector<1x1x128xf32> to vector<4x128x128xf32>
    %37 = arith.addf %35, %36 : vector<4x128x128xf32>
    %cst_18 = arith.constant dense<0xFF800000> : vector<4x128xf32>
    %38 = vector.multi_reduction <maximumf>, %37, %cst_18 [2] : vector<4x128x128xf32> to vector<4x128xf32>
    %39 = vector.shape_cast %38 : vector<4x128xf32> to vector<4x128x1xf32>
    %40 = vector.broadcast %39 : vector<4x128x1xf32> to vector<4x128x128xf32>
    %41 = arith.subf %37, %40 : vector<4x128x128xf32>
    %42 = math.exp %41 : vector<4x128x128xf32>
    %cst_19 = arith.constant dense<0.000000e+00> : vector<4x128xf32>
    %43 = vector.multi_reduction <add>, %42, %cst_19 [2] : vector<4x128x128xf32> to vector<4x128xf32>
    %44 = vector.shape_cast %43 : vector<4x128xf32> to vector<4x128x1xf32>
    %45 = tpu.reciprocal %44 {approx = true} : vector<4x128x1xf32> -> vector<4x128x1xf32>
    %46 = vector.broadcast %45 : vector<4x128x1xf32> to vector<4x128x128xf32>
    %47 = arith.mulf %42, %46 : vector<4x128x128xf32>
    %48 = arith.truncf %47 : vector<4x128x128xf32> to vector<4x128x128xbf16>
    "tpu.trace_start"() <{level = 10 : i32, message = "hqk,hkd->hqd"}> : () -> ()
    %cst_20 = arith.constant dense<0.000000e+00> : vector<4x128x32xf32>
    %49 = tpu.matmul %48, %24, %cst_20 {dimension_numbers = #tpu.dot_dimension_numbers<[2], [1], [1], [2], [0, 0, 0, 1, 1, 2], [0], [0]>} : vector<4x128x128xbf16>, vector<4x128x32xbf16>, vector<4x128x32xf32> -> vector<4x128x32xf32>
    "tpu.trace_stop"() : () -> ()
    %50 = arith.truncf %49 : vector<4x128x32xf32> to vector<4x128x32xbf16>
    %51 = vector.extract_strided_slice %50 {offsets = [0, 0, 0], sizes = [1, 128, 32], strides = [1, 1, 1]} : vector<4x128x32xbf16> to vector<1x128x32xbf16>
    %52 = vector.shape_cast %51 : vector<1x128x32xbf16> to vector<128x32xbf16>
    %c0_21 = arith.constant 0 : index
    %c0_22 = arith.constant 0 : index
    %c0_23 = arith.constant 0 : index
    %c0_24 = arith.constant 0 : index
    %53 = vector.load %arg6[%c0_21, %c0_22, %c0_23, %c0_24] : memref<1x4x32x128xbf16, #tpu.memory_space<vmem>>, vector<1x1x32x128xbf16>
    %54 = vector.shape_cast %53 : vector<1x1x32x128xbf16> to vector<32x128xbf16>
    %cst_25 = arith.constant dense<0.000000e+00> : vector<128x128xf32>
    %55 = tpu.matmul %52, %54, %cst_25 {dimension_numbers = #tpu.dot_dimension_numbers<[1], [0], [0], [1], [0, 0, 1, 1], [], []>} : vector<128x32xbf16>, vector<32x128xbf16>, vector<128x128xf32> -> vector<128x128xf32>
    %56 = vector.extract_strided_slice %50 {offsets = [1, 0, 0], sizes = [1, 128, 32], strides = [1, 1, 1]} : vector<4x128x32xbf16> to vector<1x128x32xbf16>
    %57 = vector.shape_cast %56 : vector<1x128x32xbf16> to vector<128x32xbf16>
    %c0_26 = arith.constant 0 : index
    %c1 = arith.constant 1 : index
    %c0_27 = arith.constant 0 : index
    %c0_28 = arith.constant 0 : index
    %58 = vector.load %arg6[%c0_26, %c1, %c0_27, %c0_28] : memref<1x4x32x128xbf16, #tpu.memory_space<vmem>>, vector<1x1x32x128xbf16>
    %59 = vector.shape_cast %58 : vector<1x1x32x128xbf16> to vector<32x128xbf16>
    %cst_29 = arith.constant dense<0.000000e+00> : vector<128x128xf32>
    %60 = tpu.matmul %57, %59, %cst_29 {dimension_numbers = #tpu.dot_dimension_numbers<[1], [0], [0], [1], [0, 0, 1, 1], [], []>} : vector<128x32xbf16>, vector<32x128xbf16>, vector<128x128xf32> -> vector<128x128xf32>
    %61 = arith.addf %55, %60 : vector<128x128xf32>
    %62 = vector.extract_strided_slice %50 {offsets = [2, 0, 0], sizes = [1, 128, 32], strides = [1, 1, 1]} : vector<4x128x32xbf16> to vector<1x128x32xbf16>
    %63 = vector.shape_cast %62 : vector<1x128x32xbf16> to vector<128x32xbf16>
    %c0_30 = arith.constant 0 : index
    %c2 = arith.constant 2 : index
    %c0_31 = arith.constant 0 : index
    %c0_32 = arith.constant 0 : index
    %64 = vector.load %arg6[%c0_30, %c2, %c0_31, %c0_32] : memref<1x4x32x128xbf16, #tpu.memory_space<vmem>>, vector<1x1x32x128xbf16>
    %65 = vector.shape_cast %64 : vector<1x1x32x128xbf16> to vector<32x128xbf16>
    %cst_33 = arith.constant dense<0.000000e+00> : vector<128x128xf32>
    %66 = tpu.matmul %63, %65, %cst_33 {dimension_numbers = #tpu.dot_dimension_numbers<[1], [0], [0], [1], [0, 0, 1, 1], [], []>} : vector<128x32xbf16>, vector<32x128xbf16>, vector<128x128xf32> -> vector<128x128xf32>
    %67 = arith.addf %61, %66 : vector<128x128xf32>
    %68 = vector.extract_strided_slice %50 {offsets = [3, 0, 0], sizes = [1, 128, 32], strides = [1, 1, 1]} : vector<4x128x32xbf16> to vector<1x128x32xbf16>
    %69 = vector.shape_cast %68 : vector<1x128x32xbf16> to vector<128x32xbf16>
    %c0_34 = arith.constant 0 : index
    %c3 = arith.constant 3 : index
    %c0_35 = arith.constant 0 : index
    %c0_36 = arith.constant 0 : index
    %70 = vector.load %arg6[%c0_34, %c3, %c0_35, %c0_36] : memref<1x4x32x128xbf16, #tpu.memory_space<vmem>>, vector<1x1x32x128xbf16>
    %71 = vector.shape_cast %70 : vector<1x1x32x128xbf16> to vector<32x128xbf16>
    %cst_37 = arith.constant dense<0.000000e+00> : vector<128x128xf32>
    %72 = tpu.matmul %69, %71, %cst_37 {dimension_numbers = #tpu.dot_dimension_numbers<[1], [0], [0], [1], [0, 0, 1, 1], [], []>} : vector<128x32xbf16>, vector<32x128xbf16>, vector<128x128xf32> -> vector<128x128xf32>
    %73 = arith.addf %67, %72 : vector<128x128xf32>
    %74 = arith.addf %4, %73 : vector<128x128xf32>
    %75 = arith.mulf %74, %74 : vector<128x128xf32>
    %cst_38 = arith.constant dense<0.000000e+00> : vector<128xf32>
    %76 = vector.multi_reduction <add>, %75, %cst_38 [1] : vector<128x128xf32> to vector<128xf32>
    %77 = vector.shape_cast %76 : vector<128xf32> to vector<128x1xf32>
    %cst_39 = arith.constant 1.280000e+02 : f32
    %78 = vector.broadcast %cst_39 : f32 to vector<128x1xf32>
    %79 = arith.divf %77, %78 : vector<128x1xf32>
    %cst_40 = arith.constant 9.99999997E-7 : f32
    %80 = vector.broadcast %cst_40 : f32 to vector<128x1xf32>
    %81 = arith.addf %79, %80 : vector<128x1xf32>
    %82 = math.rsqrt %81 : vector<128x1xf32>
    %83 = vector.broadcast %82 : vector<128x1xf32> to vector<128x128xf32>
    %84 = arith.mulf %74, %83 : vector<128x128xf32>
    %85 = arith.truncf %84 : vector<128x128xf32> to vector<128x128xbf16>
    %c0_41 = arith.constant 0 : index
    %c0_42 = arith.constant 0 : index
    %c0_43 = arith.constant 0 : index
    %86 = vector.load %arg7[%c0_41, %c0_42, %c0_43] : memref<1x128x256xbf16, #tpu.memory_space<vmem>>, vector<1x128x256xbf16>
    %87 = vector.shape_cast %86 : vector<1x128x256xbf16> to vector<128x256xbf16>
    %cst_44 = arith.constant dense<0.000000e+00> : vector<128x256xf32>
    %88 = tpu.matmul %85, %87, %cst_44 {dimension_numbers = #tpu.dot_dimension_numbers<[1], [0], [0], [1], [0, 0, 1, 1], [], []>} : vector<128x128xbf16>, vector<128x256xbf16>, vector<128x256xf32> -> vector<128x256xf32>
    %cst_45 = arith.constant 0.000000e+00 : f32
    %89 = vector.broadcast %cst_45 : f32 to vector<128x256xf32>
    %90 = arith.maximumf %88, %89 : vector<128x256xf32>
    %91 = arith.truncf %90 : vector<128x256xf32> to vector<128x256xbf16>
    %c0_46 = arith.constant 0 : index
    %c0_47 = arith.constant 0 : index
    %c0_48 = arith.constant 0 : index
    %92 = vector.load %arg8[%c0_46, %c0_47, %c0_48] : memref<1x256x128xbf16, #tpu.memory_space<vmem>>, vector<1x256x128xbf16>
    %93 = vector.shape_cast %92 : vector<1x256x128xbf16> to vector<256x128xbf16>
    %cst_49 = arith.constant dense<0.000000e+00> : vector<128x128xf32>
    %94 = tpu.matmul %91, %93, %cst_49 {dimension_numbers = #tpu.dot_dimension_numbers<[1], [0], [0], [1], [0, 0, 1, 1], [], []>} : vector<128x256xbf16>, vector<256x128xbf16>, vector<128x128xf32> -> vector<128x128xf32>
    %95 = arith.addf %74, %94 : vector<128x128xf32>
    %c1_i32 = arith.constant 1 : i32
    %96 = arith.cmpi slt, %arg1, %c1_i32 : i32
    %97 = arith.extui %96 : i1 to i32
    %c0_i32_50 = arith.constant 0 : i32
    %98 = arith.cmpi ne, %97, %c0_i32_50 : i32
    scf.if %98 {
      %c0_53 = arith.constant 0 : index
      %c0_54 = arith.constant 0 : index
      %c0_55 = arith.constant 0 : index
      %102 = vector.load %arg10[%c0_53, %c0_54, %c0_55] : memref<1x128x128xf32, #tpu.memory_space<vmem>>, vector<1x128x128xf32>
      %103 = vector.shape_cast %102 : vector<1x128x128xf32> to vector<128x128xf32>
      %104 = vector.shape_cast %95 : vector<128x128xf32> to vector<1x128x128xf32>
      tpu.vector_store %arg10[%c0_53, %c0_54, %c0_55], %104 {strides = array<i32>} : memref<1x128x128xf32, #tpu.memory_space<vmem>>, vector<1x128x128xf32>,
    } else {
    }
    %c1_i32_51 = arith.constant 1 : i32
    %99 = arith.cmpi eq, %arg1, %c1_i32_51 : i32
    %100 = arith.extui %99 : i1 to i32
    %c0_i32_52 = arith.constant 0 : i32
    %101 = arith.cmpi ne, %100, %c0_i32_52 : i32
    scf.if %101 {
      %102 = arith.mulf %95, %95 : vector<128x128xf32>
      %cst_53 = arith.constant dense<0.000000e+00> : vector<128xf32>
      %103 = vector.multi_reduction <add>, %102, %cst_53 [1] : vector<128x128xf32> to vector<128xf32>
      %104 = vector.shape_cast %103 : vector<128xf32> to vector<128x1xf32>
      %cst_54 = arith.constant 1.280000e+02 : f32
      %105 = vector.broadcast %cst_54 : f32 to vector<128x1xf32>
      %106 = arith.divf %104, %105 : vector<128x1xf32>
      %cst_55 = arith.constant 9.99999997E-7 : f32
      %107 = vector.broadcast %cst_55 : f32 to vector<128x1xf32>
      %108 = arith.addf %106, %107 : vector<128x1xf32>
      %109 = math.rsqrt %108 : vector<128x1xf32>
      %110 = vector.broadcast %109 : vector<128x1xf32> to vector<128x128xf32>
      %111 = arith.mulf %95, %110 : vector<128x128xf32>
      %c0_56 = arith.constant 0 : index
      %c0_57 = arith.constant 0 : index
      %112 = vector.load %arg9[%c0_56, %c0_57] : memref<1x128xf32, #tpu.memory_space<vmem>>, vector<1x128xf32>
      %113 = vector.broadcast %112 : vector<1x128xf32> to vector<128x128xf32>
      %114 = arith.mulf %111, %113 : vector<128x128xf32>
      %c0_58 = arith.constant 0 : index
      %c0_59 = arith.constant 0 : index
      %c0_60 = arith.constant 0 : index
      %115 = vector.load %arg10[%c0_58, %c0_59, %c0_60] : memref<1x128x128xf32, #tpu.memory_space<vmem>>, vector<1x128x128xf32>
      %116 = vector.shape_cast %115 : vector<1x128x128xf32> to vector<128x128xf32>
      %117 = vector.shape_cast %114 : vector<128x128xf32> to vector<1x128x128xf32>
      tpu.vector_store %arg10[%c0_58, %c0_59, %c0_60], %117 {strides = array<i32>} : memref<1x128x128xf32, #tpu.memory_space<vmem>>, vector<1x128x128xf32>,
    } else {
    }
    return
  }
  func.func @transform_0(%arg0: i32, %arg1: i32) -> (i32, i32, i32) {
    %c0_i32 = arith.constant 0 : i32
    %c0_i32_0 = arith.constant 0 : i32
    %c0_i32_1 = arith.constant 0 : i32
    return %arg0, %c0_i32, %c0_i32_0 : i32, i32, i32
  }
  func.func @transform_1(%arg0: i32, %arg1: i32) -> (i32, i32, i32) {
    %c0_i32 = arith.constant 0 : i32
    %c0_i32_0 = arith.constant 0 : i32
    %c0_i32_1 = arith.constant 0 : i32
    return %arg0, %c0_i32, %c0_i32_0 : i32, i32, i32
  }
  func.func @transform_2(%arg0: i32, %arg1: i32) -> (i32, i32, i32) {
    %c0_i32 = arith.constant 0 : i32
    %c0_i32_0 = arith.constant 0 : i32
    %c0_i32_1 = arith.constant 0 : i32
    %c0_i32_2 = arith.constant 0 : i32
    return %c0_i32, %c0_i32_0, %c0_i32_1 : i32, i32, i32
  }
  func.func @transform_3(%arg0: i32, %arg1: i32) -> (i32, i32, i32) {
    %c0_i32 = arith.constant 0 : i32
    %c0_i32_0 = arith.constant 0 : i32
    %c0_i32_1 = arith.constant 0 : i32
    return %arg1, %c0_i32, %c0_i32_0 : i32, i32, i32
  }
  func.func @transform_4(%arg0: i32, %arg1: i32) -> (i32, i32, i32, i32) {
    %c0_i32 = arith.constant 0 : i32
    %c0_i32_0 = arith.constant 0 : i32
    %c0_i32_1 = arith.constant 0 : i32
    %c0_i32_2 = arith.constant 0 : i32
    return %arg1, %c0_i32, %c0_i32_0, %c0_i32_1 : i32, i32, i32, i32
  }
  func.func @transform_5(%arg0: i32, %arg1: i32) -> (i32, i32, i32) {
    %c0_i32 = arith.constant 0 : i32
    %c0_i32_0 = arith.constant 0 : i32
    %c0_i32_1 = arith.constant 0 : i32
    return %arg1, %c0_i32, %c0_i32_0 : i32, i32, i32
  }
  func.func @transform_6(%arg0: i32, %arg1: i32) -> (i32, i32, i32) {
    %c0_i32 = arith.constant 0 : i32
    %c0_i32_0 = arith.constant 0 : i32
    %c0_i32_1 = arith.constant 0 : i32
    return %arg1, %c0_i32, %c0_i32_0 : i32, i32, i32
  }
  func.func @transform_7(%arg0: i32, %arg1: i32) -> (i32, i32) {
    %c0_i32 = arith.constant 0 : i32
    %c0_i32_0 = arith.constant 0 : i32
    %c0_i32_1 = arith.constant 0 : i32
    return %c0_i32, %c0_i32_0 : i32, i32
  }
  func.func @transform_8(%arg0: i32, %arg1: i32) -> (i32, i32, i32) {
    %c0_i32 = arith.constant 0 : i32
    %c0_i32_0 = arith.constant 0 : i32
    %c0_i32_1 = arith.constant 0 : i32
    return %arg0, %c0_i32, %c0_i32_0 : i32, i32, i32
  }
}

</mosaic_0001>

<llo_original>
// kernel: tpu_custom_call.1
$region0: #{tpu_custom_call.1}
  #allocation0 [shape = 'u32[]', space=smem, size = 0x4, offset = 0x4, fixed_abs, tag = 'smem constant byte address 0x4 - core index']
  #allocation1 [shape = 'u32[72,128]{1,0:T(1,128)}', space=vmem, size = 0x9000, scoped, tag = 'internal scratch']
  %s0 = inlined_call_operand.hbm [shape: f32[2,128,128], index: 0, kind: input, shape index: {}]
  %s1 = inlined_call_operand.hbm [shape: f32[2,1,128], index: 1, kind: input, shape index: {}]
  %s2 = inlined_call_operand.hbm [shape: bf16[4,128,128], index: 2, kind: input, shape index: {}]
  %s3 = inlined_call_operand.hbm [shape: bf16[2,128,384], index: 3, kind: input, shape index: {}]
  %s4 = inlined_call_operand.hbm [shape: bf16[2,4,32,128], index: 4, kind: input, shape index: {}]
  %s5 = inlined_call_operand.hbm [shape: bf16[2,128,256], index: 5, kind: input, shape index: {}]
  %s6 = inlined_call_operand.hbm [shape: bf16[2,256,128], index: 6, kind: input, shape index: {}]
  %s7 = inlined_call_operand.vmem [shape: f32[1,128], index: 7, kind: input, shape index: {}]
  %s8 = inlined_call_operand.hbm [shape: f32[2,128,128], index: 8, kind: output, shape index: {}]
  %s9 = sld [smem:[#allocation0]]
  $region105: #{tpu_custom_call.1} parent=0
    _
  %s11 = ssub.s32 1, %s9
  %s12 = scalar_select 0, %s11, %s9
  $region1: #{tpu_custom_call.1} parent=0
    #allocation2 [shape = 'u8[131072]{0}', space=vmem, size = 0x20000, scoped, tag = 'input window, operand 0']
    #allocation3 [shape = 's32[2]{0}', space=sflag, size = 0x8, scoped, tag = 'scoped memory for tpu_custom_call.1']
    #allocation4 [shape = 's32[2]{0}', space=sflag, size = 0x8, scoped, tag = 'scoped memory for tpu_custom_call.1']
    #allocation5 [shape = 'u8[1024]{0}', space=vmem, size = 0x400, scoped, tag = 'input window, operand 1']
    #allocation6 [shape = 's32[2]{0}', space=sflag, size = 0x8, scoped, tag = 'scoped memory for tpu_custom_call.1']
    #allocation7 [shape = 'u8[131072]{0}', space=vmem, size = 0x20000, scoped, tag = 'input window, operand 2, single buffered']
    #allocation8 [shape = 'u8[196608]{0}', space=vmem, size = 0x30000, scoped, tag = 'input window, operand 3']
    #allocation9 [shape = 's32[2]{0}', space=sflag, size = 0x8, scoped, tag = 'scoped memory for tpu_custom_call.1']
    #allocation10 [shape = 'u8[65536]{0}', space=vmem, size = 0x10000, scoped, tag = 'input window, operand 4']
    #allocation11 [shape = 'u8[131072]{0}', space=vmem, size = 0x20000, scoped, tag = 'input window, operand 5']
    #allocation12 [shape = 's32[2]{0}', space=sflag, size = 0x8, scoped, tag = 'scoped memory for tpu_custom_call.1']
    #allocation13 [shape = 'u8[131072]{0}', space=vmem, size = 0x20000, scoped, tag = 'input window, operand 6']
    #allocation14 [shape = 'u8[131072]{0}', space=vmem, size = 0x20000, scoped, tag = 'output window, operand 0']
    %13 = vsyncpa [#allocation3], 0
    %s14 = scalar_lea.sflag [#allocation3], 1
    %15 = vsyncpa %s14, 0
    %16 = vsyncpa [#allocation6], 0
    %s17 = scalar_lea.sflag [#allocation6], 1
    %18 = vsyncpa %s17, 0
    %19 = vsyncpa [#allocation9], 0
    %s20 = scalar_lea.sflag [#allocation9], 1
    %21 = vsyncpa %s20, 0
    %22 = vsyncpa [#allocation12], 0
    %s23 = scalar_lea.sflag [#allocation12], 1
    %24 = vsyncpa %s23, 0
    %25 = vsyncpa [#allocation4], 0
    %s26 = scalar_lea.sflag [#allocation4], 1
    %27 = vsyncpa %s26, 0
    loop: start=0, step=1, limit=6
    $region2: #{tpu_custom_call.1} parent=1 // loop_pre_header
      _
    $region3: #{tpu_custom_call.1} parent=1 // loop_header
      %s29 = sphi 0, %s33
      %p30 = scmp.ge.s32.totalorder %s29, 6
      %s36 = sphi 0, %s48
      %s37 = sphi 0, %s44
      %s38 = sphi 0, %s36
      %s39 = sphi 0, %s37
      %s40 = sphi 0, %s38
      %s41 = sphi 0, %s39
      %s51 = sphi 0, %s53
      %s54 = sphi 0, %s51
      %s55 = sphi 0, %s54
      %s71 = sphi 0, %s55
      %s77 = sphi 0, %s79
      %s80 = sphi 0, %s77
      %s81 = sphi 0, %s80
      %s97 = sphi 0, %s81
      %s101 = sphi 0, %s101
      %s103 = sphi 0, %s101
      %s104 = sphi 0, %s103
      %s118 = sphi 0, %s104
      %s124 = sphi 0, %s126
      %s127 = sphi 0, %s124
      %s128 = sphi 0, %s127
      %s144 = sphi 0, %s128
      %s150 = sphi 0, %s152
      %s153 = sphi 0, %s150
      %s154 = sphi 0, %s153
      %s170 = sphi 0, %s154
      %s176 = sphi 0, %s178
      %s179 = sphi 0, %s176
      %s180 = sphi 0, %s179
      %s196 = sphi 0, %s180
      %s202 = sphi 0, %s204
      %s205 = sphi 0, %s202
      %s206 = sphi 0, %s205
      %s222 = sphi 0, %s206
      %s226 = sphi 0, %s226
      %s228 = sphi 0, %s226
      %s229 = sphi 0, %s228
      %s243 = sphi 0, %s229
      %s249 = sphi 0, %s251
      %s252 = sphi 0, %s249
      %s253 = sphi 0, %s252
      %s269 = sphi 0, %s253
    $region4: #{tpu_custom_call.1} parent=1 // loop_header_branch
      %32 = sbr.rel (%p30) target = $region8
    $region5: #{tpu_custom_call.1} parent=1 // loop_body
      %s34 = ssub.s32 %s29, 1
      %s35 = ssub.s32 %s29, 2
      %s42 = sadd.s32 1, %s37
      %p43 = scmp.ge.s32.totalorder %s42, 2
      %s44 = scalar_select %p43, 0, %s42
      %s45 = sadd.s32 1, %s36
      %s46 = scalar_select %p43, %s45, %s36
      %p47 = scmp.ge.s32.totalorder %s46, 2
      %s48 = scalar_select %p47, 0, %s46
      %s49 = ssub.s32 %s36, %s48
      %p50 = scmp.eq.s32.totalorder %s49, 0
      %s52 = sadd.s32 %s51, 1
      %s53 = scalar_select %p50, %s51, %s52
      %p56 = pneg %p50
      %p57 = scmp.eq.s32.totalorder %s29, 3
      %p58 = por %p56, %p57
      %p59 = scmp.ne.s32.totalorder %s51, %s54
      %p60 = scmp.eq.s32.totalorder %s29, 0
      %p61 = por %p59, %p60
      %p62 = scmp.ne.s32.totalorder %s51, %s54
      %p63 = scmp.eq.s32.totalorder %s34, 3
      %p64 = por %p62, %p63
      %p65 = scmp.ne.s32.totalorder %s54, %s55
      %p66 = scmp.eq.s32.totalorder %s34, 0
      %p67 = por %p65, %p66
      %p68 = scmp.ne.s32.totalorder %s54, %s55
      %p69 = scmp.eq.s32.totalorder %s35, 3
      %p70 = por %p68, %p69
      %p72 = scmp.ne.s32.totalorder %s55, %s71
      %p73 = scmp.eq.s32.totalorder %s35, 0
      %p74 = por %p72, %p73
      %s75 = ssub.s32 %s36, %s48
      %p76 = scmp.eq.s32.totalorder %s75, 0
      %s78 = sadd.s32 %s77, 1
      %s79 = scalar_select %p76, %s77, %s78
      %p82 = pneg %p76
      %p83 = scmp.eq.s32.totalorder %s29, 3
      %p84 = por %p82, %p83
      %p85 = scmp.ne.s32.totalorder %s77, %s80
      %p86 = scmp.eq.s32.totalorder %s29, 0
      %p87 = por %p85, %p86
      %p88 = scmp.ne.s32.totalorder %s77, %s80
      %p89 = scmp.eq.s32.totalorder %s34, 3
      %p90 = por %p88, %p89
      %p91 = scmp.ne.s32.totalorder %s80, %s81
      %p92 = scmp.eq.s32.totalorder %s34, 0
      %p93 = por %p91, %p92
      %p94 = scmp.ne.s32.totalorder %s80, %s81
      %p95 = scmp.eq.s32.totalorder %s35, 3
      %p96 = por %p94, %p95
      %p98 = scmp.ne.s32.totalorder %s81, %s97
      %p99 = scmp.eq.s32.totalorder %s35, 0
      %p100 = por %p98, %p99
      %s102 = sadd.s32 %s101, 1
      %p105 = scmp.eq.s32.totalorder %s29, 3
      %p106 = scmp.ne.s32.totalorder %s101, %s103
      %p107 = scmp.eq.s32.totalorder %s29, 0
      %p108 = por %p106, %p107
      %p109 = scmp.ne.s32.totalorder %s101, %s103
      %p110 = scmp.eq.s32.totalorder %s34, 3
      %p111 = por %p109, %p110
      %p112 = scmp.ne.s32.totalorder %s103, %s104
      %p113 = scmp.eq.s32.totalorder %s34, 0
      %p114 = por %p112, %p113
      %p115 = scmp.ne.s32.totalorder %s103, %s104
      %p116 = scmp.eq.s32.totalorder %s35, 3
      %p117 = por %p115, %p116
      %p119 = scmp.ne.s32.totalorder %s104, %s118
      %p120 = scmp.eq.s32.totalorder %s35, 0
      %p121 = por %p119, %p120
      %s122 = ssub.s32 %s37, %s44
      %p123 = scmp.eq.s32.totalorder %s122, 0
      %s125 = sadd.s32 %s124, 1
      %s126 = scalar_select %p123, %s124, %s125
      %p129 = pneg %p123
      %p130 = scmp.eq.s32.totalorder %s29, 3
      %p131 = por %p129, %p130
      %p132 = scmp.ne.s32.totalorder %s124, %s127
      %p133 = scmp.eq.s32.totalorder %s29, 0
      %p134 = por %p132, %p133
      %p135 = scmp.ne.s32.totalorder %s124, %s127
      %p136 = scmp.eq.s32.totalorder %s34, 3
      %p137 = por %p135, %p136
      %p138 = scmp.ne.s32.totalorder %s127, %s128
      %p139 = scmp.eq.s32.totalorder %s34, 0
      %p140 = por %p138, %p139
      %p141 = scmp.ne.s32.totalorder %s127, %s128
      %p142 = scmp.eq.s32.totalorder %s35, 3
      %p143 = por %p141, %p142
      %p145 = scmp.ne.s32.totalorder %s128, %s144
      %p146 = scmp.eq.s32.totalorder %s35, 0
      %p147 = por %p145, %p146
      %s148 = ssub.s32 %s37, %s44
      %p149 = scmp.eq.s32.totalorder %s148, 0
      %s151 = sadd.s32 %s150, 1
      %s152 = scalar_select %p149, %s150, %s151
      %p155 = pneg %p149
      %p156 = scmp.eq.s32.totalorder %s29, 3
      %p157 = por %p155, %p156
      %p158 = scmp.ne.s32.totalorder %s150, %s153
      %p159 = scmp.eq.s32.totalorder %s29, 0
      %p160 = por %p158, %p159
      %p161 = scmp.ne.s32.totalorder %s150, %s153
      %p162 = scmp.eq.s32.totalorder %s34, 3
      %p163 = por %p161, %p162
      %p164 = scmp.ne.s32.totalorder %s153, %s154
      %p165 = scmp.eq.s32.totalorder %s34, 0
      %p166 = por %p164, %p165
      %p167 = scmp.ne.s32.totalorder %s153, %s154
      %p168 = scmp.eq.s32.totalorder %s35, 3
      %p169 = por %p167, %p168
      %p171 = scmp.ne.s32.totalorder %s154, %s170
      %p172 = scmp.eq.s32.totalorder %s35, 0
      %p173 = por %p171, %p172
      %s174 = ssub.s32 %s37, %s44
      %p175 = scmp.eq.s32.totalorder %s174, 0
      %s177 = sadd.s32 %s176, 1
      %s178 = scalar_select %p175, %s176, %s177
      %p181 = pneg %p175
      %p182 = scmp.eq.s32.totalorder %s29, 3
      %p183 = por %p181, %p182
      %p184 = scmp.ne.s32.totalorder %s176, %s179
      %p185 = scmp.eq.s32.totalorder %s29, 0
      %p186 = por %p184, %p185
      %p187 = scmp.ne.s32.totalorder %s176, %s179
      %p188 = scmp.eq.s32.totalorder %s34, 3
      %p189 = por %p187, %p188
      %p190 = scmp.ne.s32.totalorder %s179, %s180
      %p191 = scmp.eq.s32.totalorder %s34, 0
      %p192 = por %p190, %p191
      %p193 = scmp.ne.s32.totalorder %s179, %s180
      %p194 = scmp.eq.s32.totalorder %s35, 3
      %p195 = por %p193, %p194
      %p197 = scmp.ne.s32.totalorder %s180, %s196
      %p198 = scmp.eq.s32.totalorder %s35, 0
      %p199 = por %p197, %p198
      %s200 = ssub.s32 %s37, %s44
      %p201 = scmp.eq.s32.totalorder %s200, 0
      %s203 = sadd.s32 %s202, 1
      %s204 = scalar_select %p201, %s202, %s203
      %p207 = pneg %p201
      %p208 = scmp.eq.s32.totalorder %s29, 3
      %p209 = por %p207, %p208
      %p210 = scmp.ne.s32.totalorder %s202, %s205
      %p211 = scmp.eq.s32.totalorder %s29, 0
      %p212 = por %p210, %p211
      %p213 = scmp.ne.s32.totalorder %s202, %s205
      %p214 = scmp.eq.s32.totalorder %s34, 3
      %p215 = por %p213, %p214
      %p216 = scmp.ne.s32.totalorder %s205, %s206
      %p217 = scmp.eq.s32.totalorder %s34, 0
      %p218 = por %p216, %p217
      %p219 = scmp.ne.s32.totalorder %s205, %s206
      %p220 = scmp.eq.s32.totalorder %s35, 3
      %p221 = por %p219, %p220
      %p223 = scmp.ne.s32.totalorder %s206, %s222
      %p224 = scmp.eq.s32.totalorder %s35, 0
      %p225 = por %p223, %p224
      %s227 = sadd.s32 %s226, 1
      %p230 = scmp.eq.s32.totalorder %s29, 3
      %p231 = scmp.ne.s32.totalorder %s226, %s228
      %p232 = scmp.eq.s32.totalorder %s29, 0
      %p233 = por %p231, %p232
      %p234 = scmp.ne.s32.totalorder %s226, %s228
      %p235 = scmp.eq.s32.totalorder %s34, 3
      %p236 = por %p234, %p235
      %p237 = scmp.ne.s32.totalorder %s228, %s229
      %p238 = scmp.eq.s32.totalorder %s34, 0
      %p239 = por %p237, %p238
      %p240 = scmp.ne.s32.totalorder %s228, %s229
      %p241 = scmp.eq.s32.totalorder %s35, 3
      %p242 = por %p240, %p241
      %p244 = scmp.ne.s32.totalorder %s229, %s243
      %p245 = scmp.eq.s32.totalorder %s35, 0
      %p246 = por %p244, %p245
      %s247 = ssub.s32 %s36, %s48
      %p248 = scmp.eq.s32.totalorder %s247, 0
      %s250 = sadd.s32 %s249, 1
      %s251 = scalar_select %p248, %s249, %s250
      %p254 = pneg %p248
      %p255 = scmp.eq.s32.totalorder %s29, 3
      %p256 = por %p254, %p255
      %p257 = scmp.ne.s32.totalorder %s249, %s252
      %p258 = scmp.eq.s32.totalorder %s29, 0
      %p259 = por %p257, %p258
      %p260 = scmp.ne.s32.totalorder %s249, %s252
      %p261 = scmp.eq.s32.totalorder %s34, 3
      %p262 = por %p260, %p261
      %p263 = scmp.ne.s32.totalorder %s252, %s253
      %p264 = scmp.eq.s32.totalorder %s34, 0
      %p265 = por %p263, %p264
      %p266 = scmp.ne.s32.totalorder %s252, %s253
      %p267 = scmp.eq.s32.totalorder %s35, 3
      %p268 = por %p266, %p267
      %p270 = scmp.ne.s32.totalorder %s253, %s269
      %p271 = scmp.eq.s32.totalorder %s35, 0
      %p272 = por %p270, %p271
      %p273 = scmp.le.s32.totalorder 1, %s29
      %p274 = scmp.lt.s32.totalorder %s29, 5
      %p275 = pnand %p273, %p274
      %p276 = pneg %p275
      // Predicated region
      $region9: #{tpu_custom_call.1} parent=5 // pred_check
        _
      $region10: #{tpu_custom_call.1} parent=5 // pred_check_branch
        %278 = sbr.rel (%p275) target = $region12
      $region11: #{tpu_custom_call.1} parent=5 // pred_region
        %s279 = ssub.s32 %s29, 1
        // Predicated region
        $region13: #{tpu_custom_call.1} parent=11 // pred_check
          %p280 = pneg %p114
        $region14: #{tpu_custom_call.1} parent=11 // pred_check_branch
          %282 = sbr.rel (%p280) target = $region16
        $region15: #{tpu_custom_call.1} parent=11 // pred_region
          %284 = vsyncadd [#allocation6], 0
          %s285 = sshll.u32 %s2, 4
          %s286 = int_to_ptr.hbm [resolvable:$true] %s285
          %s287 = sshll.u32 [#allocation7], 4
          %s288 = int_to_ptr.vmem [resolvable:$true] %s287
          %293 = dma.hbm_to_vmem [thread:$0]  %s286, 4096, %s288, [#allocation6], 64, 64, 4
        $region16: #{tpu_custom_call.1} parent=11 // pred_fallthru
          _
        // Predicated region
        $region17: #{tpu_custom_call.1} parent=11 // pred_check
          %p294 = pneg %p239
        $region18: #{tpu_custom_call.1} parent=11 // pred_check_branch
          %296 = sbr.rel (%p294) target = $region20
        $region19: #{tpu_custom_call.1} parent=11 // pred_region
          _
        $region20: #{tpu_custom_call.1} parent=11 // pred_fallthru
          _
      $region12: #{tpu_custom_call.1} parent=5 // pred_fallthru
        _
      %p297 = scmp.lt.s32.totalorder %s29, 4
      // Predicated region
      $region21: #{tpu_custom_call.1} parent=5 // pred_check
        %p298 = pneg %p297
      $region22: #{tpu_custom_call.1} parent=5 // pred_check_branch
        %300 = sbr.rel (%p298) target = $region24
      $region23: #{tpu_custom_call.1} parent=5 // pred_region
        // Predicated region
        $region25: #{tpu_custom_call.1} parent=23 // pred_check
          %p301 = pneg %p61
        $region26: #{tpu_custom_call.1} parent=23 // pred_check_branch
          %303 = sbr.rel (%p301) target = $region28
        $region27: #{tpu_custom_call.1} parent=23 // pred_region
          %s304 = sand.u32 %s51, 1
          %s305 = scalar_lea.sflag [#allocation3], %s304
          %s306 = sand.u32 %s51, 1
          %s307 = smul.addr %s306, 128
          %s308 = scalar_lea.vmem [#allocation2], %s307
          %310 = vsyncadd %s305, 0
          %s311 = smul.addr %s36, 16
          %s312 = smul.addr %s311, 8
          %s313 = scalar_lea.hbm %s0, %s312
          %s314 = sshll.u32 %s313, 4
          %s315 = int_to_ptr.hbm [resolvable:$true] %s314
          %s316 = sshll.u32 %s308, 4
          %s317 = int_to_ptr.vmem [resolvable:$true] %s316
          %322 = dma.hbm_to_vmem [thread:$0]  %s315, 2048, %s317, %s305, 128, 128, 8
        $region28: #{tpu_custom_call.1} parent=23 // pred_fallthru
          _
        // Predicated region
        $region29: #{tpu_custom_call.1} parent=23 // pred_check
          %p323 = pneg %p87
        $region30: #{tpu_custom_call.1} parent=23 // pred_check_branch
          %325 = sbr.rel (%p323) target = $region32
        $region31: #{tpu_custom_call.1} parent=23 // pred_region
          %s326 = sand.u32 %s29, 1
          %s327 = scalar_lea.sflag [#allocation6], %s326
          %s328 = sand.u32 %s77, 1
          %s329 = scalar_lea.vmem [#allocation5], %s328
          %331 = vsyncadd %s327, 0
          %s332 = scalar_lea.hbm %s1, %s36
          %s334 = sshll.u32 %s332, 4
          %s335 = int_to_ptr.hbm [resolvable:$true] %s334
          %s336 = sshll.u32 %s329, 4
          %s337 = int_to_ptr.vmem [resolvable:$true] %s336
          %339 = dma.hbm_to_vmem [thread:$0]  %s335, 16, %s337, %s327
        $region32: #{tpu_custom_call.1} parent=23 // pred_fallthru
          _
        // Predicated region
        $region33: #{tpu_custom_call.1} parent=23 // pred_check
          %p340 = pneg %p134
        $region34: #{tpu_custom_call.1} parent=23 // pred_check_branch
          %342 = sbr.rel (%p340) target = $region36
        $region35: #{tpu_custom_call.1} parent=23 // pred_region
          %s343 = sand.u32 %s29, 1
          %s344 = scalar_lea.sflag [#allocation9], %s343
          %s345 = sand.u32 %s124, 1
          %s346 = smul.addr %s345, 192
          %s347 = scalar_lea.vmem [#allocation8], %s346
          %349 = vsyncadd %s344, 0
          %s350 = smul.addr %s37, 48
          %s351 = smul.addr %s350, 4
          %s352 = scalar_lea.hbm %s3, %s351
          %s353 = sshll.u32 %s352, 4
          %s354 = int_to_ptr.hbm [resolvable:$true] %s353
          %s355 = sshll.u32 %s347, 4
          %s356 = int_to_ptr.vmem [resolvable:$true] %s355
          %361 = dma.hbm_to_vmem [thread:$0]  %s354, 3072, %s356, %s344, 192, 192, 12
        $region36: #{tpu_custom_call.1} parent=23 // pred_fallthru
          _
        // Predicated region
        $region37: #{tpu_custom_call.1} parent=23 // pred_check
          %p362 = pneg %p160
        $region38: #{tpu_custom_call.1} parent=23 // pred_check_branch
          %364 = sbr.rel (%p362) target = $region40
        $region39: #{tpu_custom_call.1} parent=23 // pred_region
          %s365 = sand.u32 %s29, 1
          %s366 = scalar_lea.sflag [#allocation9], %s365
          %s367 = sand.u32 %s150, 1
          %s368 = smul.addr %s367, 64
          %s369 = scalar_lea.vmem [#allocation10], %s368
          %371 = vsyncadd %s366, 0
          %s372 = smul.addr %s37, 16
          %s373 = smul.addr %s372, 4
          %s374 = scalar_lea.hbm %s4, %s373
          %s375 = sshll.u32 %s374, 4
          %s376 = int_to_ptr.hbm [resolvable:$true] %s375
          %s377 = sshll.u32 %s369, 4
          %s378 = int_to_ptr.vmem [resolvable:$true] %s377
          %383 = dma.hbm_to_vmem [thread:$0]  %s376, 1024, %s378, %s366, 64, 64, 4
        $region40: #{tpu_custom_call.1} parent=23 // pred_fallthru
          _
        // Predicated region
        $region41: #{tpu_custom_call.1} parent=23 // pred_check
          %p384 = pneg %p186
        $region42: #{tpu_custom_call.1} parent=23 // pred_check_branch
          %386 = sbr.rel (%p384) target = $region44
        $region43: #{tpu_custom_call.1} parent=23 // pred_region
          %s387 = sand.u32 %s29, 1
          %s388 = scalar_lea.sflag [#allocation12], %s387
          %s389 = sand.u32 %s176, 1
          %s390 = smul.addr %s389, 128
          %s391 = scalar_lea.vmem [#allocation11], %s390
          %393 = vsyncadd %s388, 0
          %s394 = smul.addr %s37, 32
          %s395 = smul.addr %s394, 4
          %s396 = scalar_lea.hbm %s5, %s395
          %s397 = sshll.u32 %s396, 4
          %s398 = int_to_ptr.hbm [resolvable:$true] %s397
          %s399 = sshll.u32 %s391, 4
          %s400 = int_to_ptr.vmem [resolvable:$true] %s399
          %405 = dma.hbm_to_vmem [thread:$0]  %s398, 2048, %s400, %s388, 128, 128, 8
        $region44: #{tpu_custom_call.1} parent=23 // pred_fallthru
          _
        // Predicated region
        $region45: #{tpu_custom_call.1} parent=23 // pred_check
          %p406 = pneg %p212
        $region46: #{tpu_custom_call.1} parent=23 // pred_check_branch
          %408 = sbr.rel (%p406) target = $region48
        $region47: #{tpu_custom_call.1} parent=23 // pred_region
          %s409 = sand.u32 %s29, 1
          %s410 = scalar_lea.sflag [#allocation12], %s409
          %s411 = sand.u32 %s202, 1
          %s412 = smul.addr %s411, 128
          %s413 = scalar_lea.vmem [#allocation13], %s412
          %415 = vsyncadd %s410, 0
          %s416 = smul.addr %s37, 32
          %s417 = smul.addr %s416, 4
          %s418 = scalar_lea.hbm %s6, %s417
          %s419 = sshll.u32 %s418, 4
          %s420 = int_to_ptr.hbm [resolvable:$true] %s419
          %s421 = sshll.u32 %s413, 4
          %s422 = int_to_ptr.vmem [resolvable:$true] %s421
          %427 = dma.hbm_to_vmem [thread:$0]  %s420, 2048, %s422, %s410, 64, 64, 4
        $region48: #{tpu_custom_call.1} parent=23 // pred_fallthru
          _
      $region24: #{tpu_custom_call.1} parent=5 // pred_fallthru
        _
      %p428 = scmp.le.s32.totalorder 1, %s29
      %p429 = scmp.lt.s32.totalorder %s29, 5
      %p430 = pnand %p428, %p429
      %p431 = pneg %p430
      // Predicated region
      $region49: #{tpu_custom_call.1} parent=5 // pred_check
        _
      $region50: #{tpu_custom_call.1} parent=5 // pred_check_branch
        %433 = sbr.rel (%p430) target = $region52
      $region51: #{tpu_custom_call.1} parent=5 // pred_region
        %s434 = ssub.s32 %s29, 1
        %s435 = sand.u32 %s54, 1
        %s436 = scalar_lea.sflag [#allocation3], %s435
        %s437 = sand.u32 %s54, 1
        %s438 = smul.addr %s437, 128
        %s439 = scalar_lea.vmem [#allocation2], %s438
        // Predicated region
        $region53: #{tpu_custom_call.1} parent=51 // pred_check
          %p440 = pneg %p67
        $region54: #{tpu_custom_call.1} parent=51 // pred_check_branch
          %442 = sbr.rel (%p440) target = $region56
        $region55: #{tpu_custom_call.1} parent=51 // pred_region
          %444 = dma.done %s436, 2048
        $region56: #{tpu_custom_call.1} parent=51 // pred_fallthru
          _
        %s445 = sand.u32 %s34, 1
        %s446 = scalar_lea.sflag [#allocation6], %s445
        %s447 = sand.u32 %s80, 1
        %s448 = scalar_lea.vmem [#allocation5], %s447
        // Predicated region
        $region57: #{tpu_custom_call.1} parent=51 // pred_check
          %p449 = pneg %p93
        $region58: #{tpu_custom_call.1} parent=51 // pred_check_branch
          %451 = sbr.rel (%p449) target = $region60
        $region59: #{tpu_custom_call.1} parent=51 // pred_region
          %453 = dma.done %s446, 16
        $region60: #{tpu_custom_call.1} parent=51 // pred_fallthru
          _
        // Predicated region
        $region61: #{tpu_custom_call.1} parent=51 // pred_check
          %p454 = pneg %p114
        $region62: #{tpu_custom_call.1} parent=51 // pred_check_branch
          %456 = sbr.rel (%p454) target = $region64
        $region63: #{tpu_custom_call.1} parent=51 // pred_region
          %458 = dma.done [#allocation6], 4096
        $region64: #{tpu_custom_call.1} parent=51 // pred_fallthru
          _
        %s459 = sand.u32 %s34, 1
        %s460 = scalar_lea.sflag [#allocation9], %s459
        %s461 = sand.u32 %s127, 1
        %s462 = smul.addr %s461, 192
        %s463 = scalar_lea.vmem [#allocation8], %s462
        // Predicated region
        $region65: #{tpu_custom_call.1} parent=51 // pred_check
          %p464 = pneg %p140
        $region66: #{tpu_custom_call.1} parent=51 // pred_check_branch
          %466 = sbr.rel (%p464) target = $region68
        $region67: #{tpu_custom_call.1} parent=51 // pred_region
          %468 = dma.done %s460, 3072
        $region68: #{tpu_custom_call.1} parent=51 // pred_fallthru
          _
        %s469 = sand.u32 %s34, 1
        %s470 = scalar_lea.sflag [#allocation9], %s469
        %s471 = sand.u32 %s153, 1
        %s472 = smul.addr %s471, 64
        %s473 = scalar_lea.vmem [#allocation10], %s472
        // Predicated region
        $region69: #{tpu_custom_call.1} parent=51 // pred_check
          %p474 = pneg %p166
        $region70: #{tpu_custom_call.1} parent=51 // pred_check_branch
          %476 = sbr.rel (%p474) target = $region72
        $region71: #{tpu_custom_call.1} parent=51 // pred_region
          %478 = dma.done %s470, 1024
        $region72: #{tpu_custom_call.1} parent=51 // pred_fallthru
          _
        %s479 = sand.u32 %s34, 1
        %s480 = scalar_lea.sflag [#allocation12], %s479
        %s481 = sand.u32 %s179, 1
        %s482 = smul.addr %s481, 128
        %s483 = scalar_lea.vmem [#allocation11], %s482
        // Predicated region
        $region73: #{tpu_custom_call.1} parent=51 // pred_check
          %p484 = pneg %p192
        $region74: #{tpu_custom_call.1} parent=51 // pred_check_branch
          %486 = sbr.rel (%p484) target = $region76
        $region75: #{tpu_custom_call.1} parent=51 // pred_region
          %488 = dma.done %s480, 2048
        $region76: #{tpu_custom_call.1} parent=51 // pred_fallthru
          _
        %s489 = sand.u32 %s34, 1
        %s490 = scalar_lea.sflag [#allocation12], %s489
        %s491 = sand.u32 %s205, 1
        %s492 = smul.addr %s491, 128
        %s493 = scalar_lea.vmem [#allocation13], %s492
        // Predicated region
        $region77: #{tpu_custom_call.1} parent=51 // pred_check
          %p494 = pneg %p218
        $region78: #{tpu_custom_call.1} parent=51 // pred_check_branch
          %496 = sbr.rel (%p494) target = $region80
        $region79: #{tpu_custom_call.1} parent=51 // pred_region
          %498 = dma.done %s490, 2048
        $region80: #{tpu_custom_call.1} parent=51 // pred_fallthru
          _
        %s499 = sand.u32 %s54, 1
        %s500 = scalar_lea.sflag [#allocation3], %s499
        %s501 = sand.u32 %s54, 1
        %s502 = smul.addr %s501, 128
        %s503 = scalar_lea.vmem [#allocation2], %s502
        %p504 = pneg %p67
        %p505 = pneg %p64
        %s506 = sand.u32 %s34, 1
        %s507 = scalar_lea.sflag [#allocation6], %s506
        %s508 = sand.u32 %s80, 1
        %s509 = scalar_lea.vmem [#allocation5], %s508
        %p510 = pneg %p93
        %p511 = pneg %p90
        %p512 = pneg %p114
        %p513 = pneg %p111
        %s514 = sand.u32 %s34, 1
        %s515 = scalar_lea.sflag [#allocation9], %s514
        %s516 = sand.u32 %s127, 1
        %s517 = smul.addr %s516, 192
        %s518 = scalar_lea.vmem [#allocation8], %s517
        %p519 = pneg %p140
        %p520 = pneg %p137
        %s521 = sand.u32 %s34, 1
        %s522 = scalar_lea.sflag [#allocation9], %s521
        %s523 = sand.u32 %s153, 1
        %s524 = smul.addr %s523, 64
        %s525 = scalar_lea.vmem [#allocation10], %s524
        %p526 = pneg %p166
        %p527 = pneg %p163
        %s528 = sand.u32 %s34, 1
        %s529 = scalar_lea.sflag [#allocation12], %s528
        %s530 = sand.u32 %s179, 1
        %s531 = smul.addr %s530, 128
        %s532 = scalar_lea.vmem [#allocation11], %s531
        %p533 = pneg %p192
        %p534 = pneg %p189
        %s535 = sand.u32 %s34, 1
        %s536 = scalar_lea.sflag [#allocation12], %s535
        %s537 = sand.u32 %s205, 1
        %s538 = smul.addr %s537, 128
        %s539 = scalar_lea.vmem [#allocation13], %s538
        %p540 = pneg %p218
        %p541 = pneg %p215
        %p542 = pneg %p239
        %p543 = pneg %p236
        %p544 = pneg %p265
        %p545 = pneg %p262
        %s546 = sand.u32 %s252, 1
        %s547 = scalar_lea.sflag [#allocation4], %s546
        %s548 = sand.u32 %s252, 1
        %s549 = smul.addr %s548, 128
        %s550 = scalar_lea.vmem [#allocation14], %s549
        %p552 = scmp.eq.s32.totalorder %s39, 0
        // Predicated region
        $region81: #{tpu_custom_call.1} parent=51 // pred_check
          %p553 = pneg %p552
        $region82: #{tpu_custom_call.1} parent=51 // pred_check_branch
          %555 = sbr.rel (%p553) target = $region84
        $region83: #{tpu_custom_call.1} parent=51 // pred_region
          %v556 = vld [vmem:[%s439] sm:$0xff]
          %v557 = vld [vmem:[%s439 + $0x8] sm:$0xff]
          %v558 = vld [vmem:[%s439 + $0x10] sm:$0xff]
          %v559 = vld [vmem:[%s439 + $0x18] sm:$0xff]
          %v560 = vld [vmem:[%s439 + $0x20] sm:$0xff]
          %v561 = vld [vmem:[%s439 + $0x28] sm:$0xff]
          %v562 = vld [vmem:[%s439 + $0x30] sm:$0xff]
          %v563 = vld [vmem:[%s439 + $0x38] sm:$0xff]
          %v564 = vld [vmem:[%s439 + $0x40] sm:$0xff]
          %v565 = vld [vmem:[%s439 + $0x48] sm:$0xff]
          %v566 = vld [vmem:[%s439 + $0x50] sm:$0xff]
          %v567 = vld [vmem:[%s439 + $0x58] sm:$0xff]
          %v568 = vld [vmem:[%s439 + $0x60] sm:$0xff]
          %v569 = vld [vmem:[%s439 + $0x68] sm:$0xff]
          %v570 = vld [vmem:[%s439 + $0x70] sm:$0xff]
          %v571 = vld [vmem:[%s439 + $0x78] sm:$0xff]
          %572 = vst [vmem:[%s550] sm:$0xff] %v556
          %573 = vst [vmem:[%s550 + $0x8] sm:$0xff] %v557
          %574 = vst [vmem:[%s550 + $0x10] sm:$0xff] %v558
          %575 = vst [vmem:[%s550 + $0x18] sm:$0xff] %v559
          %576 = vst [vmem:[%s550 + $0x20] sm:$0xff] %v560
          %577 = vst [vmem:[%s550 + $0x28] sm:$0xff] %v561
          %578 = vst [vmem:[%s550 + $0x30] sm:$0xff] %v562
          %579 = vst [vmem:[%s550 + $0x38] sm:$0xff] %v563
          %580 = vst [vmem:[%s550 + $0x40] sm:$0xff] %v564
          %581 = vst [vmem:[%s550 + $0x48] sm:$0xff] %v565
          %582 = vst [vmem:[%s550 + $0x50] sm:$0xff] %v566
          %583 = vst [vmem:[%s550 + $0x58] sm:$0xff] %v567
          %584 = vst [vmem:[%s550 + $0x60] sm:$0xff] %v568
          %585 = vst [vmem:[%s550 + $0x68] sm:$0xff] %v569
          %586 = vst [vmem:[%s550 + $0x70] sm:$0xff] %v570
          %587 = vst [vmem:[%s550 + $0x78] sm:$0xff] %v571
        $region84: #{tpu_custom_call.1} parent=51 // pred_fallthru
          _
        %v588 = vld [vmem:[%s550] sm:$0xff]
        %v589 = vld [vmem:[%s550 + $0x8] sm:$0xff]
        %v590 = vld [vmem:[%s550 + $0x10] sm:$0xff]
        %v591 = vld [vmem:[%s550 + $0x18] sm:$0xff]
        %v592 = vld [vmem:[%s550 + $0x20] sm:$0xff]
        %v593 = vld [vmem:[%s550 + $0x28] sm:$0xff]
        %v594 = vld [vmem:[%s550 + $0x30] sm:$0xff]
        %v595 = vld [vmem:[%s550 + $0x38] sm:$0xff]
        %v596 = vld [vmem:[%s550 + $0x40] sm:$0xff]
        %v597 = vld [vmem:[%s550 + $0x48] sm:$0xff]
        %v598 = vld [vmem:[%s550 + $0x50] sm:$0xff]
        %v599 = vld [vmem:[%s550 + $0x58] sm:$0xff]
        %v600 = vld [vmem:[%s550 + $0x60] sm:$0xff]
        %v601 = vld [vmem:[%s550 + $0x68] sm:$0xff]
        %v602 = vld [vmem:[%s550 + $0x70] sm:$0xff]
        %v603 = vld [vmem:[%s550 + $0x78] sm:$0xff]
        %v604 = vmul.f32 %v588, %v588
        %v605 = vmul.f32 %v589, %v589
        %v606 = vmul.f32 %v590, %v590
        %v607 = vmul.f32 %v591, %v591
        %v608 = vmul.f32 %v592, %v592
        %v609 = vmul.f32 %v593, %v593
        %v610 = vmul.f32 %v594, %v594
        %v611 = vmul.f32 %v595, %v595
        %v612 = vmul.f32 %v596, %v596
        %v613 = vmul.f32 %v597, %v597
        %v614 = vmul.f32 %v598, %v598
        %v615 = vmul.f32 %v599, %v599
        %v616 = vmul.f32 %v600, %v600
        %v617 = vmul.f32 %v601, %v601
        %v618 = vmul.f32 %v602, %v602
        %v619 = vmul.f32 %v603, %v603
        %620 = vadd.xlane.f32.xlu0 %v604
        %v621 = vpop.xlane.xlu0 %620
        %622 = vadd.xlane.f32.xlu0 %v605
        %v623 = vpop.xlane.xlu0 %622
        %624 = vadd.xlane.f32.xlu0 %v606
        %v625 = vpop.xlane.xlu0 %624
        %626 = vadd.xlane.f32.xlu0 %v607
        %v627 = vpop.xlane.xlu0 %626
        %628 = vadd.xlane.f32.xlu0 %v608
        %v629 = vpop.xlane.xlu0 %628
        %630 = vadd.xlane.f32.xlu0 %v609
        %v631 = vpop.xlane.xlu0 %630
        %632 = vadd.xlane.f32.xlu0 %v610
        %v633 = vpop.xlane.xlu0 %632
        %634 = vadd.xlane.f32.xlu0 %v611
        %v635 = vpop.xlane.xlu0 %634
        %636 = vadd.xlane.f32.xlu0 %v612
        %v637 = vpop.xlane.xlu0 %636
        %638 = vadd.xlane.f32.xlu0 %v613
        %v639 = vpop.xlane.xlu0 %638
        %640 = vadd.xlane.f32.xlu0 %v614
        %v641 = vpop.xlane.xlu0 %640
        %642 = vadd.xlane.f32.xlu0 %v615
        %v643 = vpop.xlane.xlu0 %642
        %644 = vadd.xlane.f32.xlu0 %v616
        %v645 = vpop.xlane.xlu0 %644
        %646 = vadd.xlane.f32.xlu0 %v617
        %v647 = vpop.xlane.xlu0 %646
        %648 = vadd.xlane.f32.xlu0 %v618
        %v649 = vpop.xlane.xlu0 %648
        %650 = vadd.xlane.f32.xlu0 %v619
        %v651 = vpop.xlane.xlu0 %650
        %v652 = vrcp.pop 128.0
        %v653 = vmul.f32 128.0, %v652
        %v654 = vsub.f32 1.0, %v653
        %v655 = vmul.f32 %v652, %v654
        %v656 = vadd.f32 %v652, %v655
        %vm657 = vweird.f32 %v652
        %v658 = vsel %vm657, %v652, %v656
        %v659 = vmul.f32 %v621, %v658
        %v660 = vmul.f32 %v623, %v658
        %v661 = vmul.f32 %v625, %v658
        %v662 = vmul.f32 %v627, %v658
        %v663 = vmul.f32 %v629, %v658
        %v664 = vmul.f32 %v631, %v658
        %v665 = vmul.f32 %v633, %v658
        %v666 = vmul.f32 %v635, %v658
        %v667 = vmul.f32 %v637, %v658
        %v668 = vmul.f32 %v639, %v658
        %v669 = vmul.f32 %v641, %v658
        %v670 = vmul.f32 %v643, %v658
        %v671 = vmul.f32 %v645, %v658
        %v672 = vmul.f32 %v647, %v658
        %v673 = vmul.f32 %v649, %v658
        %v674 = vmul.f32 %v651, %v658
        %v675 = vadd.f32 %v659, 1e-06
        %v676 = vadd.f32 %v660, 1e-06
        %v677 = vadd.f32 %v661, 1e-06
        %v678 = vadd.f32 %v662, 1e-06
        %v679 = vadd.f32 %v663, 1e-06
        %v680 = vadd.f32 %v664, 1e-06
        %v681 = vadd.f32 %v665, 1e-06
        %v682 = vadd.f32 %v666, 1e-06
        %v683 = vadd.f32 %v667, 1e-06
        %v684 = vadd.f32 %v668, 1e-06
        %v685 = vadd.f32 %v669, 1e-06
        %v686 = vadd.f32 %v670, 1e-06
        %v687 = vadd.f32 %v671, 1e-06
        %v688 = vadd.f32 %v672, 1e-06
        %v689 = vadd.f32 %v673, 1e-06
        %v690 = vadd.f32 %v674, 1e-06
        %v691 = vrsqrt.pop %v675
        %v692 = vmul.f32 %v691, %v675
        %v693 = vmul.f32 %v692, %v691
        %v694 = vmul.f32 0.5, %v693
        %v695 = vsub.f32 1.5, %v694
        %v696 = vmul.f32 %v691, %v695
        %vm697 = vweird.f32 %v675
        %vm698 = vweird.f32 %v691
        %vm699 = vmor %vm697, %vm698
        %v700 = vsel %vm699, %v691, %v696
        %v701 = vrsqrt.pop %v676
        %v702 = vmul.f32 %v701, %v676
        %v703 = vmul.f32 %v702, %v701
        %v704 = vmul.f32 0.5, %v703
        %v705 = vsub.f32 1.5, %v704
        %v706 = vmul.f32 %v701, %v705
        %vm707 = vweird.f32 %v676
        %vm708 = vweird.f32 %v701
        %vm709 = vmor %vm707, %vm708
        %v710 = vsel %vm709, %v701, %v706
        %v711 = vrsqrt.pop %v677
        %v712 = vmul.f32 %v711, %v677
        %v713 = vmul.f32 %v712, %v711
        %v714 = vmul.f32 0.5, %v713
        %v715 = vsub.f32 1.5, %v714
        %v716 = vmul.f32 %v711, %v715
        %vm717 = vweird.f32 %v677
        %vm718 = vweird.f32 %v711
        %vm719 = vmor %vm717, %vm718
        %v720 = vsel %vm719, %v711, %v716
        %v721 = vrsqrt.pop %v678
        %v722 = vmul.f32 %v721, %v678
        %v723 = vmul.f32 %v722, %v721
        %v724 = vmul.f32 0.5, %v723
        %v725 = vsub.f32 1.5, %v724
        %v726 = vmul.f32 %v721, %v725
        %vm727 = vweird.f32 %v678
        %vm728 = vweird.f32 %v721
        %vm729 = vmor %vm727, %vm728
        %v730 = vsel %vm729, %v721, %v726
        %v731 = vrsqrt.pop %v679
        %v732 = vmul.f32 %v731, %v679
        %v733 = vmul.f32 %v732, %v731
        %v734 = vmul.f32 0.5, %v733
        %v735 = vsub.f32 1.5, %v734
        %v736 = vmul.f32 %v731, %v735
        %vm737 = vweird.f32 %v679
        %vm738 = vweird.f32 %v731
        %vm739 = vmor %vm737, %vm738
        %v740 = vsel %vm739, %v731, %v736
        %v741 = vrsqrt.pop %v680
        %v742 = vmul.f32 %v741, %v680
        %v743 = vmul.f32 %v742, %v741
        %v744 = vmul.f32 0.5, %v743
        %v745 = vsub.f32 1.5, %v744
        %v746 = vmul.f32 %v741, %v745
        %vm747 = vweird.f32 %v680
        %vm748 = vweird.f32 %v741
        %vm749 = vmor %vm747, %vm748
        %v750 = vsel %vm749, %v741, %v746
        %v751 = vrsqrt.pop %v681
        %v752 = vmul.f32 %v751, %v681
        %v753 = vmul.f32 %v752, %v751
        %v754 = vmul.f32 0.5, %v753
        %v755 = vsub.f32 1.5, %v754
        %v756 = vmul.f32 %v751, %v755
        %vm757 = vweird.f32 %v681
        %vm758 = vweird.f32 %v751
        %vm759 = vmor %vm757, %vm758
        %v760 = vsel %vm759, %v751, %v756
        %v761 = vrsqrt.pop %v682
        %v762 = vmul.f32 %v761, %v682
        %v763 = vmul.f32 %v762, %v761
        %v764 = vmul.f32 0.5, %v763
        %v765 = vsub.f32 1.5, %v764
        %v766 = vmul.f32 %v761, %v765
        %vm767 = vweird.f32 %v682
        %vm768 = vweird.f32 %v761
        %vm769 = vmor %vm767, %vm768
        %v770 = vsel %vm769, %v761, %v766
        %v771 = vrsqrt.pop %v683
        %v772 = vmul.f32 %v771, %v683
        %v773 = vmul.f32 %v772, %v771
        %v774 = vmul.f32 0.5, %v773
        %v775 = vsub.f32 1.5, %v774
        %v776 = vmul.f32 %v771, %v775
        %vm777 = vweird.f32 %v683
        %vm778 = vweird.f32 %v771
        %vm779 = vmor %vm777, %vm778
        %v780 = vsel %vm779, %v771, %v776
        %v781 = vrsqrt.pop %v684
        %v782 = vmul.f32 %v781, %v684
        %v783 = vmul.f32 %v782, %v781
        %v784 = vmul.f32 0.5, %v783
        %v785 = vsub.f32 1.5, %v784
        %v786 = vmul.f32 %v781, %v785
        %vm787 = vweird.f32 %v684
        %vm788 = vweird.f32 %v781
        %vm789 = vmor %vm787, %vm788
        %v790 = vsel %vm789, %v781, %v786
        %v791 = vrsqrt.pop %v685
        %v792 = vmul.f32 %v791, %v685
        %v793 = vmul.f32 %v792, %v791
        %v794 = vmul.f32 0.5, %v793
        %v795 = vsub.f32 1.5, %v794
        %v796 = vmul.f32 %v791, %v795
        %vm797 = vweird.f32 %v685
        %vm798 = vweird.f32 %v791
        %vm799 = vmor %vm797, %vm798
        %v800 = vsel %vm799, %v791, %v796
        %v801 = vrsqrt.pop %v686
        %v802 = vmul.f32 %v801, %v686
        %v803 = vmul.f32 %v802, %v801
        %v804 = vmul.f32 0.5, %v803
        %v805 = vsub.f32 1.5, %v804
        %v806 = vmul.f32 %v801, %v805
        %vm807 = vweird.f32 %v686
        %vm808 = vweird.f32 %v801
        %vm809 = vmor %vm807, %vm808
        %v810 = vsel %vm809, %v801, %v806
        %v811 = vrsqrt.pop %v687
        %v812 = vmul.f32 %v811, %v687
        %v813 = vmul.f32 %v812, %v811
        %v814 = vmul.f32 0.5, %v813
        %v815 = vsub.f32 1.5, %v814
        %v816 = vmul.f32 %v811, %v815
        %vm817 = vweird.f32 %v687
        %vm818 = vweird.f32 %v811
        %vm819 = vmor %vm817, %vm818
        %v820 = vsel %vm819, %v811, %v816
        %v821 = vrsqrt.pop %v688
        %v822 = vmul.f32 %v821, %v688
        %v823 = vmul.f32 %v822, %v821
        %v824 = vmul.f32 0.5, %v823
        %v825 = vsub.f32 1.5, %v824
        %v826 = vmul.f32 %v821, %v825
        %vm827 = vweird.f32 %v688
        %vm828 = vweird.f32 %v821
        %vm829 = vmor %vm827, %vm828
        %v830 = vsel %vm829, %v821, %v826
        %v831 = vrsqrt.pop %v689
        %v832 = vmul.f32 %v831, %v689
        %v833 = vmul.f32 %v832, %v831
        %v834 = vmul.f32 0.5, %v833
        %v835 = vsub.f32 1.5, %v834
        %v836 = vmul.f32 %v831, %v835
        %vm837 = vweird.f32 %v689
        %vm838 = vweird.f32 %v831
        %vm839 = vmor %vm837, %vm838
        %v840 = vsel %vm839, %v831, %v836
        %v841 = vrsqrt.pop %v690
        %v842 = vmul.f32 %v841, %v690
        %v843 = vmul.f32 %v842, %v841
        %v844 = vmul.f32 0.5, %v843
        %v845 = vsub.f32 1.5, %v844
        %v846 = vmul.f32 %v841, %v845
        %vm847 = vweird.f32 %v690
        %vm848 = vweird.f32 %v841
        %vm849 = vmor %vm847, %vm848
        %v850 = vsel %vm849, %v841, %v846
        %v851 = vmul.f32 %v588, %v700
        %v852 = vmul.f32 %v589, %v710
        %v853 = vmul.f32 %v590, %v720
        %v854 = vmul.f32 %v591, %v730
        %v855 = vmul.f32 %v592, %v740
        %v856 = vmul.f32 %v593, %v750
        %v857 = vmul.f32 %v594, %v760
        %v858 = vmul.f32 %v595, %v770
        %v859 = vmul.f32 %v596, %v780
        %v860 = vmul.f32 %v597, %v790
        %v861 = vmul.f32 %v598, %v800
        %v862 = vmul.f32 %v599, %v810
        %v863 = vmul.f32 %v600, %v820
        %v864 = vmul.f32 %v601, %v830
        %v865 = vmul.f32 %v602, %v840
        %v866 = vmul.f32 %v603, %v850
        %v867 = vpack.c.bf16 %v852, %v851
        %v868 = vpack.c.bf16 %v854, %v853
        %v869 = vpack.c.bf16 %v856, %v855
        %v870 = vpack.c.bf16 %v858, %v857
        %v871 = vpack.c.bf16 %v860, %v859
        %v872 = vpack.c.bf16 %v862, %v861
        %v873 = vpack.c.bf16 %v864, %v863
        %v874 = vpack.c.bf16 %v866, %v865
        %v875 = vld [vmem:[%s463] sm:$0xff]
        %v876 = vld [vmem:[%s463 + $0x8] sm:$0xf]
        %v877 = vld [vmem:[%s463 + $0xc] sm:$0xff]
        %v878 = vld [vmem:[%s463 + $0x14] sm:$0xf]
        %v879 = vld [vmem:[%s463 + $0x18] sm:$0xff]
        %v880 = vld [vmem:[%s463 + $0x20] sm:$0xf]
        %v881 = vld [vmem:[%s463 + $0x24] sm:$0xff]
        %v882 = vld [vmem:[%s463 + $0x2c] sm:$0xf]
        %v883 = vld [vmem:[%s463 + $0x30] sm:$0xff]
        %v884 = vld [vmem:[%s463 + $0x38] sm:$0xf]
        %v885 = vld [vmem:[%s463 + $0x3c] sm:$0xff]
        %v886 = vld [vmem:[%s463 + $0x44] sm:$0xf]
        %v887 = vld [vmem:[%s463 + $0x48] sm:$0xff]
        %v888 = vld [vmem:[%s463 + $0x50] sm:$0xf]
        %v889 = vld [vmem:[%s463 + $0x54] sm:$0xff]
        %v890 = vld [vmem:[%s463 + $0x5c] sm:$0xf]
        %v891 = vld [vmem:[%s463 + $0x60] sm:$0xff]
        %v892 = vld [vmem:[%s463 + $0x68] sm:$0xf]
        %v893 = vld [vmem:[%s463 + $0x6c] sm:$0xff]
        %v894 = vld [vmem:[%s463 + $0x74] sm:$0xf]
        %v895 = vld [vmem:[%s463 + $0x78] sm:$0xff]
        %v896 = vld [vmem:[%s463 + $0x80] sm:$0xf]
        %v897 = vld [vmem:[%s463 + $0x84] sm:$0xff]
        %v898 = vld [vmem:[%s463 + $0x8c] sm:$0xf]
        %v899 = vld [vmem:[%s463 + $0x90] sm:$0xff]
        %v900 = vld [vmem:[%s463 + $0x98] sm:$0xf]
        %v901 = vld [vmem:[%s463 + $0x9c] sm:$0xff]
        %v902 = vld [vmem:[%s463 + $0xa4] sm:$0xf]
        %v903 = vld [vmem:[%s463 + $0xa8] sm:$0xff]
        %v904 = vld [vmem:[%s463 + $0xb0] sm:$0xf]
        %v905 = vld [vmem:[%s463 + $0xb4] sm:$0xff]
        %v906 = vld [vmem:[%s463 + $0xbc] sm:$0xf]
        %v939 = vunpack.c.l.b16 %v875
        %v940 = vunpack.c.h.b16 %v875
        %v941 = vunpack.c.l.b16 %v876
        %v942 = vunpack.c.l.b16 %v877
        %v943 = vunpack.c.h.b16 %v877
        %v944 = vunpack.c.l.b16 %v878
        %v945 = vunpack.c.l.b16 %v879
        %v946 = vunpack.c.h.b16 %v879
        %v947 = vunpack.c.l.b16 %v880
        %v948 = vunpack.c.l.b16 %v881
        %v949 = vunpack.c.h.b16 %v881
        %v950 = vunpack.c.l.b16 %v882
        %v951 = vunpack.c.l.b16 %v883
        %v952 = vunpack.c.h.b16 %v883
        %v953 = vunpack.c.l.b16 %v884
        %v954 = vunpack.c.l.b16 %v885
        %v955 = vunpack.c.h.b16 %v885
        %v956 = vunpack.c.l.b16 %v886
        %v957 = vunpack.c.l.b16 %v887
        %v958 = vunpack.c.h.b16 %v887
        %v959 = vunpack.c.l.b16 %v888
        %v960 = vunpack.c.l.b16 %v889
        %v961 = vunpack.c.h.b16 %v889
        %v962 = vunpack.c.l.b16 %v890
        %v963 = vunpack.c.l.b16 %v891
        %v964 = vunpack.c.h.b16 %v891
        %v965 = vunpack.c.l.b16 %v892
        %v966 = vunpack.c.l.b16 %v893
        %v967 = vunpack.c.h.b16 %v893
        %v968 = vunpack.c.l.b16 %v894
        %v969 = vunpack.c.l.b16 %v895
        %v970 = vunpack.c.h.b16 %v895
        %v971 = vunpack.c.l.b16 %v896
        %v972 = vunpack.c.l.b16 %v897
        %v973 = vunpack.c.h.b16 %v897
        %v974 = vunpack.c.l.b16 %v898
        %v975 = vunpack.c.l.b16 %v899
        %v976 = vunpack.c.h.b16 %v899
        %v977 = vunpack.c.l.b16 %v900
        %v978 = vunpack.c.l.b16 %v901
        %v979 = vunpack.c.h.b16 %v901
        %v980 = vunpack.c.l.b16 %v902
        %v981 = vunpack.c.l.b16 %v903
        %v982 = vunpack.c.h.b16 %v903
        %v983 = vunpack.c.l.b16 %v904
        %v984 = vunpack.c.l.b16 %v905
        %v985 = vunpack.c.h.b16 %v905
        %v986 = vunpack.c.l.b16 %v906
        %v987 = vpack.c.b16 %v942, %v939
        %v988 = vpack.c.b16 %v943, %v940
        %v989 = vpack.c.b16 %v944, %v941
        %v990 = vpack.c.b16 %v948, %v945
        %v991 = vpack.c.b16 %v949, %v946
        %v992 = vpack.c.b16 %v950, %v947
        %v993 = vpack.c.b16 %v954, %v951
        %v994 = vpack.c.b16 %v955, %v952
        %v995 = vpack.c.b16 %v956, %v953
        %v996 = vpack.c.b16 %v960, %v957
        %v997 = vpack.c.b16 %v961, %v958
        %v998 = vpack.c.b16 %v962, %v959
        %v999 = vpack.c.b16 %v966, %v963
        %v1000 = vpack.c.b16 %v967, %v964
        %v1001 = vpack.c.b16 %v968, %v965
        %v1002 = vpack.c.b16 %v972, %v969
        %v1003 = vpack.c.b16 %v973, %v970
        %v1004 = vpack.c.b16 %v974, %v971
        %v1005 = vpack.c.b16 %v978, %v975
        %v1006 = vpack.c.b16 %v979, %v976
        %v1007 = vpack.c.b16 %v980, %v977
        %v1008 = vpack.c.b16 %v984, %v981
        %v1009 = vpack.c.b16 %v985, %v982
        %v1010 = vpack.c.b16 %v986, %v983
        %1035 = vmatpush.bf16.msra.mxu0 %v1008
        %1036 = vmatpush.bf16.msra.mxu0 %v1005
        %1037 = vmatpush.bf16.msra.mxu0 %v1002
        %1038 = vmatpush.bf16.msra.mxu0 %v999
        %1039 = vmatpush.bf16.msra.mxu0 %v996
        %1040 = vmatpush.bf16.msra.mxu0 %v993
        %1041 = vmatpush.bf16.msra.mxu0 %v990
        %1042 = vmatpush.bf16.msra.mxu0 %v987
        %1043 = vmatmul.bf16.gmra.mxu0 %v867
        %v1044 = vpop.f32.mrf.mxu0
        %v1045 = vadd.f32 0.0, %v1044
        %v1046 = vpop.f32.mrf.mxu0
        %v1047 = vadd.f32 0.0, %v1046
        %1048 = vmatmul.bf16.gmra.mxu0 %v868
        %v1049 = vpop.f32.mrf.mxu0
        %v1050 = vadd.f32 0.0, %v1049
        %v1051 = vpop.f32.mrf.mxu0
        %v1052 = vadd.f32 0.0, %v1051
        %1053 = vmatmul.bf16.gmra.mxu0 %v869
        %v1054 = vpop.f32.mrf.mxu0
        %v1055 = vadd.f32 0.0, %v1054
        %v1056 = vpop.f32.mrf.mxu0
        %v1057 = vadd.f32 0.0, %v1056
        %1058 = vmatmul.bf16.gmra.mxu0 %v870
        %v1059 = vpop.f32.mrf.mxu0
        %v1060 = vadd.f32 0.0, %v1059
        %v1061 = vpop.f32.mrf.mxu0
        %v1062 = vadd.f32 0.0, %v1061
        %1063 = vmatmul.bf16.gmra.mxu0 %v871
        %v1064 = vpop.f32.mrf.mxu0
        %v1065 = vadd.f32 0.0, %v1064
        %v1066 = vpop.f32.mrf.mxu0
        %v1067 = vadd.f32 0.0, %v1066
        %1068 = vmatmul.bf16.gmra.mxu0 %v872
        %v1069 = vpop.f32.mrf.mxu0
        %v1070 = vadd.f32 0.0, %v1069
        %v1071 = vpop.f32.mrf.mxu0
        %v1072 = vadd.f32 0.0, %v1071
        %1073 = vmatmul.bf16.gmra.mxu0 %v873
        %v1074 = vpop.f32.mrf.mxu0
        %v1075 = vadd.f32 0.0, %v1074
        %v1076 = vpop.f32.mrf.mxu0
        %v1077 = vadd.f32 0.0, %v1076
        %1078 = vmatmul.bf16.gmra.mxu0 %v874
        %v1079 = vpop.f32.mrf.mxu0
        %v1080 = vadd.f32 0.0, %v1079
        %v1081 = vpop.f32.mrf.mxu0
        %v1082 = vadd.f32 0.0, %v1081
        %1083 = vdwg.mxu0
        %1084 = vmatpush.bf16.msra.mxu0 %v1009
        %1085 = vmatpush.bf16.msra.mxu0 %v1006
        %1086 = vmatpush.bf16.msra.mxu0 %v1003
        %1087 = vmatpush.bf16.msra.mxu0 %v1000
        %1088 = vmatpush.bf16.msra.mxu0 %v997
        %1089 = vmatpush.bf16.msra.mxu0 %v994
        %1090 = vmatpush.bf16.msra.mxu0 %v991
        %1091 = vmatpush.bf16.msra.mxu0 %v988
        %1092 = vmatmul.bf16.gmra.mxu0 %v867
        %v1093 = vpop.f32.mrf.mxu0
        %v1094 = vadd.f32 0.0, %v1093
        %v1095 = vpop.f32.mrf.mxu0
        %v1096 = vadd.f32 0.0, %v1095
        %1097 = vmatmul.bf16.gmra.mxu0 %v868
        %v1098 = vpop.f32.mrf.mxu0
        %v1099 = vadd.f32 0.0, %v1098
        %v1100 = vpop.f32.mrf.mxu0
        %v1101 = vadd.f32 0.0, %v1100
        %1102 = vmatmul.bf16.gmra.mxu0 %v869
        %v1103 = vpop.f32.mrf.mxu0
        %v1104 = vadd.f32 0.0, %v1103
        %v1105 = vpop.f32.mrf.mxu0
        %v1106 = vadd.f32 0.0, %v1105
        %1107 = vmatmul.bf16.gmra.mxu0 %v870
        %v1108 = vpop.f32.mrf.mxu0
        %v1109 = vadd.f32 0.0, %v1108
        %v1110 = vpop.f32.mrf.mxu0
        %v1111 = vadd.f32 0.0, %v1110
        %1112 = vmatmul.bf16.gmra.mxu0 %v871
        %v1113 = vpop.f32.mrf.mxu0
        %v1114 = vadd.f32 0.0, %v1113
        %v1115 = vpop.f32.mrf.mxu0
        %v1116 = vadd.f32 0.0, %v1115
        %1117 = vmatmul.bf16.gmra.mxu0 %v872
        %v1118 = vpop.f32.mrf.mxu0
        %v1119 = vadd.f32 0.0, %v1118
        %v1120 = vpop.f32.mrf.mxu0
        %v1121 = vadd.f32 0.0, %v1120
        %1122 = vmatmul.bf16.gmra.mxu0 %v873
        %v1123 = vpop.f32.mrf.mxu0
        %v1124 = vadd.f32 0.0, %v1123
        %v1125 = vpop.f32.mrf.mxu0
        %v1126 = vadd.f32 0.0, %v1125
        %1127 = vmatmul.bf16.gmra.mxu0 %v874
        %v1128 = vpop.f32.mrf.mxu0
        %v1129 = vadd.f32 0.0, %v1128
        %v1130 = vpop.f32.mrf.mxu0
        %v1131 = vadd.f32 0.0, %v1130
        %1132 = vdwg.mxu0
        %1133 = vmatpush.bf16.msra.mxu0 %v1010
        %1134 = vmatpush.bf16.msra.mxu0 %v1007
        %1135 = vmatpush.bf16.msra.mxu0 %v1004
        %1136 = vmatpush.bf16.msra.mxu0 %v1001
        %1137 = vmatpush.bf16.msra.mxu0 %v998
        %1138 = vmatpush.bf16.msra.mxu0 %v995
        %1139 = vmatpush.bf16.msra.mxu0 %v992
        %1140 = vmatpush.bf16.msra.mxu0 %v989
        %1141 = vmatmul.bf16.gmra.mxu0 %v867
        %v1142 = vpop.f32.mrf.mxu0
        %v1143 = vadd.f32 0.0, %v1142
        %v1144 = vpop.f32.mrf.mxu0
        %v1145 = vadd.f32 0.0, %v1144
        %1146 = vmatmul.bf16.gmra.mxu0 %v868
        %v1147 = vpop.f32.mrf.mxu0
        %v1148 = vadd.f32 0.0, %v1147
        %v1149 = vpop.f32.mrf.mxu0
        %v1150 = vadd.f32 0.0, %v1149
        %1151 = vmatmul.bf16.gmra.mxu0 %v869
        %v1152 = vpop.f32.mrf.mxu0
        %v1153 = vadd.f32 0.0, %v1152
        %v1154 = vpop.f32.mrf.mxu0
        %v1155 = vadd.f32 0.0, %v1154
        %1156 = vmatmul.bf16.gmra.mxu0 %v870
        %v1157 = vpop.f32.mrf.mxu0
        %v1158 = vadd.f32 0.0, %v1157
        %v1159 = vpop.f32.mrf.mxu0
        %v1160 = vadd.f32 0.0, %v1159
        %1161 = vmatmul.bf16.gmra.mxu0 %v871
        %v1162 = vpop.f32.mrf.mxu0
        %v1163 = vadd.f32 0.0, %v1162
        %v1164 = vpop.f32.mrf.mxu0
        %v1165 = vadd.f32 0.0, %v1164
        %1166 = vmatmul.bf16.gmra.mxu0 %v872
        %v1167 = vpop.f32.mrf.mxu0
        %v1168 = vadd.f32 0.0, %v1167
        %v1169 = vpop.f32.mrf.mxu0
        %v1170 = vadd.f32 0.0, %v1169
        %1171 = vmatmul.bf16.gmra.mxu0 %v873
        %v1172 = vpop.f32.mrf.mxu0
        %v1173 = vadd.f32 0.0, %v1172
        %v1174 = vpop.f32.mrf.mxu0
        %v1175 = vadd.f32 0.0, %v1174
        %1176 = vmatmul.bf16.gmra.mxu0 %v874
        %v1177 = vpop.f32.mrf.mxu0
        %v1178 = vadd.f32 0.0, %v1177
        %v1179 = vpop.f32.mrf.mxu0
        %v1180 = vadd.f32 0.0, %v1179
        %1181 = vdwg.mxu0
        %v1182 = vpack.c.bf16 %v1094, %v1045
        %v1183 = vpack.c.bf16 %v1143, %v1143
        %v1184 = vpack.c.bf16 %v1096, %v1047
        %v1185 = vpack.c.bf16 %v1145, %v1145
        %v1186 = vpack.c.bf16 %v1099, %v1050
        %v1187 = vpack.c.bf16 %v1148, %v1148
        %v1188 = vpack.c.bf16 %v1101, %v1052
        %v1189 = vpack.c.bf16 %v1150, %v1150
        %v1190 = vpack.c.bf16 %v1104, %v1055
        %v1191 = vpack.c.bf16 %v1153, %v1153
        %v1192 = vpack.c.bf16 %v1106, %v1057
        %v1193 = vpack.c.bf16 %v1155, %v1155
        %v1194 = vpack.c.bf16 %v1109, %v1060
        %v1195 = vpack.c.bf16 %v1158, %v1158
        %v1196 = vpack.c.bf16 %v1111, %v1062
        %v1197 = vpack.c.bf16 %v1160, %v1160
        %v1198 = vpack.c.bf16 %v1114, %v1065
        %v1199 = vpack.c.bf16 %v1163, %v1163
        %v1200 = vpack.c.bf16 %v1116, %v1067
        %v1201 = vpack.c.bf16 %v1165, %v1165
        %v1202 = vpack.c.bf16 %v1119, %v1070
        %v1203 = vpack.c.bf16 %v1168, %v1168
        %v1204 = vpack.c.bf16 %v1121, %v1072
        %v1205 = vpack.c.bf16 %v1170, %v1170
        %v1206 = vpack.c.bf16 %v1124, %v1075
        %v1207 = vpack.c.bf16 %v1173, %v1173
        %v1208 = vpack.c.bf16 %v1126, %v1077
        %v1209 = vpack.c.bf16 %v1175, %v1175
        %v1210 = vpack.c.bf16 %v1129, %v1080
        %v1211 = vpack.c.bf16 %v1178, %v1178
        %v1212 = vpack.c.bf16 %v1131, %v1082
        %v1213 = vpack.c.bf16 %v1180, %v1180
        %v1230 = vrot.slane %v1182, 4
        %v1231 = vrot.slane %v1184, 4
        %v1232 = vrot.slane %v1186, 4
        %v1233 = vrot.slane %v1188, 4
        %v1234 = vrot.slane %v1190, 4
        %v1235 = vrot.slane %v1192, 4
        %v1236 = vrot.slane %v1194, 4
        %v1237 = vrot.slane %v1196, 4
        %v1238 = vrot.slane %v1198, 4
        %v1239 = vrot.slane %v1200, 4
        %v1240 = vrot.slane %v1202, 4
        %v1241 = vrot.slane %v1204, 4
        %v1242 = vrot.slane %v1206, 4
        %v1243 = vrot.slane %v1208, 4
        %v1244 = vrot.slane %v1210, 4
        %v1245 = vrot.slane %v1212, 4
        %1246 = vrot.lane.b32.xlu0 %v1182, 96
        %v1247 = vpop.permute.xlu0 %1246
        %1248 = vrot.lane.b32.xlu0 %v1184, 96
        %v1249 = vpop.permute.xlu0 %1248
        %1250 = vrot.lane.b32.xlu0 %v1186, 96
        %v1251 = vpop.permute.xlu0 %1250
        %1252 = vrot.lane.b32.xlu0 %v1188, 96
        %v1253 = vpop.permute.xlu0 %1252
        %1254 = vrot.lane.b32.xlu0 %v1190, 96
        %v1255 = vpop.permute.xlu0 %1254
        %1256 = vrot.lane.b32.xlu0 %v1192, 96
        %v1257 = vpop.permute.xlu0 %1256
        %1258 = vrot.lane.b32.xlu0 %v1194, 96
        %v1259 = vpop.permute.xlu0 %1258
        %1260 = vrot.lane.b32.xlu0 %v1196, 96
        %v1261 = vpop.permute.xlu0 %1260
        %1262 = vrot.lane.b32.xlu0 %v1198, 96
        %v1263 = vpop.permute.xlu0 %1262
        %1264 = vrot.lane.b32.xlu0 %v1200, 96
        %v1265 = vpop.permute.xlu0 %1264
        %1266 = vrot.lane.b32.xlu0 %v1202, 96
        %v1267 = vpop.permute.xlu0 %1266
        %1268 = vrot.lane.b32.xlu0 %v1204, 96
        %v1269 = vpop.permute.xlu0 %1268
        %1270 = vrot.lane.b32.xlu0 %v1206, 96
        %v1271 = vpop.permute.xlu0 %1270
        %1272 = vrot.lane.b32.xlu0 %v1208, 96
        %v1273 = vpop.permute.xlu0 %1272
        %1274 = vrot.lane.b32.xlu0 %v1210, 96
        %v1275 = vpop.permute.xlu0 %1274
        %1276 = vrot.lane.b32.xlu0 %v1212, 96
        %v1277 = vpop.permute.xlu0 %1276
        %v1278 = vrot.slane %v1247, 4
        %v1279 = vrot.slane %v1249, 4
        %v1280 = vrot.slane %v1251, 4
        %v1281 = vrot.slane %v1253, 4
        %v1282 = vrot.slane %v1255, 4
        %v1283 = vrot.slane %v1257, 4
        %v1284 = vrot.slane %v1259, 4
        %v1285 = vrot.slane %v1261, 4
        %v1286 = vrot.slane %v1263, 4
        %v1287 = vrot.slane %v1265, 4
        %v1288 = vrot.slane %v1267, 4
        %v1289 = vrot.slane %v1269, 4
        %v1290 = vrot.slane %v1271, 4
        %v1291 = vrot.slane %v1273, 4
        %v1292 = vrot.slane %v1275, 4
        %v1293 = vrot.slane %v1277, 4
        %1294 = vrot.lane.b32.xlu0 %v1182, 64
        %v1295 = vpop.permute.xlu0 %1294
        %1296 = vrot.lane.b32.xlu0 %v1184, 64
        %v1297 = vpop.permute.xlu0 %1296
        %1298 = vrot.lane.b32.xlu0 %v1186, 64
        %v1299 = vpop.permute.xlu0 %1298
        %1300 = vrot.lane.b32.xlu0 %v1188, 64
        %v1301 = vpop.permute.xlu0 %1300
        %1302 = vrot.lane.b32.xlu0 %v1190, 64
        %v1303 = vpop.permute.xlu0 %1302
        %1304 = vrot.lane.b32.xlu0 %v1192, 64
        %v1305 = vpop.permute.xlu0 %1304
        %1306 = vrot.lane.b32.xlu0 %v1194, 64
        %v1307 = vpop.permute.xlu0 %1306
        %1308 = vrot.lane.b32.xlu0 %v1196, 64
        %v1309 = vpop.permute.xlu0 %1308
        %1310 = vrot.lane.b32.xlu0 %v1198, 64
        %v1311 = vpop.permute.xlu0 %1310
        %1312 = vrot.lane.b32.xlu0 %v1200, 64
        %v1313 = vpop.permute.xlu0 %1312
        %1314 = vrot.lane.b32.xlu0 %v1202, 64
        %v1315 = vpop.permute.xlu0 %1314
        %1316 = vrot.lane.b32.xlu0 %v1204, 64
        %v1317 = vpop.permute.xlu0 %1316
        %1318 = vrot.lane.b32.xlu0 %v1206, 64
        %v1319 = vpop.permute.xlu0 %1318
        %1320 = vrot.lane.b32.xlu0 %v1208, 64
        %v1321 = vpop.permute.xlu0 %1320
        %1322 = vrot.lane.b32.xlu0 %v1210, 64
        %v1323 = vpop.permute.xlu0 %1322
        %1324 = vrot.lane.b32.xlu0 %v1212, 64
        %v1325 = vpop.permute.xlu0 %1324
        %v1326 = vrot.slane %v1295, 4
        %v1327 = vrot.slane %v1297, 4
        %v1328 = vrot.slane %v1299, 4
        %v1329 = vrot.slane %v1301, 4
        %v1330 = vrot.slane %v1303, 4
        %v1331 = vrot.slane %v1305, 4
        %v1332 = vrot.slane %v1307, 4
        %v1333 = vrot.slane %v1309, 4
        %v1334 = vrot.slane %v1311, 4
        %v1335 = vrot.slane %v1313, 4
        %v1336 = vrot.slane %v1315, 4
        %v1337 = vrot.slane %v1317, 4
        %v1338 = vrot.slane %v1319, 4
        %v1339 = vrot.slane %v1321, 4
        %v1340 = vrot.slane %v1323, 4
        %v1341 = vrot.slane %v1325, 4
        %1342 = vrot.lane.b32.xlu0 %v1182, 32
        %v1343 = vpop.permute.xlu0 %1342
        %1344 = vrot.lane.b32.xlu0 %v1184, 32
        %v1345 = vpop.permute.xlu0 %1344
        %1346 = vrot.lane.b32.xlu0 %v1186, 32
        %v1347 = vpop.permute.xlu0 %1346
        %1348 = vrot.lane.b32.xlu0 %v1188, 32
        %v1349 = vpop.permute.xlu0 %1348
        %1350 = vrot.lane.b32.xlu0 %v1190, 32
        %v1351 = vpop.permute.xlu0 %1350
        %1352 = vrot.lane.b32.xlu0 %v1192, 32
        %v1353 = vpop.permute.xlu0 %1352
        %1354 = vrot.lane.b32.xlu0 %v1194, 32
        %v1355 = vpop.permute.xlu0 %1354
        %1356 = vrot.lane.b32.xlu0 %v1196, 32
        %v1357 = vpop.permute.xlu0 %1356
        %1358 = vrot.lane.b32.xlu0 %v1198, 32
        %v1359 = vpop.permute.xlu0 %1358
        %1360 = vrot.lane.b32.xlu0 %v1200, 32
        %v1361 = vpop.permute.xlu0 %1360
        %1362 = vrot.lane.b32.xlu0 %v1202, 32
        %v1363 = vpop.permute.xlu0 %1362
        %1364 = vrot.lane.b32.xlu0 %v1204, 32
        %v1365 = vpop.permute.xlu0 %1364
        %1366 = vrot.lane.b32.xlu0 %v1206, 32
        %v1367 = vpop.permute.xlu0 %1366
        %1368 = vrot.lane.b32.xlu0 %v1208, 32
        %v1369 = vpop.permute.xlu0 %1368
        %1370 = vrot.lane.b32.xlu0 %v1210, 32
        %v1371 = vpop.permute.xlu0 %1370
        %1372 = vrot.lane.b32.xlu0 %v1212, 32
        %v1373 = vpop.permute.xlu0 %1372
        %v1374 = vrot.slane %v1343, 4
        %v1375 = vrot.slane %v1345, 4
        %v1376 = vrot.slane %v1347, 4
        %v1377 = vrot.slane %v1349, 4
        %v1378 = vrot.slane %v1351, 4
        %v1379 = vrot.slane %v1353, 4
        %v1380 = vrot.slane %v1355, 4
        %v1381 = vrot.slane %v1357, 4
        %v1382 = vrot.slane %v1359, 4
        %v1383 = vrot.slane %v1361, 4
        %v1384 = vrot.slane %v1363, 4
        %v1385 = vrot.slane %v1365, 4
        %v1386 = vrot.slane %v1367, 4
        %v1387 = vrot.slane %v1369, 4
        %v1388 = vrot.slane %v1371, 4
        %v1389 = vrot.slane %v1373, 4
        %1406 = vrot.lane.b32.xlu0 %v1183, 96
        %v1407 = vpop.permute.xlu0 %1406
        %1408 = vrot.lane.b32.xlu0 %v1185, 96
        %v1409 = vpop.permute.xlu0 %1408
        %1410 = vrot.lane.b32.xlu0 %v1187, 96
        %v1411 = vpop.permute.xlu0 %1410
        %1412 = vrot.lane.b32.xlu0 %v1189, 96
        %v1413 = vpop.permute.xlu0 %1412
        %1414 = vrot.lane.b32.xlu0 %v1191, 96
        %v1415 = vpop.permute.xlu0 %1414
        %1416 = vrot.lane.b32.xlu0 %v1193, 96
        %v1417 = vpop.permute.xlu0 %1416
        %1418 = vrot.lane.b32.xlu0 %v1195, 96
        %v1419 = vpop.permute.xlu0 %1418
        %1420 = vrot.lane.b32.xlu0 %v1197, 96
        %v1421 = vpop.permute.xlu0 %1420
        %1422 = vrot.lane.b32.xlu0 %v1199, 96
        %v1423 = vpop.permute.xlu0 %1422
        %1424 = vrot.lane.b32.xlu0 %v1201, 96
        %v1425 = vpop.permute.xlu0 %1424
        %1426 = vrot.lane.b32.xlu0 %v1203, 96
        %v1427 = vpop.permute.xlu0 %1426
        %1428 = vrot.lane.b32.xlu0 %v1205, 96
        %v1429 = vpop.permute.xlu0 %1428
        %1430 = vrot.lane.b32.xlu0 %v1207, 96
        %v1431 = vpop.permute.xlu0 %1430
        %1432 = vrot.lane.b32.xlu0 %v1209, 96
        %v1433 = vpop.permute.xlu0 %1432
        %1434 = vrot.lane.b32.xlu0 %v1211, 96
        %v1435 = vpop.permute.xlu0 %1434
        %1436 = vrot.lane.b32.xlu0 %v1213, 96
        %v1437 = vpop.permute.xlu0 %1436
        %1438 = vrot.lane.b32.xlu0 %v1183, 64
        %v1439 = vpop.permute.xlu0 %1438
        %1440 = vrot.lane.b32.xlu0 %v1185, 64
        %v1441 = vpop.permute.xlu0 %1440
        %1442 = vrot.lane.b32.xlu0 %v1187, 64
        %v1443 = vpop.permute.xlu0 %1442
        %1444 = vrot.lane.b32.xlu0 %v1189, 64
        %v1445 = vpop.permute.xlu0 %1444
        %1446 = vrot.lane.b32.xlu0 %v1191, 64
        %v1447 = vpop.permute.xlu0 %1446
        %1448 = vrot.lane.b32.xlu0 %v1193, 64
        %v1449 = vpop.permute.xlu0 %1448
        %1450 = vrot.lane.b32.xlu0 %v1195, 64
        %v1451 = vpop.permute.xlu0 %1450
        %1452 = vrot.lane.b32.xlu0 %v1197, 64
        %v1453 = vpop.permute.xlu0 %1452
        %1454 = vrot.lane.b32.xlu0 %v1199, 64
        %v1455 = vpop.permute.xlu0 %1454
        %1456 = vrot.lane.b32.xlu0 %v1201, 64
        %v1457 = vpop.permute.xlu0 %1456
        %1458 = vrot.lane.b32.xlu0 %v1203, 64
        %v1459 = vpop.permute.xlu0 %1458
        %1460 = vrot.lane.b32.xlu0 %v1205, 64
        %v1461 = vpop.permute.xlu0 %1460
        %1462 = vrot.lane.b32.xlu0 %v1207, 64
        %v1463 = vpop.permute.xlu0 %1462
        %1464 = vrot.lane.b32.xlu0 %v1209, 64
        %v1465 = vpop.permute.xlu0 %1464
        %1466 = vrot.lane.b32.xlu0 %v1211, 64
        %v1467 = vpop.permute.xlu0 %1466
        %1468 = vrot.lane.b32.xlu0 %v1213, 64
        %v1469 = vpop.permute.xlu0 %1468
        %1470 = vrot.lane.b32.xlu0 %v1183, 32
        %v1471 = vpop.permute.xlu0 %1470
        %1472 = vrot.lane.b32.xlu0 %v1185, 32
        %v1473 = vpop.permute.xlu0 %1472
        %1474 = vrot.lane.b32.xlu0 %v1187, 32
        %v1475 = vpop.permute.xlu0 %1474
        %1476 = vrot.lane.b32.xlu0 %v1189, 32
        %v1477 = vpop.permute.xlu0 %1476
        %1478 = vrot.lane.b32.xlu0 %v1191, 32
        %v1479 = vpop.permute.xlu0 %1478
        %1480 = vrot.lane.b32.xlu0 %v1193, 32
        %v1481 = vpop.permute.xlu0 %1480
        %1482 = vrot.lane.b32.xlu0 %v1195, 32
        %v1483 = vpop.permute.xlu0 %1482
        %1484 = vrot.lane.b32.xlu0 %v1197, 32
        %v1485 = vpop.permute.xlu0 %1484
        %1486 = vrot.lane.b32.xlu0 %v1199, 32
        %v1487 = vpop.permute.xlu0 %1486
        %1488 = vrot.lane.b32.xlu0 %v1201, 32
        %v1489 = vpop.permute.xlu0 %1488
        %1490 = vrot.lane.b32.xlu0 %v1203, 32
        %v1491 = vpop.permute.xlu0 %1490
        %1492 = vrot.lane.b32.xlu0 %v1205, 32
        %v1493 = vpop.permute.xlu0 %1492
        %1494 = vrot.lane.b32.xlu0 %v1207, 32
        %v1495 = vpop.permute.xlu0 %1494
        %1496 = vrot.lane.b32.xlu0 %v1209, 32
        %v1497 = vpop.permute.xlu0 %1496
        %1498 = vrot.lane.b32.xlu0 %v1211, 32
        %v1499 = vpop.permute.xlu0 %1498
        %1500 = vrot.lane.b32.xlu0 %v1213, 32
        %v1501 = vpop.permute.xlu0 %1500
        %v1504 = vpack.i.b16 %v1247, %v1182
        %v1506 = vshrl.u32 %v1182, 16
        %v1507 = vshrl.u32 %v1247, 16
        %v1508 = vpack.i.b16 %v1507, %v1506
        %v1512 = vpack.i.b16 %v1343, %v1295
        %v1514 = vshrl.u32 %v1295, 16
        %v1515 = vshrl.u32 %v1343, 16
        %v1516 = vpack.i.b16 %v1515, %v1514
        %v1520 = vpack.i.b16 %v1278, %v1230
        %v1522 = vshrl.u32 %v1230, 16
        %v1523 = vshrl.u32 %v1278, 16
        %v1524 = vpack.i.b16 %v1523, %v1522
        %v1528 = vpack.i.b16 %v1374, %v1326
        %v1530 = vshrl.u32 %v1326, 16
        %v1531 = vshrl.u32 %v1374, 16
        %v1532 = vpack.i.b16 %v1531, %v1530
        %v1536 = vpack.i.b16 %v1407, %v1183
        %v1537 = vshrl.u32 %v1183, 16
        %v1538 = vshrl.u32 %v1407, 16
        %v1539 = vpack.i.b16 %v1538, %v1537
        %v1542 = vpack.i.b16 %v1471, %v1439
        %v1543 = vshrl.u32 %v1439, 16
        %v1544 = vshrl.u32 %v1471, 16
        %v1545 = vpack.i.b16 %v1544, %v1543
        %v1548 = vpack.i.b16 %v1249, %v1184
        %v1550 = vshrl.u32 %v1184, 16
        %v1551 = vshrl.u32 %v1249, 16
        %v1552 = vpack.i.b16 %v1551, %v1550
        %v1556 = vpack.i.b16 %v1345, %v1297
        %v1558 = vshrl.u32 %v1297, 16
        %v1559 = vshrl.u32 %v1345, 16
        %v1560 = vpack.i.b16 %v1559, %v1558
        %v1564 = vpack.i.b16 %v1279, %v1231
        %v1566 = vshrl.u32 %v1231, 16
        %v1567 = vshrl.u32 %v1279, 16
        %v1568 = vpack.i.b16 %v1567, %v1566
        %v1572 = vpack.i.b16 %v1375, %v1327
        %v1574 = vshrl.u32 %v1327, 16
        %v1575 = vshrl.u32 %v1375, 16
        %v1576 = vpack.i.b16 %v1575, %v1574
        %v1580 = vpack.i.b16 %v1409, %v1185
        %v1581 = vshrl.u32 %v1185, 16
        %v1582 = vshrl.u32 %v1409, 16
        %v1583 = vpack.i.b16 %v1582, %v1581
        %v1586 = vpack.i.b16 %v1473, %v1441
        %v1587 = vshrl.u32 %v1441, 16
        %v1588 = vshrl.u32 %v1473, 16
        %v1589 = vpack.i.b16 %v1588, %v1587
        %v1592 = vpack.i.b16 %v1251, %v1186
        %v1594 = vshrl.u32 %v1186, 16
        %v1595 = vshrl.u32 %v1251, 16
        %v1596 = vpack.i.b16 %v1595, %v1594
        %v1600 = vpack.i.b16 %v1347, %v1299
        %v1602 = vshrl.u32 %v1299, 16
        %v1603 = vshrl.u32 %v1347, 16
        %v1604 = vpack.i.b16 %v1603, %v1602
        %v1608 = vpack.i.b16 %v1280, %v1232
        %v1610 = vshrl.u32 %v1232, 16
        %v1611 = vshrl.u32 %v1280, 16
        %v1612 = vpack.i.b16 %v1611, %v1610
        %v1616 = vpack.i.b16 %v1376, %v1328
        %v1618 = vshrl.u32 %v1328, 16
        %v1619 = vshrl.u32 %v1376, 16
        %v1620 = vpack.i.b16 %v1619, %v1618
        %v1624 = vpack.i.b16 %v1411, %v1187
        %v1625 = vshrl.u32 %v1187, 16
        %v1626 = vshrl.u32 %v1411, 16
        %v1627 = vpack.i.b16 %v1626, %v1625
        %v1630 = vpack.i.b16 %v1475, %v1443
        %v1631 = vshrl.u32 %v1443, 16
        %v1632 = vshrl.u32 %v1475, 16
        %v1633 = vpack.i.b16 %v1632, %v1631
        %v1636 = vpack.i.b16 %v1253, %v1188
        %v1638 = vshrl.u32 %v1188, 16
        %v1639 = vshrl.u32 %v1253, 16
        %v1640 = vpack.i.b16 %v1639, %v1638
        %v1644 = vpack.i.b16 %v1349, %v1301
        %v1646 = vshrl.u32 %v1301, 16
        %v1647 = vshrl.u32 %v1349, 16
        %v1648 = vpack.i.b16 %v1647, %v1646
        %v1652 = vpack.i.b16 %v1281, %v1233
        %v1654 = vshrl.u32 %v1233, 16
        %v1655 = vshrl.u32 %v1281, 16
        %v1656 = vpack.i.b16 %v1655, %v1654
        %v1660 = vpack.i.b16 %v1377, %v1329
        %v1662 = vshrl.u32 %v1329, 16
        %v1663 = vshrl.u32 %v1377, 16
        %v1664 = vpack.i.b16 %v1663, %v1662
        %v1668 = vpack.i.b16 %v1413, %v1189
        %v1669 = vshrl.u32 %v1189, 16
        %v1670 = vshrl.u32 %v1413, 16
        %v1671 = vpack.i.b16 %v1670, %v1669
        %v1674 = vpack.i.b16 %v1477, %v1445
        %v1675 = vshrl.u32 %v1445, 16
        %v1676 = vshrl.u32 %v1477, 16
        %v1677 = vpack.i.b16 %v1676, %v1675
        %v1680 = vpack.i.b16 %v1255, %v1190
        %v1682 = vshrl.u32 %v1190, 16
        %v1683 = vshrl.u32 %v1255, 16
        %v1684 = vpack.i.b16 %v1683, %v1682
        %v1688 = vpack.i.b16 %v1351, %v1303
        %v1690 = vshrl.u32 %v1303, 16
        %v1691 = vshrl.u32 %v1351, 16
        %v1692 = vpack.i.b16 %v1691, %v1690
        %v1696 = vpack.i.b16 %v1282, %v1234
        %v1698 = vshrl.u32 %v1234, 16
        %v1699 = vshrl.u32 %v1282, 16
        %v1700 = vpack.i.b16 %v1699, %v1698
        %v1704 = vpack.i.b16 %v1378, %v1330
        %v1706 = vshrl.u32 %v1330, 16
        %v1707 = vshrl.u32 %v1378, 16
        %v1708 = vpack.i.b16 %v1707, %v1706
        %v1712 = vpack.i.b16 %v1415, %v1191
        %v1713 = vshrl.u32 %v1191, 16
        %v1714 = vshrl.u32 %v1415, 16
        %v1715 = vpack.i.b16 %v1714, %v1713
        %v1718 = vpack.i.b16 %v1479, %v1447
        %v1719 = vshrl.u32 %v1447, 16
        %v1720 = vshrl.u32 %v1479, 16
        %v1721 = vpack.i.b16 %v1720, %v1719
        %v1724 = vpack.i.b16 %v1257, %v1192
        %v1726 = vshrl.u32 %v1192, 16
        %v1727 = vshrl.u32 %v1257, 16
        %v1728 = vpack.i.b16 %v1727, %v1726
        %v1732 = vpack.i.b16 %v1353, %v1305
        %v1734 = vshrl.u32 %v1305, 16
        %v1735 = vshrl.u32 %v1353, 16
        %v1736 = vpack.i.b16 %v1735, %v1734
        %v1740 = vpack.i.b16 %v1283, %v1235
        %v1742 = vshrl.u32 %v1235, 16
        %v1743 = vshrl.u32 %v1283, 16
        %v1744 = vpack.i.b16 %v1743, %v1742
        %v1748 = vpack.i.b16 %v1379, %v1331
        %v1750 = vshrl.u32 %v1331, 16
        %v1751 = vshrl.u32 %v1379, 16
        %v1752 = vpack.i.b16 %v1751, %v1750
        %v1756 = vpack.i.b16 %v1417, %v1193
        %v1757 = vshrl.u32 %v1193, 16
        %v1758 = vshrl.u32 %v1417, 16
        %v1759 = vpack.i.b16 %v1758, %v1757
        %v1762 = vpack.i.b16 %v1481, %v1449
        %v1763 = vshrl.u32 %v1449, 16
        %v1764 = vshrl.u32 %v1481, 16
        %v1765 = vpack.i.b16 %v1764, %v1763
        %v1768 = vpack.i.b16 %v1259, %v1194
        %v1770 = vshrl.u32 %v1194, 16
        %v1771 = vshrl.u32 %v1259, 16
        %v1772 = vpack.i.b16 %v1771, %v1770
        %v1776 = vpack.i.b16 %v1355, %v1307
        %v1778 = vshrl.u32 %v1307, 16
        %v1779 = vshrl.u32 %v1355, 16
        %v1780 = vpack.i.b16 %v1779, %v1778
        %v1784 = vpack.i.b16 %v1284, %v1236
        %v1786 = vshrl.u32 %v1236, 16
        %v1787 = vshrl.u32 %v1284, 16
        %v1788 = vpack.i.b16 %v1787, %v1786
        %v1792 = vpack.i.b16 %v1380, %v1332
        %v1794 = vshrl.u32 %v1332, 16
        %v1795 = vshrl.u32 %v1380, 16
        %v1796 = vpack.i.b16 %v1795, %v1794
        %v1800 = vpack.i.b16 %v1419, %v1195
        %v1801 = vshrl.u32 %v1195, 16
        %v1802 = vshrl.u32 %v1419, 16
        %v1803 = vpack.i.b16 %v1802, %v1801
        %v1806 = vpack.i.b16 %v1483, %v1451
        %v1807 = vshrl.u32 %v1451, 16
        %v1808 = vshrl.u32 %v1483, 16
        %v1809 = vpack.i.b16 %v1808, %v1807
        %v1812 = vpack.i.b16 %v1261, %v1196
        %v1814 = vshrl.u32 %v1196, 16
        %v1815 = vshrl.u32 %v1261, 16
        %v1816 = vpack.i.b16 %v1815, %v1814
        %v1820 = vpack.i.b16 %v1357, %v1309
        %v1822 = vshrl.u32 %v1309, 16
        %v1823 = vshrl.u32 %v1357, 16
        %v1824 = vpack.i.b16 %v1823, %v1822
        %v1828 = vpack.i.b16 %v1285, %v1237
        %v1830 = vshrl.u32 %v1237, 16
        %v1831 = vshrl.u32 %v1285, 16
        %v1832 = vpack.i.b16 %v1831, %v1830
        %v1836 = vpack.i.b16 %v1381, %v1333
        %v1838 = vshrl.u32 %v1333, 16
        %v1839 = vshrl.u32 %v1381, 16
        %v1840 = vpack.i.b16 %v1839, %v1838
        %v1844 = vpack.i.b16 %v1421, %v1197
        %v1845 = vshrl.u32 %v1197, 16
        %v1846 = vshrl.u32 %v1421, 16
        %v1847 = vpack.i.b16 %v1846, %v1845
        %v1850 = vpack.i.b16 %v1485, %v1453
        %v1851 = vshrl.u32 %v1453, 16
        %v1852 = vshrl.u32 %v1485, 16
        %v1853 = vpack.i.b16 %v1852, %v1851
        %v1856 = vpack.i.b16 %v1263, %v1198
        %v1858 = vshrl.u32 %v1198, 16
        %v1859 = vshrl.u32 %v1263, 16
        %v1860 = vpack.i.b16 %v1859, %v1858
        %v1864 = vpack.i.b16 %v1359, %v1311
        %v1866 = vshrl.u32 %v1311, 16
        %v1867 = vshrl.u32 %v1359, 16
        %v1868 = vpack.i.b16 %v1867, %v1866
        %v1872 = vpack.i.b16 %v1286, %v1238
        %v1874 = vshrl.u32 %v1238, 16
        %v1875 = vshrl.u32 %v1286, 16
        %v1876 = vpack.i.b16 %v1875, %v1874
        %v1880 = vpack.i.b16 %v1382, %v1334
        %v1882 = vshrl.u32 %v1334, 16
        %v1883 = vshrl.u32 %v1382, 16
        %v1884 = vpack.i.b16 %v1883, %v1882
        %v1888 = vpack.i.b16 %v1423, %v1199
        %v1889 = vshrl.u32 %v1199, 16
        %v1890 = vshrl.u32 %v1423, 16
        %v1891 = vpack.i.b16 %v1890, %v1889
        %v1894 = vpack.i.b16 %v1487, %v1455
        %v1895 = vshrl.u32 %v1455, 16
        %v1896 = vshrl.u32 %v1487, 16
        %v1897 = vpack.i.b16 %v1896, %v1895
        %v1900 = vpack.i.b16 %v1265, %v1200
        %v1902 = vshrl.u32 %v1200, 16
        %v1903 = vshrl.u32 %v1265, 16
        %v1904 = vpack.i.b16 %v1903, %v1902
        %v1908 = vpack.i.b16 %v1361, %v1313
        %v1910 = vshrl.u32 %v1313, 16
        %v1911 = vshrl.u32 %v1361, 16
        %v1912 = vpack.i.b16 %v1911, %v1910
        %v1916 = vpack.i.b16 %v1287, %v1239
        %v1918 = vshrl.u32 %v1239, 16
        %v1919 = vshrl.u32 %v1287, 16
        %v1920 = vpack.i.b16 %v1919, %v1918
        %v1924 = vpack.i.b16 %v1383, %v1335
        %v1926 = vshrl.u32 %v1335, 16
        %v1927 = vshrl.u32 %v1383, 16
        %v1928 = vpack.i.b16 %v1927, %v1926
        %v1932 = vpack.i.b16 %v1425, %v1201
        %v1933 = vshrl.u32 %v1201, 16
        %v1934 = vshrl.u32 %v1425, 16
        %v1935 = vpack.i.b16 %v1934, %v1933
        %v1938 = vpack.i.b16 %v1489, %v1457
        %v1939 = vshrl.u32 %v1457, 16
        %v1940 = vshrl.u32 %v1489, 16
        %v1941 = vpack.i.b16 %v1940, %v1939
        %v1944 = vpack.i.b16 %v1267, %v1202
        %v1946 = vshrl.u32 %v1202, 16
        %v1947 = vshrl.u32 %v1267, 16
        %v1948 = vpack.i.b16 %v1947, %v1946
        %v1952 = vpack.i.b16 %v1363, %v1315
        %v1954 = vshrl.u32 %v1315, 16
        %v1955 = vshrl.u32 %v1363, 16
        %v1956 = vpack.i.b16 %v1955, %v1954
        %v1960 = vpack.i.b16 %v1288, %v1240
        %v1962 = vshrl.u32 %v1240, 16
        %v1963 = vshrl.u32 %v1288, 16
        %v1964 = vpack.i.b16 %v1963, %v1962
        %v1968 = vpack.i.b16 %v1384, %v1336
        %v1970 = vshrl.u32 %v1336, 16
        %v1971 = vshrl.u32 %v1384, 16
        %v1972 = vpack.i.b16 %v1971, %v1970
        %v1976 = vpack.i.b16 %v1427, %v1203
        %v1977 = vshrl.u32 %v1203, 16
        %v1978 = vshrl.u32 %v1427, 16
        %v1979 = vpack.i.b16 %v1978, %v1977
        %v1982 = vpack.i.b16 %v1491, %v1459
        %v1983 = vshrl.u32 %v1459, 16
        %v1984 = vshrl.u32 %v1491, 16
        %v1985 = vpack.i.b16 %v1984, %v1983
        %v1988 = vpack.i.b16 %v1269, %v1204
        %v1990 = vshrl.u32 %v1204, 16
        %v1991 = vshrl.u32 %v1269, 16
        %v1992 = vpack.i.b16 %v1991, %v1990
        %v1996 = vpack.i.b16 %v1365, %v1317
        %v1998 = vshrl.u32 %v1317, 16
        %v1999 = vshrl.u32 %v1365, 16
        %v2000 = vpack.i.b16 %v1999, %v1998
        %v2004 = vpack.i.b16 %v1289, %v1241
        %v2006 = vshrl.u32 %v1241, 16
        %v2007 = vshrl.u32 %v1289, 16
        %v2008 = vpack.i.b16 %v2007, %v2006
        %v2012 = vpack.i.b16 %v1385, %v1337
        %v2014 = vshrl.u32 %v1337, 16
        %v2015 = vshrl.u32 %v1385, 16
        %v2016 = vpack.i.b16 %v2015, %v2014
        %v2020 = vpack.i.b16 %v1429, %v1205
        %v2021 = vshrl.u32 %v1205, 16
        %v2022 = vshrl.u32 %v1429, 16
        %v2023 = vpack.i.b16 %v2022, %v2021
        %v2026 = vpack.i.b16 %v1493, %v1461
        %v2027 = vshrl.u32 %v1461, 16
        %v2028 = vshrl.u32 %v1493, 16
        %v2029 = vpack.i.b16 %v2028, %v2027
        %v2032 = vpack.i.b16 %v1271, %v1206
        %v2034 = vshrl.u32 %v1206, 16
        %v2035 = vshrl.u32 %v1271, 16
        %v2036 = vpack.i.b16 %v2035, %v2034
        %v2040 = vpack.i.b16 %v1367, %v1319
        %v2042 = vshrl.u32 %v1319, 16
        %v2043 = vshrl.u32 %v1367, 16
        %v2044 = vpack.i.b16 %v2043, %v2042
        %v2048 = vpack.i.b16 %v1290, %v1242
        %v2050 = vshrl.u32 %v1242, 16
        %v2051 = vshrl.u32 %v1290, 16
        %v2052 = vpack.i.b16 %v2051, %v2050
        %v2056 = vpack.i.b16 %v1386, %v1338
        %v2058 = vshrl.u32 %v1338, 16
        %v2059 = vshrl.u32 %v1386, 16
        %v2060 = vpack.i.b16 %v2059, %v2058
        %v2064 = vpack.i.b16 %v1431, %v1207
        %v2065 = vshrl.u32 %v1207, 16
        %v2066 = vshrl.u32 %v1431, 16
        %v2067 = vpack.i.b16 %v2066, %v2065
        %v2070 = vpack.i.b16 %v1495, %v1463
        %v2071 = vshrl.u32 %v1463, 16
        %v2072 = vshrl.u32 %v1495, 16
        %v2073 = vpack.i.b16 %v2072, %v2071
        %v2076 = vpack.i.b16 %v1273, %v1208
        %v2078 = vshrl.u32 %v1208, 16
        %v2079 = vshrl.u32 %v1273, 16
        %v2080 = vpack.i.b16 %v2079, %v2078
        %v2084 = vpack.i.b16 %v1369, %v1321
        %v2086 = vshrl.u32 %v1321, 16
        %v2087 = vshrl.u32 %v1369, 16
        %v2088 = vpack.i.b16 %v2087, %v2086
        %v2092 = vpack.i.b16 %v1291, %v1243
        %v2094 = vshrl.u32 %v1243, 16
        %v2095 = vshrl.u32 %v1291, 16
        %v2096 = vpack.i.b16 %v2095, %v2094
        %v2100 = vpack.i.b16 %v1387, %v1339
        %v2102 = vshrl.u32 %v1339, 16
        %v2103 = vshrl.u32 %v1387, 16
        %v2104 = vpack.i.b16 %v2103, %v2102
        %v2108 = vpack.i.b16 %v1433, %v1209
        %v2109 = vshrl.u32 %v1209, 16
        %v2110 = vshrl.u32 %v1433, 16
        %v2111 = vpack.i.b16 %v2110, %v2109
        %v2114 = vpack.i.b16 %v1497, %v1465
        %v2115 = vshrl.u32 %v1465, 16
        %v2116 = vshrl.u32 %v1497, 16
        %v2117 = vpack.i.b16 %v2116, %v2115
        %v2120 = vpack.i.b16 %v1275, %v1210
        %v2122 = vshrl.u32 %v1210, 16
        %v2123 = vshrl.u32 %v1275, 16
        %v2124 = vpack.i.b16 %v2123, %v2122
        %v2128 = vpack.i.b16 %v1371, %v1323
        %v2130 = vshrl.u32 %v1323, 16
        %v2131 = vshrl.u32 %v1371, 16
        %v2132 = vpack.i.b16 %v2131, %v2130
        %v2136 = vpack.i.b16 %v1292, %v1244
        %v2138 = vshrl.u32 %v1244, 16
        %v2139 = vshrl.u32 %v1292, 16
        %v2140 = vpack.i.b16 %v2139, %v2138
        %v2144 = vpack.i.b16 %v1388, %v1340
        %v2146 = vshrl.u32 %v1340, 16
        %v2147 = vshrl.u32 %v1388, 16
        %v2148 = vpack.i.b16 %v2147, %v2146
        %v2152 = vpack.i.b16 %v1435, %v1211
        %v2153 = vshrl.u32 %v1211, 16
        %v2154 = vshrl.u32 %v1435, 16
        %v2155 = vpack.i.b16 %v2154, %v2153
        %v2158 = vpack.i.b16 %v1499, %v1467
        %v2159 = vshrl.u32 %v1467, 16
        %v2160 = vshrl.u32 %v1499, 16
        %v2161 = vpack.i.b16 %v2160, %v2159
        %v2164 = vpack.i.b16 %v1277, %v1212
        %v2166 = vshrl.u32 %v1212, 16
        %v2167 = vshrl.u32 %v1277, 16
        %v2168 = vpack.i.b16 %v2167, %v2166
        %v2172 = vpack.i.b16 %v1373, %v1325
        %v2174 = vshrl.u32 %v1325, 16
        %v2175 = vshrl.u32 %v1373, 16
        %v2176 = vpack.i.b16 %v2175, %v2174
        %v2180 = vpack.i.b16 %v1293, %v1245
        %v2182 = vshrl.u32 %v1245, 16
        %v2183 = vshrl.u32 %v1293, 16
        %v2184 = vpack.i.b16 %v2183, %v2182
        %v2188 = vpack.i.b16 %v1389, %v1341
        %v2190 = vshrl.u32 %v1341, 16
        %v2191 = vshrl.u32 %v1389, 16
        %v2192 = vpack.i.b16 %v2191, %v2190
        %v2196 = vpack.i.b16 %v1437, %v1213
        %v2197 = vshrl.u32 %v1213, 16
        %v2198 = vshrl.u32 %v1437, 16
        %v2199 = vpack.i.b16 %v2198, %v2197
        %v2202 = vpack.i.b16 %v1501, %v1469
        %v2203 = vshrl.u32 %v1469, 16
        %v2204 = vshrl.u32 %v1501, 16
        %v2205 = vpack.i.b16 %v2204, %v2203
        %v2206 = vrot.slane %v1520, 4
        %vm2207 = vcmask 1047556
        %v2208 = vsel %vm2207, %v2206, %v1504
        %v2210 = vunpack.c.l.s4 1983009808
        %v2211 = vunpack.c.0.s8 %v2210
        %v2212 = vperm.slane %v2208, %v2211
        %v2213 = vrot.slane %v1528, 4
        %v2214 = vsel %vm2207, %v2213, %v1512
        %v2216 = vunpack.c.l.s4 1983009808
        %v2217 = vunpack.c.0.s8 %v2216
        %v2218 = vperm.slane %v2214, %v2217
        %v2219 = vrot.slane %v2218, 4
        %v2220 = vsel %vm2207, %v2219, %v2212
        %v2221 = vrot.slane %v2212, 4
        %v2222 = vsel %vm2207, %v2218, %v2221
        %v2224 = vunpack.c.l.s4 1934713408
        %v2225 = vunpack.c.0.s8 %v2224
        %v2226 = vperm.slane %v2220, %v2225
        %v2228 = vunpack.c.l.s4 1934713408
        %v2229 = vunpack.c.0.s8 %v2228
        %v2230 = vperm.slane %v2222, %v2229
        %v2231 = vrot.slane %v2226, 4
        %v2232 = vsel %vm2207, 0, %v2231
        %v2233 = vrot.slane %v2230, 4
        %v2234 = vsel %vm2207, 0, %v2233
        %v2235 = vrot.slane %v1524, 4
        %v2236 = vsel %vm2207, %v2235, %v1508
        %v2238 = vunpack.c.l.s4 1983009808
        %v2239 = vunpack.c.0.s8 %v2238
        %v2240 = vperm.slane %v2236, %v2239
        %v2241 = vrot.slane %v1532, 4
        %v2242 = vsel %vm2207, %v2241, %v1516
        %v2244 = vunpack.c.l.s4 1983009808
        %v2245 = vunpack.c.0.s8 %v2244
        %v2246 = vperm.slane %v2242, %v2245
        %v2247 = vrot.slane %v2246, 4
        %v2248 = vsel %vm2207, %v2247, %v2240
        %v2249 = vrot.slane %v2240, 4
        %v2250 = vsel %vm2207, %v2246, %v2249
        %v2252 = vunpack.c.l.s4 1934713408
        %v2253 = vunpack.c.0.s8 %v2252
        %v2254 = vperm.slane %v2248, %v2253
        %v2256 = vunpack.c.l.s4 1934713408
        %v2257 = vunpack.c.0.s8 %v2256
        %v2258 = vperm.slane %v2250, %v2257
        %v2259 = vrot.slane %v2254, 4
        %v2260 = vsel %vm2207, 0, %v2259
        %v2261 = vrot.slane %v2258, 4
        %v2262 = vsel %vm2207, 0, %v2261
        %v2265 = vunpack.c.l.s4 1983009808
        %v2266 = vunpack.c.0.s8 %v2265
        %v2267 = vperm.slane %v1536, %v2266
        %v2270 = vunpack.c.l.s4 1983009808
        %v2271 = vunpack.c.0.s8 %v2270
        %v2272 = vperm.slane %v1542, %v2271
        %v2273 = vrot.slane %v2272, 4
        %v2274 = vsel %vm2207, %v2273, %v2267
        %v2275 = vrot.slane %v2267, 4
        %v2276 = vsel %vm2207, %v2272, %v2275
        %v2278 = vunpack.c.l.s4 1934713408
        %v2279 = vunpack.c.0.s8 %v2278
        %v2280 = vperm.slane %v2274, %v2279
        %v2282 = vunpack.c.l.s4 1934713408
        %v2283 = vunpack.c.0.s8 %v2282
        %v2284 = vperm.slane %v2276, %v2283
        %v2285 = vrot.slane %v2280, 4
        %v2286 = vsel %vm2207, 0, %v2285
        %v2287 = vrot.slane %v2284, 4
        %v2288 = vsel %vm2207, 0, %v2287
        %v2291 = vunpack.c.l.s4 1983009808
        %v2292 = vunpack.c.0.s8 %v2291
        %v2293 = vperm.slane %v1539, %v2292
        %v2296 = vunpack.c.l.s4 1983009808
        %v2297 = vunpack.c.0.s8 %v2296
        %v2298 = vperm.slane %v1545, %v2297
        %v2299 = vrot.slane %v2298, 4
        %v2300 = vsel %vm2207, %v2299, %v2293
        %v2301 = vrot.slane %v2293, 4
        %v2302 = vsel %vm2207, %v2298, %v2301
        %v2304 = vunpack.c.l.s4 1934713408
        %v2305 = vunpack.c.0.s8 %v2304
        %v2306 = vperm.slane %v2300, %v2305
        %v2308 = vunpack.c.l.s4 1934713408
        %v2309 = vunpack.c.0.s8 %v2308
        %v2310 = vperm.slane %v2302, %v2309
        %v2311 = vrot.slane %v2306, 4
        %v2312 = vsel %vm2207, 0, %v2311
        %v2313 = vrot.slane %v2310, 4
        %v2314 = vsel %vm2207, 0, %v2313
        %v2315 = vrot.slane %v1564, 4
        %v2316 = vsel %vm2207, %v2315, %v1548
        %v2318 = vunpack.c.l.s4 1983009808
        %v2319 = vunpack.c.0.s8 %v2318
        %v2320 = vperm.slane %v2316, %v2319
        %v2321 = vrot.slane %v1572, 4
        %v2322 = vsel %vm2207, %v2321, %v1556
        %v2324 = vunpack.c.l.s4 1983009808
        %v2325 = vunpack.c.0.s8 %v2324
        %v2326 = vperm.slane %v2322, %v2325
        %v2327 = vrot.slane %v2326, 4
        %v2328 = vsel %vm2207, %v2327, %v2320
        %v2329 = vrot.slane %v2320, 4
        %v2330 = vsel %vm2207, %v2326, %v2329
        %v2332 = vunpack.c.l.s4 1934713408
        %v2333 = vunpack.c.0.s8 %v2332
        %v2334 = vperm.slane %v2328, %v2333
        %v2336 = vunpack.c.l.s4 1934713408
        %v2337 = vunpack.c.0.s8 %v2336
        %v2338 = vperm.slane %v2330, %v2337
        %v2339 = vrot.slane %v2334, 4
        %v2340 = vsel %vm2207, 0, %v2339
        %v2341 = vrot.slane %v2338, 4
        %v2342 = vsel %vm2207, 0, %v2341
        %v2343 = vrot.slane %v1568, 4
        %v2344 = vsel %vm2207, %v2343, %v1552
        %v2346 = vunpack.c.l.s4 1983009808
        %v2347 = vunpack.c.0.s8 %v2346
        %v2348 = vperm.slane %v2344, %v2347
        %v2349 = vrot.slane %v1576, 4
        %v2350 = vsel %vm2207, %v2349, %v1560
        %v2352 = vunpack.c.l.s4 1983009808
        %v2353 = vunpack.c.0.s8 %v2352
        %v2354 = vperm.slane %v2350, %v2353
        %v2355 = vrot.slane %v2354, 4
        %v2356 = vsel %vm2207, %v2355, %v2348
        %v2357 = vrot.slane %v2348, 4
        %v2358 = vsel %vm2207, %v2354, %v2357
        %v2360 = vunpack.c.l.s4 1934713408
        %v2361 = vunpack.c.0.s8 %v2360
        %v2362 = vperm.slane %v2356, %v2361
        %v2364 = vunpack.c.l.s4 1934713408
        %v2365 = vunpack.c.0.s8 %v2364
        %v2366 = vperm.slane %v2358, %v2365
        %v2367 = vrot.slane %v2362, 4
        %v2368 = vsel %vm2207, 0, %v2367
        %v2369 = vrot.slane %v2366, 4
        %v2370 = vsel %vm2207, 0, %v2369
        %v2373 = vunpack.c.l.s4 1983009808
        %v2374 = vunpack.c.0.s8 %v2373
        %v2375 = vperm.slane %v1580, %v2374
        %v2378 = vunpack.c.l.s4 1983009808
        %v2379 = vunpack.c.0.s8 %v2378
        %v2380 = vperm.slane %v1586, %v2379
        %v2381 = vrot.slane %v2380, 4
        %v2382 = vsel %vm2207, %v2381, %v2375
        %v2383 = vrot.slane %v2375, 4
        %v2384 = vsel %vm2207, %v2380, %v2383
        %v2386 = vunpack.c.l.s4 1934713408
        %v2387 = vunpack.c.0.s8 %v2386
        %v2388 = vperm.slane %v2382, %v2387
        %v2390 = vunpack.c.l.s4 1934713408
        %v2391 = vunpack.c.0.s8 %v2390
        %v2392 = vperm.slane %v2384, %v2391
        %v2393 = vrot.slane %v2388, 4
        %v2394 = vsel %vm2207, 0, %v2393
        %v2395 = vrot.slane %v2392, 4
        %v2396 = vsel %vm2207, 0, %v2395
        %v2399 = vunpack.c.l.s4 1983009808
        %v2400 = vunpack.c.0.s8 %v2399
        %v2401 = vperm.slane %v1583, %v2400
        %v2404 = vunpack.c.l.s4 1983009808
        %v2405 = vunpack.c.0.s8 %v2404
        %v2406 = vperm.slane %v1589, %v2405
        %v2407 = vrot.slane %v2406, 4
        %v2408 = vsel %vm2207, %v2407, %v2401
        %v2409 = vrot.slane %v2401, 4
        %v2410 = vsel %vm2207, %v2406, %v2409
        %v2412 = vunpack.c.l.s4 1934713408
        %v2413 = vunpack.c.0.s8 %v2412
        %v2414 = vperm.slane %v2408, %v2413
        %v2416 = vunpack.c.l.s4 1934713408
        %v2417 = vunpack.c.0.s8 %v2416
        %v2418 = vperm.slane %v2410, %v2417
        %v2419 = vrot.slane %v2414, 4
        %v2420 = vsel %vm2207, 0, %v2419
        %v2421 = vrot.slane %v2418, 4
        %v2422 = vsel %vm2207, 0, %v2421
        %v2423 = vrot.slane %v1608, 4
        %v2424 = vsel %vm2207, %v2423, %v1592
        %v2426 = vunpack.c.l.s4 1983009808
        %v2427 = vunpack.c.0.s8 %v2426
        %v2428 = vperm.slane %v2424, %v2427
        %v2429 = vrot.slane %v1616, 4
        %v2430 = vsel %vm2207, %v2429, %v1600
        %v2432 = vunpack.c.l.s4 1983009808
        %v2433 = vunpack.c.0.s8 %v2432
        %v2434 = vperm.slane %v2430, %v2433
        %v2435 = vrot.slane %v2434, 4
        %v2436 = vsel %vm2207, %v2435, %v2428
        %v2437 = vrot.slane %v2428, 4
        %v2438 = vsel %vm2207, %v2434, %v2437
        %v2440 = vunpack.c.l.s4 1934713408
        %v2441 = vunpack.c.0.s8 %v2440
        %v2442 = vperm.slane %v2436, %v2441
        %v2444 = vunpack.c.l.s4 1934713408
        %v2445 = vunpack.c.0.s8 %v2444
        %v2446 = vperm.slane %v2438, %v2445
        %v2447 = vrot.slane %v2442, 4
        %v2448 = vsel %vm2207, 0, %v2447
        %v2449 = vrot.slane %v2446, 4
        %v2450 = vsel %vm2207, 0, %v2449
        %v2451 = vrot.slane %v1612, 4
        %v2452 = vsel %vm2207, %v2451, %v1596
        %v2454 = vunpack.c.l.s4 1983009808
        %v2455 = vunpack.c.0.s8 %v2454
        %v2456 = vperm.slane %v2452, %v2455
        %v2457 = vrot.slane %v1620, 4
        %v2458 = vsel %vm2207, %v2457, %v1604
        %v2460 = vunpack.c.l.s4 1983009808
        %v2461 = vunpack.c.0.s8 %v2460
        %v2462 = vperm.slane %v2458, %v2461
        %v2463 = vrot.slane %v2462, 4
        %v2464 = vsel %vm2207, %v2463, %v2456
        %v2465 = vrot.slane %v2456, 4
        %v2466 = vsel %vm2207, %v2462, %v2465
        %v2468 = vunpack.c.l.s4 1934713408
        %v2469 = vunpack.c.0.s8 %v2468
        %v2470 = vperm.slane %v2464, %v2469
        %v2472 = vunpack.c.l.s4 1934713408
        %v2473 = vunpack.c.0.s8 %v2472
        %v2474 = vperm.slane %v2466, %v2473
        %v2475 = vrot.slane %v2470, 4
        %v2476 = vsel %vm2207, 0, %v2475
        %v2477 = vrot.slane %v2474, 4
        %v2478 = vsel %vm2207, 0, %v2477
        %v2481 = vunpack.c.l.s4 1983009808
        %v2482 = vunpack.c.0.s8 %v2481
        %v2483 = vperm.slane %v1624, %v2482
        %v2486 = vunpack.c.l.s4 1983009808
        %v2487 = vunpack.c.0.s8 %v2486
        %v2488 = vperm.slane %v1630, %v2487
        %v2489 = vrot.slane %v2488, 4
        %v2490 = vsel %vm2207, %v2489, %v2483
        %v2491 = vrot.slane %v2483, 4
        %v2492 = vsel %vm2207, %v2488, %v2491
        %v2494 = vunpack.c.l.s4 1934713408
        %v2495 = vunpack.c.0.s8 %v2494
        %v2496 = vperm.slane %v2490, %v2495
        %v2498 = vunpack.c.l.s4 1934713408
        %v2499 = vunpack.c.0.s8 %v2498
        %v2500 = vperm.slane %v2492, %v2499
        %v2501 = vrot.slane %v2496, 4
        %v2502 = vsel %vm2207, 0, %v2501
        %v2503 = vrot.slane %v2500, 4
        %v2504 = vsel %vm2207, 0, %v2503
        %v2507 = vunpack.c.l.s4 1983009808
        %v2508 = vunpack.c.0.s8 %v2507
        %v2509 = vperm.slane %v1627, %v2508
        %v2512 = vunpack.c.l.s4 1983009808
        %v2513 = vunpack.c.0.s8 %v2512
        %v2514 = vperm.slane %v1633, %v2513
        %v2515 = vrot.slane %v2514, 4
        %v2516 = vsel %vm2207, %v2515, %v2509
        %v2517 = vrot.slane %v2509, 4
        %v2518 = vsel %vm2207, %v2514, %v2517
        %v2520 = vunpack.c.l.s4 1934713408
        %v2521 = vunpack.c.0.s8 %v2520
        %v2522 = vperm.slane %v2516, %v2521
        %v2524 = vunpack.c.l.s4 1934713408
        %v2525 = vunpack.c.0.s8 %v2524
        %v2526 = vperm.slane %v2518, %v2525
        %v2527 = vrot.slane %v2522, 4
        %v2528 = vsel %vm2207, 0, %v2527
        %v2529 = vrot.slane %v2526, 4
        %v2530 = vsel %vm2207, 0, %v2529
        %v2531 = vrot.slane %v1652, 4
        %v2532 = vsel %vm2207, %v2531, %v1636
        %v2534 = vunpack.c.l.s4 1983009808
        %v2535 = vunpack.c.0.s8 %v2534
        %v2536 = vperm.slane %v2532, %v2535
        %v2537 = vrot.slane %v1660, 4
        %v2538 = vsel %vm2207, %v2537, %v1644
        %v2540 = vunpack.c.l.s4 1983009808
        %v2541 = vunpack.c.0.s8 %v2540
        %v2542 = vperm.slane %v2538, %v2541
        %v2543 = vrot.slane %v2542, 4
        %v2544 = vsel %vm2207, %v2543, %v2536
        %v2545 = vrot.slane %v2536, 4
        %v2546 = vsel %vm2207, %v2542, %v2545
        %v2548 = vunpack.c.l.s4 1934713408
        %v2549 = vunpack.c.0.s8 %v2548
        %v2550 = vperm.slane %v2544, %v2549
        %v2552 = vunpack.c.l.s4 1934713408
        %v2553 = vunpack.c.0.s8 %v2552
        %v2554 = vperm.slane %v2546, %v2553
        %v2555 = vrot.slane %v2550, 4
        %v2556 = vsel %vm2207, 0, %v2555
        %v2557 = vrot.slane %v2554, 4
        %v2558 = vsel %vm2207, 0, %v2557
        %v2559 = vrot.slane %v1656, 4
        %v2560 = vsel %vm2207, %v2559, %v1640
        %v2562 = vunpack.c.l.s4 1983009808
        %v2563 = vunpack.c.0.s8 %v2562
        %v2564 = vperm.slane %v2560, %v2563
        %v2565 = vrot.slane %v1664, 4
        %v2566 = vsel %vm2207, %v2565, %v1648
        %v2568 = vunpack.c.l.s4 1983009808
        %v2569 = vunpack.c.0.s8 %v2568
        %v2570 = vperm.slane %v2566, %v2569
        %v2571 = vrot.slane %v2570, 4
        %v2572 = vsel %vm2207, %v2571, %v2564
        %v2573 = vrot.slane %v2564, 4
        %v2574 = vsel %vm2207, %v2570, %v2573
        %v2576 = vunpack.c.l.s4 1934713408
        %v2577 = vunpack.c.0.s8 %v2576
        %v2578 = vperm.slane %v2572, %v2577
        %v2580 = vunpack.c.l.s4 1934713408
        %v2581 = vunpack.c.0.s8 %v2580
        %v2582 = vperm.slane %v2574, %v2581
        %v2583 = vrot.slane %v2578, 4
        %v2584 = vsel %vm2207, 0, %v2583
        %v2585 = vrot.slane %v2582, 4
        %v2586 = vsel %vm2207, 0, %v2585
        %v2589 = vunpack.c.l.s4 1983009808
        %v2590 = vunpack.c.0.s8 %v2589
        %v2591 = vperm.slane %v1668, %v2590
        %v2594 = vunpack.c.l.s4 1983009808
        %v2595 = vunpack.c.0.s8 %v2594
        %v2596 = vperm.slane %v1674, %v2595
        %v2597 = vrot.slane %v2596, 4
        %v2598 = vsel %vm2207, %v2597, %v2591
        %v2599 = vrot.slane %v2591, 4
        %v2600 = vsel %vm2207, %v2596, %v2599
        %v2602 = vunpack.c.l.s4 1934713408
        %v2603 = vunpack.c.0.s8 %v2602
        %v2604 = vperm.slane %v2598, %v2603
        %v2606 = vunpack.c.l.s4 1934713408
        %v2607 = vunpack.c.0.s8 %v2606
        %v2608 = vperm.slane %v2600, %v2607
        %v2609 = vrot.slane %v2604, 4
        %v2610 = vsel %vm2207, 0, %v2609
        %v2611 = vrot.slane %v2608, 4
        %v2612 = vsel %vm2207, 0, %v2611
        %v2615 = vunpack.c.l.s4 1983009808
        %v2616 = vunpack.c.0.s8 %v2615
        %v2617 = vperm.slane %v1671, %v2616
        %v2620 = vunpack.c.l.s4 1983009808
        %v2621 = vunpack.c.0.s8 %v2620
        %v2622 = vperm.slane %v1677, %v2621
        %v2623 = vrot.slane %v2622, 4
        %v2624 = vsel %vm2207, %v2623, %v2617
        %v2625 = vrot.slane %v2617, 4
        %v2626 = vsel %vm2207, %v2622, %v2625
        %v2628 = vunpack.c.l.s4 1934713408
        %v2629 = vunpack.c.0.s8 %v2628
        %v2630 = vperm.slane %v2624, %v2629
        %v2632 = vunpack.c.l.s4 1934713408
        %v2633 = vunpack.c.0.s8 %v2632
        %v2634 = vperm.slane %v2626, %v2633
        %v2635 = vrot.slane %v2630, 4
        %v2636 = vsel %vm2207, 0, %v2635
        %v2637 = vrot.slane %v2634, 4
        %v2638 = vsel %vm2207, 0, %v2637
        %v2639 = vrot.slane %v1696, 4
        %v2640 = vsel %vm2207, %v2639, %v1680
        %v2642 = vunpack.c.l.s4 1983009808
        %v2643 = vunpack.c.0.s8 %v2642
        %v2644 = vperm.slane %v2640, %v2643
        %v2645 = vrot.slane %v1704, 4
        %v2646 = vsel %vm2207, %v2645, %v1688
        %v2648 = vunpack.c.l.s4 1983009808
        %v2649 = vunpack.c.0.s8 %v2648
        %v2650 = vperm.slane %v2646, %v2649
        %v2651 = vrot.slane %v2650, 4
        %v2652 = vsel %vm2207, %v2651, %v2644
        %v2653 = vrot.slane %v2644, 4
        %v2654 = vsel %vm2207, %v2650, %v2653
        %v2656 = vunpack.c.l.s4 1934713408
        %v2657 = vunpack.c.0.s8 %v2656
        %v2658 = vperm.slane %v2652, %v2657
        %v2660 = vunpack.c.l.s4 1934713408
        %v2661 = vunpack.c.0.s8 %v2660
        %v2662 = vperm.slane %v2654, %v2661
        %v2663 = vrot.slane %v2658, 4
        %v2664 = vsel %vm2207, 0, %v2663
        %v2665 = vrot.slane %v2662, 4
        %v2666 = vsel %vm2207, 0, %v2665
        %v2667 = vrot.slane %v1700, 4
        %v2668 = vsel %vm2207, %v2667, %v1684
        %v2670 = vunpack.c.l.s4 1983009808
        %v2671 = vunpack.c.0.s8 %v2670
        %v2672 = vperm.slane %v2668, %v2671
        %v2673 = vrot.slane %v1708, 4
        %v2674 = vsel %vm2207, %v2673, %v1692
        %v2676 = vunpack.c.l.s4 1983009808
        %v2677 = vunpack.c.0.s8 %v2676
        %v2678 = vperm.slane %v2674, %v2677
        %v2679 = vrot.slane %v2678, 4
        %v2680 = vsel %vm2207, %v2679, %v2672
        %v2681 = vrot.slane %v2672, 4
        %v2682 = vsel %vm2207, %v2678, %v2681
        %v2684 = vunpack.c.l.s4 1934713408
        %v2685 = vunpack.c.0.s8 %v2684
        %v2686 = vperm.slane %v2680, %v2685
        %v2688 = vunpack.c.l.s4 1934713408
        %v2689 = vunpack.c.0.s8 %v2688
        %v2690 = vperm.slane %v2682, %v2689
        %v2691 = vrot.slane %v2686, 4
        %v2692 = vsel %vm2207, 0, %v2691
        %v2693 = vrot.slane %v2690, 4
        %v2694 = vsel %vm2207, 0, %v2693
        %v2697 = vunpack.c.l.s4 1983009808
        %v2698 = vunpack.c.0.s8 %v2697
        %v2699 = vperm.slane %v1712, %v2698
        %v2702 = vunpack.c.l.s4 1983009808
        %v2703 = vunpack.c.0.s8 %v2702
        %v2704 = vperm.slane %v1718, %v2703
        %v2705 = vrot.slane %v2704, 4
        %v2706 = vsel %vm2207, %v2705, %v2699
        %v2707 = vrot.slane %v2699, 4
        %v2708 = vsel %vm2207, %v2704, %v2707
        %v2710 = vunpack.c.l.s4 1934713408
        %v2711 = vunpack.c.0.s8 %v2710
        %v2712 = vperm.slane %v2706, %v2711
        %v2714 = vunpack.c.l.s4 1934713408
        %v2715 = vunpack.c.0.s8 %v2714
        %v2716 = vperm.slane %v2708, %v2715
        %v2717 = vrot.slane %v2712, 4
        %v2718 = vsel %vm2207, 0, %v2717
        %v2719 = vrot.slane %v2716, 4
        %v2720 = vsel %vm2207, 0, %v2719
        %v2723 = vunpack.c.l.s4 1983009808
        %v2724 = vunpack.c.0.s8 %v2723
        %v2725 = vperm.slane %v1715, %v2724
        %v2728 = vunpack.c.l.s4 1983009808
        %v2729 = vunpack.c.0.s8 %v2728
        %v2730 = vperm.slane %v1721, %v2729
        %v2731 = vrot.slane %v2730, 4
        %v2732 = vsel %vm2207, %v2731, %v2725
        %v2733 = vrot.slane %v2725, 4
        %v2734 = vsel %vm2207, %v2730, %v2733
        %v2736 = vunpack.c.l.s4 1934713408
        %v2737 = vunpack.c.0.s8 %v2736
        %v2738 = vperm.slane %v2732, %v2737
        %v2740 = vunpack.c.l.s4 1934713408
        %v2741 = vunpack.c.0.s8 %v2740
        %v2742 = vperm.slane %v2734, %v2741
        %v2743 = vrot.slane %v2738, 4
        %v2744 = vsel %vm2207, 0, %v2743
        %v2745 = vrot.slane %v2742, 4
        %v2746 = vsel %vm2207, 0, %v2745
        %v2747 = vrot.slane %v1740, 4
        %v2748 = vsel %vm2207, %v2747, %v1724
        %v2750 = vunpack.c.l.s4 1983009808
        %v2751 = vunpack.c.0.s8 %v2750
        %v2752 = vperm.slane %v2748, %v2751
        %v2753 = vrot.slane %v1748, 4
        %v2754 = vsel %vm2207, %v2753, %v1732
        %v2756 = vunpack.c.l.s4 1983009808
        %v2757 = vunpack.c.0.s8 %v2756
        %v2758 = vperm.slane %v2754, %v2757
        %v2759 = vrot.slane %v2758, 4
        %v2760 = vsel %vm2207, %v2759, %v2752
        %v2761 = vrot.slane %v2752, 4
        %v2762 = vsel %vm2207, %v2758, %v2761
        %v2764 = vunpack.c.l.s4 1934713408
        %v2765 = vunpack.c.0.s8 %v2764
        %v2766 = vperm.slane %v2760, %v2765
        %v2768 = vunpack.c.l.s4 1934713408
        %v2769 = vunpack.c.0.s8 %v2768
        %v2770 = vperm.slane %v2762, %v2769
        %v2771 = vrot.slane %v2766, 4
        %v2772 = vsel %vm2207, 0, %v2771
        %v2773 = vrot.slane %v2770, 4
        %v2774 = vsel %vm2207, 0, %v2773
        %v2775 = vrot.slane %v1744, 4
        %v2776 = vsel %vm2207, %v2775, %v1728
        %v2778 = vunpack.c.l.s4 1983009808
        %v2779 = vunpack.c.0.s8 %v2778
        %v2780 = vperm.slane %v2776, %v2779
        %v2781 = vrot.slane %v1752, 4
        %v2782 = vsel %vm2207, %v2781, %v1736
        %v2784 = vunpack.c.l.s4 1983009808
        %v2785 = vunpack.c.0.s8 %v2784
        %v2786 = vperm.slane %v2782, %v2785
        %v2787 = vrot.slane %v2786, 4
        %v2788 = vsel %vm2207, %v2787, %v2780
        %v2789 = vrot.slane %v2780, 4
        %v2790 = vsel %vm2207, %v2786, %v2789
        %v2792 = vunpack.c.l.s4 1934713408
        %v2793 = vunpack.c.0.s8 %v2792
        %v2794 = vperm.slane %v2788, %v2793
        %v2796 = vunpack.c.l.s4 1934713408
        %v2797 = vunpack.c.0.s8 %v2796
        %v2798 = vperm.slane %v2790, %v2797
        %v2799 = vrot.slane %v2794, 4
        %v2800 = vsel %vm2207, 0, %v2799
        %v2801 = vrot.slane %v2798, 4
        %v2802 = vsel %vm2207, 0, %v2801
        %v2805 = vunpack.c.l.s4 1983009808
        %v2806 = vunpack.c.0.s8 %v2805
        %v2807 = vperm.slane %v1756, %v2806
        %v2810 = vunpack.c.l.s4 1983009808
        %v2811 = vunpack.c.0.s8 %v2810
        %v2812 = vperm.slane %v1762, %v2811
        %v2813 = vrot.slane %v2812, 4
        %v2814 = vsel %vm2207, %v2813, %v2807
        %v2815 = vrot.slane %v2807, 4
        %v2816 = vsel %vm2207, %v2812, %v2815
        %v2818 = vunpack.c.l.s4 1934713408
        %v2819 = vunpack.c.0.s8 %v2818
        %v2820 = vperm.slane %v2814, %v2819
        %v2822 = vunpack.c.l.s4 1934713408
        %v2823 = vunpack.c.0.s8 %v2822
        %v2824 = vperm.slane %v2816, %v2823
        %v2825 = vrot.slane %v2820, 4
        %v2826 = vsel %vm2207, 0, %v2825
        %v2827 = vrot.slane %v2824, 4
        %v2828 = vsel %vm2207, 0, %v2827
        %v2831 = vunpack.c.l.s4 1983009808
        %v2832 = vunpack.c.0.s8 %v2831
        %v2833 = vperm.slane %v1759, %v2832
        %v2836 = vunpack.c.l.s4 1983009808
        %v2837 = vunpack.c.0.s8 %v2836
        %v2838 = vperm.slane %v1765, %v2837
        %v2839 = vrot.slane %v2838, 4
        %v2840 = vsel %vm2207, %v2839, %v2833
        %v2841 = vrot.slane %v2833, 4
        %v2842 = vsel %vm2207, %v2838, %v2841
        %v2844 = vunpack.c.l.s4 1934713408
        %v2845 = vunpack.c.0.s8 %v2844
        %v2846 = vperm.slane %v2840, %v2845
        %v2848 = vunpack.c.l.s4 1934713408
        %v2849 = vunpack.c.0.s8 %v2848
        %v2850 = vperm.slane %v2842, %v2849
        %v2851 = vrot.slane %v2846, 4
        %v2852 = vsel %vm2207, 0, %v2851
        %v2853 = vrot.slane %v2850, 4
        %v2854 = vsel %vm2207, 0, %v2853
        %v2855 = vrot.slane %v1784, 4
        %v2856 = vsel %vm2207, %v2855, %v1768
        %v2858 = vunpack.c.l.s4 1983009808
        %v2859 = vunpack.c.0.s8 %v2858
        %v2860 = vperm.slane %v2856, %v2859
        %v2861 = vrot.slane %v1792, 4
        %v2862 = vsel %vm2207, %v2861, %v1776
        %v2864 = vunpack.c.l.s4 1983009808
        %v2865 = vunpack.c.0.s8 %v2864
        %v2866 = vperm.slane %v2862, %v2865
        %v2867 = vrot.slane %v2866, 4
        %v2868 = vsel %vm2207, %v2867, %v2860
        %v2869 = vrot.slane %v2860, 4
        %v2870 = vsel %vm2207, %v2866, %v2869
        %v2872 = vunpack.c.l.s4 1934713408
        %v2873 = vunpack.c.0.s8 %v2872
        %v2874 = vperm.slane %v2868, %v2873
        %v2876 = vunpack.c.l.s4 1934713408
        %v2877 = vunpack.c.0.s8 %v2876
        %v2878 = vperm.slane %v2870, %v2877
        %v2879 = vrot.slane %v2874, 4
        %v2880 = vsel %vm2207, 0, %v2879
        %v2881 = vrot.slane %v2878, 4
        %v2882 = vsel %vm2207, 0, %v2881
        %v2883 = vrot.slane %v1788, 4
        %v2884 = vsel %vm2207, %v2883, %v1772
        %v2886 = vunpack.c.l.s4 1983009808
        %v2887 = vunpack.c.0.s8 %v2886
        %v2888 = vperm.slane %v2884, %v2887
        %v2889 = vrot.slane %v1796, 4
        %v2890 = vsel %vm2207, %v2889, %v1780
        %v2892 = vunpack.c.l.s4 1983009808
        %v2893 = vunpack.c.0.s8 %v2892
        %v2894 = vperm.slane %v2890, %v2893
        %v2895 = vrot.slane %v2894, 4
        %v2896 = vsel %vm2207, %v2895, %v2888
        %v2897 = vrot.slane %v2888, 4
        %v2898 = vsel %vm2207, %v2894, %v2897
        %v2900 = vunpack.c.l.s4 1934713408
        %v2901 = vunpack.c.0.s8 %v2900
        %v2902 = vperm.slane %v2896, %v2901
        %v2904 = vunpack.c.l.s4 1934713408
        %v2905 = vunpack.c.0.s8 %v2904
        %v2906 = vperm.slane %v2898, %v2905
        %v2907 = vrot.slane %v2902, 4
        %v2908 = vsel %vm2207, 0, %v2907
        %v2909 = vrot.slane %v2906, 4
        %v2910 = vsel %vm2207, 0, %v2909
        %v2913 = vunpack.c.l.s4 1983009808
        %v2914 = vunpack.c.0.s8 %v2913
        %v2915 = vperm.slane %v1800, %v2914
        %v2918 = vunpack.c.l.s4 1983009808
        %v2919 = vunpack.c.0.s8 %v2918
        %v2920 = vperm.slane %v1806, %v2919
        %v2921 = vrot.slane %v2920, 4
        %v2922 = vsel %vm2207, %v2921, %v2915
        %v2923 = vrot.slane %v2915, 4
        %v2924 = vsel %vm2207, %v2920, %v2923
        %v2926 = vunpack.c.l.s4 1934713408
        %v2927 = vunpack.c.0.s8 %v2926
        %v2928 = vperm.slane %v2922, %v2927
        %v2930 = vunpack.c.l.s4 1934713408
        %v2931 = vunpack.c.0.s8 %v2930
        %v2932 = vperm.slane %v2924, %v2931
        %v2933 = vrot.slane %v2928, 4
        %v2934 = vsel %vm2207, 0, %v2933
        %v2935 = vrot.slane %v2932, 4
        %v2936 = vsel %vm2207, 0, %v2935
        %v2939 = vunpack.c.l.s4 1983009808
        %v2940 = vunpack.c.0.s8 %v2939
        %v2941 = vperm.slane %v1803, %v2940
        %v2944 = vunpack.c.l.s4 1983009808
        %v2945 = vunpack.c.0.s8 %v2944
        %v2946 = vperm.slane %v1809, %v2945
        %v2947 = vrot.slane %v2946, 4
        %v2948 = vsel %vm2207, %v2947, %v2941
        %v2949 = vrot.slane %v2941, 4
        %v2950 = vsel %vm2207, %v2946, %v2949
        %v2952 = vunpack.c.l.s4 1934713408
        %v2953 = vunpack.c.0.s8 %v2952
        %v2954 = vperm.slane %v2948, %v2953
        %v2956 = vunpack.c.l.s4 1934713408
        %v2957 = vunpack.c.0.s8 %v2956
        %v2958 = vperm.slane %v2950, %v2957
        %v2959 = vrot.slane %v2954, 4
        %v2960 = vsel %vm2207, 0, %v2959
        %v2961 = vrot.slane %v2958, 4
        %v2962 = vsel %vm2207, 0, %v2961
        %v2963 = vrot.slane %v1828, 4
        %v2964 = vsel %vm2207, %v2963, %v1812
        %v2966 = vunpack.c.l.s4 1983009808
        %v2967 = vunpack.c.0.s8 %v2966
        %v2968 = vperm.slane %v2964, %v2967
        %v2969 = vrot.slane %v1836, 4
        %v2970 = vsel %vm2207, %v2969, %v1820
        %v2972 = vunpack.c.l.s4 1983009808
        %v2973 = vunpack.c.0.s8 %v2972
        %v2974 = vperm.slane %v2970, %v2973
        %v2975 = vrot.slane %v2974, 4
        %v2976 = vsel %vm2207, %v2975, %v2968
        %v2977 = vrot.slane %v2968, 4
        %v2978 = vsel %vm2207, %v2974, %v2977
        %v2980 = vunpack.c.l.s4 1934713408
        %v2981 = vunpack.c.0.s8 %v2980
        %v2982 = vperm.slane %v2976, %v2981
        %v2984 = vunpack.c.l.s4 1934713408
        %v2985 = vunpack.c.0.s8 %v2984
        %v2986 = vperm.slane %v2978, %v2985
        %v2987 = vrot.slane %v2982, 4
        %v2988 = vsel %vm2207, 0, %v2987
        %v2989 = vrot.slane %v2986, 4
        %v2990 = vsel %vm2207, 0, %v2989
        %v2991 = vrot.slane %v1832, 4
        %v2992 = vsel %vm2207, %v2991, %v1816
        %v2994 = vunpack.c.l.s4 1983009808
        %v2995 = vunpack.c.0.s8 %v2994
        %v2996 = vperm.slane %v2992, %v2995
        %v2997 = vrot.slane %v1840, 4
        %v2998 = vsel %vm2207, %v2997, %v1824
        %v3000 = vunpack.c.l.s4 1983009808
        %v3001 = vunpack.c.0.s8 %v3000
        %v3002 = vperm.slane %v2998, %v3001
        %v3003 = vrot.slane %v3002, 4
        %v3004 = vsel %vm2207, %v3003, %v2996
        %v3005 = vrot.slane %v2996, 4
        %v3006 = vsel %vm2207, %v3002, %v3005
        %v3008 = vunpack.c.l.s4 1934713408
        %v3009 = vunpack.c.0.s8 %v3008
        %v3010 = vperm.slane %v3004, %v3009
        %v3012 = vunpack.c.l.s4 1934713408
        %v3013 = vunpack.c.0.s8 %v3012
        %v3014 = vperm.slane %v3006, %v3013
        %v3015 = vrot.slane %v3010, 4
        %v3016 = vsel %vm2207, 0, %v3015
        %v3017 = vrot.slane %v3014, 4
        %v3018 = vsel %vm2207, 0, %v3017
        %v3021 = vunpack.c.l.s4 1983009808
        %v3022 = vunpack.c.0.s8 %v3021
        %v3023 = vperm.slane %v1844, %v3022
        %v3026 = vunpack.c.l.s4 1983009808
        %v3027 = vunpack.c.0.s8 %v3026
        %v3028 = vperm.slane %v1850, %v3027
        %v3029 = vrot.slane %v3028, 4
        %v3030 = vsel %vm2207, %v3029, %v3023
        %v3031 = vrot.slane %v3023, 4
        %v3032 = vsel %vm2207, %v3028, %v3031
        %v3034 = vunpack.c.l.s4 1934713408
        %v3035 = vunpack.c.0.s8 %v3034
        %v3036 = vperm.slane %v3030, %v3035
        %v3038 = vunpack.c.l.s4 1934713408
        %v3039 = vunpack.c.0.s8 %v3038
        %v3040 = vperm.slane %v3032, %v3039
        %v3041 = vrot.slane %v3036, 4
        %v3042 = vsel %vm2207, 0, %v3041
        %v3043 = vrot.slane %v3040, 4
        %v3044 = vsel %vm2207, 0, %v3043
        %v3047 = vunpack.c.l.s4 1983009808
        %v3048 = vunpack.c.0.s8 %v3047
        %v3049 = vperm.slane %v1847, %v3048
        %v3052 = vunpack.c.l.s4 1983009808
        %v3053 = vunpack.c.0.s8 %v3052
        %v3054 = vperm.slane %v1853, %v3053
        %v3055 = vrot.slane %v3054, 4
        %v3056 = vsel %vm2207, %v3055, %v3049
        %v3057 = vrot.slane %v3049, 4
        %v3058 = vsel %vm2207, %v3054, %v3057
        %v3060 = vunpack.c.l.s4 1934713408
        %v3061 = vunpack.c.0.s8 %v3060
        %v3062 = vperm.slane %v3056, %v3061
        %v3064 = vunpack.c.l.s4 1934713408
        %v3065 = vunpack.c.0.s8 %v3064
        %v3066 = vperm.slane %v3058, %v3065
        %v3067 = vrot.slane %v3062, 4
        %v3068 = vsel %vm2207, 0, %v3067
        %v3069 = vrot.slane %v3066, 4
        %v3070 = vsel %vm2207, 0, %v3069
        %v3071 = vrot.slane %v1872, 4
        %v3072 = vsel %vm2207, %v3071, %v1856
        %v3074 = vunpack.c.l.s4 1983009808
        %v3075 = vunpack.c.0.s8 %v3074
        %v3076 = vperm.slane %v3072, %v3075
        %v3077 = vrot.slane %v1880, 4
        %v3078 = vsel %vm2207, %v3077, %v1864
        %v3080 = vunpack.c.l.s4 1983009808
        %v3081 = vunpack.c.0.s8 %v3080
        %v3082 = vperm.slane %v3078, %v3081
        %v3083 = vrot.slane %v3082, 4
        %v3084 = vsel %vm2207, %v3083, %v3076
        %v3085 = vrot.slane %v3076, 4
        %v3086 = vsel %vm2207, %v3082, %v3085
        %v3088 = vunpack.c.l.s4 1934713408
        %v3089 = vunpack.c.0.s8 %v3088
        %v3090 = vperm.slane %v3084, %v3089
        %v3092 = vunpack.c.l.s4 1934713408
        %v3093 = vunpack.c.0.s8 %v3092
        %v3094 = vperm.slane %v3086, %v3093
        %v3095 = vrot.slane %v3090, 4
        %v3096 = vsel %vm2207, 0, %v3095
        %v3097 = vrot.slane %v3094, 4
        %v3098 = vsel %vm2207, 0, %v3097
        %v3099 = vrot.slane %v1876, 4
        %v3100 = vsel %vm2207, %v3099, %v1860
        %v3102 = vunpack.c.l.s4 1983009808
        %v3103 = vunpack.c.0.s8 %v3102
        %v3104 = vperm.slane %v3100, %v3103
        %v3105 = vrot.slane %v1884, 4
        %v3106 = vsel %vm2207, %v3105, %v1868
        %v3108 = vunpack.c.l.s4 1983009808
        %v3109 = vunpack.c.0.s8 %v3108
        %v3110 = vperm.slane %v3106, %v3109
        %v3111 = vrot.slane %v3110, 4
        %v3112 = vsel %vm2207, %v3111, %v3104
        %v3113 = vrot.slane %v3104, 4
        %v3114 = vsel %vm2207, %v3110, %v3113
        %v3116 = vunpack.c.l.s4 1934713408
        %v3117 = vunpack.c.0.s8 %v3116
        %v3118 = vperm.slane %v3112, %v3117
        %v3120 = vunpack.c.l.s4 1934713408
        %v3121 = vunpack.c.0.s8 %v3120
        %v3122 = vperm.slane %v3114, %v3121
        %v3123 = vrot.slane %v3118, 4
        %v3124 = vsel %vm2207, 0, %v3123
        %v3125 = vrot.slane %v3122, 4
        %v3126 = vsel %vm2207, 0, %v3125
        %v3129 = vunpack.c.l.s4 1983009808
        %v3130 = vunpack.c.0.s8 %v3129
        %v3131 = vperm.slane %v1888, %v3130
        %v3134 = vunpack.c.l.s4 1983009808
        %v3135 = vunpack.c.0.s8 %v3134
        %v3136 = vperm.slane %v1894, %v3135
        %v3137 = vrot.slane %v3136, 4
        %v3138 = vsel %vm2207, %v3137, %v3131
        %v3139 = vrot.slane %v3131, 4
        %v3140 = vsel %vm2207, %v3136, %v3139
        %v3142 = vunpack.c.l.s4 1934713408
        %v3143 = vunpack.c.0.s8 %v3142
        %v3144 = vperm.slane %v3138, %v3143
        %v3146 = vunpack.c.l.s4 1934713408
        %v3147 = vunpack.c.0.s8 %v3146
        %v3148 = vperm.slane %v3140, %v3147
        %v3149 = vrot.slane %v3144, 4
        %v3150 = vsel %vm2207, 0, %v3149
        %v3151 = vrot.slane %v3148, 4
        %v3152 = vsel %vm2207, 0, %v3151
        %v3155 = vunpack.c.l.s4 1983009808
        %v3156 = vunpack.c.0.s8 %v3155
        %v3157 = vperm.slane %v1891, %v3156
        %v3160 = vunpack.c.l.s4 1983009808
        %v3161 = vunpack.c.0.s8 %v3160
        %v3162 = vperm.slane %v1897, %v3161
        %v3163 = vrot.slane %v3162, 4
        %v3164 = vsel %vm2207, %v3163, %v3157
        %v3165 = vrot.slane %v3157, 4
        %v3166 = vsel %vm2207, %v3162, %v3165
        %v3168 = vunpack.c.l.s4 1934713408
        %v3169 = vunpack.c.0.s8 %v3168
        %v3170 = vperm.slane %v3164, %v3169
        %v3172 = vunpack.c.l.s4 1934713408
        %v3173 = vunpack.c.0.s8 %v3172
        %v3174 = vperm.slane %v3166, %v3173
        %v3175 = vrot.slane %v3170, 4
        %v3176 = vsel %vm2207, 0, %v3175
        %v3177 = vrot.slane %v3174, 4
        %v3178 = vsel %vm2207, 0, %v3177
        %v3179 = vrot.slane %v1916, 4
        %v3180 = vsel %vm2207, %v3179, %v1900
        %v3182 = vunpack.c.l.s4 1983009808
        %v3183 = vunpack.c.0.s8 %v3182
        %v3184 = vperm.slane %v3180, %v3183
        %v3185 = vrot.slane %v1924, 4
        %v3186 = vsel %vm2207, %v3185, %v1908
        %v3188 = vunpack.c.l.s4 1983009808
        %v3189 = vunpack.c.0.s8 %v3188
        %v3190 = vperm.slane %v3186, %v3189
        %v3191 = vrot.slane %v3190, 4
        %v3192 = vsel %vm2207, %v3191, %v3184
        %v3193 = vrot.slane %v3184, 4
        %v3194 = vsel %vm2207, %v3190, %v3193
        %v3196 = vunpack.c.l.s4 1934713408
        %v3197 = vunpack.c.0.s8 %v3196
        %v3198 = vperm.slane %v3192, %v3197
        %v3200 = vunpack.c.l.s4 1934713408
        %v3201 = vunpack.c.0.s8 %v3200
        %v3202 = vperm.slane %v3194, %v3201
        %v3203 = vrot.slane %v3198, 4
        %v3204 = vsel %vm2207, 0, %v3203
        %v3205 = vrot.slane %v3202, 4
        %v3206 = vsel %vm2207, 0, %v3205
        %v3207 = vrot.slane %v1920, 4
        %v3208 = vsel %vm2207, %v3207, %v1904
        %v3210 = vunpack.c.l.s4 1983009808
        %v3211 = vunpack.c.0.s8 %v3210
        %v3212 = vperm.slane %v3208, %v3211
        %v3213 = vrot.slane %v1928, 4
        %v3214 = vsel %vm2207, %v3213, %v1912
        %v3216 = vunpack.c.l.s4 1983009808
        %v3217 = vunpack.c.0.s8 %v3216
        %v3218 = vperm.slane %v3214, %v3217
        %v3219 = vrot.slane %v3218, 4
        %v3220 = vsel %vm2207, %v3219, %v3212
        %v3221 = vrot.slane %v3212, 4
        %v3222 = vsel %vm2207, %v3218, %v3221
        %v3224 = vunpack.c.l.s4 1934713408
        %v3225 = vunpack.c.0.s8 %v3224
        %v3226 = vperm.slane %v3220, %v3225
        %v3228 = vunpack.c.l.s4 1934713408
        %v3229 = vunpack.c.0.s8 %v3228
        %v3230 = vperm.slane %v3222, %v3229
        %v3231 = vrot.slane %v3226, 4
        %v3232 = vsel %vm2207, 0, %v3231
        %v3233 = vrot.slane %v3230, 4
        %v3234 = vsel %vm2207, 0, %v3233
        %v3237 = vunpack.c.l.s4 1983009808
        %v3238 = vunpack.c.0.s8 %v3237
        %v3239 = vperm.slane %v1932, %v3238
        %v3242 = vunpack.c.l.s4 1983009808
        %v3243 = vunpack.c.0.s8 %v3242
        %v3244 = vperm.slane %v1938, %v3243
        %v3245 = vrot.slane %v3244, 4
        %v3246 = vsel %vm2207, %v3245, %v3239
        %v3247 = vrot.slane %v3239, 4
        %v3248 = vsel %vm2207, %v3244, %v3247
        %v3250 = vunpack.c.l.s4 1934713408
        %v3251 = vunpack.c.0.s8 %v3250
        %v3252 = vperm.slane %v3246, %v3251
        %v3254 = vunpack.c.l.s4 1934713408
        %v3255 = vunpack.c.0.s8 %v3254
        %v3256 = vperm.slane %v3248, %v3255
        %v3257 = vrot.slane %v3252, 4
        %v3258 = vsel %vm2207, 0, %v3257
        %v3259 = vrot.slane %v3256, 4
        %v3260 = vsel %vm2207, 0, %v3259
        %v3263 = vunpack.c.l.s4 1983009808
        %v3264 = vunpack.c.0.s8 %v3263
        %v3265 = vperm.slane %v1935, %v3264
        %v3268 = vunpack.c.l.s4 1983009808
        %v3269 = vunpack.c.0.s8 %v3268
        %v3270 = vperm.slane %v1941, %v3269
        %v3271 = vrot.slane %v3270, 4
        %v3272 = vsel %vm2207, %v3271, %v3265
        %v3273 = vrot.slane %v3265, 4
        %v3274 = vsel %vm2207, %v3270, %v3273
        %v3276 = vunpack.c.l.s4 1934713408
        %v3277 = vunpack.c.0.s8 %v3276
        %v3278 = vperm.slane %v3272, %v3277
        %v3280 = vunpack.c.l.s4 1934713408
        %v3281 = vunpack.c.0.s8 %v3280
        %v3282 = vperm.slane %v3274, %v3281
        %v3283 = vrot.slane %v3278, 4
        %v3284 = vsel %vm2207, 0, %v3283
        %v3285 = vrot.slane %v3282, 4
        %v3286 = vsel %vm2207, 0, %v3285
        %v3287 = vrot.slane %v1960, 4
        %v3288 = vsel %vm2207, %v3287, %v1944
        %v3290 = vunpack.c.l.s4 1983009808
        %v3291 = vunpack.c.0.s8 %v3290
        %v3292 = vperm.slane %v3288, %v3291
        %v3293 = vrot.slane %v1968, 4
        %v3294 = vsel %vm2207, %v3293, %v1952
        %v3296 = vunpack.c.l.s4 1983009808
        %v3297 = vunpack.c.0.s8 %v3296
        %v3298 = vperm.slane %v3294, %v3297
        %v3299 = vrot.slane %v3298, 4
        %v3300 = vsel %vm2207, %v3299, %v3292
        %v3301 = vrot.slane %v3292, 4
        %v3302 = vsel %vm2207, %v3298, %v3301
        %v3304 = vunpack.c.l.s4 1934713408
        %v3305 = vunpack.c.0.s8 %v3304
        %v3306 = vperm.slane %v3300, %v3305
        %v3308 = vunpack.c.l.s4 1934713408
        %v3309 = vunpack.c.0.s8 %v3308
        %v3310 = vperm.slane %v3302, %v3309
        %v3311 = vrot.slane %v3306, 4
        %v3312 = vsel %vm2207, 0, %v3311
        %v3313 = vrot.slane %v3310, 4
        %v3314 = vsel %vm2207, 0, %v3313
        %v3315 = vrot.slane %v1964, 4
        %v3316 = vsel %vm2207, %v3315, %v1948
        %v3318 = vunpack.c.l.s4 1983009808
        %v3319 = vunpack.c.0.s8 %v3318
        %v3320 = vperm.slane %v3316, %v3319
        %v3321 = vrot.slane %v1972, 4
        %v3322 = vsel %vm2207, %v3321, %v1956
        %v3324 = vunpack.c.l.s4 1983009808
        %v3325 = vunpack.c.0.s8 %v3324
        %v3326 = vperm.slane %v3322, %v3325
        %v3327 = vrot.slane %v3326, 4
        %v3328 = vsel %vm2207, %v3327, %v3320
        %v3329 = vrot.slane %v3320, 4
        %v3330 = vsel %vm2207, %v3326, %v3329
        %v3332 = vunpack.c.l.s4 1934713408
        %v3333 = vunpack.c.0.s8 %v3332
        %v3334 = vperm.slane %v3328, %v3333
        %v3336 = vunpack.c.l.s4 1934713408
        %v3337 = vunpack.c.0.s8 %v3336
        %v3338 = vperm.slane %v3330, %v3337
        %v3339 = vrot.slane %v3334, 4
        %v3340 = vsel %vm2207, 0, %v3339
        %v3341 = vrot.slane %v3338, 4
        %v3342 = vsel %vm2207, 0, %v3341
        %v3345 = vunpack.c.l.s4 1983009808
        %v3346 = vunpack.c.0.s8 %v3345
        %v3347 = vperm.slane %v1976, %v3346
        %v3350 = vunpack.c.l.s4 1983009808
        %v3351 = vunpack.c.0.s8 %v3350
        %v3352 = vperm.slane %v1982, %v3351
        %v3353 = vrot.slane %v3352, 4
        %v3354 = vsel %vm2207, %v3353, %v3347
        %v3355 = vrot.slane %v3347, 4
        %v3356 = vsel %vm2207, %v3352, %v3355
        %v3358 = vunpack.c.l.s4 1934713408
        %v3359 = vunpack.c.0.s8 %v3358
        %v3360 = vperm.slane %v3354, %v3359
        %v3362 = vunpack.c.l.s4 1934713408
        %v3363 = vunpack.c.0.s8 %v3362
        %v3364 = vperm.slane %v3356, %v3363
        %v3365 = vrot.slane %v3360, 4
        %v3366 = vsel %vm2207, 0, %v3365
        %v3367 = vrot.slane %v3364, 4
        %v3368 = vsel %vm2207, 0, %v3367
        %v3371 = vunpack.c.l.s4 1983009808
        %v3372 = vunpack.c.0.s8 %v3371
        %v3373 = vperm.slane %v1979, %v3372
        %v3376 = vunpack.c.l.s4 1983009808
        %v3377 = vunpack.c.0.s8 %v3376
        %v3378 = vperm.slane %v1985, %v3377
        %v3379 = vrot.slane %v3378, 4
        %v3380 = vsel %vm2207, %v3379, %v3373
        %v3381 = vrot.slane %v3373, 4
        %v3382 = vsel %vm2207, %v3378, %v3381
        %v3384 = vunpack.c.l.s4 1934713408
        %v3385 = vunpack.c.0.s8 %v3384
        %v3386 = vperm.slane %v3380, %v3385
        %v3388 = vunpack.c.l.s4 1934713408
        %v3389 = vunpack.c.0.s8 %v3388
        %v3390 = vperm.slane %v3382, %v3389
        %v3391 = vrot.slane %v3386, 4
        %v3392 = vsel %vm2207, 0, %v3391
        %v3393 = vrot.slane %v3390, 4
        %v3394 = vsel %vm2207, 0, %v3393
        %v3395 = vrot.slane %v2004, 4
        %v3396 = vsel %vm2207, %v3395, %v1988
        %v3398 = vunpack.c.l.s4 1983009808
        %v3399 = vunpack.c.0.s8 %v3398
        %v3400 = vperm.slane %v3396, %v3399
        %v3401 = vrot.slane %v2012, 4
        %v3402 = vsel %vm2207, %v3401, %v1996
        %v3404 = vunpack.c.l.s4 1983009808
        %v3405 = vunpack.c.0.s8 %v3404
        %v3406 = vperm.slane %v3402, %v3405
        %v3407 = vrot.slane %v3406, 4
        %v3408 = vsel %vm2207, %v3407, %v3400
        %v3409 = vrot.slane %v3400, 4
        %v3410 = vsel %vm2207, %v3406, %v3409
        %v3412 = vunpack.c.l.s4 1934713408
        %v3413 = vunpack.c.0.s8 %v3412
        %v3414 = vperm.slane %v3408, %v3413
        %v3416 = vunpack.c.l.s4 1934713408
        %v3417 = vunpack.c.0.s8 %v3416
        %v3418 = vperm.slane %v3410, %v3417
        %v3419 = vrot.slane %v3414, 4
        %v3420 = vsel %vm2207, 0, %v3419
        %v3421 = vrot.slane %v3418, 4
        %v3422 = vsel %vm2207, 0, %v3421
        %v3423 = vrot.slane %v2008, 4
        %v3424 = vsel %vm2207, %v3423, %v1992
        %v3426 = vunpack.c.l.s4 1983009808
        %v3427 = vunpack.c.0.s8 %v3426
        %v3428 = vperm.slane %v3424, %v3427
        %v3429 = vrot.slane %v2016, 4
        %v3430 = vsel %vm2207, %v3429, %v2000
        %v3432 = vunpack.c.l.s4 1983009808
        %v3433 = vunpack.c.0.s8 %v3432
        %v3434 = vperm.slane %v3430, %v3433
        %v3435 = vrot.slane %v3434, 4
        %v3436 = vsel %vm2207, %v3435, %v3428
        %v3437 = vrot.slane %v3428, 4
        %v3438 = vsel %vm2207, %v3434, %v3437
        %v3440 = vunpack.c.l.s4 1934713408
        %v3441 = vunpack.c.0.s8 %v3440
        %v3442 = vperm.slane %v3436, %v3441
        %v3444 = vunpack.c.l.s4 1934713408
        %v3445 = vunpack.c.0.s8 %v3444
        %v3446 = vperm.slane %v3438, %v3445
        %v3447 = vrot.slane %v3442, 4
        %v3448 = vsel %vm2207, 0, %v3447
        %v3449 = vrot.slane %v3446, 4
        %v3450 = vsel %vm2207, 0, %v3449
        %v3453 = vunpack.c.l.s4 1983009808
        %v3454 = vunpack.c.0.s8 %v3453
        %v3455 = vperm.slane %v2020, %v3454
        %v3458 = vunpack.c.l.s4 1983009808
        %v3459 = vunpack.c.0.s8 %v3458
        %v3460 = vperm.slane %v2026, %v3459
        %v3461 = vrot.slane %v3460, 4
        %v3462 = vsel %vm2207, %v3461, %v3455
        %v3463 = vrot.slane %v3455, 4
        %v3464 = vsel %vm2207, %v3460, %v3463
        %v3466 = vunpack.c.l.s4 1934713408
        %v3467 = vunpack.c.0.s8 %v3466
        %v3468 = vperm.slane %v3462, %v3467
        %v3470 = vunpack.c.l.s4 1934713408
        %v3471 = vunpack.c.0.s8 %v3470
        %v3472 = vperm.slane %v3464, %v3471
        %v3473 = vrot.slane %v3468, 4
        %v3474 = vsel %vm2207, 0, %v3473
        %v3475 = vrot.slane %v3472, 4
        %v3476 = vsel %vm2207, 0, %v3475
        %v3479 = vunpack.c.l.s4 1983009808
        %v3480 = vunpack.c.0.s8 %v3479
        %v3481 = vperm.slane %v2023, %v3480
        %v3484 = vunpack.c.l.s4 1983009808
        %v3485 = vunpack.c.0.s8 %v3484
        %v3486 = vperm.slane %v2029, %v3485
        %v3487 = vrot.slane %v3486, 4
        %v3488 = vsel %vm2207, %v3487, %v3481
        %v3489 = vrot.slane %v3481, 4
        %v3490 = vsel %vm2207, %v3486, %v3489
        %v3492 = vunpack.c.l.s4 1934713408
        %v3493 = vunpack.c.0.s8 %v3492
        %v3494 = vperm.slane %v3488, %v3493
        %v3496 = vunpack.c.l.s4 1934713408
        %v3497 = vunpack.c.0.s8 %v3496
        %v3498 = vperm.slane %v3490, %v3497
        %v3499 = vrot.slane %v3494, 4
        %v3500 = vsel %vm2207, 0, %v3499
        %v3501 = vrot.slane %v3498, 4
        %v3502 = vsel %vm2207, 0, %v3501
        %v3503 = vrot.slane %v2048, 4
        %v3504 = vsel %vm2207, %v3503, %v2032
        %v3506 = vunpack.c.l.s4 1983009808
        %v3507 = vunpack.c.0.s8 %v3506
        %v3508 = vperm.slane %v3504, %v3507
        %v3509 = vrot.slane %v2056, 4
        %v3510 = vsel %vm2207, %v3509, %v2040
        %v3512 = vunpack.c.l.s4 1983009808
        %v3513 = vunpack.c.0.s8 %v3512
        %v3514 = vperm.slane %v3510, %v3513
        %v3515 = vrot.slane %v3514, 4
        %v3516 = vsel %vm2207, %v3515, %v3508
        %v3517 = vrot.slane %v3508, 4
        %v3518 = vsel %vm2207, %v3514, %v3517
        %v3520 = vunpack.c.l.s4 1934713408
        %v3521 = vunpack.c.0.s8 %v3520
        %v3522 = vperm.slane %v3516, %v3521
        %v3524 = vunpack.c.l.s4 1934713408
        %v3525 = vunpack.c.0.s8 %v3524
        %v3526 = vperm.slane %v3518, %v3525
        %v3527 = vrot.slane %v3522, 4
        %v3528 = vsel %vm2207, 0, %v3527
        %v3529 = vrot.slane %v3526, 4
        %v3530 = vsel %vm2207, 0, %v3529
        %v3531 = vrot.slane %v2052, 4
        %v3532 = vsel %vm2207, %v3531, %v2036
        %v3534 = vunpack.c.l.s4 1983009808
        %v3535 = vunpack.c.0.s8 %v3534
        %v3536 = vperm.slane %v3532, %v3535
        %v3537 = vrot.slane %v2060, 4
        %v3538 = vsel %vm2207, %v3537, %v2044
        %v3540 = vunpack.c.l.s4 1983009808
        %v3541 = vunpack.c.0.s8 %v3540
        %v3542 = vperm.slane %v3538, %v3541
        %v3543 = vrot.slane %v3542, 4
        %v3544 = vsel %vm2207, %v3543, %v3536
        %v3545 = vrot.slane %v3536, 4
        %v3546 = vsel %vm2207, %v3542, %v3545
        %v3548 = vunpack.c.l.s4 1934713408
        %v3549 = vunpack.c.0.s8 %v3548
        %v3550 = vperm.slane %v3544, %v3549
        %v3552 = vunpack.c.l.s4 1934713408
        %v3553 = vunpack.c.0.s8 %v3552
        %v3554 = vperm.slane %v3546, %v3553
        %v3555 = vrot.slane %v3550, 4
        %v3556 = vsel %vm2207, 0, %v3555
        %v3557 = vrot.slane %v3554, 4
        %v3558 = vsel %vm2207, 0, %v3557
        %v3561 = vunpack.c.l.s4 1983009808
        %v3562 = vunpack.c.0.s8 %v3561
        %v3563 = vperm.slane %v2064, %v3562
        %v3566 = vunpack.c.l.s4 1983009808
        %v3567 = vunpack.c.0.s8 %v3566
        %v3568 = vperm.slane %v2070, %v3567
        %v3569 = vrot.slane %v3568, 4
        %v3570 = vsel %vm2207, %v3569, %v3563
        %v3571 = vrot.slane %v3563, 4
        %v3572 = vsel %vm2207, %v3568, %v3571
        %v3574 = vunpack.c.l.s4 1934713408
        %v3575 = vunpack.c.0.s8 %v3574
        %v3576 = vperm.slane %v3570, %v3575
        %v3578 = vunpack.c.l.s4 1934713408
        %v3579 = vunpack.c.0.s8 %v3578
        %v3580 = vperm.slane %v3572, %v3579
        %v3581 = vrot.slane %v3576, 4
        %v3582 = vsel %vm2207, 0, %v3581
        %v3583 = vrot.slane %v3580, 4
        %v3584 = vsel %vm2207, 0, %v3583
        %v3587 = vunpack.c.l.s4 1983009808
        %v3588 = vunpack.c.0.s8 %v3587
        %v3589 = vperm.slane %v2067, %v3588
        %v3592 = vunpack.c.l.s4 1983009808
        %v3593 = vunpack.c.0.s8 %v3592
        %v3594 = vperm.slane %v2073, %v3593
        %v3595 = vrot.slane %v3594, 4
        %v3596 = vsel %vm2207, %v3595, %v3589
        %v3597 = vrot.slane %v3589, 4
        %v3598 = vsel %vm2207, %v3594, %v3597
        %v3600 = vunpack.c.l.s4 1934713408
        %v3601 = vunpack.c.0.s8 %v3600
        %v3602 = vperm.slane %v3596, %v3601
        %v3604 = vunpack.c.l.s4 1934713408
        %v3605 = vunpack.c.0.s8 %v3604
        %v3606 = vperm.slane %v3598, %v3605
        %v3607 = vrot.slane %v3602, 4
        %v3608 = vsel %vm2207, 0, %v3607
        %v3609 = vrot.slane %v3606, 4
        %v3610 = vsel %vm2207, 0, %v3609
        %v3611 = vrot.slane %v2092, 4
        %v3612 = vsel %vm2207, %v3611, %v2076
        %v3614 = vunpack.c.l.s4 1983009808
        %v3615 = vunpack.c.0.s8 %v3614
        %v3616 = vperm.slane %v3612, %v3615
        %v3617 = vrot.slane %v2100, 4
        %v3618 = vsel %vm2207, %v3617, %v2084
        %v3620 = vunpack.c.l.s4 1983009808
        %v3621 = vunpack.c.0.s8 %v3620
        %v3622 = vperm.slane %v3618, %v3621
        %v3623 = vrot.slane %v3622, 4
        %v3624 = vsel %vm2207, %v3623, %v3616
        %v3625 = vrot.slane %v3616, 4
        %v3626 = vsel %vm2207, %v3622, %v3625
        %v3628 = vunpack.c.l.s4 1934713408
        %v3629 = vunpack.c.0.s8 %v3628
        %v3630 = vperm.slane %v3624, %v3629
        %v3632 = vunpack.c.l.s4 1934713408
        %v3633 = vunpack.c.0.s8 %v3632
        %v3634 = vperm.slane %v3626, %v3633
        %v3635 = vrot.slane %v3630, 4
        %v3636 = vsel %vm2207, 0, %v3635
        %v3637 = vrot.slane %v3634, 4
        %v3638 = vsel %vm2207, 0, %v3637
        %v3639 = vrot.slane %v2096, 4
        %v3640 = vsel %vm2207, %v3639, %v2080
        %v3642 = vunpack.c.l.s4 1983009808
        %v3643 = vunpack.c.0.s8 %v3642
        %v3644 = vperm.slane %v3640, %v3643
        %v3645 = vrot.slane %v2104, 4
        %v3646 = vsel %vm2207, %v3645, %v2088
        %v3648 = vunpack.c.l.s4 1983009808
        %v3649 = vunpack.c.0.s8 %v3648
        %v3650 = vperm.slane %v3646, %v3649
        %v3651 = vrot.slane %v3650, 4
        %v3652 = vsel %vm2207, %v3651, %v3644
        %v3653 = vrot.slane %v3644, 4
        %v3654 = vsel %vm2207, %v3650, %v3653
        %v3656 = vunpack.c.l.s4 1934713408
        %v3657 = vunpack.c.0.s8 %v3656
        %v3658 = vperm.slane %v3652, %v3657
        %v3660 = vunpack.c.l.s4 1934713408
        %v3661 = vunpack.c.0.s8 %v3660
        %v3662 = vperm.slane %v3654, %v3661
        %v3663 = vrot.slane %v3658, 4
        %v3664 = vsel %vm2207, 0, %v3663
        %v3665 = vrot.slane %v3662, 4
        %v3666 = vsel %vm2207, 0, %v3665
        %v3669 = vunpack.c.l.s4 1983009808
        %v3670 = vunpack.c.0.s8 %v3669
        %v3671 = vperm.slane %v2108, %v3670
        %v3674 = vunpack.c.l.s4 1983009808
        %v3675 = vunpack.c.0.s8 %v3674
        %v3676 = vperm.slane %v2114, %v3675
        %v3677 = vrot.slane %v3676, 4
        %v3678 = vsel %vm2207, %v3677, %v3671
        %v3679 = vrot.slane %v3671, 4
        %v3680 = vsel %vm2207, %v3676, %v3679
        %v3682 = vunpack.c.l.s4 1934713408
        %v3683 = vunpack.c.0.s8 %v3682
        %v3684 = vperm.slane %v3678, %v3683
        %v3686 = vunpack.c.l.s4 1934713408
        %v3687 = vunpack.c.0.s8 %v3686
        %v3688 = vperm.slane %v3680, %v3687
        %v3689 = vrot.slane %v3684, 4
        %v3690 = vsel %vm2207, 0, %v3689
        %v3691 = vrot.slane %v3688, 4
        %v3692 = vsel %vm2207, 0, %v3691
        %v3695 = vunpack.c.l.s4 1983009808
        %v3696 = vunpack.c.0.s8 %v3695
        %v3697 = vperm.slane %v2111, %v3696
        %v3700 = vunpack.c.l.s4 1983009808
        %v3701 = vunpack.c.0.s8 %v3700
        %v3702 = vperm.slane %v2117, %v3701
        %v3703 = vrot.slane %v3702, 4
        %v3704 = vsel %vm2207, %v3703, %v3697
        %v3705 = vrot.slane %v3697, 4
        %v3706 = vsel %vm2207, %v3702, %v3705
        %v3708 = vunpack.c.l.s4 1934713408
        %v3709 = vunpack.c.0.s8 %v3708
        %v3710 = vperm.slane %v3704, %v3709
        %v3712 = vunpack.c.l.s4 1934713408
        %v3713 = vunpack.c.0.s8 %v3712
        %v3714 = vperm.slane %v3706, %v3713
        %v3715 = vrot.slane %v3710, 4
        %v3716 = vsel %vm2207, 0, %v3715
        %v3717 = vrot.slane %v3714, 4
        %v3718 = vsel %vm2207, 0, %v3717
        %v3719 = vrot.slane %v2136, 4
        %v3720 = vsel %vm2207, %v3719, %v2120
        %v3722 = vunpack.c.l.s4 1983009808
        %v3723 = vunpack.c.0.s8 %v3722
        %v3724 = vperm.slane %v3720, %v3723
        %v3725 = vrot.slane %v2144, 4
        %v3726 = vsel %vm2207, %v3725, %v2128
        %v3728 = vunpack.c.l.s4 1983009808
        %v3729 = vunpack.c.0.s8 %v3728
        %v3730 = vperm.slane %v3726, %v3729
        %v3731 = vrot.slane %v3730, 4
        %v3732 = vsel %vm2207, %v3731, %v3724
        %v3733 = vrot.slane %v3724, 4
        %v3734 = vsel %vm2207, %v3730, %v3733
        %v3736 = vunpack.c.l.s4 1934713408
        %v3737 = vunpack.c.0.s8 %v3736
        %v3738 = vperm.slane %v3732, %v3737
        %v3740 = vunpack.c.l.s4 1934713408
        %v3741 = vunpack.c.0.s8 %v3740
        %v3742 = vperm.slane %v3734, %v3741
        %v3743 = vrot.slane %v3738, 4
        %v3744 = vsel %vm2207, 0, %v3743
        %v3745 = vrot.slane %v3742, 4
        %v3746 = vsel %vm2207, 0, %v3745
        %v3747 = vrot.slane %v2140, 4
        %v3748 = vsel %vm2207, %v3747, %v2124
        %v3750 = vunpack.c.l.s4 1983009808
        %v3751 = vunpack.c.0.s8 %v3750
        %v3752 = vperm.slane %v3748, %v3751
        %v3753 = vrot.slane %v2148, 4
        %v3754 = vsel %vm2207, %v3753, %v2132
        %v3756 = vunpack.c.l.s4 1983009808
        %v3757 = vunpack.c.0.s8 %v3756
        %v3758 = vperm.slane %v3754, %v3757
        %v3759 = vrot.slane %v3758, 4
        %v3760 = vsel %vm2207, %v3759, %v3752
        %v3761 = vrot.slane %v3752, 4
        %v3762 = vsel %vm2207, %v3758, %v3761
        %v3764 = vunpack.c.l.s4 1934713408
        %v3765 = vunpack.c.0.s8 %v3764
        %v3766 = vperm.slane %v3760, %v3765
        %v3768 = vunpack.c.l.s4 1934713408
        %v3769 = vunpack.c.0.s8 %v3768
        %v3770 = vperm.slane %v3762, %v3769
        %v3771 = vrot.slane %v3766, 4
        %v3772 = vsel %vm2207, 0, %v3771
        %v3773 = vrot.slane %v3770, 4
        %v3774 = vsel %vm2207, 0, %v3773
        %v3777 = vunpack.c.l.s4 1983009808
        %v3778 = vunpack.c.0.s8 %v3777
        %v3779 = vperm.slane %v2152, %v3778
        %v3782 = vunpack.c.l.s4 1983009808
        %v3783 = vunpack.c.0.s8 %v3782
        %v3784 = vperm.slane %v2158, %v3783
        %v3785 = vrot.slane %v3784, 4
        %v3786 = vsel %vm2207, %v3785, %v3779
        %v3787 = vrot.slane %v3779, 4
        %v3788 = vsel %vm2207, %v3784, %v3787
        %v3790 = vunpack.c.l.s4 1934713408
        %v3791 = vunpack.c.0.s8 %v3790
        %v3792 = vperm.slane %v3786, %v3791
        %v3794 = vunpack.c.l.s4 1934713408
        %v3795 = vunpack.c.0.s8 %v3794
        %v3796 = vperm.slane %v3788, %v3795
        %v3797 = vrot.slane %v3792, 4
        %v3798 = vsel %vm2207, 0, %v3797
        %v3799 = vrot.slane %v3796, 4
        %v3800 = vsel %vm2207, 0, %v3799
        %v3803 = vunpack.c.l.s4 1983009808
        %v3804 = vunpack.c.0.s8 %v3803
        %v3805 = vperm.slane %v2155, %v3804
        %v3808 = vunpack.c.l.s4 1983009808
        %v3809 = vunpack.c.0.s8 %v3808
        %v3810 = vperm.slane %v2161, %v3809
        %v3811 = vrot.slane %v3810, 4
        %v3812 = vsel %vm2207, %v3811, %v3805
        %v3813 = vrot.slane %v3805, 4
        %v3814 = vsel %vm2207, %v3810, %v3813
        %v3816 = vunpack.c.l.s4 1934713408
        %v3817 = vunpack.c.0.s8 %v3816
        %v3818 = vperm.slane %v3812, %v3817
        %v3820 = vunpack.c.l.s4 1934713408
        %v3821 = vunpack.c.0.s8 %v3820
        %v3822 = vperm.slane %v3814, %v3821
        %v3823 = vrot.slane %v3818, 4
        %v3824 = vsel %vm2207, 0, %v3823
        %v3825 = vrot.slane %v3822, 4
        %v3826 = vsel %vm2207, 0, %v3825
        %v3827 = vrot.slane %v2180, 4
        %v3828 = vsel %vm2207, %v3827, %v2164
        %v3830 = vunpack.c.l.s4 1983009808
        %v3831 = vunpack.c.0.s8 %v3830
        %v3832 = vperm.slane %v3828, %v3831
        %v3833 = vrot.slane %v2188, 4
        %v3834 = vsel %vm2207, %v3833, %v2172
        %v3836 = vunpack.c.l.s4 1983009808
        %v3837 = vunpack.c.0.s8 %v3836
        %v3838 = vperm.slane %v3834, %v3837
        %v3839 = vrot.slane %v3838, 4
        %v3840 = vsel %vm2207, %v3839, %v3832
        %v3841 = vrot.slane %v3832, 4
        %v3842 = vsel %vm2207, %v3838, %v3841
        %v3844 = vunpack.c.l.s4 1934713408
        %v3845 = vunpack.c.0.s8 %v3844
        %v3846 = vperm.slane %v3840, %v3845
        %v3848 = vunpack.c.l.s4 1934713408
        %v3849 = vunpack.c.0.s8 %v3848
        %v3850 = vperm.slane %v3842, %v3849
        %v3851 = vrot.slane %v3846, 4
        %v3852 = vsel %vm2207, 0, %v3851
        %v3853 = vrot.slane %v3850, 4
        %v3854 = vsel %vm2207, 0, %v3853
        %v3855 = vrot.slane %v2184, 4
        %v3856 = vsel %vm2207, %v3855, %v2168
        %v3858 = vunpack.c.l.s4 1983009808
        %v3859 = vunpack.c.0.s8 %v3858
        %v3860 = vperm.slane %v3856, %v3859
        %v3861 = vrot.slane %v2192, 4
        %v3862 = vsel %vm2207, %v3861, %v2176
        %v3864 = vunpack.c.l.s4 1983009808
        %v3865 = vunpack.c.0.s8 %v3864
        %v3866 = vperm.slane %v3862, %v3865
        %v3867 = vrot.slane %v3866, 4
        %v3868 = vsel %vm2207, %v3867, %v3860
        %v3869 = vrot.slane %v3860, 4
        %v3870 = vsel %vm2207, %v3866, %v3869
        %v3872 = vunpack.c.l.s4 1934713408
        %v3873 = vunpack.c.0.s8 %v3872
        %v3874 = vperm.slane %v3868, %v3873
        %v3876 = vunpack.c.l.s4 1934713408
        %v3877 = vunpack.c.0.s8 %v3876
        %v3878 = vperm.slane %v3870, %v3877
        %v3879 = vrot.slane %v3874, 4
        %v3880 = vsel %vm2207, 0, %v3879
        %v3881 = vrot.slane %v3878, 4
        %v3882 = vsel %vm2207, 0, %v3881
        %v3885 = vunpack.c.l.s4 1983009808
        %v3886 = vunpack.c.0.s8 %v3885
        %v3887 = vperm.slane %v2196, %v3886
        %v3890 = vunpack.c.l.s4 1983009808
        %v3891 = vunpack.c.0.s8 %v3890
        %v3892 = vperm.slane %v2202, %v3891
        %v3893 = vrot.slane %v3892, 4
        %v3894 = vsel %vm2207, %v3893, %v3887
        %v3895 = vrot.slane %v3887, 4
        %v3896 = vsel %vm2207, %v3892, %v3895
        %v3898 = vunpack.c.l.s4 1934713408
        %v3899 = vunpack.c.0.s8 %v3898
        %v3900 = vperm.slane %v3894, %v3899
        %v3902 = vunpack.c.l.s4 1934713408
        %v3903 = vunpack.c.0.s8 %v3902
        %v3904 = vperm.slane %v3896, %v3903
        %v3905 = vrot.slane %v3900, 4
        %v3906 = vsel %vm2207, 0, %v3905
        %v3907 = vrot.slane %v3904, 4
        %v3908 = vsel %vm2207, 0, %v3907
        %v3911 = vunpack.c.l.s4 1983009808
        %v3912 = vunpack.c.0.s8 %v3911
        %v3913 = vperm.slane %v2199, %v3912
        %v3916 = vunpack.c.l.s4 1983009808
        %v3917 = vunpack.c.0.s8 %v3916
        %v3918 = vperm.slane %v2205, %v3917
        %v3919 = vrot.slane %v3918, 4
        %v3920 = vsel %vm2207, %v3919, %v3913
        %v3921 = vrot.slane %v3913, 4
        %v3922 = vsel %vm2207, %v3918, %v3921
        %v3924 = vunpack.c.l.s4 1934713408
        %v3925 = vunpack.c.0.s8 %v3924
        %v3926 = vperm.slane %v3920, %v3925
        %v3928 = vunpack.c.l.s4 1934713408
        %v3929 = vunpack.c.0.s8 %v3928
        %v3930 = vperm.slane %v3922, %v3929
        %v3931 = vrot.slane %v3926, 4
        %v3932 = vsel %vm2207, 0, %v3931
        %v3933 = vrot.slane %v3930, 4
        %v3934 = vsel %vm2207, 0, %v3933
        %v3935 = vsel %vm2207, %v2233, %v2226
        %v3937 = vunpack.c.l.s4 1983009808
        %v3938 = vunpack.c.0.s8 %v3937
        %v3939 = vperm.slane %v3935, %v3938
        %v3940 = vrot.slane %v2234, 4
        %v3941 = vsel %vm2207, %v3940, %v2232
        %v3943 = vunpack.c.l.s4 1983009808
        %v3944 = vunpack.c.0.s8 %v3943
        %v3945 = vperm.slane %v3941, %v3944
        %v3946 = vrot.slane %v3945, 4
        %v3947 = vsel %vm2207, %v3946, %v3939
        %v3948 = vrot.slane %v3939, 4
        %v3949 = vsel %vm2207, %v3945, %v3948
        %v3951 = vunpack.c.l.s4 1934713408
        %v3952 = vunpack.c.0.s8 %v3951
        %v3953 = vperm.slane %v3947, %v3952
        %v3955 = vunpack.c.l.s4 1934713408
        %v3956 = vunpack.c.0.s8 %v3955
        %v3957 = vperm.slane %v3949, %v3956
        %v3958 = vrot.slane %v3953, 4
        %v3959 = vsel %vm2207, 0, %v3958
        %v3960 = vrot.slane %v3957, 4
        %v3961 = vsel %vm2207, 0, %v3960
        %v3962 = vsel %vm2207, %v2261, %v2254
        %v3964 = vunpack.c.l.s4 1983009808
        %v3965 = vunpack.c.0.s8 %v3964
        %v3966 = vperm.slane %v3962, %v3965
        %v3967 = vrot.slane %v2262, 4
        %v3968 = vsel %vm2207, %v3967, %v2260
        %v3970 = vunpack.c.l.s4 1983009808
        %v3971 = vunpack.c.0.s8 %v3970
        %v3972 = vperm.slane %v3968, %v3971
        %v3973 = vrot.slane %v3972, 4
        %v3974 = vsel %vm2207, %v3973, %v3966
        %v3975 = vrot.slane %v3966, 4
        %v3976 = vsel %vm2207, %v3972, %v3975
        %v3978 = vunpack.c.l.s4 1934713408
        %v3979 = vunpack.c.0.s8 %v3978
        %v3980 = vperm.slane %v3974, %v3979
        %v3982 = vunpack.c.l.s4 1934713408
        %v3983 = vunpack.c.0.s8 %v3982
        %v3984 = vperm.slane %v3976, %v3983
        %v3985 = vrot.slane %v3980, 4
        %v3986 = vsel %vm2207, 0, %v3985
        %v3987 = vrot.slane %v3984, 4
        %v3988 = vsel %vm2207, 0, %v3987
        %v3989 = vsel %vm2207, %v2341, %v2334
        %v3991 = vunpack.c.l.s4 1983009808
        %v3992 = vunpack.c.0.s8 %v3991
        %v3993 = vperm.slane %v3989, %v3992
        %v3994 = vrot.slane %v2342, 4
        %v3995 = vsel %vm2207, %v3994, %v2340
        %v3997 = vunpack.c.l.s4 1983009808
        %v3998 = vunpack.c.0.s8 %v3997
        %v3999 = vperm.slane %v3995, %v3998
        %v4000 = vrot.slane %v3999, 4
        %v4001 = vsel %vm2207, %v4000, %v3993
        %v4002 = vrot.slane %v3993, 4
        %v4003 = vsel %vm2207, %v3999, %v4002
        %v4005 = vunpack.c.l.s4 1934713408
        %v4006 = vunpack.c.0.s8 %v4005
        %v4007 = vperm.slane %v4001, %v4006
        %v4009 = vunpack.c.l.s4 1934713408
        %v4010 = vunpack.c.0.s8 %v4009
        %v4011 = vperm.slane %v4003, %v4010
        %v4012 = vrot.slane %v4007, 4
        %v4013 = vsel %vm2207, 0, %v4012
        %v4014 = vrot.slane %v4011, 4
        %v4015 = vsel %vm2207, 0, %v4014
        %v4016 = vsel %vm2207, %v2369, %v2362
        %v4018 = vunpack.c.l.s4 1983009808
        %v4019 = vunpack.c.0.s8 %v4018
        %v4020 = vperm.slane %v4016, %v4019
        %v4021 = vrot.slane %v2370, 4
        %v4022 = vsel %vm2207, %v4021, %v2368
        %v4024 = vunpack.c.l.s4 1983009808
        %v4025 = vunpack.c.0.s8 %v4024
        %v4026 = vperm.slane %v4022, %v4025
        %v4027 = vrot.slane %v4026, 4
        %v4028 = vsel %vm2207, %v4027, %v4020
        %v4029 = vrot.slane %v4020, 4
        %v4030 = vsel %vm2207, %v4026, %v4029
        %v4032 = vunpack.c.l.s4 1934713408
        %v4033 = vunpack.c.0.s8 %v4032
        %v4034 = vperm.slane %v4028, %v4033
        %v4036 = vunpack.c.l.s4 1934713408
        %v4037 = vunpack.c.0.s8 %v4036
        %v4038 = vperm.slane %v4030, %v4037
        %v4039 = vrot.slane %v4034, 4
        %v4040 = vsel %vm2207, 0, %v4039
        %v4041 = vrot.slane %v4038, 4
        %v4042 = vsel %vm2207, 0, %v4041
        %v4043 = vsel %vm2207, %v2449, %v2442
        %v4045 = vunpack.c.l.s4 1983009808
        %v4046 = vunpack.c.0.s8 %v4045
        %v4047 = vperm.slane %v4043, %v4046
        %v4048 = vrot.slane %v2450, 4
        %v4049 = vsel %vm2207, %v4048, %v2448
        %v4051 = vunpack.c.l.s4 1983009808
        %v4052 = vunpack.c.0.s8 %v4051
        %v4053 = vperm.slane %v4049, %v4052
        %v4054 = vrot.slane %v4053, 4
        %v4055 = vsel %vm2207, %v4054, %v4047
        %v4056 = vrot.slane %v4047, 4
        %v4057 = vsel %vm2207, %v4053, %v4056
        %v4059 = vunpack.c.l.s4 1934713408
        %v4060 = vunpack.c.0.s8 %v4059
        %v4061 = vperm.slane %v4055, %v4060
        %v4063 = vunpack.c.l.s4 1934713408
        %v4064 = vunpack.c.0.s8 %v4063
        %v4065 = vperm.slane %v4057, %v4064
        %v4066 = vrot.slane %v4061, 4
        %v4067 = vsel %vm2207, 0, %v4066
        %v4068 = vrot.slane %v4065, 4
        %v4069 = vsel %vm2207, 0, %v4068
        %v4070 = vsel %vm2207, %v2477, %v2470
        %v4072 = vunpack.c.l.s4 1983009808
        %v4073 = vunpack.c.0.s8 %v4072
        %v4074 = vperm.slane %v4070, %v4073
        %v4075 = vrot.slane %v2478, 4
        %v4076 = vsel %vm2207, %v4075, %v2476
        %v4078 = vunpack.c.l.s4 1983009808
        %v4079 = vunpack.c.0.s8 %v4078
        %v4080 = vperm.slane %v4076, %v4079
        %v4081 = vrot.slane %v4080, 4
        %v4082 = vsel %vm2207, %v4081, %v4074
        %v4083 = vrot.slane %v4074, 4
        %v4084 = vsel %vm2207, %v4080, %v4083
        %v4086 = vunpack.c.l.s4 1934713408
        %v4087 = vunpack.c.0.s8 %v4086
        %v4088 = vperm.slane %v4082, %v4087
        %v4090 = vunpack.c.l.s4 1934713408
        %v4091 = vunpack.c.0.s8 %v4090
        %v4092 = vperm.slane %v4084, %v4091
        %v4093 = vrot.slane %v4088, 4
        %v4094 = vsel %vm2207, 0, %v4093
        %v4095 = vrot.slane %v4092, 4
        %v4096 = vsel %vm2207, 0, %v4095
        %v4097 = vsel %vm2207, %v2557, %v2550
        %v4099 = vunpack.c.l.s4 1983009808
        %v4100 = vunpack.c.0.s8 %v4099
        %v4101 = vperm.slane %v4097, %v4100
        %v4102 = vrot.slane %v2558, 4
        %v4103 = vsel %vm2207, %v4102, %v2556
        %v4105 = vunpack.c.l.s4 1983009808
        %v4106 = vunpack.c.0.s8 %v4105
        %v4107 = vperm.slane %v4103, %v4106
        %v4108 = vrot.slane %v4107, 4
        %v4109 = vsel %vm2207, %v4108, %v4101
        %v4110 = vrot.slane %v4101, 4
        %v4111 = vsel %vm2207, %v4107, %v4110
        %v4113 = vunpack.c.l.s4 1934713408
        %v4114 = vunpack.c.0.s8 %v4113
        %v4115 = vperm.slane %v4109, %v4114
        %v4117 = vunpack.c.l.s4 1934713408
        %v4118 = vunpack.c.0.s8 %v4117
        %v4119 = vperm.slane %v4111, %v4118
        %v4120 = vrot.slane %v4115, 4
        %v4121 = vsel %vm2207, 0, %v4120
        %v4122 = vrot.slane %v4119, 4
        %v4123 = vsel %vm2207, 0, %v4122
        %v4124 = vsel %vm2207, %v2585, %v2578
        %v4126 = vunpack.c.l.s4 1983009808
        %v4127 = vunpack.c.0.s8 %v4126
        %v4128 = vperm.slane %v4124, %v4127
        %v4129 = vrot.slane %v2586, 4
        %v4130 = vsel %vm2207, %v4129, %v2584
        %v4132 = vunpack.c.l.s4 1983009808
        %v4133 = vunpack.c.0.s8 %v4132
        %v4134 = vperm.slane %v4130, %v4133
        %v4135 = vrot.slane %v4134, 4
        %v4136 = vsel %vm2207, %v4135, %v4128
        %v4137 = vrot.slane %v4128, 4
        %v4138 = vsel %vm2207, %v4134, %v4137
        %v4140 = vunpack.c.l.s4 1934713408
        %v4141 = vunpack.c.0.s8 %v4140
        %v4142 = vperm.slane %v4136, %v4141
        %v4144 = vunpack.c.l.s4 1934713408
        %v4145 = vunpack.c.0.s8 %v4144
        %v4146 = vperm.slane %v4138, %v4145
        %v4147 = vrot.slane %v4142, 4
        %v4148 = vsel %vm2207, 0, %v4147
        %v4149 = vrot.slane %v4146, 4
        %v4150 = vsel %vm2207, 0, %v4149
        %v4151 = vsel %vm2207, %v2665, %v2658
        %v4153 = vunpack.c.l.s4 1983009808
        %v4154 = vunpack.c.0.s8 %v4153
        %v4155 = vperm.slane %v4151, %v4154
        %v4156 = vrot.slane %v2666, 4
        %v4157 = vsel %vm2207, %v4156, %v2664
        %v4159 = vunpack.c.l.s4 1983009808
        %v4160 = vunpack.c.0.s8 %v4159
        %v4161 = vperm.slane %v4157, %v4160
        %v4162 = vrot.slane %v4161, 4
        %v4163 = vsel %vm2207, %v4162, %v4155
        %v4164 = vrot.slane %v4155, 4
        %v4165 = vsel %vm2207, %v4161, %v4164
        %v4167 = vunpack.c.l.s4 1934713408
        %v4168 = vunpack.c.0.s8 %v4167
        %v4169 = vperm.slane %v4163, %v4168
        %v4171 = vunpack.c.l.s4 1934713408
        %v4172 = vunpack.c.0.s8 %v4171
        %v4173 = vperm.slane %v4165, %v4172
        %v4174 = vrot.slane %v4169, 4
        %v4175 = vsel %vm2207, 0, %v4174
        %v4176 = vrot.slane %v4173, 4
        %v4177 = vsel %vm2207, 0, %v4176
        %v4178 = vsel %vm2207, %v2693, %v2686
        %v4180 = vunpack.c.l.s4 1983009808
        %v4181 = vunpack.c.0.s8 %v4180
        %v4182 = vperm.slane %v4178, %v4181
        %v4183 = vrot.slane %v2694, 4
        %v4184 = vsel %vm2207, %v4183, %v2692
        %v4186 = vunpack.c.l.s4 1983009808
        %v4187 = vunpack.c.0.s8 %v4186
        %v4188 = vperm.slane %v4184, %v4187
        %v4189 = vrot.slane %v4188, 4
        %v4190 = vsel %vm2207, %v4189, %v4182
        %v4191 = vrot.slane %v4182, 4
        %v4192 = vsel %vm2207, %v4188, %v4191
        %v4194 = vunpack.c.l.s4 1934713408
        %v4195 = vunpack.c.0.s8 %v4194
        %v4196 = vperm.slane %v4190, %v4195
        %v4198 = vunpack.c.l.s4 1934713408
        %v4199 = vunpack.c.0.s8 %v4198
        %v4200 = vperm.slane %v4192, %v4199
        %v4201 = vrot.slane %v4196, 4
        %v4202 = vsel %vm2207, 0, %v4201
        %v4203 = vrot.slane %v4200, 4
        %v4204 = vsel %vm2207, 0, %v4203
        %v4205 = vsel %vm2207, %v2773, %v2766
        %v4207 = vunpack.c.l.s4 1983009808
        %v4208 = vunpack.c.0.s8 %v4207
        %v4209 = vperm.slane %v4205, %v4208
        %v4210 = vrot.slane %v2774, 4
        %v4211 = vsel %vm2207, %v4210, %v2772
        %v4213 = vunpack.c.l.s4 1983009808
        %v4214 = vunpack.c.0.s8 %v4213
        %v4215 = vperm.slane %v4211, %v4214
        %v4216 = vrot.slane %v4215, 4
        %v4217 = vsel %vm2207, %v4216, %v4209
        %v4218 = vrot.slane %v4209, 4
        %v4219 = vsel %vm2207, %v4215, %v4218
        %v4221 = vunpack.c.l.s4 1934713408
        %v4222 = vunpack.c.0.s8 %v4221
        %v4223 = vperm.slane %v4217, %v4222
        %v4225 = vunpack.c.l.s4 1934713408
        %v4226 = vunpack.c.0.s8 %v4225
        %v4227 = vperm.slane %v4219, %v4226
        %v4228 = vrot.slane %v4223, 4
        %v4229 = vsel %vm2207, 0, %v4228
        %v4230 = vrot.slane %v4227, 4
        %v4231 = vsel %vm2207, 0, %v4230
        %v4232 = vsel %vm2207, %v2801, %v2794
        %v4234 = vunpack.c.l.s4 1983009808
        %v4235 = vunpack.c.0.s8 %v4234
        %v4236 = vperm.slane %v4232, %v4235
        %v4237 = vrot.slane %v2802, 4
        %v4238 = vsel %vm2207, %v4237, %v2800
        %v4240 = vunpack.c.l.s4 1983009808
        %v4241 = vunpack.c.0.s8 %v4240
        %v4242 = vperm.slane %v4238, %v4241
        %v4243 = vrot.slane %v4242, 4
        %v4244 = vsel %vm2207, %v4243, %v4236
        %v4245 = vrot.slane %v4236, 4
        %v4246 = vsel %vm2207, %v4242, %v4245
        %v4248 = vunpack.c.l.s4 1934713408
        %v4249 = vunpack.c.0.s8 %v4248
        %v4250 = vperm.slane %v4244, %v4249
        %v4252 = vunpack.c.l.s4 1934713408
        %v4253 = vunpack.c.0.s8 %v4252
        %v4254 = vperm.slane %v4246, %v4253
        %v4255 = vrot.slane %v4250, 4
        %v4256 = vsel %vm2207, 0, %v4255
        %v4257 = vrot.slane %v4254, 4
        %v4258 = vsel %vm2207, 0, %v4257
        %v4259 = vsel %vm2207, %v2881, %v2874
        %v4261 = vunpack.c.l.s4 1983009808
        %v4262 = vunpack.c.0.s8 %v4261
        %v4263 = vperm.slane %v4259, %v4262
        %v4264 = vrot.slane %v2882, 4
        %v4265 = vsel %vm2207, %v4264, %v2880
        %v4267 = vunpack.c.l.s4 1983009808
        %v4268 = vunpack.c.0.s8 %v4267
        %v4269 = vperm.slane %v4265, %v4268
        %v4270 = vrot.slane %v4269, 4
        %v4271 = vsel %vm2207, %v4270, %v4263
        %v4272 = vrot.slane %v4263, 4
        %v4273 = vsel %vm2207, %v4269, %v4272
        %v4275 = vunpack.c.l.s4 1934713408
        %v4276 = vunpack.c.0.s8 %v4275
        %v4277 = vperm.slane %v4271, %v4276
        %v4279 = vunpack.c.l.s4 1934713408
        %v4280 = vunpack.c.0.s8 %v4279
        %v4281 = vperm.slane %v4273, %v4280
        %v4282 = vrot.slane %v4277, 4
        %v4283 = vsel %vm2207, 0, %v4282
        %v4284 = vrot.slane %v4281, 4
        %v4285 = vsel %vm2207, 0, %v4284
        %v4286 = vsel %vm2207, %v2909, %v2902
        %v4288 = vunpack.c.l.s4 1983009808
        %v4289 = vunpack.c.0.s8 %v4288
        %v4290 = vperm.slane %v4286, %v4289
        %v4291 = vrot.slane %v2910, 4
        %v4292 = vsel %vm2207, %v4291, %v2908
        %v4294 = vunpack.c.l.s4 1983009808
        %v4295 = vunpack.c.0.s8 %v4294
        %v4296 = vperm.slane %v4292, %v4295
        %v4297 = vrot.slane %v4296, 4
        %v4298 = vsel %vm2207, %v4297, %v4290
        %v4299 = vrot.slane %v4290, 4
        %v4300 = vsel %vm2207, %v4296, %v4299
        %v4302 = vunpack.c.l.s4 1934713408
        %v4303 = vunpack.c.0.s8 %v4302
        %v4304 = vperm.slane %v4298, %v4303
        %v4306 = vunpack.c.l.s4 1934713408
        %v4307 = vunpack.c.0.s8 %v4306
        %v4308 = vperm.slane %v4300, %v4307
        %v4309 = vrot.slane %v4304, 4
        %v4310 = vsel %vm2207, 0, %v4309
        %v4311 = vrot.slane %v4308, 4
        %v4312 = vsel %vm2207, 0, %v4311
        %v4313 = vsel %vm2207, %v2989, %v2982
        %v4315 = vunpack.c.l.s4 1983009808
        %v4316 = vunpack.c.0.s8 %v4315
        %v4317 = vperm.slane %v4313, %v4316
        %v4318 = vrot.slane %v2990, 4
        %v4319 = vsel %vm2207, %v4318, %v2988
        %v4321 = vunpack.c.l.s4 1983009808
        %v4322 = vunpack.c.0.s8 %v4321
        %v4323 = vperm.slane %v4319, %v4322
        %v4324 = vrot.slane %v4323, 4
        %v4325 = vsel %vm2207, %v4324, %v4317
        %v4326 = vrot.slane %v4317, 4
        %v4327 = vsel %vm2207, %v4323, %v4326
        %v4329 = vunpack.c.l.s4 1934713408
        %v4330 = vunpack.c.0.s8 %v4329
        %v4331 = vperm.slane %v4325, %v4330
        %v4333 = vunpack.c.l.s4 1934713408
        %v4334 = vunpack.c.0.s8 %v4333
        %v4335 = vperm.slane %v4327, %v4334
        %v4336 = vrot.slane %v4331, 4
        %v4337 = vsel %vm2207, 0, %v4336
        %v4338 = vrot.slane %v4335, 4
        %v4339 = vsel %vm2207, 0, %v4338
        %v4340 = vsel %vm2207, %v3017, %v3010
        %v4342 = vunpack.c.l.s4 1983009808
        %v4343 = vunpack.c.0.s8 %v4342
        %v4344 = vperm.slane %v4340, %v4343
        %v4345 = vrot.slane %v3018, 4
        %v4346 = vsel %vm2207, %v4345, %v3016
        %v4348 = vunpack.c.l.s4 1983009808
        %v4349 = vunpack.c.0.s8 %v4348
        %v4350 = vperm.slane %v4346, %v4349
        %v4351 = vrot.slane %v4350, 4
        %v4352 = vsel %vm2207, %v4351, %v4344
        %v4353 = vrot.slane %v4344, 4
        %v4354 = vsel %vm2207, %v4350, %v4353
        %v4356 = vunpack.c.l.s4 1934713408
        %v4357 = vunpack.c.0.s8 %v4356
        %v4358 = vperm.slane %v4352, %v4357
        %v4360 = vunpack.c.l.s4 1934713408
        %v4361 = vunpack.c.0.s8 %v4360
        %v4362 = vperm.slane %v4354, %v4361
        %v4363 = vrot.slane %v4358, 4
        %v4364 = vsel %vm2207, 0, %v4363
        %v4365 = vrot.slane %v4362, 4
        %v4366 = vsel %vm2207, 0, %v4365
        %v4367 = vsel %vm2207, %v3097, %v3090
        %v4369 = vunpack.c.l.s4 1983009808
        %v4370 = vunpack.c.0.s8 %v4369
        %v4371 = vperm.slane %v4367, %v4370
        %v4372 = vrot.slane %v3098, 4
        %v4373 = vsel %vm2207, %v4372, %v3096
        %v4375 = vunpack.c.l.s4 1983009808
        %v4376 = vunpack.c.0.s8 %v4375
        %v4377 = vperm.slane %v4373, %v4376
        %v4378 = vrot.slane %v4377, 4
        %v4379 = vsel %vm2207, %v4378, %v4371
        %v4380 = vrot.slane %v4371, 4
        %v4381 = vsel %vm2207, %v4377, %v4380
        %v4383 = vunpack.c.l.s4 1934713408
        %v4384 = vunpack.c.0.s8 %v4383
        %v4385 = vperm.slane %v4379, %v4384
        %v4387 = vunpack.c.l.s4 1934713408
        %v4388 = vunpack.c.0.s8 %v4387
        %v4389 = vperm.slane %v4381, %v4388
        %v4390 = vrot.slane %v4385, 4
        %v4391 = vsel %vm2207, 0, %v4390
        %v4392 = vrot.slane %v4389, 4
        %v4393 = vsel %vm2207, 0, %v4392
        %v4394 = vsel %vm2207, %v3125, %v3118
        %v4396 = vunpack.c.l.s4 1983009808
        %v4397 = vunpack.c.0.s8 %v4396
        %v4398 = vperm.slane %v4394, %v4397
        %v4399 = vrot.slane %v3126, 4
        %v4400 = vsel %vm2207, %v4399, %v3124
        %v4402 = vunpack.c.l.s4 1983009808
        %v4403 = vunpack.c.0.s8 %v4402
        %v4404 = vperm.slane %v4400, %v4403
        %v4405 = vrot.slane %v4404, 4
        %v4406 = vsel %vm2207, %v4405, %v4398
        %v4407 = vrot.slane %v4398, 4
        %v4408 = vsel %vm2207, %v4404, %v4407
        %v4410 = vunpack.c.l.s4 1934713408
        %v4411 = vunpack.c.0.s8 %v4410
        %v4412 = vperm.slane %v4406, %v4411
        %v4414 = vunpack.c.l.s4 1934713408
        %v4415 = vunpack.c.0.s8 %v4414
        %v4416 = vperm.slane %v4408, %v4415
        %v4417 = vrot.slane %v4412, 4
        %v4418 = vsel %vm2207, 0, %v4417
        %v4419 = vrot.slane %v4416, 4
        %v4420 = vsel %vm2207, 0, %v4419
        %v4421 = vsel %vm2207, %v3205, %v3198
        %v4423 = vunpack.c.l.s4 1983009808
        %v4424 = vunpack.c.0.s8 %v4423
        %v4425 = vperm.slane %v4421, %v4424
        %v4426 = vrot.slane %v3206, 4
        %v4427 = vsel %vm2207, %v4426, %v3204
        %v4429 = vunpack.c.l.s4 1983009808
        %v4430 = vunpack.c.0.s8 %v4429
        %v4431 = vperm.slane %v4427, %v4430
        %v4432 = vrot.slane %v4431, 4
        %v4433 = vsel %vm2207, %v4432, %v4425
        %v4434 = vrot.slane %v4425, 4
        %v4435 = vsel %vm2207, %v4431, %v4434
        %v4437 = vunpack.c.l.s4 1934713408
        %v4438 = vunpack.c.0.s8 %v4437
        %v4439 = vperm.slane %v4433, %v4438
        %v4441 = vunpack.c.l.s4 1934713408
        %v4442 = vunpack.c.0.s8 %v4441
        %v4443 = vperm.slane %v4435, %v4442
        %v4444 = vrot.slane %v4439, 4
        %v4445 = vsel %vm2207, 0, %v4444
        %v4446 = vrot.slane %v4443, 4
        %v4447 = vsel %vm2207, 0, %v4446
        %v4448 = vsel %vm2207, %v3233, %v3226
        %v4450 = vunpack.c.l.s4 1983009808
        %v4451 = vunpack.c.0.s8 %v4450
        %v4452 = vperm.slane %v4448, %v4451
        %v4453 = vrot.slane %v3234, 4
        %v4454 = vsel %vm2207, %v4453, %v3232
        %v4456 = vunpack.c.l.s4 1983009808
        %v4457 = vunpack.c.0.s8 %v4456
        %v4458 = vperm.slane %v4454, %v4457
        %v4459 = vrot.slane %v4458, 4
        %v4460 = vsel %vm2207, %v4459, %v4452
        %v4461 = vrot.slane %v4452, 4
        %v4462 = vsel %vm2207, %v4458, %v4461
        %v4464 = vunpack.c.l.s4 1934713408
        %v4465 = vunpack.c.0.s8 %v4464
        %v4466 = vperm.slane %v4460, %v4465
        %v4468 = vunpack.c.l.s4 1934713408
        %v4469 = vunpack.c.0.s8 %v4468
        %v4470 = vperm.slane %v4462, %v4469
        %v4471 = vrot.slane %v4466, 4
        %v4472 = vsel %vm2207, 0, %v4471
        %v4473 = vrot.slane %v4470, 4
        %v4474 = vsel %vm2207, 0, %v4473
        %v4475 = vsel %vm2207, %v3313, %v3306
        %v4477 = vunpack.c.l.s4 1983009808
        %v4478 = vunpack.c.0.s8 %v4477
        %v4479 = vperm.slane %v4475, %v4478
        %v4480 = vrot.slane %v3314, 4
        %v4481 = vsel %vm2207, %v4480, %v3312
        %v4483 = vunpack.c.l.s4 1983009808
        %v4484 = vunpack.c.0.s8 %v4483
        %v4485 = vperm.slane %v4481, %v4484
        %v4486 = vrot.slane %v4485, 4
        %v4487 = vsel %vm2207, %v4486, %v4479
        %v4488 = vrot.slane %v4479, 4
        %v4489 = vsel %vm2207, %v4485, %v4488
        %v4491 = vunpack.c.l.s4 1934713408
        %v4492 = vunpack.c.0.s8 %v4491
        %v4493 = vperm.slane %v4487, %v4492
        %v4495 = vunpack.c.l.s4 1934713408
        %v4496 = vunpack.c.0.s8 %v4495
        %v4497 = vperm.slane %v4489, %v4496
        %v4498 = vrot.slane %v4493, 4
        %v4499 = vsel %vm2207, 0, %v4498
        %v4500 = vrot.slane %v4497, 4
        %v4501 = vsel %vm2207, 0, %v4500
        %v4502 = vsel %vm2207, %v3341, %v3334
        %v4504 = vunpack.c.l.s4 1983009808
        %v4505 = vunpack.c.0.s8 %v4504
        %v4506 = vperm.slane %v4502, %v4505
        %v4507 = vrot.slane %v3342, 4
        %v4508 = vsel %vm2207, %v4507, %v3340
        %v4510 = vunpack.c.l.s4 1983009808
        %v4511 = vunpack.c.0.s8 %v4510
        %v4512 = vperm.slane %v4508, %v4511
        %v4513 = vrot.slane %v4512, 4
        %v4514 = vsel %vm2207, %v4513, %v4506
        %v4515 = vrot.slane %v4506, 4
        %v4516 = vsel %vm2207, %v4512, %v4515
        %v4518 = vunpack.c.l.s4 1934713408
        %v4519 = vunpack.c.0.s8 %v4518
        %v4520 = vperm.slane %v4514, %v4519
        %v4522 = vunpack.c.l.s4 1934713408
        %v4523 = vunpack.c.0.s8 %v4522
        %v4524 = vperm.slane %v4516, %v4523
        %v4525 = vrot.slane %v4520, 4
        %v4526 = vsel %vm2207, 0, %v4525
        %v4527 = vrot.slane %v4524, 4
        %v4528 = vsel %vm2207, 0, %v4527
        %v4529 = vsel %vm2207, %v3421, %v3414
        %v4531 = vunpack.c.l.s4 1983009808
        %v4532 = vunpack.c.0.s8 %v4531
        %v4533 = vperm.slane %v4529, %v4532
        %v4534 = vrot.slane %v3422, 4
        %v4535 = vsel %vm2207, %v4534, %v3420
        %v4537 = vunpack.c.l.s4 1983009808
        %v4538 = vunpack.c.0.s8 %v4537
        %v4539 = vperm.slane %v4535, %v4538
        %v4540 = vrot.slane %v4539, 4
        %v4541 = vsel %vm2207, %v4540, %v4533
        %v4542 = vrot.slane %v4533, 4
        %v4543 = vsel %vm2207, %v4539, %v4542
        %v4545 = vunpack.c.l.s4 1934713408
        %v4546 = vunpack.c.0.s8 %v4545
        %v4547 = vperm.slane %v4541, %v4546
        %v4549 = vunpack.c.l.s4 1934713408
        %v4550 = vunpack.c.0.s8 %v4549
        %v4551 = vperm.slane %v4543, %v4550
        %v4552 = vrot.slane %v4547, 4
        %v4553 = vsel %vm2207, 0, %v4552
        %v4554 = vrot.slane %v4551, 4
        %v4555 = vsel %vm2207, 0, %v4554
        %v4556 = vsel %vm2207, %v3449, %v3442
        %v4558 = vunpack.c.l.s4 1983009808
        %v4559 = vunpack.c.0.s8 %v4558
        %v4560 = vperm.slane %v4556, %v4559
        %v4561 = vrot.slane %v3450, 4
        %v4562 = vsel %vm2207, %v4561, %v3448
        %v4564 = vunpack.c.l.s4 1983009808
        %v4565 = vunpack.c.0.s8 %v4564
        %v4566 = vperm.slane %v4562, %v4565
        %v4567 = vrot.slane %v4566, 4
        %v4568 = vsel %vm2207, %v4567, %v4560
        %v4569 = vrot.slane %v4560, 4
        %v4570 = vsel %vm2207, %v4566, %v4569
        %v4572 = vunpack.c.l.s4 1934713408
        %v4573 = vunpack.c.0.s8 %v4572
        %v4574 = vperm.slane %v4568, %v4573
        %v4576 = vunpack.c.l.s4 1934713408
        %v4577 = vunpack.c.0.s8 %v4576
        %v4578 = vperm.slane %v4570, %v4577
        %v4579 = vrot.slane %v4574, 4
        %v4580 = vsel %vm2207, 0, %v4579
        %v4581 = vrot.slane %v4578, 4
        %v4582 = vsel %vm2207, 0, %v4581
        %v4583 = vsel %vm2207, %v3529, %v3522
        %v4585 = vunpack.c.l.s4 1983009808
        %v4586 = vunpack.c.0.s8 %v4585
        %v4587 = vperm.slane %v4583, %v4586
        %v4588 = vrot.slane %v3530, 4
        %v4589 = vsel %vm2207, %v4588, %v3528
        %v4591 = vunpack.c.l.s4 1983009808
        %v4592 = vunpack.c.0.s8 %v4591
        %v4593 = vperm.slane %v4589, %v4592
        %v4594 = vrot.slane %v4593, 4
        %v4595 = vsel %vm2207, %v4594, %v4587
        %v4596 = vrot.slane %v4587, 4
        %v4597 = vsel %vm2207, %v4593, %v4596
        %v4599 = vunpack.c.l.s4 1934713408
        %v4600 = vunpack.c.0.s8 %v4599
        %v4601 = vperm.slane %v4595, %v4600
        %v4603 = vunpack.c.l.s4 1934713408
        %v4604 = vunpack.c.0.s8 %v4603
        %v4605 = vperm.slane %v4597, %v4604
        %v4606 = vrot.slane %v4601, 4
        %v4607 = vsel %vm2207, 0, %v4606
        %v4608 = vrot.slane %v4605, 4
        %v4609 = vsel %vm2207, 0, %v4608
        %v4610 = vsel %vm2207, %v3557, %v3550
        %v4612 = vunpack.c.l.s4 1983009808
        %v4613 = vunpack.c.0.s8 %v4612
        %v4614 = vperm.slane %v4610, %v4613
        %v4615 = vrot.slane %v3558, 4
        %v4616 = vsel %vm2207, %v4615, %v3556
        %v4618 = vunpack.c.l.s4 1983009808
        %v4619 = vunpack.c.0.s8 %v4618
        %v4620 = vperm.slane %v4616, %v4619
        %v4621 = vrot.slane %v4620, 4
        %v4622 = vsel %vm2207, %v4621, %v4614
        %v4623 = vrot.slane %v4614, 4
        %v4624 = vsel %vm2207, %v4620, %v4623
        %v4626 = vunpack.c.l.s4 1934713408
        %v4627 = vunpack.c.0.s8 %v4626
        %v4628 = vperm.slane %v4622, %v4627
        %v4630 = vunpack.c.l.s4 1934713408
        %v4631 = vunpack.c.0.s8 %v4630
        %v4632 = vperm.slane %v4624, %v4631
        %v4633 = vrot.slane %v4628, 4
        %v4634 = vsel %vm2207, 0, %v4633
        %v4635 = vrot.slane %v4632, 4
        %v4636 = vsel %vm2207, 0, %v4635
        %v4637 = vsel %vm2207, %v3637, %v3630
        %v4639 = vunpack.c.l.s4 1983009808
        %v4640 = vunpack.c.0.s8 %v4639
        %v4641 = vperm.slane %v4637, %v4640
        %v4642 = vrot.slane %v3638, 4
        %v4643 = vsel %vm2207, %v4642, %v3636
        %v4645 = vunpack.c.l.s4 1983009808
        %v4646 = vunpack.c.0.s8 %v4645
        %v4647 = vperm.slane %v4643, %v4646
        %v4648 = vrot.slane %v4647, 4
        %v4649 = vsel %vm2207, %v4648, %v4641
        %v4650 = vrot.slane %v4641, 4
        %v4651 = vsel %vm2207, %v4647, %v4650
        %v4653 = vunpack.c.l.s4 1934713408
        %v4654 = vunpack.c.0.s8 %v4653
        %v4655 = vperm.slane %v4649, %v4654
        %v4657 = vunpack.c.l.s4 1934713408
        %v4658 = vunpack.c.0.s8 %v4657
        %v4659 = vperm.slane %v4651, %v4658
        %v4660 = vrot.slane %v4655, 4
        %v4661 = vsel %vm2207, 0, %v4660
        %v4662 = vrot.slane %v4659, 4
        %v4663 = vsel %vm2207, 0, %v4662
        %v4664 = vsel %vm2207, %v3665, %v3658
        %v4666 = vunpack.c.l.s4 1983009808
        %v4667 = vunpack.c.0.s8 %v4666
        %v4668 = vperm.slane %v4664, %v4667
        %v4669 = vrot.slane %v3666, 4
        %v4670 = vsel %vm2207, %v4669, %v3664
        %v4672 = vunpack.c.l.s4 1983009808
        %v4673 = vunpack.c.0.s8 %v4672
        %v4674 = vperm.slane %v4670, %v4673
        %v4675 = vrot.slane %v4674, 4
        %v4676 = vsel %vm2207, %v4675, %v4668
        %v4677 = vrot.slane %v4668, 4
        %v4678 = vsel %vm2207, %v4674, %v4677
        %v4680 = vunpack.c.l.s4 1934713408
        %v4681 = vunpack.c.0.s8 %v4680
        %v4682 = vperm.slane %v4676, %v4681
        %v4684 = vunpack.c.l.s4 1934713408
        %v4685 = vunpack.c.0.s8 %v4684
        %v4686 = vperm.slane %v4678, %v4685
        %v4687 = vrot.slane %v4682, 4
        %v4688 = vsel %vm2207, 0, %v4687
        %v4689 = vrot.slane %v4686, 4
        %v4690 = vsel %vm2207, 0, %v4689
        %v4691 = vsel %vm2207, %v3745, %v3738
        %v4693 = vunpack.c.l.s4 1983009808
        %v4694 = vunpack.c.0.s8 %v4693
        %v4695 = vperm.slane %v4691, %v4694
        %v4696 = vrot.slane %v3746, 4
        %v4697 = vsel %vm2207, %v4696, %v3744
        %v4699 = vunpack.c.l.s4 1983009808
        %v4700 = vunpack.c.0.s8 %v4699
        %v4701 = vperm.slane %v4697, %v4700
        %v4702 = vrot.slane %v4701, 4
        %v4703 = vsel %vm2207, %v4702, %v4695
        %v4704 = vrot.slane %v4695, 4
        %v4705 = vsel %vm2207, %v4701, %v4704
        %v4707 = vunpack.c.l.s4 1934713408
        %v4708 = vunpack.c.0.s8 %v4707
        %v4709 = vperm.slane %v4703, %v4708
        %v4711 = vunpack.c.l.s4 1934713408
        %v4712 = vunpack.c.0.s8 %v4711
        %v4713 = vperm.slane %v4705, %v4712
        %v4714 = vrot.slane %v4709, 4
        %v4715 = vsel %vm2207, 0, %v4714
        %v4716 = vrot.slane %v4713, 4
        %v4717 = vsel %vm2207, 0, %v4716
        %v4718 = vsel %vm2207, %v3773, %v3766
        %v4720 = vunpack.c.l.s4 1983009808
        %v4721 = vunpack.c.0.s8 %v4720
        %v4722 = vperm.slane %v4718, %v4721
        %v4723 = vrot.slane %v3774, 4
        %v4724 = vsel %vm2207, %v4723, %v3772
        %v4726 = vunpack.c.l.s4 1983009808
        %v4727 = vunpack.c.0.s8 %v4726
        %v4728 = vperm.slane %v4724, %v4727
        %v4729 = vrot.slane %v4728, 4
        %v4730 = vsel %vm2207, %v4729, %v4722
        %v4731 = vrot.slane %v4722, 4
        %v4732 = vsel %vm2207, %v4728, %v4731
        %v4734 = vunpack.c.l.s4 1934713408
        %v4735 = vunpack.c.0.s8 %v4734
        %v4736 = vperm.slane %v4730, %v4735
        %v4738 = vunpack.c.l.s4 1934713408
        %v4739 = vunpack.c.0.s8 %v4738
        %v4740 = vperm.slane %v4732, %v4739
        %v4741 = vrot.slane %v4736, 4
        %v4742 = vsel %vm2207, 0, %v4741
        %v4743 = vrot.slane %v4740, 4
        %v4744 = vsel %vm2207, 0, %v4743
        %v4745 = vsel %vm2207, %v3853, %v3846
        %v4747 = vunpack.c.l.s4 1983009808
        %v4748 = vunpack.c.0.s8 %v4747
        %v4749 = vperm.slane %v4745, %v4748
        %v4750 = vrot.slane %v3854, 4
        %v4751 = vsel %vm2207, %v4750, %v3852
        %v4753 = vunpack.c.l.s4 1983009808
        %v4754 = vunpack.c.0.s8 %v4753
        %v4755 = vperm.slane %v4751, %v4754
        %v4756 = vrot.slane %v4755, 4
        %v4757 = vsel %vm2207, %v4756, %v4749
        %v4758 = vrot.slane %v4749, 4
        %v4759 = vsel %vm2207, %v4755, %v4758
        %v4761 = vunpack.c.l.s4 1934713408
        %v4762 = vunpack.c.0.s8 %v4761
        %v4763 = vperm.slane %v4757, %v4762
        %v4765 = vunpack.c.l.s4 1934713408
        %v4766 = vunpack.c.0.s8 %v4765
        %v4767 = vperm.slane %v4759, %v4766
        %v4768 = vrot.slane %v4763, 4
        %v4769 = vsel %vm2207, 0, %v4768
        %v4770 = vrot.slane %v4767, 4
        %v4771 = vsel %vm2207, 0, %v4770
        %v4772 = vsel %vm2207, %v3881, %v3874
        %v4774 = vunpack.c.l.s4 1983009808
        %v4775 = vunpack.c.0.s8 %v4774
        %v4776 = vperm.slane %v4772, %v4775
        %v4777 = vrot.slane %v3882, 4
        %v4778 = vsel %vm2207, %v4777, %v3880
        %v4780 = vunpack.c.l.s4 1983009808
        %v4781 = vunpack.c.0.s8 %v4780
        %v4782 = vperm.slane %v4778, %v4781
        %v4783 = vrot.slane %v4782, 4
        %v4784 = vsel %vm2207, %v4783, %v4776
        %v4785 = vrot.slane %v4776, 4
        %v4786 = vsel %vm2207, %v4782, %v4785
        %v4788 = vunpack.c.l.s4 1934713408
        %v4789 = vunpack.c.0.s8 %v4788
        %v4790 = vperm.slane %v4784, %v4789
        %v4792 = vunpack.c.l.s4 1934713408
        %v4793 = vunpack.c.0.s8 %v4792
        %v4794 = vperm.slane %v4786, %v4793
        %v4795 = vrot.slane %v4790, 4
        %v4796 = vsel %vm2207, 0, %v4795
        %v4797 = vrot.slane %v4794, 4
        %v4798 = vsel %vm2207, 0, %v4797
        %v4799 = vsel %vm2207, %v2287, %v2280
        %v4801 = vunpack.c.l.s4 1983009808
        %v4802 = vunpack.c.0.s8 %v4801
        %v4803 = vperm.slane %v4799, %v4802
        %v4804 = vrot.slane %v2288, 4
        %v4805 = vsel %vm2207, %v4804, %v2286
        %v4807 = vunpack.c.l.s4 1983009808
        %v4808 = vunpack.c.0.s8 %v4807
        %v4809 = vperm.slane %v4805, %v4808
        %v4810 = vrot.slane %v4809, 4
        %v4811 = vsel %vm2207, %v4810, %v4803
        %v4813 = vunpack.c.l.s4 1934713408
        %v4814 = vunpack.c.0.s8 %v4813
        %v4815 = vperm.slane %v4811, %v4814
        %v4816 = vrot.slane %v4815, 4
        %v4817 = vsel %vm2207, 0, %v4816
        %v4818 = vsel %vm2207, %v2313, %v2306
        %v4820 = vunpack.c.l.s4 1983009808
        %v4821 = vunpack.c.0.s8 %v4820
        %v4822 = vperm.slane %v4818, %v4821
        %v4823 = vrot.slane %v2314, 4
        %v4824 = vsel %vm2207, %v4823, %v2312
        %v4826 = vunpack.c.l.s4 1983009808
        %v4827 = vunpack.c.0.s8 %v4826
        %v4828 = vperm.slane %v4824, %v4827
        %v4829 = vrot.slane %v4828, 4
        %v4830 = vsel %vm2207, %v4829, %v4822
        %v4832 = vunpack.c.l.s4 1934713408
        %v4833 = vunpack.c.0.s8 %v4832
        %v4834 = vperm.slane %v4830, %v4833
        %v4835 = vrot.slane %v4834, 4
        %v4836 = vsel %vm2207, 0, %v4835
        %v4837 = vsel %vm2207, %v2395, %v2388
        %v4839 = vunpack.c.l.s4 1983009808
        %v4840 = vunpack.c.0.s8 %v4839
        %v4841 = vperm.slane %v4837, %v4840
        %v4842 = vrot.slane %v2396, 4
        %v4843 = vsel %vm2207, %v4842, %v2394
        %v4845 = vunpack.c.l.s4 1983009808
        %v4846 = vunpack.c.0.s8 %v4845
        %v4847 = vperm.slane %v4843, %v4846
        %v4848 = vrot.slane %v4847, 4
        %v4849 = vsel %vm2207, %v4848, %v4841
        %v4851 = vunpack.c.l.s4 1934713408
        %v4852 = vunpack.c.0.s8 %v4851
        %v4853 = vperm.slane %v4849, %v4852
        %v4854 = vrot.slane %v4853, 4
        %v4855 = vsel %vm2207, 0, %v4854
        %v4856 = vsel %vm2207, %v2421, %v2414
        %v4858 = vunpack.c.l.s4 1983009808
        %v4859 = vunpack.c.0.s8 %v4858
        %v4860 = vperm.slane %v4856, %v4859
        %v4861 = vrot.slane %v2422, 4
        %v4862 = vsel %vm2207, %v4861, %v2420
        %v4864 = vunpack.c.l.s4 1983009808
        %v4865 = vunpack.c.0.s8 %v4864
        %v4866 = vperm.slane %v4862, %v4865
        %v4867 = vrot.slane %v4866, 4
        %v4868 = vsel %vm2207, %v4867, %v4860
        %v4870 = vunpack.c.l.s4 1934713408
        %v4871 = vunpack.c.0.s8 %v4870
        %v4872 = vperm.slane %v4868, %v4871
        %v4873 = vrot.slane %v4872, 4
        %v4874 = vsel %vm2207, 0, %v4873
        %v4875 = vsel %vm2207, %v2503, %v2496
        %v4877 = vunpack.c.l.s4 1983009808
        %v4878 = vunpack.c.0.s8 %v4877
        %v4879 = vperm.slane %v4875, %v4878
        %v4880 = vrot.slane %v2504, 4
        %v4881 = vsel %vm2207, %v4880, %v2502
        %v4883 = vunpack.c.l.s4 1983009808
        %v4884 = vunpack.c.0.s8 %v4883
        %v4885 = vperm.slane %v4881, %v4884
        %v4886 = vrot.slane %v4885, 4
        %v4887 = vsel %vm2207, %v4886, %v4879
        %v4889 = vunpack.c.l.s4 1934713408
        %v4890 = vunpack.c.0.s8 %v4889
        %v4891 = vperm.slane %v4887, %v4890
        %v4892 = vrot.slane %v4891, 4
        %v4893 = vsel %vm2207, 0, %v4892
        %v4894 = vsel %vm2207, %v2529, %v2522
        %v4896 = vunpack.c.l.s4 1983009808
        %v4897 = vunpack.c.0.s8 %v4896
        %v4898 = vperm.slane %v4894, %v4897
        %v4899 = vrot.slane %v2530, 4
        %v4900 = vsel %vm2207, %v4899, %v2528
        %v4902 = vunpack.c.l.s4 1983009808
        %v4903 = vunpack.c.0.s8 %v4902
        %v4904 = vperm.slane %v4900, %v4903
        %v4905 = vrot.slane %v4904, 4
        %v4906 = vsel %vm2207, %v4905, %v4898
        %v4908 = vunpack.c.l.s4 1934713408
        %v4909 = vunpack.c.0.s8 %v4908
        %v4910 = vperm.slane %v4906, %v4909
        %v4911 = vrot.slane %v4910, 4
        %v4912 = vsel %vm2207, 0, %v4911
        %v4913 = vsel %vm2207, %v2611, %v2604
        %v4915 = vunpack.c.l.s4 1983009808
        %v4916 = vunpack.c.0.s8 %v4915
        %v4917 = vperm.slane %v4913, %v4916
        %v4918 = vrot.slane %v2612, 4
        %v4919 = vsel %vm2207, %v4918, %v2610
        %v4921 = vunpack.c.l.s4 1983009808
        %v4922 = vunpack.c.0.s8 %v4921
        %v4923 = vperm.slane %v4919, %v4922
        %v4924 = vrot.slane %v4923, 4
        %v4925 = vsel %vm2207, %v4924, %v4917
        %v4927 = vunpack.c.l.s4 1934713408
        %v4928 = vunpack.c.0.s8 %v4927
        %v4929 = vperm.slane %v4925, %v4928
        %v4930 = vrot.slane %v4929, 4
        %v4931 = vsel %vm2207, 0, %v4930
        %v4932 = vsel %vm2207, %v2637, %v2630
        %v4934 = vunpack.c.l.s4 1983009808
        %v4935 = vunpack.c.0.s8 %v4934
        %v4936 = vperm.slane %v4932, %v4935
        %v4937 = vrot.slane %v2638, 4
        %v4938 = vsel %vm2207, %v4937, %v2636
        %v4940 = vunpack.c.l.s4 1983009808
        %v4941 = vunpack.c.0.s8 %v4940
        %v4942 = vperm.slane %v4938, %v4941
        %v4943 = vrot.slane %v4942, 4
        %v4944 = vsel %vm2207, %v4943, %v4936
        %v4946 = vunpack.c.l.s4 1934713408
        %v4947 = vunpack.c.0.s8 %v4946
        %v4948 = vperm.slane %v4944, %v4947
        %v4949 = vrot.slane %v4948, 4
        %v4950 = vsel %vm2207, 0, %v4949
        %v4951 = vsel %vm2207, %v2719, %v2712
        %v4953 = vunpack.c.l.s4 1983009808
        %v4954 = vunpack.c.0.s8 %v4953
        %v4955 = vperm.slane %v4951, %v4954
        %v4956 = vrot.slane %v2720, 4
        %v4957 = vsel %vm2207, %v4956, %v2718
        %v4959 = vunpack.c.l.s4 1983009808
        %v4960 = vunpack.c.0.s8 %v4959
        %v4961 = vperm.slane %v4957, %v4960
        %v4962 = vrot.slane %v4961, 4
        %v4963 = vsel %vm2207, %v4962, %v4955
        %v4965 = vunpack.c.l.s4 1934713408
        %v4966 = vunpack.c.0.s8 %v4965
        %v4967 = vperm.slane %v4963, %v4966
        %v4968 = vrot.slane %v4967, 4
        %v4969 = vsel %vm2207, 0, %v4968
        %v4970 = vsel %vm2207, %v2745, %v2738
        %v4972 = vunpack.c.l.s4 1983009808
        %v4973 = vunpack.c.0.s8 %v4972
        %v4974 = vperm.slane %v4970, %v4973
        %v4975 = vrot.slane %v2746, 4
        %v4976 = vsel %vm2207, %v4975, %v2744
        %v4978 = vunpack.c.l.s4 1983009808
        %v4979 = vunpack.c.0.s8 %v4978
        %v4980 = vperm.slane %v4976, %v4979
        %v4981 = vrot.slane %v4980, 4
        %v4982 = vsel %vm2207, %v4981, %v4974
        %v4984 = vunpack.c.l.s4 1934713408
        %v4985 = vunpack.c.0.s8 %v4984
        %v4986 = vperm.slane %v4982, %v4985
        %v4987 = vrot.slane %v4986, 4
        %v4988 = vsel %vm2207, 0, %v4987
        %v4989 = vsel %vm2207, %v2827, %v2820
        %v4991 = vunpack.c.l.s4 1983009808
        %v4992 = vunpack.c.0.s8 %v4991
        %v4993 = vperm.slane %v4989, %v4992
        %v4994 = vrot.slane %v2828, 4
        %v4995 = vsel %vm2207, %v4994, %v2826
        %v4997 = vunpack.c.l.s4 1983009808
        %v4998 = vunpack.c.0.s8 %v4997
        %v4999 = vperm.slane %v4995, %v4998
        %v5000 = vrot.slane %v4999, 4
        %v5001 = vsel %vm2207, %v5000, %v4993
        %v5003 = vunpack.c.l.s4 1934713408
        %v5004 = vunpack.c.0.s8 %v5003
        %v5005 = vperm.slane %v5001, %v5004
        %v5006 = vrot.slane %v5005, 4
        %v5007 = vsel %vm2207, 0, %v5006
        %v5008 = vsel %vm2207, %v2853, %v2846
        %v5010 = vunpack.c.l.s4 1983009808
        %v5011 = vunpack.c.0.s8 %v5010
        %v5012 = vperm.slane %v5008, %v5011
        %v5013 = vrot.slane %v2854, 4
        %v5014 = vsel %vm2207, %v5013, %v2852
        %v5016 = vunpack.c.l.s4 1983009808
        %v5017 = vunpack.c.0.s8 %v5016
        %v5018 = vperm.slane %v5014, %v5017
        %v5019 = vrot.slane %v5018, 4
        %v5020 = vsel %vm2207, %v5019, %v5012
        %v5022 = vunpack.c.l.s4 1934713408
        %v5023 = vunpack.c.0.s8 %v5022
        %v5024 = vperm.slane %v5020, %v5023
        %v5025 = vrot.slane %v5024, 4
        %v5026 = vsel %vm2207, 0, %v5025
        %v5027 = vsel %vm2207, %v2935, %v2928
        %v5029 = vunpack.c.l.s4 1983009808
        %v5030 = vunpack.c.0.s8 %v5029
        %v5031 = vperm.slane %v5027, %v5030
        %v5032 = vrot.slane %v2936, 4
        %v5033 = vsel %vm2207, %v5032, %v2934
        %v5035 = vunpack.c.l.s4 1983009808
        %v5036 = vunpack.c.0.s8 %v5035
        %v5037 = vperm.slane %v5033, %v5036
        %v5038 = vrot.slane %v5037, 4
        %v5039 = vsel %vm2207, %v5038, %v5031
        %v5041 = vunpack.c.l.s4 1934713408
        %v5042 = vunpack.c.0.s8 %v5041
        %v5043 = vperm.slane %v5039, %v5042
        %v5044 = vrot.slane %v5043, 4
        %v5045 = vsel %vm2207, 0, %v5044
        %v5046 = vsel %vm2207, %v2961, %v2954
        %v5048 = vunpack.c.l.s4 1983009808
        %v5049 = vunpack.c.0.s8 %v5048
        %v5050 = vperm.slane %v5046, %v5049
        %v5051 = vrot.slane %v2962, 4
        %v5052 = vsel %vm2207, %v5051, %v2960
        %v5054 = vunpack.c.l.s4 1983009808
        %v5055 = vunpack.c.0.s8 %v5054
        %v5056 = vperm.slane %v5052, %v5055
        %v5057 = vrot.slane %v5056, 4
        %v5058 = vsel %vm2207, %v5057, %v5050
        %v5060 = vunpack.c.l.s4 1934713408
        %v5061 = vunpack.c.0.s8 %v5060
        %v5062 = vperm.slane %v5058, %v5061
        %v5063 = vrot.slane %v5062, 4
        %v5064 = vsel %vm2207, 0, %v5063
        %v5065 = vsel %vm2207, %v3043, %v3036
        %v5067 = vunpack.c.l.s4 1983009808
        %v5068 = vunpack.c.0.s8 %v5067
        %v5069 = vperm.slane %v5065, %v5068
        %v5070 = vrot.slane %v3044, 4
        %v5071 = vsel %vm2207, %v5070, %v3042
        %v5073 = vunpack.c.l.s4 1983009808
        %v5074 = vunpack.c.0.s8 %v5073
        %v5075 = vperm.slane %v5071, %v5074
        %v5076 = vrot.slane %v5075, 4
        %v5077 = vsel %vm2207, %v5076, %v5069
        %v5079 = vunpack.c.l.s4 1934713408
        %v5080 = vunpack.c.0.s8 %v5079
        %v5081 = vperm.slane %v5077, %v5080
        %v5082 = vrot.slane %v5081, 4
        %v5083 = vsel %vm2207, 0, %v5082
        %v5084 = vsel %vm2207, %v3069, %v3062
        %v5086 = vunpack.c.l.s4 1983009808
        %v5087 = vunpack.c.0.s8 %v5086
        %v5088 = vperm.slane %v5084, %v5087
        %v5089 = vrot.slane %v3070, 4
        %v5090 = vsel %vm2207, %v5089, %v3068
        %v5092 = vunpack.c.l.s4 1983009808
        %v5093 = vunpack.c.0.s8 %v5092
        %v5094 = vperm.slane %v5090, %v5093
        %v5095 = vrot.slane %v5094, 4
        %v5096 = vsel %vm2207, %v5095, %v5088
        %v5098 = vunpack.c.l.s4 1934713408
        %v5099 = vunpack.c.0.s8 %v5098
        %v5100 = vperm.slane %v5096, %v5099
        %v5101 = vrot.slane %v5100, 4
        %v5102 = vsel %vm2207, 0, %v5101
        %v5103 = vsel %vm2207, %v3151, %v3144
        %v5105 = vunpack.c.l.s4 1983009808
        %v5106 = vunpack.c.0.s8 %v5105
        %v5107 = vperm.slane %v5103, %v5106
        %v5108 = vrot.slane %v3152, 4
        %v5109 = vsel %vm2207, %v5108, %v3150
        %v5111 = vunpack.c.l.s4 1983009808
        %v5112 = vunpack.c.0.s8 %v5111
        %v5113 = vperm.slane %v5109, %v5112
        %v5114 = vrot.slane %v5113, 4
        %v5115 = vsel %vm2207, %v5114, %v5107
        %v5117 = vunpack.c.l.s4 1934713408
        %v5118 = vunpack.c.0.s8 %v5117
        %v5119 = vperm.slane %v5115, %v5118
        %v5120 = vrot.slane %v5119, 4
        %v5121 = vsel %vm2207, 0, %v5120
        %v5122 = vsel %vm2207, %v3177, %v3170
        %v5124 = vunpack.c.l.s4 1983009808
        %v5125 = vunpack.c.0.s8 %v5124
        %v5126 = vperm.slane %v5122, %v5125
        %v5127 = vrot.slane %v3178, 4
        %v5128 = vsel %vm2207, %v5127, %v3176
        %v5130 = vunpack.c.l.s4 1983009808
        %v5131 = vunpack.c.0.s8 %v5130
        %v5132 = vperm.slane %v5128, %v5131
        %v5133 = vrot.slane %v5132, 4
        %v5134 = vsel %vm2207, %v5133, %v5126
        %v5136 = vunpack.c.l.s4 1934713408
        %v5137 = vunpack.c.0.s8 %v5136
        %v5138 = vperm.slane %v5134, %v5137
        %v5139 = vrot.slane %v5138, 4
        %v5140 = vsel %vm2207, 0, %v5139
        %v5141 = vsel %vm2207, %v3259, %v3252
        %v5143 = vunpack.c.l.s4 1983009808
        %v5144 = vunpack.c.0.s8 %v5143
        %v5145 = vperm.slane %v5141, %v5144
        %v5146 = vrot.slane %v3260, 4
        %v5147 = vsel %vm2207, %v5146, %v3258
        %v5149 = vunpack.c.l.s4 1983009808
        %v5150 = vunpack.c.0.s8 %v5149
        %v5151 = vperm.slane %v5147, %v5150
        %v5152 = vrot.slane %v5151, 4
        %v5153 = vsel %vm2207, %v5152, %v5145
        %v5155 = vunpack.c.l.s4 1934713408
        %v5156 = vunpack.c.0.s8 %v5155
        %v5157 = vperm.slane %v5153, %v5156
        %v5158 = vrot.slane %v5157, 4
        %v5159 = vsel %vm2207, 0, %v5158
        %v5160 = vsel %vm2207, %v3285, %v3278
        %v5162 = vunpack.c.l.s4 1983009808
        %v5163 = vunpack.c.0.s8 %v5162
        %v5164 = vperm.slane %v5160, %v5163
        %v5165 = vrot.slane %v3286, 4
        %v5166 = vsel %vm2207, %v5165, %v3284
        %v5168 = vunpack.c.l.s4 1983009808
        %v5169 = vunpack.c.0.s8 %v5168
        %v5170 = vperm.slane %v5166, %v5169
        %v5171 = vrot.slane %v5170, 4
        %v5172 = vsel %vm2207, %v5171, %v5164
        %v5174 = vunpack.c.l.s4 1934713408
        %v5175 = vunpack.c.0.s8 %v5174
        %v5176 = vperm.slane %v5172, %v5175
        %v5177 = vrot.slane %v5176, 4
        %v5178 = vsel %vm2207, 0, %v5177
        %v5179 = vsel %vm2207, %v3367, %v3360
        %v5181 = vunpack.c.l.s4 1983009808
        %v5182 = vunpack.c.0.s8 %v5181
        %v5183 = vperm.slane %v5179, %v5182
        %v5184 = vrot.slane %v3368, 4
        %v5185 = vsel %vm2207, %v5184, %v3366
        %v5187 = vunpack.c.l.s4 1983009808
        %v5188 = vunpack.c.0.s8 %v5187
        %v5189 = vperm.slane %v5185, %v5188
        %v5190 = vrot.slane %v5189, 4
        %v5191 = vsel %vm2207, %v5190, %v5183
        %v5193 = vunpack.c.l.s4 1934713408
        %v5194 = vunpack.c.0.s8 %v5193
        %v5195 = vperm.slane %v5191, %v5194
        %v5196 = vrot.slane %v5195, 4
        %v5197 = vsel %vm2207, 0, %v5196
        %v5198 = vsel %vm2207, %v3393, %v3386
        %v5200 = vunpack.c.l.s4 1983009808
        %v5201 = vunpack.c.0.s8 %v5200
        %v5202 = vperm.slane %v5198, %v5201
        %v5203 = vrot.slane %v3394, 4
        %v5204 = vsel %vm2207, %v5203, %v3392
        %v5206 = vunpack.c.l.s4 1983009808
        %v5207 = vunpack.c.0.s8 %v5206
        %v5208 = vperm.slane %v5204, %v5207
        %v5209 = vrot.slane %v5208, 4
        %v5210 = vsel %vm2207, %v5209, %v5202
        %v5212 = vunpack.c.l.s4 1934713408
        %v5213 = vunpack.c.0.s8 %v5212
        %v5214 = vperm.slane %v5210, %v5213
        %v5215 = vrot.slane %v5214, 4
        %v5216 = vsel %vm2207, 0, %v5215
        %v5217 = vsel %vm2207, %v3475, %v3468
        %v5219 = vunpack.c.l.s4 1983009808
        %v5220 = vunpack.c.0.s8 %v5219
        %v5221 = vperm.slane %v5217, %v5220
        %v5222 = vrot.slane %v3476, 4
        %v5223 = vsel %vm2207, %v5222, %v3474
        %v5225 = vunpack.c.l.s4 1983009808
        %v5226 = vunpack.c.0.s8 %v5225
        %v5227 = vperm.slane %v5223, %v5226
        %v5228 = vrot.slane %v5227, 4
        %v5229 = vsel %vm2207, %v5228, %v5221
        %v5231 = vunpack.c.l.s4 1934713408
        %v5232 = vunpack.c.0.s8 %v5231
        %v5233 = vperm.slane %v5229, %v5232
        %v5234 = vrot.slane %v5233, 4
        %v5235 = vsel %vm2207, 0, %v5234
        %v5236 = vsel %vm2207, %v3501, %v3494
        %v5238 = vunpack.c.l.s4 1983009808
        %v5239 = vunpack.c.0.s8 %v5238
        %v5240 = vperm.slane %v5236, %v5239
        %v5241 = vrot.slane %v3502, 4
        %v5242 = vsel %vm2207, %v5241, %v3500
        %v5244 = vunpack.c.l.s4 1983009808
        %v5245 = vunpack.c.0.s8 %v5244
        %v5246 = vperm.slane %v5242, %v5245
        %v5247 = vrot.slane %v5246, 4
        %v5248 = vsel %vm2207, %v5247, %v5240
        %v5250 = vunpack.c.l.s4 1934713408
        %v5251 = vunpack.c.0.s8 %v5250
        %v5252 = vperm.slane %v5248, %v5251
        %v5253 = vrot.slane %v5252, 4
        %v5254 = vsel %vm2207, 0, %v5253
        %v5255 = vsel %vm2207, %v3583, %v3576
        %v5257 = vunpack.c.l.s4 1983009808
        %v5258 = vunpack.c.0.s8 %v5257
        %v5259 = vperm.slane %v5255, %v5258
        %v5260 = vrot.slane %v3584, 4
        %v5261 = vsel %vm2207, %v5260, %v3582
        %v5263 = vunpack.c.l.s4 1983009808
        %v5264 = vunpack.c.0.s8 %v5263
        %v5265 = vperm.slane %v5261, %v5264
        %v5266 = vrot.slane %v5265, 4
        %v5267 = vsel %vm2207, %v5266, %v5259
        %v5269 = vunpack.c.l.s4 1934713408
        %v5270 = vunpack.c.0.s8 %v5269
        %v5271 = vperm.slane %v5267, %v5270
        %v5272 = vrot.slane %v5271, 4
        %v5273 = vsel %vm2207, 0, %v5272
        %v5274 = vsel %vm2207, %v3609, %v3602
        %v5276 = vunpack.c.l.s4 1983009808
        %v5277 = vunpack.c.0.s8 %v5276
        %v5278 = vperm.slane %v5274, %v5277
        %v5279 = vrot.slane %v3610, 4
        %v5280 = vsel %vm2207, %v5279, %v3608
        %v5282 = vunpack.c.l.s4 1983009808
        %v5283 = vunpack.c.0.s8 %v5282
        %v5284 = vperm.slane %v5280, %v5283
        %v5285 = vrot.slane %v5284, 4
        %v5286 = vsel %vm2207, %v5285, %v5278
        %v5288 = vunpack.c.l.s4 1934713408
        %v5289 = vunpack.c.0.s8 %v5288
        %v5290 = vperm.slane %v5286, %v5289
        %v5291 = vrot.slane %v5290, 4
        %v5292 = vsel %vm2207, 0, %v5291
        %v5293 = vsel %vm2207, %v3691, %v3684
        %v5295 = vunpack.c.l.s4 1983009808
        %v5296 = vunpack.c.0.s8 %v5295
        %v5297 = vperm.slane %v5293, %v5296
        %v5298 = vrot.slane %v3692, 4
        %v5299 = vsel %vm2207, %v5298, %v3690
        %v5301 = vunpack.c.l.s4 1983009808
        %v5302 = vunpack.c.0.s8 %v5301
        %v5303 = vperm.slane %v5299, %v5302
        %v5304 = vrot.slane %v5303, 4
        %v5305 = vsel %vm2207, %v5304, %v5297
        %v5307 = vunpack.c.l.s4 1934713408
        %v5308 = vunpack.c.0.s8 %v5307
        %v5309 = vperm.slane %v5305, %v5308
        %v5310 = vrot.slane %v5309, 4
        %v5311 = vsel %vm2207, 0, %v5310
        %v5312 = vsel %vm2207, %v3717, %v3710
        %v5314 = vunpack.c.l.s4 1983009808
        %v5315 = vunpack.c.0.s8 %v5314
        %v5316 = vperm.slane %v5312, %v5315
        %v5317 = vrot.slane %v3718, 4
        %v5318 = vsel %vm2207, %v5317, %v3716
        %v5320 = vunpack.c.l.s4 1983009808
        %v5321 = vunpack.c.0.s8 %v5320
        %v5322 = vperm.slane %v5318, %v5321
        %v5323 = vrot.slane %v5322, 4
        %v5324 = vsel %vm2207, %v5323, %v5316
        %v5326 = vunpack.c.l.s4 1934713408
        %v5327 = vunpack.c.0.s8 %v5326
        %v5328 = vperm.slane %v5324, %v5327
        %v5329 = vrot.slane %v5328, 4
        %v5330 = vsel %vm2207, 0, %v5329
        %v5331 = vsel %vm2207, %v3799, %v3792
        %v5333 = vunpack.c.l.s4 1983009808
        %v5334 = vunpack.c.0.s8 %v5333
        %v5335 = vperm.slane %v5331, %v5334
        %v5336 = vrot.slane %v3800, 4
        %v5337 = vsel %vm2207, %v5336, %v3798
        %v5339 = vunpack.c.l.s4 1983009808
        %v5340 = vunpack.c.0.s8 %v5339
        %v5341 = vperm.slane %v5337, %v5340
        %v5342 = vrot.slane %v5341, 4
        %v5343 = vsel %vm2207, %v5342, %v5335
        %v5345 = vunpack.c.l.s4 1934713408
        %v5346 = vunpack.c.0.s8 %v5345
        %v5347 = vperm.slane %v5343, %v5346
        %v5348 = vrot.slane %v5347, 4
        %v5349 = vsel %vm2207, 0, %v5348
        %v5350 = vsel %vm2207, %v3825, %v3818
        %v5352 = vunpack.c.l.s4 1983009808
        %v5353 = vunpack.c.0.s8 %v5352
        %v5354 = vperm.slane %v5350, %v5353
        %v5355 = vrot.slane %v3826, 4
        %v5356 = vsel %vm2207, %v5355, %v3824
        %v5358 = vunpack.c.l.s4 1983009808
        %v5359 = vunpack.c.0.s8 %v5358
        %v5360 = vperm.slane %v5356, %v5359
        %v5361 = vrot.slane %v5360, 4
        %v5362 = vsel %vm2207, %v5361, %v5354
        %v5364 = vunpack.c.l.s4 1934713408
        %v5365 = vunpack.c.0.s8 %v5364
        %v5366 = vperm.slane %v5362, %v5365
        %v5367 = vrot.slane %v5366, 4
        %v5368 = vsel %vm2207, 0, %v5367
        %v5369 = vsel %vm2207, %v3907, %v3900
        %v5371 = vunpack.c.l.s4 1983009808
        %v5372 = vunpack.c.0.s8 %v5371
        %v5373 = vperm.slane %v5369, %v5372
        %v5374 = vrot.slane %v3908, 4
        %v5375 = vsel %vm2207, %v5374, %v3906
        %v5377 = vunpack.c.l.s4 1983009808
        %v5378 = vunpack.c.0.s8 %v5377
        %v5379 = vperm.slane %v5375, %v5378
        %v5380 = vrot.slane %v5379, 4
        %v5381 = vsel %vm2207, %v5380, %v5373
        %v5383 = vunpack.c.l.s4 1934713408
        %v5384 = vunpack.c.0.s8 %v5383
        %v5385 = vperm.slane %v5381, %v5384
        %v5386 = vrot.slane %v5385, 4
        %v5387 = vsel %vm2207, 0, %v5386
        %v5388 = vsel %vm2207, %v3933, %v3926
        %v5390 = vunpack.c.l.s4 1983009808
        %v5391 = vunpack.c.0.s8 %v5390
        %v5392 = vperm.slane %v5388, %v5391
        %v5393 = vrot.slane %v3934, 4
        %v5394 = vsel %vm2207, %v5393, %v3932
        %v5396 = vunpack.c.l.s4 1983009808
        %v5397 = vunpack.c.0.s8 %v5396
        %v5398 = vperm.slane %v5394, %v5397
        %v5399 = vrot.slane %v5398, 4
        %v5400 = vsel %vm2207, %v5399, %v5392
        %v5402 = vunpack.c.l.s4 1934713408
        %v5403 = vunpack.c.0.s8 %v5402
        %v5404 = vperm.slane %v5400, %v5403
        %v5405 = vrot.slane %v5404, 4
        %v5406 = vsel %vm2207, 0, %v5405
        %v5409 = vpack.i.b16 %v3980, %v3953
        %v5410 = vshrl.u32 %v3953, 16
        %v5411 = vshrl.u32 %v3980, 16
        %v5412 = vpack.i.b16 %v5411, %v5410
        %v5415 = vpack.i.b16 %v3986, %v3959
        %v5416 = vshrl.u32 %v3959, 16
        %v5417 = vshrl.u32 %v3986, 16
        %v5418 = vpack.i.b16 %v5417, %v5416
        %v5421 = vpack.i.b16 %v3984, %v3957
        %v5422 = vshrl.u32 %v3957, 16
        %v5423 = vshrl.u32 %v3984, 16
        %v5424 = vpack.i.b16 %v5423, %v5422
        %v5427 = vpack.i.b16 %v3988, %v3961
        %v5428 = vshrl.u32 %v3961, 16
        %v5429 = vshrl.u32 %v3988, 16
        %v5430 = vpack.i.b16 %v5429, %v5428
        %v5433 = vpack.i.b16 %v4834, %v4815
        %v5434 = vshrl.u32 %v4815, 16
        %v5435 = vshrl.u32 %v4834, 16
        %v5436 = vpack.i.b16 %v5435, %v5434
        %v5439 = vpack.i.b16 %v4836, %v4817
        %v5440 = vshrl.u32 %v4817, 16
        %v5441 = vshrl.u32 %v4836, 16
        %v5442 = vpack.i.b16 %v5441, %v5440
        %v5445 = vpack.i.b16 %v4034, %v4007
        %v5446 = vshrl.u32 %v4007, 16
        %v5447 = vshrl.u32 %v4034, 16
        %v5448 = vpack.i.b16 %v5447, %v5446
        %v5451 = vpack.i.b16 %v4040, %v4013
        %v5452 = vshrl.u32 %v4013, 16
        %v5453 = vshrl.u32 %v4040, 16
        %v5454 = vpack.i.b16 %v5453, %v5452
        %v5457 = vpack.i.b16 %v4038, %v4011
        %v5458 = vshrl.u32 %v4011, 16
        %v5459 = vshrl.u32 %v4038, 16
        %v5460 = vpack.i.b16 %v5459, %v5458
        %v5463 = vpack.i.b16 %v4042, %v4015
        %v5464 = vshrl.u32 %v4015, 16
        %v5465 = vshrl.u32 %v4042, 16
        %v5466 = vpack.i.b16 %v5465, %v5464
        %v5469 = vpack.i.b16 %v4872, %v4853
        %v5470 = vshrl.u32 %v4853, 16
        %v5471 = vshrl.u32 %v4872, 16
        %v5472 = vpack.i.b16 %v5471, %v5470
        %v5475 = vpack.i.b16 %v4874, %v4855
        %v5476 = vshrl.u32 %v4855, 16
        %v5477 = vshrl.u32 %v4874, 16
        %v5478 = vpack.i.b16 %v5477, %v5476
        %v5481 = vpack.i.b16 %v4088, %v4061
        %v5482 = vshrl.u32 %v4061, 16
        %v5483 = vshrl.u32 %v4088, 16
        %v5484 = vpack.i.b16 %v5483, %v5482
        %v5487 = vpack.i.b16 %v4094, %v4067
        %v5488 = vshrl.u32 %v4067, 16
        %v5489 = vshrl.u32 %v4094, 16
        %v5490 = vpack.i.b16 %v5489, %v5488
        %v5493 = vpack.i.b16 %v4092, %v4065
        %v5494 = vshrl.u32 %v4065, 16
        %v5495 = vshrl.u32 %v4092, 16
        %v5496 = vpack.i.b16 %v5495, %v5494
        %v5499 = vpack.i.b16 %v4096, %v4069
        %v5500 = vshrl.u32 %v4069, 16
        %v5501 = vshrl.u32 %v4096, 16
        %v5502 = vpack.i.b16 %v5501, %v5500
        %v5505 = vpack.i.b16 %v4910, %v4891
        %v5506 = vshrl.u32 %v4891, 16
        %v5507 = vshrl.u32 %v4910, 16
        %v5508 = vpack.i.b16 %v5507, %v5506
        %v5511 = vpack.i.b16 %v4912, %v4893
        %v5512 = vshrl.u32 %v4893, 16
        %v5513 = vshrl.u32 %v4912, 16
        %v5514 = vpack.i.b16 %v5513, %v5512
        %v5517 = vpack.i.b16 %v4142, %v4115
        %v5518 = vshrl.u32 %v4115, 16
        %v5519 = vshrl.u32 %v4142, 16
        %v5520 = vpack.i.b16 %v5519, %v5518
        %v5523 = vpack.i.b16 %v4148, %v4121
        %v5524 = vshrl.u32 %v4121, 16
        %v5525 = vshrl.u32 %v4148, 16
        %v5526 = vpack.i.b16 %v5525, %v5524
        %v5529 = vpack.i.b16 %v4146, %v4119
        %v5530 = vshrl.u32 %v4119, 16
        %v5531 = vshrl.u32 %v4146, 16
        %v5532 = vpack.i.b16 %v5531, %v5530
        %v5535 = vpack.i.b16 %v4150, %v4123
        %v5536 = vshrl.u32 %v4123, 16
        %v5537 = vshrl.u32 %v4150, 16
        %v5538 = vpack.i.b16 %v5537, %v5536
        %v5541 = vpack.i.b16 %v4948, %v4929
        %v5542 = vshrl.u32 %v4929, 16
        %v5543 = vshrl.u32 %v4948, 16
        %v5544 = vpack.i.b16 %v5543, %v5542
        %v5547 = vpack.i.b16 %v4950, %v4931
        %v5548 = vshrl.u32 %v4931, 16
        %v5549 = vshrl.u32 %v4950, 16
        %v5550 = vpack.i.b16 %v5549, %v5548
        %v5553 = vpack.i.b16 %v4196, %v4169
        %v5554 = vshrl.u32 %v4169, 16
        %v5555 = vshrl.u32 %v4196, 16
        %v5556 = vpack.i.b16 %v5555, %v5554
        %v5559 = vpack.i.b16 %v4202, %v4175
        %v5560 = vshrl.u32 %v4175, 16
        %v5561 = vshrl.u32 %v4202, 16
        %v5562 = vpack.i.b16 %v5561, %v5560
        %v5565 = vpack.i.b16 %v4200, %v4173
        %v5566 = vshrl.u32 %v4173, 16
        %v5567 = vshrl.u32 %v4200, 16
        %v5568 = vpack.i.b16 %v5567, %v5566
        %v5571 = vpack.i.b16 %v4204, %v4177
        %v5572 = vshrl.u32 %v4177, 16
        %v5573 = vshrl.u32 %v4204, 16
        %v5574 = vpack.i.b16 %v5573, %v5572
        %v5577 = vpack.i.b16 %v4986, %v4967
        %v5578 = vshrl.u32 %v4967, 16
        %v5579 = vshrl.u32 %v4986, 16
        %v5580 = vpack.i.b16 %v5579, %v5578
        %v5583 = vpack.i.b16 %v4988, %v4969
        %v5584 = vshrl.u32 %v4969, 16
        %v5585 = vshrl.u32 %v4988, 16
        %v5586 = vpack.i.b16 %v5585, %v5584
        %v5589 = vpack.i.b16 %v4250, %v4223
        %v5590 = vshrl.u32 %v4223, 16
        %v5591 = vshrl.u32 %v4250, 16
        %v5592 = vpack.i.b16 %v5591, %v5590
        %v5595 = vpack.i.b16 %v4256, %v4229
        %v5596 = vshrl.u32 %v4229, 16
        %v5597 = vshrl.u32 %v4256, 16
        %v5598 = vpack.i.b16 %v5597, %v5596
        %v5601 = vpack.i.b16 %v4254, %v4227
        %v5602 = vshrl.u32 %v4227, 16
        %v5603 = vshrl.u32 %v4254, 16
        %v5604 = vpack.i.b16 %v5603, %v5602
        %v5607 = vpack.i.b16 %v4258, %v4231
        %v5608 = vshrl.u32 %v4231, 16
        %v5609 = vshrl.u32 %v4258, 16
        %v5610 = vpack.i.b16 %v5609, %v5608
        %v5613 = vpack.i.b16 %v5024, %v5005
        %v5614 = vshrl.u32 %v5005, 16
        %v5615 = vshrl.u32 %v5024, 16
        %v5616 = vpack.i.b16 %v5615, %v5614
        %v5619 = vpack.i.b16 %v5026, %v5007
        %v5620 = vshrl.u32 %v5007, 16
        %v5621 = vshrl.u32 %v5026, 16
        %v5622 = vpack.i.b16 %v5621, %v5620
        %v5625 = vpack.i.b16 %v4304, %v4277
        %v5626 = vshrl.u32 %v4277, 16
        %v5627 = vshrl.u32 %v4304, 16
        %v5628 = vpack.i.b16 %v5627, %v5626
        %v5631 = vpack.i.b16 %v4310, %v4283
        %v5632 = vshrl.u32 %v4283, 16
        %v5633 = vshrl.u32 %v4310, 16
        %v5634 = vpack.i.b16 %v5633, %v5632
        %v5637 = vpack.i.b16 %v4308, %v4281
        %v5638 = vshrl.u32 %v4281, 16
        %v5639 = vshrl.u32 %v4308, 16
        %v5640 = vpack.i.b16 %v5639, %v5638
        %v5643 = vpack.i.b16 %v4312, %v4285
        %v5644 = vshrl.u32 %v4285, 16
        %v5645 = vshrl.u32 %v4312, 16
        %v5646 = vpack.i.b16 %v5645, %v5644
        %v5649 = vpack.i.b16 %v5062, %v5043
        %v5650 = vshrl.u32 %v5043, 16
        %v5651 = vshrl.u32 %v5062, 16
        %v5652 = vpack.i.b16 %v5651, %v5650
        %v5655 = vpack.i.b16 %v5064, %v5045
        %v5656 = vshrl.u32 %v5045, 16
        %v5657 = vshrl.u32 %v5064, 16
        %v5658 = vpack.i.b16 %v5657, %v5656
        %v5661 = vpack.i.b16 %v4358, %v4331
        %v5662 = vshrl.u32 %v4331, 16
        %v5663 = vshrl.u32 %v4358, 16
        %v5664 = vpack.i.b16 %v5663, %v5662
        %v5667 = vpack.i.b16 %v4364, %v4337
        %v5668 = vshrl.u32 %v4337, 16
        %v5669 = vshrl.u32 %v4364, 16
        %v5670 = vpack.i.b16 %v5669, %v5668
        %v5673 = vpack.i.b16 %v4362, %v4335
        %v5674 = vshrl.u32 %v4335, 16
        %v5675 = vshrl.u32 %v4362, 16
        %v5676 = vpack.i.b16 %v5675, %v5674
        %v5679 = vpack.i.b16 %v4366, %v4339
        %v5680 = vshrl.u32 %v4339, 16
        %v5681 = vshrl.u32 %v4366, 16
        %v5682 = vpack.i.b16 %v5681, %v5680
        %v5685 = vpack.i.b16 %v5100, %v5081
        %v5686 = vshrl.u32 %v5081, 16
        %v5687 = vshrl.u32 %v5100, 16
        %v5688 = vpack.i.b16 %v5687, %v5686
        %v5691 = vpack.i.b16 %v5102, %v5083
        %v5692 = vshrl.u32 %v5083, 16
        %v5693 = vshrl.u32 %v5102, 16
        %v5694 = vpack.i.b16 %v5693, %v5692
        %v5697 = vpack.i.b16 %v4412, %v4385
        %v5698 = vshrl.u32 %v4385, 16
        %v5699 = vshrl.u32 %v4412, 16
        %v5700 = vpack.i.b16 %v5699, %v5698
        %v5703 = vpack.i.b16 %v4418, %v4391
        %v5704 = vshrl.u32 %v4391, 16
        %v5705 = vshrl.u32 %v4418, 16
        %v5706 = vpack.i.b16 %v5705, %v5704
        %v5709 = vpack.i.b16 %v4416, %v4389
        %v5710 = vshrl.u32 %v4389, 16
        %v5711 = vshrl.u32 %v4416, 16
        %v5712 = vpack.i.b16 %v5711, %v5710
        %v5715 = vpack.i.b16 %v4420, %v4393
        %v5716 = vshrl.u32 %v4393, 16
        %v5717 = vshrl.u32 %v4420, 16
        %v5718 = vpack.i.b16 %v5717, %v5716
        %v5721 = vpack.i.b16 %v5138, %v5119
        %v5722 = vshrl.u32 %v5119, 16
        %v5723 = vshrl.u32 %v5138, 16
        %v5724 = vpack.i.b16 %v5723, %v5722
        %v5727 = vpack.i.b16 %v5140, %v5121
        %v5728 = vshrl.u32 %v5121, 16
        %v5729 = vshrl.u32 %v5140, 16
        %v5730 = vpack.i.b16 %v5729, %v5728
        %v5733 = vpack.i.b16 %v4466, %v4439
        %v5734 = vshrl.u32 %v4439, 16
        %v5735 = vshrl.u32 %v4466, 16
        %v5736 = vpack.i.b16 %v5735, %v5734
        %v5739 = vpack.i.b16 %v4472, %v4445
        %v5740 = vshrl.u32 %v4445, 16
        %v5741 = vshrl.u32 %v4472, 16
        %v5742 = vpack.i.b16 %v5741, %v5740
        %v5745 = vpack.i.b16 %v4470, %v4443
        %v5746 = vshrl.u32 %v4443, 16
        %v5747 = vshrl.u32 %v4470, 16
        %v5748 = vpack.i.b16 %v5747, %v5746
        %v5751 = vpack.i.b16 %v4474, %v4447
        %v5752 = vshrl.u32 %v4447, 16
        %v5753 = vshrl.u32 %v4474, 16
        %v5754 = vpack.i.b16 %v5753, %v5752
        %v5757 = vpack.i.b16 %v5176, %v5157
        %v5758 = vshrl.u32 %v5157, 16
        %v5759 = vshrl.u32 %v5176, 16
        %v5760 = vpack.i.b16 %v5759, %v5758
        %v5763 = vpack.i.b16 %v5178, %v5159
        %v5764 = vshrl.u32 %v5159, 16
        %v5765 = vshrl.u32 %v5178, 16
        %v5766 = vpack.i.b16 %v5765, %v5764
        %v5769 = vpack.i.b16 %v4520, %v4493
        %v5770 = vshrl.u32 %v4493, 16
        %v5771 = vshrl.u32 %v4520, 16
        %v5772 = vpack.i.b16 %v5771, %v5770
        %v5775 = vpack.i.b16 %v4526, %v4499
        %v5776 = vshrl.u32 %v4499, 16
        %v5777 = vshrl.u32 %v4526, 16
        %v5778 = vpack.i.b16 %v5777, %v5776
        %v5781 = vpack.i.b16 %v4524, %v4497
        %v5782 = vshrl.u32 %v4497, 16
        %v5783 = vshrl.u32 %v4524, 16
        %v5784 = vpack.i.b16 %v5783, %v5782
        %v5787 = vpack.i.b16 %v4528, %v4501
        %v5788 = vshrl.u32 %v4501, 16
        %v5789 = vshrl.u32 %v4528, 16
        %v5790 = vpack.i.b16 %v5789, %v5788
        %v5793 = vpack.i.b16 %v5214, %v5195
        %v5794 = vshrl.u32 %v5195, 16
        %v5795 = vshrl.u32 %v5214, 16
        %v5796 = vpack.i.b16 %v5795, %v5794
        %v5799 = vpack.i.b16 %v5216, %v5197
        %v5800 = vshrl.u32 %v5197, 16
        %v5801 = vshrl.u32 %v5216, 16
        %v5802 = vpack.i.b16 %v5801, %v5800
        %v5805 = vpack.i.b16 %v4574, %v4547
        %v5806 = vshrl.u32 %v4547, 16
        %v5807 = vshrl.u32 %v4574, 16
        %v5808 = vpack.i.b16 %v5807, %v5806
        %v5811 = vpack.i.b16 %v4580, %v4553
        %v5812 = vshrl.u32 %v4553, 16
        %v5813 = vshrl.u32 %v4580, 16
        %v5814 = vpack.i.b16 %v5813, %v5812
        %v5817 = vpack.i.b16 %v4578, %v4551
        %v5818 = vshrl.u32 %v4551, 16
        %v5819 = vshrl.u32 %v4578, 16
        %v5820 = vpack.i.b16 %v5819, %v5818
        %v5823 = vpack.i.b16 %v4582, %v4555
        %v5824 = vshrl.u32 %v4555, 16
        %v5825 = vshrl.u32 %v4582, 16
        %v5826 = vpack.i.b16 %v5825, %v5824
        %v5829 = vpack.i.b16 %v5252, %v5233
        %v5830 = vshrl.u32 %v5233, 16
        %v5831 = vshrl.u32 %v5252, 16
        %v5832 = vpack.i.b16 %v5831, %v5830
        %v5835 = vpack.i.b16 %v5254, %v5235
        %v5836 = vshrl.u32 %v5235, 16
        %v5837 = vshrl.u32 %v5254, 16
        %v5838 = vpack.i.b16 %v5837, %v5836
        %v5841 = vpack.i.b16 %v4628, %v4601
        %v5842 = vshrl.u32 %v4601, 16
        %v5843 = vshrl.u32 %v4628, 16
        %v5844 = vpack.i.b16 %v5843, %v5842
        %v5847 = vpack.i.b16 %v4634, %v4607
        %v5848 = vshrl.u32 %v4607, 16
        %v5849 = vshrl.u32 %v4634, 16
        %v5850 = vpack.i.b16 %v5849, %v5848
        %v5853 = vpack.i.b16 %v4632, %v4605
        %v5854 = vshrl.u32 %v4605, 16
        %v5855 = vshrl.u32 %v4632, 16
        %v5856 = vpack.i.b16 %v5855, %v5854
        %v5859 = vpack.i.b16 %v4636, %v4609
        %v5860 = vshrl.u32 %v4609, 16
        %v5861 = vshrl.u32 %v4636, 16
        %v5862 = vpack.i.b16 %v5861, %v5860
        %v5865 = vpack.i.b16 %v5290, %v5271
        %v5866 = vshrl.u32 %v5271, 16
        %v5867 = vshrl.u32 %v5290, 16
        %v5868 = vpack.i.b16 %v5867, %v5866
        %v5871 = vpack.i.b16 %v5292, %v5273
        %v5872 = vshrl.u32 %v5273, 16
        %v5873 = vshrl.u32 %v5292, 16
        %v5874 = vpack.i.b16 %v5873, %v5872
        %v5877 = vpack.i.b16 %v4682, %v4655
        %v5878 = vshrl.u32 %v4655, 16
        %v5879 = vshrl.u32 %v4682, 16
        %v5880 = vpack.i.b16 %v5879, %v5878
        %v5883 = vpack.i.b16 %v4688, %v4661
        %v5884 = vshrl.u32 %v4661, 16
        %v5885 = vshrl.u32 %v4688, 16
        %v5886 = vpack.i.b16 %v5885, %v5884
        %v5889 = vpack.i.b16 %v4686, %v4659
        %v5890 = vshrl.u32 %v4659, 16
        %v5891 = vshrl.u32 %v4686, 16
        %v5892 = vpack.i.b16 %v5891, %v5890
        %v5895 = vpack.i.b16 %v4690, %v4663
        %v5896 = vshrl.u32 %v4663, 16
        %v5897 = vshrl.u32 %v4690, 16
        %v5898 = vpack.i.b16 %v5897, %v5896
        %v5901 = vpack.i.b16 %v5328, %v5309
        %v5902 = vshrl.u32 %v5309, 16
        %v5903 = vshrl.u32 %v5328, 16
        %v5904 = vpack.i.b16 %v5903, %v5902
        %v5907 = vpack.i.b16 %v5330, %v5311
        %v5908 = vshrl.u32 %v5311, 16
        %v5909 = vshrl.u32 %v5330, 16
        %v5910 = vpack.i.b16 %v5909, %v5908
        %v5913 = vpack.i.b16 %v4736, %v4709
        %v5914 = vshrl.u32 %v4709, 16
        %v5915 = vshrl.u32 %v4736, 16
        %v5916 = vpack.i.b16 %v5915, %v5914
        %v5919 = vpack.i.b16 %v4742, %v4715
        %v5920 = vshrl.u32 %v4715, 16
        %v5921 = vshrl.u32 %v4742, 16
        %v5922 = vpack.i.b16 %v5921, %v5920
        %v5925 = vpack.i.b16 %v4740, %v4713
        %v5926 = vshrl.u32 %v4713, 16
        %v5927 = vshrl.u32 %v4740, 16
        %v5928 = vpack.i.b16 %v5927, %v5926
        %v5931 = vpack.i.b16 %v4744, %v4717
        %v5932 = vshrl.u32 %v4717, 16
        %v5933 = vshrl.u32 %v4744, 16
        %v5934 = vpack.i.b16 %v5933, %v5932
        %v5937 = vpack.i.b16 %v5366, %v5347
        %v5938 = vshrl.u32 %v5347, 16
        %v5939 = vshrl.u32 %v5366, 16
        %v5940 = vpack.i.b16 %v5939, %v5938
        %v5943 = vpack.i.b16 %v5368, %v5349
        %v5944 = vshrl.u32 %v5349, 16
        %v5945 = vshrl.u32 %v5368, 16
        %v5946 = vpack.i.b16 %v5945, %v5944
        %v5949 = vpack.i.b16 %v4790, %v4763
        %v5950 = vshrl.u32 %v4763, 16
        %v5951 = vshrl.u32 %v4790, 16
        %v5952 = vpack.i.b16 %v5951, %v5950
        %v5955 = vpack.i.b16 %v4796, %v4769
        %v5956 = vshrl.u32 %v4769, 16
        %v5957 = vshrl.u32 %v4796, 16
        %v5958 = vpack.i.b16 %v5957, %v5956
        %v5961 = vpack.i.b16 %v4794, %v4767
        %v5962 = vshrl.u32 %v4767, 16
        %v5963 = vshrl.u32 %v4794, 16
        %v5964 = vpack.i.b16 %v5963, %v5962
        %v5967 = vpack.i.b16 %v4798, %v4771
        %v5968 = vshrl.u32 %v4771, 16
        %v5969 = vshrl.u32 %v4798, 16
        %v5970 = vpack.i.b16 %v5969, %v5968
        %v5973 = vpack.i.b16 %v5404, %v5385
        %v5974 = vshrl.u32 %v5385, 16
        %v5975 = vshrl.u32 %v5404, 16
        %v5976 = vpack.i.b16 %v5975, %v5974
        %v5979 = vpack.i.b16 %v5406, %v5387
        %v5980 = vshrl.u32 %v5387, 16
        %v5981 = vshrl.u32 %v5406, 16
        %v5982 = vpack.i.b16 %v5981, %v5980
        %v5983 = vld [vmem:[%s448] sm:$0x1]
        %v5984 = vsub.f32 1.0, %v5983
        %v5985 = vmul.f32 %v5984, -10000.0
        %v5986 = vld [vmem:[#allocation7] sm:$0xf]
        %v5987 = vld [vmem:[#allocation7 + $0x4] sm:$0xf]
        %v5988 = vld [vmem:[#allocation7 + $0x8] sm:$0xf]
        %v5989 = vld [vmem:[#allocation7 + $0xc] sm:$0xf]
        %v5990 = vld [vmem:[#allocation7 + $0x10] sm:$0xf]
        %v5991 = vld [vmem:[#allocation7 + $0x14] sm:$0xf]
        %v5992 = vld [vmem:[#allocation7 + $0x18] sm:$0xf]
        %v5993 = vld [vmem:[#allocation7 + $0x1c] sm:$0xf]
        %v5994 = vld [vmem:[#allocation7 + $0x20] sm:$0xf]
        %v5995 = vld [vmem:[#allocation7 + $0x24] sm:$0xf]
        %v5996 = vld [vmem:[#allocation7 + $0x28] sm:$0xf]
        %v5997 = vld [vmem:[#allocation7 + $0x2c] sm:$0xf]
        %v5998 = vld [vmem:[#allocation7 + $0x30] sm:$0xf]
        %v5999 = vld [vmem:[#allocation7 + $0x34] sm:$0xf]
        %v6000 = vld [vmem:[#allocation7 + $0x38] sm:$0xf]
        %v6001 = vld [vmem:[#allocation7 + $0x3c] sm:$0xf]
        %v6002 = vld [vmem:[#allocation7 + $0x40] sm:$0xf]
        %v6003 = vld [vmem:[#allocation7 + $0x44] sm:$0xf]
        %v6004 = vld [vmem:[#allocation7 + $0x48] sm:$0xf]
        %v6005 = vld [vmem:[#allocation7 + $0x4c] sm:$0xf]
        %v6006 = vld [vmem:[#allocation7 + $0x50] sm:$0xf]
        %v6007 = vld [vmem:[#allocation7 + $0x54] sm:$0xf]
        %v6008 = vld [vmem:[#allocation7 + $0x58] sm:$0xf]
        %v6009 = vld [vmem:[#allocation7 + $0x5c] sm:$0xf]
        %v6010 = vld [vmem:[#allocation7 + $0x60] sm:$0xf]
        %v6011 = vld [vmem:[#allocation7 + $0x64] sm:$0xf]
        %v6012 = vld [vmem:[#allocation7 + $0x68] sm:$0xf]
        %v6013 = vld [vmem:[#allocation7 + $0x6c] sm:$0xf]
        %v6014 = vld [vmem:[#allocation7 + $0x70] sm:$0xf]
        %v6015 = vld [vmem:[#allocation7 + $0x74] sm:$0xf]
        %v6016 = vld [vmem:[#allocation7 + $0x78] sm:$0xf]
        %v6017 = vld [vmem:[#allocation7 + $0x7c] sm:$0xf]
        %v6018 = vld [vmem:[#allocation7 + $0x80] sm:$0xf]
        %v6019 = vld [vmem:[#allocation7 + $0x84] sm:$0xf]
        %v6020 = vld [vmem:[#allocation7 + $0x88] sm:$0xf]
        %v6021 = vld [vmem:[#allocation7 + $0x8c] sm:$0xf]
        %v6022 = vld [vmem:[#allocation7 + $0x90] sm:$0xf]
        %v6023 = vld [vmem:[#allocation7 + $0x94] sm:$0xf]
        %v6024 = vld [vmem:[#allocation7 + $0x98] sm:$0xf]
        %v6025 = vld [vmem:[#allocation7 + $0x9c] sm:$0xf]
        %v6026 = vld [vmem:[#allocation7 + $0xa0] sm:$0xf]
        %v6027 = vld [vmem:[#allocation7 + $0xa4] sm:$0xf]
        %v6028 = vld [vmem:[#allocation7 + $0xa8] sm:$0xf]
        %v6029 = vld [vmem:[#allocation7 + $0xac] sm:$0xf]
        %v6030 = vld [vmem:[#allocation7 + $0xb0] sm:$0xf]
        %v6031 = vld [vmem:[#allocation7 + $0xb4] sm:$0xf]
        %v6032 = vld [vmem:[#allocation7 + $0xb8] sm:$0xf]
        %v6033 = vld [vmem:[#allocation7 + $0xbc] sm:$0xf]
        %v6034 = vld [vmem:[#allocation7 + $0xc0] sm:$0xf]
        %v6035 = vld [vmem:[#allocation7 + $0xc4] sm:$0xf]
        %v6036 = vld [vmem:[#allocation7 + $0xc8] sm:$0xf]
        %v6037 = vld [vmem:[#allocation7 + $0xcc] sm:$0xf]
        %v6038 = vld [vmem:[#allocation7 + $0xd0] sm:$0xf]
        %v6039 = vld [vmem:[#allocation7 + $0xd4] sm:$0xf]
        %v6040 = vld [vmem:[#allocation7 + $0xd8] sm:$0xf]
        %v6041 = vld [vmem:[#allocation7 + $0xdc] sm:$0xf]
        %v6042 = vld [vmem:[#allocation7 + $0xe0] sm:$0xf]
        %v6043 = vld [vmem:[#allocation7 + $0xe4] sm:$0xf]
        %v6044 = vld [vmem:[#allocation7 + $0xe8] sm:$0xf]
        %v6045 = vld [vmem:[#allocation7 + $0xec] sm:$0xf]
        %v6046 = vld [vmem:[#allocation7 + $0xf0] sm:$0xf]
        %v6047 = vld [vmem:[#allocation7 + $0xf4] sm:$0xf]
        %v6048 = vld [vmem:[#allocation7 + $0xf8] sm:$0xf]
        %v6049 = vld [vmem:[#allocation7 + $0xfc] sm:$0xf]
        %v6050 = vunpack.c.l.bf16 %v5986
        %v6051 = vunpack.c.l.bf16 %v5987
        %v6052 = vunpack.c.l.bf16 %v5988
        %v6053 = vunpack.c.l.bf16 %v5989
        %v6054 = vunpack.c.l.bf16 %v5990
        %v6055 = vunpack.c.l.bf16 %v5991
        %v6056 = vunpack.c.l.bf16 %v5992
        %v6057 = vunpack.c.l.bf16 %v5993
        %v6058 = vunpack.c.l.bf16 %v5994
        %v6059 = vunpack.c.l.bf16 %v5995
        %v6060 = vunpack.c.l.bf16 %v5996
        %v6061 = vunpack.c.l.bf16 %v5997
        %v6062 = vunpack.c.l.bf16 %v5998
        %v6063 = vunpack.c.l.bf16 %v5999
        %v6064 = vunpack.c.l.bf16 %v6000
        %v6065 = vunpack.c.l.bf16 %v6001
        %v6066 = vunpack.c.l.bf16 %v6002
        %v6067 = vunpack.c.l.bf16 %v6003
        %v6068 = vunpack.c.l.bf16 %v6004
        %v6069 = vunpack.c.l.bf16 %v6005
        %v6070 = vunpack.c.l.bf16 %v6006
        %v6071 = vunpack.c.l.bf16 %v6007
        %v6072 = vunpack.c.l.bf16 %v6008
        %v6073 = vunpack.c.l.bf16 %v6009
        %v6074 = vunpack.c.l.bf16 %v6010
        %v6075 = vunpack.c.l.bf16 %v6011
        %v6076 = vunpack.c.l.bf16 %v6012
        %v6077 = vunpack.c.l.bf16 %v6013
        %v6078 = vunpack.c.l.bf16 %v6014
        %v6079 = vunpack.c.l.bf16 %v6015
        %v6080 = vunpack.c.l.bf16 %v6016
        %v6081 = vunpack.c.l.bf16 %v6017
        %v6082 = vunpack.c.l.bf16 %v6018
        %v6083 = vunpack.c.l.bf16 %v6019
        %v6084 = vunpack.c.l.bf16 %v6020
        %v6085 = vunpack.c.l.bf16 %v6021
        %v6086 = vunpack.c.l.bf16 %v6022
        %v6087 = vunpack.c.l.bf16 %v6023
        %v6088 = vunpack.c.l.bf16 %v6024
        %v6089 = vunpack.c.l.bf16 %v6025
        %v6090 = vunpack.c.l.bf16 %v6026
        %v6091 = vunpack.c.l.bf16 %v6027
        %v6092 = vunpack.c.l.bf16 %v6028
        %v6093 = vunpack.c.l.bf16 %v6029
        %v6094 = vunpack.c.l.bf16 %v6030
        %v6095 = vunpack.c.l.bf16 %v6031
        %v6096 = vunpack.c.l.bf16 %v6032
        %v6097 = vunpack.c.l.bf16 %v6033
        %v6098 = vunpack.c.l.bf16 %v6034
        %v6099 = vunpack.c.l.bf16 %v6035
        %v6100 = vunpack.c.l.bf16 %v6036
        %v6101 = vunpack.c.l.bf16 %v6037
        %v6102 = vunpack.c.l.bf16 %v6038
        %v6103 = vunpack.c.l.bf16 %v6039
        %v6104 = vunpack.c.l.bf16 %v6040
        %v6105 = vunpack.c.l.bf16 %v6041
        %v6106 = vunpack.c.l.bf16 %v6042
        %v6107 = vunpack.c.l.bf16 %v6043
        %v6108 = vunpack.c.l.bf16 %v6044
        %v6109 = vunpack.c.l.bf16 %v6045
        %v6110 = vunpack.c.l.bf16 %v6046
        %v6111 = vunpack.c.l.bf16 %v6047
        %v6112 = vunpack.c.l.bf16 %v6048
        %v6113 = vunpack.c.l.bf16 %v6049
        %v6114 = vunpack.c.l.b16 %v5409
        %v6115 = vunpack.c.l.b16 %v5445
        %v6116 = vunpack.c.l.b16 %v5481
        %v6117 = vunpack.c.l.b16 %v5517
        %v6118 = vunpack.c.l.b16 %v5553
        %v6119 = vunpack.c.l.b16 %v5589
        %v6120 = vunpack.c.l.b16 %v5625
        %v6121 = vunpack.c.l.b16 %v5661
        %v6122 = vunpack.c.l.b16 %v5697
        %v6123 = vunpack.c.l.b16 %v5733
        %v6124 = vunpack.c.l.b16 %v5769
        %v6125 = vunpack.c.l.b16 %v5805
        %v6126 = vunpack.c.l.b16 %v5841
        %v6127 = vunpack.c.l.b16 %v5877
        %v6128 = vunpack.c.l.b16 %v5913
        %v6129 = vunpack.c.l.b16 %v5949
        %v6130 = vpack.c.b16 %v6115, %v6114
        %v6131 = vpack.c.b16 %v6117, %v6116
        %v6132 = vpack.c.b16 %v6119, %v6118
        %v6133 = vpack.c.b16 %v6121, %v6120
        %v6134 = vpack.c.b16 %v6123, %v6122
        %v6135 = vpack.c.b16 %v6125, %v6124
        %v6136 = vpack.c.b16 %v6127, %v6126
        %v6137 = vpack.c.b16 %v6129, %v6128
        %v6138 = vunpack.c.l.b16 %v5421
        %v6139 = vunpack.c.l.b16 %v5457
        %v6140 = vunpack.c.l.b16 %v5493
        %v6141 = vunpack.c.l.b16 %v5529
        %v6142 = vunpack.c.l.b16 %v5565
        %v6143 = vunpack.c.l.b16 %v5601
        %v6144 = vunpack.c.l.b16 %v5637
        %v6145 = vunpack.c.l.b16 %v5673
        %v6146 = vunpack.c.l.b16 %v5709
        %v6147 = vunpack.c.l.b16 %v5745
        %v6148 = vunpack.c.l.b16 %v5781
        %v6149 = vunpack.c.l.b16 %v5817
        %v6150 = vunpack.c.l.b16 %v5853
        %v6151 = vunpack.c.l.b16 %v5889
        %v6152 = vunpack.c.l.b16 %v5925
        %v6153 = vunpack.c.l.b16 %v5961
        %v6154 = vpack.c.b16 %v6139, %v6138
        %v6155 = vpack.c.b16 %v6141, %v6140
        %v6156 = vpack.c.b16 %v6143, %v6142
        %v6157 = vpack.c.b16 %v6145, %v6144
        %v6158 = vpack.c.b16 %v6147, %v6146
        %v6159 = vpack.c.b16 %v6149, %v6148
        %v6160 = vpack.c.b16 %v6151, %v6150
        %v6161 = vpack.c.b16 %v6153, %v6152
        %vm6162 = vcmask 261120
        %v6164 = vsel %vm6162, %v6130, 0
        %v6167 = vsel %vm6162, %v6131, 0
        %v6170 = vsel %vm6162, %v6132, 0
        %v6173 = vsel %vm6162, %v6133, 0
        %v6176 = vsel %vm6162, %v6134, 0
        %v6179 = vsel %vm6162, %v6135, 0
        %v6182 = vsel %vm6162, %v6136, 0
        %v6185 = vsel %vm6162, %v6137, 0
        %v6188 = vsel %vm6162, %v6154, 0
        %v6191 = vsel %vm6162, %v6155, 0
        %v6194 = vsel %vm6162, %v6156, 0
        %v6197 = vsel %vm6162, %v6157, 0
        %v6200 = vsel %vm6162, %v6158, 0
        %v6203 = vsel %vm6162, %v6159, 0
        %v6206 = vsel %vm6162, %v6160, 0
        %v6209 = vsel %vm6162, %v6161, 0
        %6211 = vmatpush.bf16.xpose.msra.mxu0 %v6209
        %6212 = vmatpush.bf16.xpose.msra.mxu0 %v6206
        %6213 = vmatpush.bf16.xpose.msra.mxu0 %v6203
        %6214 = vmatpush.bf16.xpose.msra.mxu0 %v6200
        %6215 = vmatpush.bf16.xpose.msra.mxu0 %v6197
        %6216 = vmatpush.bf16.xpose.msra.mxu0 %v6194
        %6217 = vmatpush.bf16.xpose.msra.mxu0 %v6191
        %6218 = vmatpush.bf16.xpose.msra.mxu0 %v6188
        %6219 = vmatmul.bf16.gmra.mxu0 %v6164
        %v6220 = vpop.f32.mrf.mxu0
        %v6221 = vadd.f32 %v6050, %v6220
        %v6222 = vpop.f32.mrf.mxu0
        %v6223 = vadd.f32 %v6051, %v6222
        %6224 = vmatmul.bf16.gmra.mxu0 %v6167
        %v6225 = vpop.f32.mrf.mxu0
        %v6226 = vadd.f32 %v6052, %v6225
        %v6227 = vpop.f32.mrf.mxu0
        %v6228 = vadd.f32 %v6053, %v6227
        %6229 = vmatmul.bf16.gmra.mxu0 %v6170
        %v6230 = vpop.f32.mrf.mxu0
        %v6231 = vadd.f32 %v6054, %v6230
        %v6232 = vpop.f32.mrf.mxu0
        %v6233 = vadd.f32 %v6055, %v6232
        %6234 = vmatmul.bf16.gmra.mxu0 %v6173
        %v6235 = vpop.f32.mrf.mxu0
        %v6236 = vadd.f32 %v6056, %v6235
        %v6237 = vpop.f32.mrf.mxu0
        %v6238 = vadd.f32 %v6057, %v6237
        %6239 = vmatmul.bf16.gmra.mxu0 %v6176
        %v6240 = vpop.f32.mrf.mxu0
        %v6241 = vadd.f32 %v6058, %v6240
        %v6242 = vpop.f32.mrf.mxu0
        %v6243 = vadd.f32 %v6059, %v6242
        %6244 = vmatmul.bf16.gmra.mxu0 %v6179
        %v6245 = vpop.f32.mrf.mxu0
        %v6246 = vadd.f32 %v6060, %v6245
        %v6247 = vpop.f32.mrf.mxu0
        %v6248 = vadd.f32 %v6061, %v6247
        %6249 = vmatmul.bf16.gmra.mxu0 %v6182
        %v6250 = vpop.f32.mrf.mxu0
        %v6251 = vadd.f32 %v6062, %v6250
        %v6252 = vpop.f32.mrf.mxu0
        %v6253 = vadd.f32 %v6063, %v6252
        %6254 = vmatmul.bf16.gmra.mxu0 %v6185
        %v6255 = vpop.f32.mrf.mxu0
        %v6256 = vadd.f32 %v6064, %v6255
        %v6257 = vpop.f32.mrf.mxu0
        %v6258 = vadd.f32 %v6065, %v6257
        %6259 = vdwg.mxu0
        %v6260 = vunpack.c.l.b16 %v5412
        %v6261 = vunpack.c.l.b16 %v5448
        %v6262 = vunpack.c.l.b16 %v5484
        %v6263 = vunpack.c.l.b16 %v5520
        %v6264 = vunpack.c.l.b16 %v5556
        %v6265 = vunpack.c.l.b16 %v5592
        %v6266 = vunpack.c.l.b16 %v5628
        %v6267 = vunpack.c.l.b16 %v5664
        %v6268 = vunpack.c.l.b16 %v5700
        %v6269 = vunpack.c.l.b16 %v5736
        %v6270 = vunpack.c.l.b16 %v5772
        %v6271 = vunpack.c.l.b16 %v5808
        %v6272 = vunpack.c.l.b16 %v5844
        %v6273 = vunpack.c.l.b16 %v5880
        %v6274 = vunpack.c.l.b16 %v5916
        %v6275 = vunpack.c.l.b16 %v5952
        %v6276 = vpack.c.b16 %v6261, %v6260
        %v6277 = vpack.c.b16 %v6263, %v6262
        %v6278 = vpack.c.b16 %v6265, %v6264
        %v6279 = vpack.c.b16 %v6267, %v6266
        %v6280 = vpack.c.b16 %v6269, %v6268
        %v6281 = vpack.c.b16 %v6271, %v6270
        %v6282 = vpack.c.b16 %v6273, %v6272
        %v6283 = vpack.c.b16 %v6275, %v6274
        %v6284 = vunpack.c.l.b16 %v5424
        %v6285 = vunpack.c.l.b16 %v5460
        %v6286 = vunpack.c.l.b16 %v5496
        %v6287 = vunpack.c.l.b16 %v5532
        %v6288 = vunpack.c.l.b16 %v5568
        %v6289 = vunpack.c.l.b16 %v5604
        %v6290 = vunpack.c.l.b16 %v5640
        %v6291 = vunpack.c.l.b16 %v5676
        %v6292 = vunpack.c.l.b16 %v5712
        %v6293 = vunpack.c.l.b16 %v5748
        %v6294 = vunpack.c.l.b16 %v5784
        %v6295 = vunpack.c.l.b16 %v5820
        %v6296 = vunpack.c.l.b16 %v5856
        %v6297 = vunpack.c.l.b16 %v5892
        %v6298 = vunpack.c.l.b16 %v5928
        %v6299 = vunpack.c.l.b16 %v5964
        %v6300 = vpack.c.b16 %v6285, %v6284
        %v6301 = vpack.c.b16 %v6287, %v6286
        %v6302 = vpack.c.b16 %v6289, %v6288
        %v6303 = vpack.c.b16 %v6291, %v6290
        %v6304 = vpack.c.b16 %v6293, %v6292
        %v6305 = vpack.c.b16 %v6295, %v6294
        %v6306 = vpack.c.b16 %v6297, %v6296
        %v6307 = vpack.c.b16 %v6299, %v6298
        %v6309 = vsel %vm6162, %v6276, 0
        %v6312 = vsel %vm6162, %v6277, 0
        %v6315 = vsel %vm6162, %v6278, 0
        %v6318 = vsel %vm6162, %v6279, 0
        %v6321 = vsel %vm6162, %v6280, 0
        %v6324 = vsel %vm6162, %v6281, 0
        %v6327 = vsel %vm6162, %v6282, 0
        %v6330 = vsel %vm6162, %v6283, 0
        %v6333 = vsel %vm6162, %v6300, 0
        %v6336 = vsel %vm6162, %v6301, 0
        %v6339 = vsel %vm6162, %v6302, 0
        %v6342 = vsel %vm6162, %v6303, 0
        %v6345 = vsel %vm6162, %v6304, 0
        %v6348 = vsel %vm6162, %v6305, 0
        %v6351 = vsel %vm6162, %v6306, 0
        %v6354 = vsel %vm6162, %v6307, 0
        %6356 = vmatpush.bf16.xpose.msra.mxu0 %v6354
        %6357 = vmatpush.bf16.xpose.msra.mxu0 %v6351
        %6358 = vmatpush.bf16.xpose.msra.mxu0 %v6348
        %6359 = vmatpush.bf16.xpose.msra.mxu0 %v6345
        %6360 = vmatpush.bf16.xpose.msra.mxu0 %v6342
        %6361 = vmatpush.bf16.xpose.msra.mxu0 %v6339
        %6362 = vmatpush.bf16.xpose.msra.mxu0 %v6336
        %6363 = vmatpush.bf16.xpose.msra.mxu0 %v6333
        %6364 = vmatmul.bf16.gmra.mxu0 %v6309
        %v6365 = vpop.f32.mrf.mxu0
        %v6366 = vadd.f32 %v6066, %v6365
        %v6367 = vpop.f32.mrf.mxu0
        %v6368 = vadd.f32 %v6067, %v6367
        %6369 = vmatmul.bf16.gmra.mxu0 %v6312
        %v6370 = vpop.f32.mrf.mxu0
        %v6371 = vadd.f32 %v6068, %v6370
        %v6372 = vpop.f32.mrf.mxu0
        %v6373 = vadd.f32 %v6069, %v6372
        %6374 = vmatmul.bf16.gmra.mxu0 %v6315
        %v6375 = vpop.f32.mrf.mxu0
        %v6376 = vadd.f32 %v6070, %v6375
        %v6377 = vpop.f32.mrf.mxu0
        %v6378 = vadd.f32 %v6071, %v6377
        %6379 = vmatmul.bf16.gmra.mxu0 %v6318
        %v6380 = vpop.f32.mrf.mxu0
        %v6381 = vadd.f32 %v6072, %v6380
        %v6382 = vpop.f32.mrf.mxu0
        %v6383 = vadd.f32 %v6073, %v6382
        %6384 = vmatmul.bf16.gmra.mxu0 %v6321
        %v6385 = vpop.f32.mrf.mxu0
        %v6386 = vadd.f32 %v6074, %v6385
        %v6387 = vpop.f32.mrf.mxu0
        %v6388 = vadd.f32 %v6075, %v6387
        %6389 = vmatmul.bf16.gmra.mxu0 %v6324
        %v6390 = vpop.f32.mrf.mxu0
        %v6391 = vadd.f32 %v6076, %v6390
        %v6392 = vpop.f32.mrf.mxu0
        %v6393 = vadd.f32 %v6077, %v6392
        %6394 = vmatmul.bf16.gmra.mxu0 %v6327
        %v6395 = vpop.f32.mrf.mxu0
        %v6396 = vadd.f32 %v6078, %v6395
        %v6397 = vpop.f32.mrf.mxu0
        %v6398 = vadd.f32 %v6079, %v6397
        %6399 = vmatmul.bf16.gmra.mxu0 %v6330
        %v6400 = vpop.f32.mrf.mxu0
        %v6401 = vadd.f32 %v6080, %v6400
        %v6402 = vpop.f32.mrf.mxu0
        %v6403 = vadd.f32 %v6081, %v6402
        %6404 = vdwg.mxu0
        %v6405 = vunpack.c.l.b16 %v5415
        %v6406 = vunpack.c.l.b16 %v5451
        %v6407 = vunpack.c.l.b16 %v5487
        %v6408 = vunpack.c.l.b16 %v5523
        %v6409 = vunpack.c.l.b16 %v5559
        %v6410 = vunpack.c.l.b16 %v5595
        %v6411 = vunpack.c.l.b16 %v5631
        %v6412 = vunpack.c.l.b16 %v5667
        %v6413 = vunpack.c.l.b16 %v5703
        %v6414 = vunpack.c.l.b16 %v5739
        %v6415 = vunpack.c.l.b16 %v5775
        %v6416 = vunpack.c.l.b16 %v5811
        %v6417 = vunpack.c.l.b16 %v5847
        %v6418 = vunpack.c.l.b16 %v5883
        %v6419 = vunpack.c.l.b16 %v5919
        %v6420 = vunpack.c.l.b16 %v5955
        %v6421 = vpack.c.b16 %v6406, %v6405
        %v6422 = vpack.c.b16 %v6408, %v6407
        %v6423 = vpack.c.b16 %v6410, %v6409
        %v6424 = vpack.c.b16 %v6412, %v6411
        %v6425 = vpack.c.b16 %v6414, %v6413
        %v6426 = vpack.c.b16 %v6416, %v6415
        %v6427 = vpack.c.b16 %v6418, %v6417
        %v6428 = vpack.c.b16 %v6420, %v6419
        %v6429 = vunpack.c.l.b16 %v5427
        %v6430 = vunpack.c.l.b16 %v5463
        %v6431 = vunpack.c.l.b16 %v5499
        %v6432 = vunpack.c.l.b16 %v5535
        %v6433 = vunpack.c.l.b16 %v5571
        %v6434 = vunpack.c.l.b16 %v5607
        %v6435 = vunpack.c.l.b16 %v5643
        %v6436 = vunpack.c.l.b16 %v5679
        %v6437 = vunpack.c.l.b16 %v5715
        %v6438 = vunpack.c.l.b16 %v5751
        %v6439 = vunpack.c.l.b16 %v5787
        %v6440 = vunpack.c.l.b16 %v5823
        %v6441 = vunpack.c.l.b16 %v5859
        %v6442 = vunpack.c.l.b16 %v5895
        %v6443 = vunpack.c.l.b16 %v5931
        %v6444 = vunpack.c.l.b16 %v5967
        %v6445 = vpack.c.b16 %v6430, %v6429
        %v6446 = vpack.c.b16 %v6432, %v6431
        %v6447 = vpack.c.b16 %v6434, %v6433
        %v6448 = vpack.c.b16 %v6436, %v6435
        %v6449 = vpack.c.b16 %v6438, %v6437
        %v6450 = vpack.c.b16 %v6440, %v6439
        %v6451 = vpack.c.b16 %v6442, %v6441
        %v6452 = vpack.c.b16 %v6444, %v6443
        %v6454 = vsel %vm6162, %v6421, 0
        %v6457 = vsel %vm6162, %v6422, 0
        %v6460 = vsel %vm6162, %v6423, 0
        %v6463 = vsel %vm6162, %v6424, 0
        %v6466 = vsel %vm6162, %v6425, 0
        %v6469 = vsel %vm6162, %v6426, 0
        %v6472 = vsel %vm6162, %v6427, 0
        %v6475 = vsel %vm6162, %v6428, 0
        %v6478 = vsel %vm6162, %v6445, 0
        %v6481 = vsel %vm6162, %v6446, 0
        %v6484 = vsel %vm6162, %v6447, 0
        %v6487 = vsel %vm6162, %v6448, 0
        %v6490 = vsel %vm6162, %v6449, 0
        %v6493 = vsel %vm6162, %v6450, 0
        %v6496 = vsel %vm6162, %v6451, 0
        %v6499 = vsel %vm6162, %v6452, 0
        %6501 = vmatpush.bf16.xpose.msra.mxu0 %v6499
        %6502 = vmatpush.bf16.xpose.msra.mxu0 %v6496
        %6503 = vmatpush.bf16.xpose.msra.mxu0 %v6493
        %6504 = vmatpush.bf16.xpose.msra.mxu0 %v6490
        %6505 = vmatpush.bf16.xpose.msra.mxu0 %v6487
        %6506 = vmatpush.bf16.xpose.msra.mxu0 %v6484
        %6507 = vmatpush.bf16.xpose.msra.mxu0 %v6481
        %6508 = vmatpush.bf16.xpose.msra.mxu0 %v6478
        %6509 = vmatmul.bf16.gmra.mxu0 %v6454
        %v6510 = vpop.f32.mrf.mxu0
        %v6511 = vadd.f32 %v6082, %v6510
        %v6512 = vpop.f32.mrf.mxu0
        %v6513 = vadd.f32 %v6083, %v6512
        %6514 = vmatmul.bf16.gmra.mxu0 %v6457
        %v6515 = vpop.f32.mrf.mxu0
        %v6516 = vadd.f32 %v6084, %v6515
        %v6517 = vpop.f32.mrf.mxu0
        %v6518 = vadd.f32 %v6085, %v6517
        %6519 = vmatmul.bf16.gmra.mxu0 %v6460
        %v6520 = vpop.f32.mrf.mxu0
        %v6521 = vadd.f32 %v6086, %v6520
        %v6522 = vpop.f32.mrf.mxu0
        %v6523 = vadd.f32 %v6087, %v6522
        %6524 = vmatmul.bf16.gmra.mxu0 %v6463
        %v6525 = vpop.f32.mrf.mxu0
        %v6526 = vadd.f32 %v6088, %v6525
        %v6527 = vpop.f32.mrf.mxu0
        %v6528 = vadd.f32 %v6089, %v6527
        %6529 = vmatmul.bf16.gmra.mxu0 %v6466
        %v6530 = vpop.f32.mrf.mxu0
        %v6531 = vadd.f32 %v6090, %v6530
        %v6532 = vpop.f32.mrf.mxu0
        %v6533 = vadd.f32 %v6091, %v6532
        %6534 = vmatmul.bf16.gmra.mxu0 %v6469
        %v6535 = vpop.f32.mrf.mxu0
        %v6536 = vadd.f32 %v6092, %v6535
        %v6537 = vpop.f32.mrf.mxu0
        %v6538 = vadd.f32 %v6093, %v6537
        %6539 = vmatmul.bf16.gmra.mxu0 %v6472
        %v6540 = vpop.f32.mrf.mxu0
        %v6541 = vadd.f32 %v6094, %v6540
        %v6542 = vpop.f32.mrf.mxu0
        %v6543 = vadd.f32 %v6095, %v6542
        %6544 = vmatmul.bf16.gmra.mxu0 %v6475
        %v6545 = vpop.f32.mrf.mxu0
        %v6546 = vadd.f32 %v6096, %v6545
        %v6547 = vpop.f32.mrf.mxu0
        %v6548 = vadd.f32 %v6097, %v6547
        %6549 = vdwg.mxu0
        %v6550 = vunpack.c.l.b16 %v5418
        %v6551 = vunpack.c.l.b16 %v5454
        %v6552 = vunpack.c.l.b16 %v5490
        %v6553 = vunpack.c.l.b16 %v5526
        %v6554 = vunpack.c.l.b16 %v5562
        %v6555 = vunpack.c.l.b16 %v5598
        %v6556 = vunpack.c.l.b16 %v5634
        %v6557 = vunpack.c.l.b16 %v5670
        %v6558 = vunpack.c.l.b16 %v5706
        %v6559 = vunpack.c.l.b16 %v5742
        %v6560 = vunpack.c.l.b16 %v5778
        %v6561 = vunpack.c.l.b16 %v5814
        %v6562 = vunpack.c.l.b16 %v5850
        %v6563 = vunpack.c.l.b16 %v5886
        %v6564 = vunpack.c.l.b16 %v5922
        %v6565 = vunpack.c.l.b16 %v5958
        %v6566 = vpack.c.b16 %v6551, %v6550
        %v6567 = vpack.c.b16 %v6553, %v6552
        %v6568 = vpack.c.b16 %v6555, %v6554
        %v6569 = vpack.c.b16 %v6557, %v6556
        %v6570 = vpack.c.b16 %v6559, %v6558
        %v6571 = vpack.c.b16 %v6561, %v6560
        %v6572 = vpack.c.b16 %v6563, %v6562
        %v6573 = vpack.c.b16 %v6565, %v6564
        %v6574 = vunpack.c.l.b16 %v5430
        %v6575 = vunpack.c.l.b16 %v5466
        %v6576 = vunpack.c.l.b16 %v5502
        %v6577 = vunpack.c.l.b16 %v5538
        %v6578 = vunpack.c.l.b16 %v5574
        %v6579 = vunpack.c.l.b16 %v5610
        %v6580 = vunpack.c.l.b16 %v5646
        %v6581 = vunpack.c.l.b16 %v5682
        %v6582 = vunpack.c.l.b16 %v5718
        %v6583 = vunpack.c.l.b16 %v5754
        %v6584 = vunpack.c.l.b16 %v5790
        %v6585 = vunpack.c.l.b16 %v5826
        %v6586 = vunpack.c.l.b16 %v5862
        %v6587 = vunpack.c.l.b16 %v5898
        %v6588 = vunpack.c.l.b16 %v5934
        %v6589 = vunpack.c.l.b16 %v5970
        %v6590 = vpack.c.b16 %v6575, %v6574
        %v6591 = vpack.c.b16 %v6577, %v6576
        %v6592 = vpack.c.b16 %v6579, %v6578
        %v6593 = vpack.c.b16 %v6581, %v6580
        %v6594 = vpack.c.b16 %v6583, %v6582
        %v6595 = vpack.c.b16 %v6585, %v6584
        %v6596 = vpack.c.b16 %v6587, %v6586
        %v6597 = vpack.c.b16 %v6589, %v6588
        %v6599 = vsel %vm6162, %v6566, 0
        %v6602 = vsel %vm6162, %v6567, 0
        %v6605 = vsel %vm6162, %v6568, 0
        %v6608 = vsel %vm6162, %v6569, 0
        %v6611 = vsel %vm6162, %v6570, 0
        %v6614 = vsel %vm6162, %v6571, 0
        %v6617 = vsel %vm6162, %v6572, 0
        %v6620 = vsel %vm6162, %v6573, 0
        %v6623 = vsel %vm6162, %v6590, 0
        %v6626 = vsel %vm6162, %v6591, 0
        %v6629 = vsel %vm6162, %v6592, 0
        %v6632 = vsel %vm6162, %v6593, 0
        %v6635 = vsel %vm6162, %v6594, 0
        %v6638 = vsel %vm6162, %v6595, 0
        %v6641 = vsel %vm6162, %v6596, 0
        %v6644 = vsel %vm6162, %v6597, 0
        %6646 = vmatpush.bf16.xpose.msra.mxu0 %v6644
        %6647 = vmatpush.bf16.xpose.msra.mxu0 %v6641
        %6648 = vmatpush.bf16.xpose.msra.mxu0 %v6638
        %6649 = vmatpush.bf16.xpose.msra.mxu0 %v6635
        %6650 = vmatpush.bf16.xpose.msra.mxu0 %v6632
        %6651 = vmatpush.bf16.xpose.msra.mxu0 %v6629
        %6652 = vmatpush.bf16.xpose.msra.mxu0 %v6626
        %6653 = vmatpush.bf16.xpose.msra.mxu0 %v6623
        %6654 = vmatmul.bf16.gmra.mxu0 %v6599
        %v6655 = vpop.f32.mrf.mxu0
        %v6656 = vadd.f32 %v6098, %v6655
        %v6657 = vpop.f32.mrf.mxu0
        %v6658 = vadd.f32 %v6099, %v6657
        %6659 = vmatmul.bf16.gmra.mxu0 %v6602
        %v6660 = vpop.f32.mrf.mxu0
        %v6661 = vadd.f32 %v6100, %v6660
        %v6662 = vpop.f32.mrf.mxu0
        %v6663 = vadd.f32 %v6101, %v6662
        %6664 = vmatmul.bf16.gmra.mxu0 %v6605
        %v6665 = vpop.f32.mrf.mxu0
        %v6666 = vadd.f32 %v6102, %v6665
        %v6667 = vpop.f32.mrf.mxu0
        %v6668 = vadd.f32 %v6103, %v6667
        %6669 = vmatmul.bf16.gmra.mxu0 %v6608
        %v6670 = vpop.f32.mrf.mxu0
        %v6671 = vadd.f32 %v6104, %v6670
        %v6672 = vpop.f32.mrf.mxu0
        %v6673 = vadd.f32 %v6105, %v6672
        %6674 = vmatmul.bf16.gmra.mxu0 %v6611
        %v6675 = vpop.f32.mrf.mxu0
        %v6676 = vadd.f32 %v6106, %v6675
        %v6677 = vpop.f32.mrf.mxu0
        %v6678 = vadd.f32 %v6107, %v6677
        %6679 = vmatmul.bf16.gmra.mxu0 %v6614
        %v6680 = vpop.f32.mrf.mxu0
        %v6681 = vadd.f32 %v6108, %v6680
        %v6682 = vpop.f32.mrf.mxu0
        %v6683 = vadd.f32 %v6109, %v6682
        %6684 = vmatmul.bf16.gmra.mxu0 %v6617
        %v6685 = vpop.f32.mrf.mxu0
        %v6686 = vadd.f32 %v6110, %v6685
        %v6687 = vpop.f32.mrf.mxu0
        %v6688 = vadd.f32 %v6111, %v6687
        %6689 = vmatmul.bf16.gmra.mxu0 %v6620
        %v6690 = vpop.f32.mrf.mxu0
        %v6691 = vadd.f32 %v6112, %v6690
        %v6692 = vpop.f32.mrf.mxu0
        %v6693 = vadd.f32 %v6113, %v6692
        %6694 = vdwg.mxu0
        %v6696 = vperm.slane %v5985, 0
        %v6698 = vadd.f32 %v6221, %v6696
        %v6699 = vadd.f32 %v6223, %v6696
        %v6700 = vadd.f32 %v6226, %v6696
        %v6701 = vadd.f32 %v6228, %v6696
        %v6702 = vadd.f32 %v6231, %v6696
        %v6703 = vadd.f32 %v6233, %v6696
        %v6704 = vadd.f32 %v6236, %v6696
        %v6705 = vadd.f32 %v6238, %v6696
        %v6706 = vadd.f32 %v6241, %v6696
        %v6707 = vadd.f32 %v6243, %v6696
        %v6708 = vadd.f32 %v6246, %v6696
        %v6709 = vadd.f32 %v6248, %v6696
        %v6710 = vadd.f32 %v6251, %v6696
        %v6711 = vadd.f32 %v6253, %v6696
        %v6712 = vadd.f32 %v6256, %v6696
        %v6713 = vadd.f32 %v6258, %v6696
        %v6714 = vadd.f32 %v6366, %v6696
        %v6715 = vadd.f32 %v6368, %v6696
        %v6716 = vadd.f32 %v6371, %v6696
        %v6717 = vadd.f32 %v6373, %v6696
        %v6718 = vadd.f32 %v6376, %v6696
        %v6719 = vadd.f32 %v6378, %v6696
        %v6720 = vadd.f32 %v6381, %v6696
        %v6721 = vadd.f32 %v6383, %v6696
        %v6722 = vadd.f32 %v6386, %v6696
        %v6723 = vadd.f32 %v6388, %v6696
        %v6724 = vadd.f32 %v6391, %v6696
        %v6725 = vadd.f32 %v6393, %v6696
        %v6726 = vadd.f32 %v6396, %v6696
        %v6727 = vadd.f32 %v6398, %v6696
        %v6728 = vadd.f32 %v6401, %v6696
        %v6729 = vadd.f32 %v6403, %v6696
        %v6730 = vadd.f32 %v6511, %v6696
        %v6731 = vadd.f32 %v6513, %v6696
        %v6732 = vadd.f32 %v6516, %v6696
        %v6733 = vadd.f32 %v6518, %v6696
        %v6734 = vadd.f32 %v6521, %v6696
        %v6735 = vadd.f32 %v6523, %v6696
        %v6736 = vadd.f32 %v6526, %v6696
        %v6737 = vadd.f32 %v6528, %v6696
        %v6738 = vadd.f32 %v6531, %v6696
        %v6739 = vadd.f32 %v6533, %v6696
        %v6740 = vadd.f32 %v6536, %v6696
        %v6741 = vadd.f32 %v6538, %v6696
        %v6742 = vadd.f32 %v6541, %v6696
        %v6743 = vadd.f32 %v6543, %v6696
        %v6744 = vadd.f32 %v6546, %v6696
        %v6745 = vadd.f32 %v6548, %v6696
        %v6746 = vadd.f32 %v6656, %v6696
        %v6747 = vadd.f32 %v6658, %v6696
        %v6748 = vadd.f32 %v6661, %v6696
        %v6749 = vadd.f32 %v6663, %v6696
        %v6750 = vadd.f32 %v6666, %v6696
        %v6751 = vadd.f32 %v6668, %v6696
        %v6752 = vadd.f32 %v6671, %v6696
        %v6753 = vadd.f32 %v6673, %v6696
        %v6754 = vadd.f32 %v6676, %v6696
        %v6755 = vadd.f32 %v6678, %v6696
        %v6756 = vadd.f32 %v6681, %v6696
        %v6757 = vadd.f32 %v6683, %v6696
        %v6758 = vadd.f32 %v6686, %v6696
        %v6759 = vadd.f32 %v6688, %v6696
        %v6760 = vadd.f32 %v6691, %v6696
        %v6761 = vadd.f32 %v6693, %v6696
        %6762 = vmax.xlane.f32.xlu0 %v6698
        %v6763 = vpop.xlane.xlu0 %6762
        %6764 = vmax.xlane.f32.xlu0 %v6699
        %v6765 = vpop.xlane.xlu0 %6764
        %6766 = vmax.xlane.f32.xlu0 %v6700
        %v6767 = vpop.xlane.xlu0 %6766
        %6768 = vmax.xlane.f32.xlu0 %v6701
        %v6769 = vpop.xlane.xlu0 %6768
        %6770 = vmax.xlane.f32.xlu0 %v6702
        %v6771 = vpop.xlane.xlu0 %6770
        %6772 = vmax.xlane.f32.xlu0 %v6703
        %v6773 = vpop.xlane.xlu0 %6772
        %6774 = vmax.xlane.f32.xlu0 %v6704
        %v6775 = vpop.xlane.xlu0 %6774
        %6776 = vmax.xlane.f32.xlu0 %v6705
        %v6777 = vpop.xlane.xlu0 %6776
        %6778 = vmax.xlane.f32.xlu0 %v6706
        %v6779 = vpop.xlane.xlu0 %6778
        %6780 = vmax.xlane.f32.xlu0 %v6707
        %v6781 = vpop.xlane.xlu0 %6780
        %6782 = vmax.xlane.f32.xlu0 %v6708
        %v6783 = vpop.xlane.xlu0 %6782
        %6784 = vmax.xlane.f32.xlu0 %v6709
        %v6785 = vpop.xlane.xlu0 %6784
        %6786 = vmax.xlane.f32.xlu0 %v6710
        %v6787 = vpop.xlane.xlu0 %6786
        %6788 = vmax.xlane.f32.xlu0 %v6711
        %v6789 = vpop.xlane.xlu0 %6788
        %6790 = vmax.xlane.f32.xlu0 %v6712
        %v6791 = vpop.xlane.xlu0 %6790
        %6792 = vmax.xlane.f32.xlu0 %v6713
        %v6793 = vpop.xlane.xlu0 %6792
        %6794 = vmax.xlane.f32.xlu0 %v6714
        %v6795 = vpop.xlane.xlu0 %6794
        %6796 = vmax.xlane.f32.xlu0 %v6715
        %v6797 = vpop.xlane.xlu0 %6796
        %6798 = vmax.xlane.f32.xlu0 %v6716
        %v6799 = vpop.xlane.xlu0 %6798
        %6800 = vmax.xlane.f32.xlu0 %v6717
        %v6801 = vpop.xlane.xlu0 %6800
        %6802 = vmax.xlane.f32.xlu0 %v6718
        %v6803 = vpop.xlane.xlu0 %6802
        %6804 = vmax.xlane.f32.xlu0 %v6719
        %v6805 = vpop.xlane.xlu0 %6804
        %6806 = vmax.xlane.f32.xlu0 %v6720
        %v6807 = vpop.xlane.xlu0 %6806
        %6808 = vmax.xlane.f32.xlu0 %v6721
        %v6809 = vpop.xlane.xlu0 %6808
        %6810 = vmax.xlane.f32.xlu0 %v6722
        %v6811 = vpop.xlane.xlu0 %6810
        %6812 = vmax.xlane.f32.xlu0 %v6723
        %v6813 = vpop.xlane.xlu0 %6812
        %6814 = vmax.xlane.f32.xlu0 %v6724
        %v6815 = vpop.xlane.xlu0 %6814
        %6816 = vmax.xlane.f32.xlu0 %v6725
        %v6817 = vpop.xlane.xlu0 %6816
        %6818 = vmax.xlane.f32.xlu0 %v6726
        %v6819 = vpop.xlane.xlu0 %6818
        %6820 = vmax.xlane.f32.xlu0 %v6727
        %v6821 = vpop.xlane.xlu0 %6820
        %6822 = vmax.xlane.f32.xlu0 %v6728
        %v6823 = vpop.xlane.xlu0 %6822
        %6824 = vmax.xlane.f32.xlu0 %v6729
        %v6825 = vpop.xlane.xlu0 %6824
        %6826 = vmax.xlane.f32.xlu0 %v6730
        %v6827 = vpop.xlane.xlu0 %6826
        %6828 = vmax.xlane.f32.xlu0 %v6731
        %v6829 = vpop.xlane.xlu0 %6828
        %6830 = vmax.xlane.f32.xlu0 %v6732
        %v6831 = vpop.xlane.xlu0 %6830
        %6832 = vmax.xlane.f32.xlu0 %v6733
        %v6833 = vpop.xlane.xlu0 %6832
        %6834 = vmax.xlane.f32.xlu0 %v6734
        %v6835 = vpop.xlane.xlu0 %6834
        %6836 = vmax.xlane.f32.xlu0 %v6735
        %v6837 = vpop.xlane.xlu0 %6836
        %6838 = vmax.xlane.f32.xlu0 %v6736
        %v6839 = vpop.xlane.xlu0 %6838
        %6840 = vmax.xlane.f32.xlu0 %v6737
        %v6841 = vpop.xlane.xlu0 %6840
        %6842 = vmax.xlane.f32.xlu0 %v6738
        %v6843 = vpop.xlane.xlu0 %6842
        %6844 = vmax.xlane.f32.xlu0 %v6739
        %v6845 = vpop.xlane.xlu0 %6844
        %6846 = vmax.xlane.f32.xlu0 %v6740
        %v6847 = vpop.xlane.xlu0 %6846
        %6848 = vmax.xlane.f32.xlu0 %v6741
        %v6849 = vpop.xlane.xlu0 %6848
        %6850 = vmax.xlane.f32.xlu0 %v6742
        %v6851 = vpop.xlane.xlu0 %6850
        %6852 = vmax.xlane.f32.xlu0 %v6743
        %v6853 = vpop.xlane.xlu0 %6852
        %6854 = vmax.xlane.f32.xlu0 %v6744
        %v6855 = vpop.xlane.xlu0 %6854
        %6856 = vmax.xlane.f32.xlu0 %v6745
        %v6857 = vpop.xlane.xlu0 %6856
        %6858 = vmax.xlane.f32.xlu0 %v6746
        %v6859 = vpop.xlane.xlu0 %6858
        %6860 = vmax.xlane.f32.xlu0 %v6747
        %v6861 = vpop.xlane.xlu0 %6860
        %6862 = vmax.xlane.f32.xlu0 %v6748
        %v6863 = vpop.xlane.xlu0 %6862
        %6864 = vmax.xlane.f32.xlu0 %v6749
        %v6865 = vpop.xlane.xlu0 %6864
        %6866 = vmax.xlane.f32.xlu0 %v6750
        %v6867 = vpop.xlane.xlu0 %6866
        %6868 = vmax.xlane.f32.xlu0 %v6751
        %v6869 = vpop.xlane.xlu0 %6868
        %6870 = vmax.xlane.f32.xlu0 %v6752
        %v6871 = vpop.xlane.xlu0 %6870
        %6872 = vmax.xlane.f32.xlu0 %v6753
        %v6873 = vpop.xlane.xlu0 %6872
        %6874 = vmax.xlane.f32.xlu0 %v6754
        %v6875 = vpop.xlane.xlu0 %6874
        %6876 = vmax.xlane.f32.xlu0 %v6755
        %v6877 = vpop.xlane.xlu0 %6876
        %6878 = vmax.xlane.f32.xlu0 %v6756
        %v6879 = vpop.xlane.xlu0 %6878
        %6880 = vmax.xlane.f32.xlu0 %v6757
        %v6881 = vpop.xlane.xlu0 %6880
        %6882 = vmax.xlane.f32.xlu0 %v6758
        %v6883 = vpop.xlane.xlu0 %6882
        %6884 = vmax.xlane.f32.xlu0 %v6759
        %v6885 = vpop.xlane.xlu0 %6884
        %6886 = vmax.xlane.f32.xlu0 %v6760
        %v6887 = vpop.xlane.xlu0 %6886
        %6888 = vmax.xlane.f32.xlu0 %v6761
        %v6889 = vpop.xlane.xlu0 %6888
        %v6890 = vsub.f32 %v6698, %v6763
        %v6891 = vsub.f32 %v6699, %v6765
        %v6892 = vsub.f32 %v6700, %v6767
        %v6893 = vsub.f32 %v6701, %v6769
        %v6894 = vsub.f32 %v6702, %v6771
        %v6895 = vsub.f32 %v6703, %v6773
        %v6896 = vsub.f32 %v6704, %v6775
        %v6897 = vsub.f32 %v6705, %v6777
        %v6898 = vsub.f32 %v6706, %v6779
        %v6899 = vsub.f32 %v6707, %v6781
        %v6900 = vsub.f32 %v6708, %v6783
        %v6901 = vsub.f32 %v6709, %v6785
        %v6902 = vsub.f32 %v6710, %v6787
        %v6903 = vsub.f32 %v6711, %v6789
        %v6904 = vsub.f32 %v6712, %v6791
        %v6905 = vsub.f32 %v6713, %v6793
        %v6906 = vsub.f32 %v6714, %v6795
        %v6907 = vsub.f32 %v6715, %v6797
        %v6908 = vsub.f32 %v6716, %v6799
        %v6909 = vsub.f32 %v6717, %v6801
        %v6910 = vsub.f32 %v6718, %v6803
        %v6911 = vsub.f32 %v6719, %v6805
        %v6912 = vsub.f32 %v6720, %v6807
        %v6913 = vsub.f32 %v6721, %v6809
        %v6914 = vsub.f32 %v6722, %v6811
        %v6915 = vsub.f32 %v6723, %v6813
        %v6916 = vsub.f32 %v6724, %v6815
        %v6917 = vsub.f32 %v6725, %v6817
        %v6918 = vsub.f32 %v6726, %v6819
        %v6919 = vsub.f32 %v6727, %v6821
        %v6920 = vsub.f32 %v6728, %v6823
        %v6921 = vsub.f32 %v6729, %v6825
        %v6922 = vsub.f32 %v6730, %v6827
        %v6923 = vsub.f32 %v6731, %v6829
        %v6924 = vsub.f32 %v6732, %v6831
        %v6925 = vsub.f32 %v6733, %v6833
        %v6926 = vsub.f32 %v6734, %v6835
        %v6927 = vsub.f32 %v6735, %v6837
        %v6928 = vsub.f32 %v6736, %v6839
        %v6929 = vsub.f32 %v6737, %v6841
        %v6930 = vsub.f32 %v6738, %v6843
        %v6931 = vsub.f32 %v6739, %v6845
        %v6932 = vsub.f32 %v6740, %v6847
        %v6933 = vsub.f32 %v6741, %v6849
        %v6934 = vsub.f32 %v6742, %v6851
        %v6935 = vsub.f32 %v6743, %v6853
        %v6936 = vsub.f32 %v6744, %v6855
        %v6937 = vsub.f32 %v6745, %v6857
        %v6938 = vsub.f32 %v6746, %v6859
        %v6939 = vsub.f32 %v6747, %v6861
        %v6940 = vsub.f32 %v6748, %v6863
        %v6941 = vsub.f32 %v6749, %v6865
        %v6942 = vsub.f32 %v6750, %v6867
        %v6943 = vsub.f32 %v6751, %v6869
        %v6944 = vsub.f32 %v6752, %v6871
        %v6945 = vsub.f32 %v6753, %v6873
        %v6946 = vsub.f32 %v6754, %v6875
        %v6947 = vsub.f32 %v6755, %v6877
        %v6948 = vsub.f32 %v6756, %v6879
        %v6949 = vsub.f32 %v6757, %v6881
        %v6950 = vsub.f32 %v6758, %v6883
        %v6951 = vsub.f32 %v6759, %v6885
        %v6952 = vsub.f32 %v6760, %v6887
        %v6953 = vsub.f32 %v6761, %v6889
        %v6954 = vmul.f32 %v6890, 1.442695
        %v6955 = vpow.pop %v6954
        %v6956 = vmul.f32 %v6891, 1.442695
        %v6957 = vpow.pop %v6956
        %v6958 = vmul.f32 %v6892, 1.442695
        %v6959 = vpow.pop %v6958
        %v6960 = vmul.f32 %v6893, 1.442695
        %v6961 = vpow.pop %v6960
        %v6962 = vmul.f32 %v6894, 1.442695
        %v6963 = vpow.pop %v6962
        %v6964 = vmul.f32 %v6895, 1.442695
        %v6965 = vpow.pop %v6964
        %v6966 = vmul.f32 %v6896, 1.442695
        %v6967 = vpow.pop %v6966
        %v6968 = vmul.f32 %v6897, 1.442695
        %v6969 = vpow.pop %v6968
        %v6970 = vmul.f32 %v6898, 1.442695
        %v6971 = vpow.pop %v6970
        %v6972 = vmul.f32 %v6899, 1.442695
        %v6973 = vpow.pop %v6972
        %v6974 = vmul.f32 %v6900, 1.442695
        %v6975 = vpow.pop %v6974
        %v6976 = vmul.f32 %v6901, 1.442695
        %v6977 = vpow.pop %v6976
        %v6978 = vmul.f32 %v6902, 1.442695
        %v6979 = vpow.pop %v6978
        %v6980 = vmul.f32 %v6903, 1.442695
        %v6981 = vpow.pop %v6980
        %v6982 = vmul.f32 %v6904, 1.442695
        %v6983 = vpow.pop %v6982
        %v6984 = vmul.f32 %v6905, 1.442695
        %v6985 = vpow.pop %v6984
        %v6986 = vmul.f32 %v6906, 1.442695
        %v6987 = vpow.pop %v6986
        %v6988 = vmul.f32 %v6907, 1.442695
        %v6989 = vpow.pop %v6988
        %v6990 = vmul.f32 %v6908, 1.442695
        %v6991 = vpow.pop %v6990
        %v6992 = vmul.f32 %v6909, 1.442695
        %v6993 = vpow.pop %v6992
        %v6994 = vmul.f32 %v6910, 1.442695
        %v6995 = vpow.pop %v6994
        %v6996 = vmul.f32 %v6911, 1.442695
        %v6997 = vpow.pop %v6996
        %v6998 = vmul.f32 %v6912, 1.442695
        %v6999 = vpow.pop %v6998
        %v7000 = vmul.f32 %v6913, 1.442695
        %v7001 = vpow.pop %v7000
        %v7002 = vmul.f32 %v6914, 1.442695
        %v7003 = vpow.pop %v7002
        %v7004 = vmul.f32 %v6915, 1.442695
        %v7005 = vpow.pop %v7004
        %v7006 = vmul.f32 %v6916, 1.442695
        %v7007 = vpow.pop %v7006
        %v7008 = vmul.f32 %v6917, 1.442695
        %v7009 = vpow.pop %v7008
        %v7010 = vmul.f32 %v6918, 1.442695
        %v7011 = vpow.pop %v7010
        %v7012 = vmul.f32 %v6919, 1.442695
        %v7013 = vpow.pop %v7012
        %v7014 = vmul.f32 %v6920, 1.442695
        %v7015 = vpow.pop %v7014
        %v7016 = vmul.f32 %v6921, 1.442695
        %v7017 = vpow.pop %v7016
        %v7018 = vmul.f32 %v6922, 1.442695
        %v7019 = vpow.pop %v7018
        %v7020 = vmul.f32 %v6923, 1.442695
        %v7021 = vpow.pop %v7020
        %v7022 = vmul.f32 %v6924, 1.442695
        %v7023 = vpow.pop %v7022
        %v7024 = vmul.f32 %v6925, 1.442695
        %v7025 = vpow.pop %v7024
        %v7026 = vmul.f32 %v6926, 1.442695
        %v7027 = vpow.pop %v7026
        %v7028 = vmul.f32 %v6927, 1.442695
        %v7029 = vpow.pop %v7028
        %v7030 = vmul.f32 %v6928, 1.442695
        %v7031 = vpow.pop %v7030
        %v7032 = vmul.f32 %v6929, 1.442695
        %v7033 = vpow.pop %v7032
        %v7034 = vmul.f32 %v6930, 1.442695
        %v7035 = vpow.pop %v7034
        %v7036 = vmul.f32 %v6931, 1.442695
        %v7037 = vpow.pop %v7036
        %v7038 = vmul.f32 %v6932, 1.442695
        %v7039 = vpow.pop %v7038
        %v7040 = vmul.f32 %v6933, 1.442695
        %v7041 = vpow.pop %v7040
        %v7042 = vmul.f32 %v6934, 1.442695
        %v7043 = vpow.pop %v7042
        %v7044 = vmul.f32 %v6935, 1.442695
        %v7045 = vpow.pop %v7044
        %v7046 = vmul.f32 %v6936, 1.442695
        %v7047 = vpow.pop %v7046
        %v7048 = vmul.f32 %v6937, 1.442695
        %v7049 = vpow.pop %v7048
        %v7050 = vmul.f32 %v6938, 1.442695
        %v7051 = vpow.pop %v7050
        %v7052 = vmul.f32 %v6939, 1.442695
        %v7053 = vpow.pop %v7052
        %v7054 = vmul.f32 %v6940, 1.442695
        %v7055 = vpow.pop %v7054
        %v7056 = vmul.f32 %v6941, 1.442695
        %v7057 = vpow.pop %v7056
        %v7058 = vmul.f32 %v6942, 1.442695
        %v7059 = vpow.pop %v7058
        %v7060 = vmul.f32 %v6943, 1.442695
        %v7061 = vpow.pop %v7060
        %v7062 = vmul.f32 %v6944, 1.442695
        %v7063 = vpow.pop %v7062
        %v7064 = vmul.f32 %v6945, 1.442695
        %v7065 = vpow.pop %v7064
        %v7066 = vmul.f32 %v6946, 1.442695
        %v7067 = vpow.pop %v7066
        %v7068 = vmul.f32 %v6947, 1.442695
        %v7069 = vpow.pop %v7068
        %v7070 = vmul.f32 %v6948, 1.442695
        %v7071 = vpow.pop %v7070
        %v7072 = vmul.f32 %v6949, 1.442695
        %v7073 = vpow.pop %v7072
        %v7074 = vmul.f32 %v6950, 1.442695
        %v7075 = vpow.pop %v7074
        %v7076 = vmul.f32 %v6951, 1.442695
        %v7077 = vpow.pop %v7076
        %v7078 = vmul.f32 %v6952, 1.442695
        %v7079 = vpow.pop %v7078
        %v7080 = vmul.f32 %v6953, 1.442695
        %v7081 = vpow.pop %v7080
        %7082 = vadd.xlane.f32.xlu0 %v6955
        %v7083 = vpop.xlane.xlu0 %7082
        %7084 = vadd.xlane.f32.xlu0 %v6957
        %v7085 = vpop.xlane.xlu0 %7084
        %7086 = vadd.xlane.f32.xlu0 %v6959
        %v7087 = vpop.xlane.xlu0 %7086
        %7088 = vadd.xlane.f32.xlu0 %v6961
        %v7089 = vpop.xlane.xlu0 %7088
        %7090 = vadd.xlane.f32.xlu0 %v6963
        %v7091 = vpop.xlane.xlu0 %7090
        %7092 = vadd.xlane.f32.xlu0 %v6965
        %v7093 = vpop.xlane.xlu0 %7092
        %7094 = vadd.xlane.f32.xlu0 %v6967
        %v7095 = vpop.xlane.xlu0 %7094
        %7096 = vadd.xlane.f32.xlu0 %v6969
        %v7097 = vpop.xlane.xlu0 %7096
        %7098 = vadd.xlane.f32.xlu0 %v6971
        %v7099 = vpop.xlane.xlu0 %7098
        %7100 = vadd.xlane.f32.xlu0 %v6973
        %v7101 = vpop.xlane.xlu0 %7100
        %7102 = vadd.xlane.f32.xlu0 %v6975
        %v7103 = vpop.xlane.xlu0 %7102
        %7104 = vadd.xlane.f32.xlu0 %v6977
        %v7105 = vpop.xlane.xlu0 %7104
        %7106 = vadd.xlane.f32.xlu0 %v6979
        %v7107 = vpop.xlane.xlu0 %7106
        %7108 = vadd.xlane.f32.xlu0 %v6981
        %v7109 = vpop.xlane.xlu0 %7108
        %7110 = vadd.xlane.f32.xlu0 %v6983
        %v7111 = vpop.xlane.xlu0 %7110
        %7112 = vadd.xlane.f32.xlu0 %v6985
        %v7113 = vpop.xlane.xlu0 %7112
        %7114 = vadd.xlane.f32.xlu0 %v6987
        %v7115 = vpop.xlane.xlu0 %7114
        %7116 = vadd.xlane.f32.xlu0 %v6989
        %v7117 = vpop.xlane.xlu0 %7116
        %7118 = vadd.xlane.f32.xlu0 %v6991
        %v7119 = vpop.xlane.xlu0 %7118
        %7120 = vadd.xlane.f32.xlu0 %v6993
        %v7121 = vpop.xlane.xlu0 %7120
        %7122 = vadd.xlane.f32.xlu0 %v6995
        %v7123 = vpop.xlane.xlu0 %7122
        %7124 = vadd.xlane.f32.xlu0 %v6997
        %v7125 = vpop.xlane.xlu0 %7124
        %7126 = vadd.xlane.f32.xlu0 %v6999
        %v7127 = vpop.xlane.xlu0 %7126
        %7128 = vadd.xlane.f32.xlu0 %v7001
        %v7129 = vpop.xlane.xlu0 %7128
        %7130 = vadd.xlane.f32.xlu0 %v7003
        %v7131 = vpop.xlane.xlu0 %7130
        %7132 = vadd.xlane.f32.xlu0 %v7005
        %v7133 = vpop.xlane.xlu0 %7132
        %7134 = vadd.xlane.f32.xlu0 %v7007
        %v7135 = vpop.xlane.xlu0 %7134
        %7136 = vadd.xlane.f32.xlu0 %v7009
        %v7137 = vpop.xlane.xlu0 %7136
        %7138 = vadd.xlane.f32.xlu0 %v7011
        %v7139 = vpop.xlane.xlu0 %7138
        %7140 = vadd.xlane.f32.xlu0 %v7013
        %v7141 = vpop.xlane.xlu0 %7140
        %7142 = vadd.xlane.f32.xlu0 %v7015
        %v7143 = vpop.xlane.xlu0 %7142
        %7144 = vadd.xlane.f32.xlu0 %v7017
        %v7145 = vpop.xlane.xlu0 %7144
        %7146 = vadd.xlane.f32.xlu0 %v7019
        %v7147 = vpop.xlane.xlu0 %7146
        %7148 = vadd.xlane.f32.xlu0 %v7021
        %v7149 = vpop.xlane.xlu0 %7148
        %7150 = vadd.xlane.f32.xlu0 %v7023
        %v7151 = vpop.xlane.xlu0 %7150
        %7152 = vadd.xlane.f32.xlu0 %v7025
        %v7153 = vpop.xlane.xlu0 %7152
        %7154 = vadd.xlane.f32.xlu0 %v7027
        %v7155 = vpop.xlane.xlu0 %7154
        %7156 = vadd.xlane.f32.xlu0 %v7029
        %v7157 = vpop.xlane.xlu0 %7156
        %7158 = vadd.xlane.f32.xlu0 %v7031
        %v7159 = vpop.xlane.xlu0 %7158
        %7160 = vadd.xlane.f32.xlu0 %v7033
        %v7161 = vpop.xlane.xlu0 %7160
        %7162 = vadd.xlane.f32.xlu0 %v7035
        %v7163 = vpop.xlane.xlu0 %7162
        %7164 = vadd.xlane.f32.xlu0 %v7037
        %v7165 = vpop.xlane.xlu0 %7164
        %7166 = vadd.xlane.f32.xlu0 %v7039
        %v7167 = vpop.xlane.xlu0 %7166
        %7168 = vadd.xlane.f32.xlu0 %v7041
        %v7169 = vpop.xlane.xlu0 %7168
        %7170 = vadd.xlane.f32.xlu0 %v7043
        %v7171 = vpop.xlane.xlu0 %7170
        %7172 = vadd.xlane.f32.xlu0 %v7045
        %v7173 = vpop.xlane.xlu0 %7172
        %7174 = vadd.xlane.f32.xlu0 %v7047
        %v7175 = vpop.xlane.xlu0 %7174
        %7176 = vadd.xlane.f32.xlu0 %v7049
        %v7177 = vpop.xlane.xlu0 %7176
        %7178 = vadd.xlane.f32.xlu0 %v7051
        %v7179 = vpop.xlane.xlu0 %7178
        %7180 = vadd.xlane.f32.xlu0 %v7053
        %v7181 = vpop.xlane.xlu0 %7180
        %7182 = vadd.xlane.f32.xlu0 %v7055
        %v7183 = vpop.xlane.xlu0 %7182
        %7184 = vadd.xlane.f32.xlu0 %v7057
        %v7185 = vpop.xlane.xlu0 %7184
        %7186 = vadd.xlane.f32.xlu0 %v7059
        %v7187 = vpop.xlane.xlu0 %7186
        %7188 = vadd.xlane.f32.xlu0 %v7061
        %v7189 = vpop.xlane.xlu0 %7188
        %7190 = vadd.xlane.f32.xlu0 %v7063
        %v7191 = vpop.xlane.xlu0 %7190
        %7192 = vadd.xlane.f32.xlu0 %v7065
        %v7193 = vpop.xlane.xlu0 %7192
        %7194 = vadd.xlane.f32.xlu0 %v7067
        %v7195 = vpop.xlane.xlu0 %7194
        %7196 = vadd.xlane.f32.xlu0 %v7069
        %v7197 = vpop.xlane.xlu0 %7196
        %7198 = vadd.xlane.f32.xlu0 %v7071
        %v7199 = vpop.xlane.xlu0 %7198
        %7200 = vadd.xlane.f32.xlu0 %v7073
        %v7201 = vpop.xlane.xlu0 %7200
        %7202 = vadd.xlane.f32.xlu0 %v7075
        %v7203 = vpop.xlane.xlu0 %7202
        %7204 = vadd.xlane.f32.xlu0 %v7077
        %v7205 = vpop.xlane.xlu0 %7204
        %7206 = vadd.xlane.f32.xlu0 %v7079
        %v7207 = vpop.xlane.xlu0 %7206
        %7208 = vadd.xlane.f32.xlu0 %v7081
        %v7209 = vpop.xlane.xlu0 %7208
        %v7210 = vrcp.pop %v7083
        %v7211 = vrcp.pop %v7085
        %v7212 = vrcp.pop %v7087
        %v7213 = vrcp.pop %v7089
        %v7214 = vrcp.pop %v7091
        %v7215 = vrcp.pop %v7093
        %v7216 = vrcp.pop %v7095
        %v7217 = vrcp.pop %v7097
        %v7218 = vrcp.pop %v7099
        %v7219 = vrcp.pop %v7101
        %v7220 = vrcp.pop %v7103
        %v7221 = vrcp.pop %v7105
        %v7222 = vrcp.pop %v7107
        %v7223 = vrcp.pop %v7109
        %v7224 = vrcp.pop %v7111
        %v7225 = vrcp.pop %v7113
        %v7226 = vrcp.pop %v7115
        %v7227 = vrcp.pop %v7117
        %v7228 = vrcp.pop %v7119
        %v7229 = vrcp.pop %v7121
        %v7230 = vrcp.pop %v7123
        %v7231 = vrcp.pop %v7125
        %v7232 = vrcp.pop %v7127
        %v7233 = vrcp.pop %v7129
        %v7234 = vrcp.pop %v7131
        %v7235 = vrcp.pop %v7133
        %v7236 = vrcp.pop %v7135
        %v7237 = vrcp.pop %v7137
        %v7238 = vrcp.pop %v7139
        %v7239 = vrcp.pop %v7141
        %v7240 = vrcp.pop %v7143
        %v7241 = vrcp.pop %v7145
        %v7242 = vrcp.pop %v7147
        %v7243 = vrcp.pop %v7149
        %v7244 = vrcp.pop %v7151
        %v7245 = vrcp.pop %v7153
        %v7246 = vrcp.pop %v7155
        %v7247 = vrcp.pop %v7157
        %v7248 = vrcp.pop %v7159
        %v7249 = vrcp.pop %v7161
        %v7250 = vrcp.pop %v7163
        %v7251 = vrcp.pop %v7165
        %v7252 = vrcp.pop %v7167
        %v7253 = vrcp.pop %v7169
        %v7254 = vrcp.pop %v7171
        %v7255 = vrcp.pop %v7173
        %v7256 = vrcp.pop %v7175
        %v7257 = vrcp.pop %v7177
        %v7258 = vrcp.pop %v7179
        %v7259 = vrcp.pop %v7181
        %v7260 = vrcp.pop %v7183
        %v7261 = vrcp.pop %v7185
        %v7262 = vrcp.pop %v7187
        %v7263 = vrcp.pop %v7189
        %v7264 = vrcp.pop %v7191
        %v7265 = vrcp.pop %v7193
        %v7266 = vrcp.pop %v7195
        %v7267 = vrcp.pop %v7197
        %v7268 = vrcp.pop %v7199
        %v7269 = vrcp.pop %v7201
        %v7270 = vrcp.pop %v7203
        %v7271 = vrcp.pop %v7205
        %v7272 = vrcp.pop %v7207
        %v7273 = vrcp.pop %v7209
        %v7274 = vmul.f32 %v6955, %v7210
        %v7275 = vmul.f32 %v6957, %v7211
        %v7276 = vmul.f32 %v6959, %v7212
        %v7277 = vmul.f32 %v6961, %v7213
        %v7278 = vmul.f32 %v6963, %v7214
        %v7279 = vmul.f32 %v6965, %v7215
        %v7280 = vmul.f32 %v6967, %v7216
        %v7281 = vmul.f32 %v6969, %v7217
        %v7282 = vmul.f32 %v6971, %v7218
        %v7283 = vmul.f32 %v6973, %v7219
        %v7284 = vmul.f32 %v6975, %v7220
        %v7285 = vmul.f32 %v6977, %v7221
        %v7286 = vmul.f32 %v6979, %v7222
        %v7287 = vmul.f32 %v6981, %v7223
        %v7288 = vmul.f32 %v6983, %v7224
        %v7289 = vmul.f32 %v6985, %v7225
        %v7290 = vmul.f32 %v6987, %v7226
        %v7291 = vmul.f32 %v6989, %v7227
        %v7292 = vmul.f32 %v6991, %v7228
        %v7293 = vmul.f32 %v6993, %v7229
        %v7294 = vmul.f32 %v6995, %v7230
        %v7295 = vmul.f32 %v6997, %v7231
        %v7296 = vmul.f32 %v6999, %v7232
        %v7297 = vmul.f32 %v7001, %v7233
        %v7298 = vmul.f32 %v7003, %v7234
        %v7299 = vmul.f32 %v7005, %v7235
        %v7300 = vmul.f32 %v7007, %v7236
        %v7301 = vmul.f32 %v7009, %v7237
        %v7302 = vmul.f32 %v7011, %v7238
        %v7303 = vmul.f32 %v7013, %v7239
        %v7304 = vmul.f32 %v7015, %v7240
        %v7305 = vmul.f32 %v7017, %v7241
        %v7306 = vmul.f32 %v7019, %v7242
        %v7307 = vmul.f32 %v7021, %v7243
        %v7308 = vmul.f32 %v7023, %v7244
        %v7309 = vmul.f32 %v7025, %v7245
        %v7310 = vmul.f32 %v7027, %v7246
        %v7311 = vmul.f32 %v7029, %v7247
        %v7312 = vmul.f32 %v7031, %v7248
        %v7313 = vmul.f32 %v7033, %v7249
        %v7314 = vmul.f32 %v7035, %v7250
        %v7315 = vmul.f32 %v7037, %v7251
        %v7316 = vmul.f32 %v7039, %v7252
        %v7317 = vmul.f32 %v7041, %v7253
        %v7318 = vmul.f32 %v7043, %v7254
        %v7319 = vmul.f32 %v7045, %v7255
        %v7320 = vmul.f32 %v7047, %v7256
        %v7321 = vmul.f32 %v7049, %v7257
        %v7322 = vmul.f32 %v7051, %v7258
        %v7323 = vmul.f32 %v7053, %v7259
        %v7324 = vmul.f32 %v7055, %v7260
        %v7325 = vmul.f32 %v7057, %v7261
        %v7326 = vmul.f32 %v7059, %v7262
        %v7327 = vmul.f32 %v7061, %v7263
        %v7328 = vmul.f32 %v7063, %v7264
        %v7329 = vmul.f32 %v7065, %v7265
        %v7330 = vmul.f32 %v7067, %v7266
        %v7331 = vmul.f32 %v7069, %v7267
        %v7332 = vmul.f32 %v7071, %v7268
        %v7333 = vmul.f32 %v7073, %v7269
        %v7334 = vmul.f32 %v7075, %v7270
        %v7335 = vmul.f32 %v7077, %v7271
        %v7336 = vmul.f32 %v7079, %v7272
        %v7337 = vmul.f32 %v7081, %v7273
        %v7338 = vpack.c.bf16 %v7274, %v7274
        %v7339 = vpack.c.bf16 %v7275, %v7275
        %v7340 = vpack.c.bf16 %v7276, %v7276
        %v7341 = vpack.c.bf16 %v7277, %v7277
        %v7342 = vpack.c.bf16 %v7278, %v7278
        %v7343 = vpack.c.bf16 %v7279, %v7279
        %v7344 = vpack.c.bf16 %v7280, %v7280
        %v7345 = vpack.c.bf16 %v7281, %v7281
        %v7346 = vpack.c.bf16 %v7282, %v7282
        %v7347 = vpack.c.bf16 %v7283, %v7283
        %v7348 = vpack.c.bf16 %v7284, %v7284
        %v7349 = vpack.c.bf16 %v7285, %v7285
        %v7350 = vpack.c.bf16 %v7286, %v7286
        %v7351 = vpack.c.bf16 %v7287, %v7287
        %v7352 = vpack.c.bf16 %v7288, %v7288
        %v7353 = vpack.c.bf16 %v7289, %v7289
        %v7354 = vpack.c.bf16 %v7290, %v7290
        %v7355 = vpack.c.bf16 %v7291, %v7291
        %v7356 = vpack.c.bf16 %v7292, %v7292
        %v7357 = vpack.c.bf16 %v7293, %v7293
        %v7358 = vpack.c.bf16 %v7294, %v7294
        %v7359 = vpack.c.bf16 %v7295, %v7295
        %v7360 = vpack.c.bf16 %v7296, %v7296
        %v7361 = vpack.c.bf16 %v7297, %v7297
        %v7362 = vpack.c.bf16 %v7298, %v7298
        %v7363 = vpack.c.bf16 %v7299, %v7299
        %v7364 = vpack.c.bf16 %v7300, %v7300
        %v7365 = vpack.c.bf16 %v7301, %v7301
        %v7366 = vpack.c.bf16 %v7302, %v7302
        %v7367 = vpack.c.bf16 %v7303, %v7303
        %v7368 = vpack.c.bf16 %v7304, %v7304
        %v7369 = vpack.c.bf16 %v7305, %v7305
        %v7370 = vpack.c.bf16 %v7306, %v7306
        %v7371 = vpack.c.bf16 %v7307, %v7307
        %v7372 = vpack.c.bf16 %v7308, %v7308
        %v7373 = vpack.c.bf16 %v7309, %v7309
        %v7374 = vpack.c.bf16 %v7310, %v7310
        %v7375 = vpack.c.bf16 %v7311, %v7311
        %v7376 = vpack.c.bf16 %v7312, %v7312
        %v7377 = vpack.c.bf16 %v7313, %v7313
        %v7378 = vpack.c.bf16 %v7314, %v7314
        %v7379 = vpack.c.bf16 %v7315, %v7315
        %v7380 = vpack.c.bf16 %v7316, %v7316
        %v7381 = vpack.c.bf16 %v7317, %v7317
        %v7382 = vpack.c.bf16 %v7318, %v7318
        %v7383 = vpack.c.bf16 %v7319, %v7319
        %v7384 = vpack.c.bf16 %v7320, %v7320
        %v7385 = vpack.c.bf16 %v7321, %v7321
        %v7386 = vpack.c.bf16 %v7322, %v7322
        %v7387 = vpack.c.bf16 %v7323, %v7323
        %v7388 = vpack.c.bf16 %v7324, %v7324
        %v7389 = vpack.c.bf16 %v7325, %v7325
        %v7390 = vpack.c.bf16 %v7326, %v7326
        %v7391 = vpack.c.bf16 %v7327, %v7327
        %v7392 = vpack.c.bf16 %v7328, %v7328
        %v7393 = vpack.c.bf16 %v7329, %v7329
        %v7394 = vpack.c.bf16 %v7330, %v7330
        %v7395 = vpack.c.bf16 %v7331, %v7331
        %v7396 = vpack.c.bf16 %v7332, %v7332
        %v7397 = vpack.c.bf16 %v7333, %v7333
        %v7398 = vpack.c.bf16 %v7334, %v7334
        %v7399 = vpack.c.bf16 %v7335, %v7335
        %v7400 = vpack.c.bf16 %v7336, %v7336
        %v7401 = vpack.c.bf16 %v7337, %v7337
        %v7418 = vunpack.c.l.b16 %v7338
        %v7419 = vunpack.c.l.b16 %v7339
        %v7420 = vunpack.c.l.b16 %v7340
        %v7421 = vunpack.c.l.b16 %v7341
        %v7422 = vunpack.c.l.b16 %v7342
        %v7423 = vunpack.c.l.b16 %v7343
        %v7424 = vunpack.c.l.b16 %v7344
        %v7425 = vunpack.c.l.b16 %v7345
        %v7426 = vunpack.c.l.b16 %v7346
        %v7427 = vunpack.c.l.b16 %v7347
        %v7428 = vunpack.c.l.b16 %v7348
        %v7429 = vunpack.c.l.b16 %v7349
        %v7430 = vunpack.c.l.b16 %v7350
        %v7431 = vunpack.c.l.b16 %v7351
        %v7432 = vunpack.c.l.b16 %v7352
        %v7433 = vunpack.c.l.b16 %v7353
        %v7434 = vpack.c.b16 %v7419, %v7418
        %v7435 = vpack.c.b16 %v7421, %v7420
        %v7436 = vpack.c.b16 %v7423, %v7422
        %v7437 = vpack.c.b16 %v7425, %v7424
        %v7438 = vpack.c.b16 %v7427, %v7426
        %v7439 = vpack.c.b16 %v7429, %v7428
        %v7440 = vpack.c.b16 %v7431, %v7430
        %v7441 = vpack.c.b16 %v7433, %v7432
        %v7450 = vunpack.c.l.b16 %v5433
        %v7451 = vunpack.c.l.b16 %v5469
        %v7452 = vunpack.c.l.b16 %v5505
        %v7453 = vunpack.c.l.b16 %v5541
        %v7454 = vunpack.c.l.b16 %v5577
        %v7455 = vunpack.c.l.b16 %v5613
        %v7456 = vunpack.c.l.b16 %v5649
        %v7457 = vunpack.c.l.b16 %v5685
        %v7458 = vunpack.c.l.b16 %v5721
        %v7459 = vunpack.c.l.b16 %v5757
        %v7460 = vunpack.c.l.b16 %v5793
        %v7461 = vunpack.c.l.b16 %v5829
        %v7462 = vunpack.c.l.b16 %v5865
        %v7463 = vunpack.c.l.b16 %v5901
        %v7464 = vunpack.c.l.b16 %v5937
        %v7465 = vunpack.c.l.b16 %v5973
        %v7466 = vpack.c.b16 %v7451, %v7450
        %v7467 = vpack.c.b16 %v7453, %v7452
        %v7468 = vpack.c.b16 %v7455, %v7454
        %v7469 = vpack.c.b16 %v7457, %v7456
        %v7470 = vpack.c.b16 %v7459, %v7458
        %v7471 = vpack.c.b16 %v7461, %v7460
        %v7472 = vpack.c.b16 %v7463, %v7462
        %v7473 = vpack.c.b16 %v7465, %v7464
        %7482 = vmatpush.bf16.msra.mxu0 %v7473
        %7483 = vmatpush.bf16.msra.mxu0 %v7472
        %7484 = vmatpush.bf16.msra.mxu0 %v7471
        %7485 = vmatpush.bf16.msra.mxu0 %v7470
        %7486 = vmatpush.bf16.msra.mxu0 %v7469
        %7487 = vmatpush.bf16.msra.mxu0 %v7468
        %7488 = vmatpush.bf16.msra.mxu0 %v7467
        %7489 = vmatpush.bf16.msra.mxu0 %v7466
        %7490 = vmatmul.bf16.gmra.mxu0 %v7434
        %v7491 = vpop.f32.mrf.mxu0
        %v7492 = vadd.f32 0.0, %v7491
        %v7493 = vpop.f32.mrf.mxu0
        %v7494 = vadd.f32 0.0, %v7493
        %7495 = vmatmul.bf16.gmra.mxu0 %v7435
        %v7496 = vpop.f32.mrf.mxu0
        %v7497 = vadd.f32 0.0, %v7496
        %v7498 = vpop.f32.mrf.mxu0
        %v7499 = vadd.f32 0.0, %v7498
        %7500 = vmatmul.bf16.gmra.mxu0 %v7436
        %v7501 = vpop.f32.mrf.mxu0
        %v7502 = vadd.f32 0.0, %v7501
        %v7503 = vpop.f32.mrf.mxu0
        %v7504 = vadd.f32 0.0, %v7503
        %7505 = vmatmul.bf16.gmra.mxu0 %v7437
        %v7506 = vpop.f32.mrf.mxu0
        %v7507 = vadd.f32 0.0, %v7506
        %v7508 = vpop.f32.mrf.mxu0
        %v7509 = vadd.f32 0.0, %v7508
        %7510 = vmatmul.bf16.gmra.mxu0 %v7438
        %v7511 = vpop.f32.mrf.mxu0
        %v7512 = vadd.f32 0.0, %v7511
        %v7513 = vpop.f32.mrf.mxu0
        %v7514 = vadd.f32 0.0, %v7513
        %7515 = vmatmul.bf16.gmra.mxu0 %v7439
        %v7516 = vpop.f32.mrf.mxu0
        %v7517 = vadd.f32 0.0, %v7516
        %v7518 = vpop.f32.mrf.mxu0
        %v7519 = vadd.f32 0.0, %v7518
        %7520 = vmatmul.bf16.gmra.mxu0 %v7440
        %v7521 = vpop.f32.mrf.mxu0
        %v7522 = vadd.f32 0.0, %v7521
        %v7523 = vpop.f32.mrf.mxu0
        %v7524 = vadd.f32 0.0, %v7523
        %7525 = vmatmul.bf16.gmra.mxu0 %v7441
        %v7526 = vpop.f32.mrf.mxu0
        %v7527 = vadd.f32 0.0, %v7526
        %v7528 = vpop.f32.mrf.mxu0
        %v7529 = vadd.f32 0.0, %v7528
        %7530 = vdwg.mxu0
        %v7547 = vunpack.c.l.b16 %v7354
        %v7548 = vunpack.c.l.b16 %v7355
        %v7549 = vunpack.c.l.b16 %v7356
        %v7550 = vunpack.c.l.b16 %v7357
        %v7551 = vunpack.c.l.b16 %v7358
        %v7552 = vunpack.c.l.b16 %v7359
        %v7553 = vunpack.c.l.b16 %v7360
        %v7554 = vunpack.c.l.b16 %v7361
        %v7555 = vunpack.c.l.b16 %v7362
        %v7556 = vunpack.c.l.b16 %v7363
        %v7557 = vunpack.c.l.b16 %v7364
        %v7558 = vunpack.c.l.b16 %v7365
        %v7559 = vunpack.c.l.b16 %v7366
        %v7560 = vunpack.c.l.b16 %v7367
        %v7561 = vunpack.c.l.b16 %v7368
        %v7562 = vunpack.c.l.b16 %v7369
        %v7563 = vpack.c.b16 %v7548, %v7547
        %v7564 = vpack.c.b16 %v7550, %v7549
        %v7565 = vpack.c.b16 %v7552, %v7551
        %v7566 = vpack.c.b16 %v7554, %v7553
        %v7567 = vpack.c.b16 %v7556, %v7555
        %v7568 = vpack.c.b16 %v7558, %v7557
        %v7569 = vpack.c.b16 %v7560, %v7559
        %v7570 = vpack.c.b16 %v7562, %v7561
        %v7579 = vunpack.c.l.b16 %v5436
        %v7580 = vunpack.c.l.b16 %v5472
        %v7581 = vunpack.c.l.b16 %v5508
        %v7582 = vunpack.c.l.b16 %v5544
        %v7583 = vunpack.c.l.b16 %v5580
        %v7584 = vunpack.c.l.b16 %v5616
        %v7585 = vunpack.c.l.b16 %v5652
        %v7586 = vunpack.c.l.b16 %v5688
        %v7587 = vunpack.c.l.b16 %v5724
        %v7588 = vunpack.c.l.b16 %v5760
        %v7589 = vunpack.c.l.b16 %v5796
        %v7590 = vunpack.c.l.b16 %v5832
        %v7591 = vunpack.c.l.b16 %v5868
        %v7592 = vunpack.c.l.b16 %v5904
        %v7593 = vunpack.c.l.b16 %v5940
        %v7594 = vunpack.c.l.b16 %v5976
        %v7595 = vpack.c.b16 %v7580, %v7579
        %v7596 = vpack.c.b16 %v7582, %v7581
        %v7597 = vpack.c.b16 %v7584, %v7583
        %v7598 = vpack.c.b16 %v7586, %v7585
        %v7599 = vpack.c.b16 %v7588, %v7587
        %v7600 = vpack.c.b16 %v7590, %v7589
        %v7601 = vpack.c.b16 %v7592, %v7591
        %v7602 = vpack.c.b16 %v7594, %v7593
        %7611 = vmatpush.bf16.msra.mxu0 %v7602
        %7612 = vmatpush.bf16.msra.mxu0 %v7601
        %7613 = vmatpush.bf16.msra.mxu0 %v7600
        %7614 = vmatpush.bf16.msra.mxu0 %v7599
        %7615 = vmatpush.bf16.msra.mxu0 %v7598
        %7616 = vmatpush.bf16.msra.mxu0 %v7597
        %7617 = vmatpush.bf16.msra.mxu0 %v7596
        %7618 = vmatpush.bf16.msra.mxu0 %v7595
        %7619 = vmatmul.bf16.gmra.mxu0 %v7563
        %v7620 = vpop.f32.mrf.mxu0
        %v7621 = vadd.f32 0.0, %v7620
        %v7622 = vpop.f32.mrf.mxu0
        %v7623 = vadd.f32 0.0, %v7622
        %7624 = vmatmul.bf16.gmra.mxu0 %v7564
        %v7625 = vpop.f32.mrf.mxu0
        %v7626 = vadd.f32 0.0, %v7625
        %v7627 = vpop.f32.mrf.mxu0
        %v7628 = vadd.f32 0.0, %v7627
        %7629 = vmatmul.bf16.gmra.mxu0 %v7565
        %v7630 = vpop.f32.mrf.mxu0
        %v7631 = vadd.f32 0.0, %v7630
        %v7632 = vpop.f32.mrf.mxu0
        %v7633 = vadd.f32 0.0, %v7632
        %7634 = vmatmul.bf16.gmra.mxu0 %v7566
        %v7635 = vpop.f32.mrf.mxu0
        %v7636 = vadd.f32 0.0, %v7635
        %v7637 = vpop.f32.mrf.mxu0
        %v7638 = vadd.f32 0.0, %v7637
        %7639 = vmatmul.bf16.gmra.mxu0 %v7567
        %v7640 = vpop.f32.mrf.mxu0
        %v7641 = vadd.f32 0.0, %v7640
        %v7642 = vpop.f32.mrf.mxu0
        %v7643 = vadd.f32 0.0, %v7642
        %7644 = vmatmul.bf16.gmra.mxu0 %v7568
        %v7645 = vpop.f32.mrf.mxu0
        %v7646 = vadd.f32 0.0, %v7645
        %v7647 = vpop.f32.mrf.mxu0
        %v7648 = vadd.f32 0.0, %v7647
        %7649 = vmatmul.bf16.gmra.mxu0 %v7569
        %v7650 = vpop.f32.mrf.mxu0
        %v7651 = vadd.f32 0.0, %v7650
        %v7652 = vpop.f32.mrf.mxu0
        %v7653 = vadd.f32 0.0, %v7652
        %7654 = vmatmul.bf16.gmra.mxu0 %v7570
        %v7655 = vpop.f32.mrf.mxu0
        %v7656 = vadd.f32 0.0, %v7655
        %v7657 = vpop.f32.mrf.mxu0
        %v7658 = vadd.f32 0.0, %v7657
        %7659 = vdwg.mxu0
        %v7676 = vunpack.c.l.b16 %v7370
        %v7677 = vunpack.c.l.b16 %v7371
        %v7678 = vunpack.c.l.b16 %v7372
        %v7679 = vunpack.c.l.b16 %v7373
        %v7680 = vunpack.c.l.b16 %v7374
        %v7681 = vunpack.c.l.b16 %v7375
        %v7682 = vunpack.c.l.b16 %v7376
        %v7683 = vunpack.c.l.b16 %v7377
        %v7684 = vunpack.c.l.b16 %v7378
        %v7685 = vunpack.c.l.b16 %v7379
        %v7686 = vunpack.c.l.b16 %v7380
        %v7687 = vunpack.c.l.b16 %v7381
        %v7688 = vunpack.c.l.b16 %v7382
        %v7689 = vunpack.c.l.b16 %v7383
        %v7690 = vunpack.c.l.b16 %v7384
        %v7691 = vunpack.c.l.b16 %v7385
        %v7692 = vpack.c.b16 %v7677, %v7676
        %v7693 = vpack.c.b16 %v7679, %v7678
        %v7694 = vpack.c.b16 %v7681, %v7680
        %v7695 = vpack.c.b16 %v7683, %v7682
        %v7696 = vpack.c.b16 %v7685, %v7684
        %v7697 = vpack.c.b16 %v7687, %v7686
        %v7698 = vpack.c.b16 %v7689, %v7688
        %v7699 = vpack.c.b16 %v7691, %v7690
        %v7708 = vunpack.c.l.b16 %v5439
        %v7709 = vunpack.c.l.b16 %v5475
        %v7710 = vunpack.c.l.b16 %v5511
        %v7711 = vunpack.c.l.b16 %v5547
        %v7712 = vunpack.c.l.b16 %v5583
        %v7713 = vunpack.c.l.b16 %v5619
        %v7714 = vunpack.c.l.b16 %v5655
        %v7715 = vunpack.c.l.b16 %v5691
        %v7716 = vunpack.c.l.b16 %v5727
        %v7717 = vunpack.c.l.b16 %v5763
        %v7718 = vunpack.c.l.b16 %v5799
        %v7719 = vunpack.c.l.b16 %v5835
        %v7720 = vunpack.c.l.b16 %v5871
        %v7721 = vunpack.c.l.b16 %v5907
        %v7722 = vunpack.c.l.b16 %v5943
        %v7723 = vunpack.c.l.b16 %v5979
        %v7724 = vpack.c.b16 %v7709, %v7708
        %v7725 = vpack.c.b16 %v7711, %v7710
        %v7726 = vpack.c.b16 %v7713, %v7712
        %v7727 = vpack.c.b16 %v7715, %v7714
        %v7728 = vpack.c.b16 %v7717, %v7716
        %v7729 = vpack.c.b16 %v7719, %v7718
        %v7730 = vpack.c.b16 %v7721, %v7720
        %v7731 = vpack.c.b16 %v7723, %v7722
        %7740 = vmatpush.bf16.msra.mxu0 %v7731
        %7741 = vmatpush.bf16.msra.mxu0 %v7730
        %7742 = vmatpush.bf16.msra.mxu0 %v7729
        %7743 = vmatpush.bf16.msra.mxu0 %v7728
        %7744 = vmatpush.bf16.msra.mxu0 %v7727
        %7745 = vmatpush.bf16.msra.mxu0 %v7726
        %7746 = vmatpush.bf16.msra.mxu0 %v7725
        %7747 = vmatpush.bf16.msra.mxu0 %v7724
        %7748 = vmatmul.bf16.gmra.mxu0 %v7692
        %v7749 = vpop.f32.mrf.mxu0
        %v7750 = vadd.f32 0.0, %v7749
        %v7751 = vpop.f32.mrf.mxu0
        %v7752 = vadd.f32 0.0, %v7751
        %7753 = vmatmul.bf16.gmra.mxu0 %v7693
        %v7754 = vpop.f32.mrf.mxu0
        %v7755 = vadd.f32 0.0, %v7754
        %v7756 = vpop.f32.mrf.mxu0
        %v7757 = vadd.f32 0.0, %v7756
        %7758 = vmatmul.bf16.gmra.mxu0 %v7694
        %v7759 = vpop.f32.mrf.mxu0
        %v7760 = vadd.f32 0.0, %v7759
        %v7761 = vpop.f32.mrf.mxu0
        %v7762 = vadd.f32 0.0, %v7761
        %7763 = vmatmul.bf16.gmra.mxu0 %v7695
        %v7764 = vpop.f32.mrf.mxu0
        %v7765 = vadd.f32 0.0, %v7764
        %v7766 = vpop.f32.mrf.mxu0
        %v7767 = vadd.f32 0.0, %v7766
        %7768 = vmatmul.bf16.gmra.mxu0 %v7696
        %v7769 = vpop.f32.mrf.mxu0
        %v7770 = vadd.f32 0.0, %v7769
        %v7771 = vpop.f32.mrf.mxu0
        %v7772 = vadd.f32 0.0, %v7771
        %7773 = vmatmul.bf16.gmra.mxu0 %v7697
        %v7774 = vpop.f32.mrf.mxu0
        %v7775 = vadd.f32 0.0, %v7774
        %v7776 = vpop.f32.mrf.mxu0
        %v7777 = vadd.f32 0.0, %v7776
        %7778 = vmatmul.bf16.gmra.mxu0 %v7698
        %v7779 = vpop.f32.mrf.mxu0
        %v7780 = vadd.f32 0.0, %v7779
        %v7781 = vpop.f32.mrf.mxu0
        %v7782 = vadd.f32 0.0, %v7781
        %7783 = vmatmul.bf16.gmra.mxu0 %v7699
        %v7784 = vpop.f32.mrf.mxu0
        %v7785 = vadd.f32 0.0, %v7784
        %v7786 = vpop.f32.mrf.mxu0
        %v7787 = vadd.f32 0.0, %v7786
        %7788 = vdwg.mxu0
        %v7805 = vunpack.c.l.b16 %v7386
        %v7806 = vunpack.c.l.b16 %v7387
        %v7807 = vunpack.c.l.b16 %v7388
        %v7808 = vunpack.c.l.b16 %v7389
        %v7809 = vunpack.c.l.b16 %v7390
        %v7810 = vunpack.c.l.b16 %v7391
        %v7811 = vunpack.c.l.b16 %v7392
        %v7812 = vunpack.c.l.b16 %v7393
        %v7813 = vunpack.c.l.b16 %v7394
        %v7814 = vunpack.c.l.b16 %v7395
        %v7815 = vunpack.c.l.b16 %v7396
        %v7816 = vunpack.c.l.b16 %v7397
        %v7817 = vunpack.c.l.b16 %v7398
        %v7818 = vunpack.c.l.b16 %v7399
        %v7819 = vunpack.c.l.b16 %v7400
        %v7820 = vunpack.c.l.b16 %v7401
        %v7821 = vpack.c.b16 %v7806, %v7805
        %v7822 = vpack.c.b16 %v7808, %v7807
        %v7823 = vpack.c.b16 %v7810, %v7809
        %v7824 = vpack.c.b16 %v7812, %v7811
        %v7825 = vpack.c.b16 %v7814, %v7813
        %v7826 = vpack.c.b16 %v7816, %v7815
        %v7827 = vpack.c.b16 %v7818, %v7817
        %v7828 = vpack.c.b16 %v7820, %v7819
        %v7837 = vunpack.c.l.b16 %v5442
        %v7838 = vunpack.c.l.b16 %v5478
        %v7839 = vunpack.c.l.b16 %v5514
        %v7840 = vunpack.c.l.b16 %v5550
        %v7841 = vunpack.c.l.b16 %v5586
        %v7842 = vunpack.c.l.b16 %v5622
        %v7843 = vunpack.c.l.b16 %v5658
        %v7844 = vunpack.c.l.b16 %v5694
        %v7845 = vunpack.c.l.b16 %v5730
        %v7846 = vunpack.c.l.b16 %v5766
        %v7847 = vunpack.c.l.b16 %v5802
        %v7848 = vunpack.c.l.b16 %v5838
        %v7849 = vunpack.c.l.b16 %v5874
        %v7850 = vunpack.c.l.b16 %v5910
        %v7851 = vunpack.c.l.b16 %v5946
        %v7852 = vunpack.c.l.b16 %v5982
        %v7853 = vpack.c.b16 %v7838, %v7837
        %v7854 = vpack.c.b16 %v7840, %v7839
        %v7855 = vpack.c.b16 %v7842, %v7841
        %v7856 = vpack.c.b16 %v7844, %v7843
        %v7857 = vpack.c.b16 %v7846, %v7845
        %v7858 = vpack.c.b16 %v7848, %v7847
        %v7859 = vpack.c.b16 %v7850, %v7849
        %v7860 = vpack.c.b16 %v7852, %v7851
        %7869 = vmatpush.bf16.msra.mxu0 %v7860
        %7870 = vmatpush.bf16.msra.mxu0 %v7859
        %7871 = vmatpush.bf16.msra.mxu0 %v7858
        %7872 = vmatpush.bf16.msra.mxu0 %v7857
        %7873 = vmatpush.bf16.msra.mxu0 %v7856
        %7874 = vmatpush.bf16.msra.mxu0 %v7855
        %7875 = vmatpush.bf16.msra.mxu0 %v7854
        %7876 = vmatpush.bf16.msra.mxu0 %v7853
        %7877 = vmatmul.bf16.gmra.mxu0 %v7821
        %v7878 = vpop.f32.mrf.mxu0
        %v7879 = vadd.f32 0.0, %v7878
        %v7880 = vpop.f32.mrf.mxu0
        %v7881 = vadd.f32 0.0, %v7880
        %7882 = vmatmul.bf16.gmra.mxu0 %v7822
        %v7883 = vpop.f32.mrf.mxu0
        %v7884 = vadd.f32 0.0, %v7883
        %v7885 = vpop.f32.mrf.mxu0
        %v7886 = vadd.f32 0.0, %v7885
        %7887 = vmatmul.bf16.gmra.mxu0 %v7823
        %v7888 = vpop.f32.mrf.mxu0
        %v7889 = vadd.f32 0.0, %v7888
        %v7890 = vpop.f32.mrf.mxu0
        %v7891 = vadd.f32 0.0, %v7890
        %7892 = vmatmul.bf16.gmra.mxu0 %v7824
        %v7893 = vpop.f32.mrf.mxu0
        %v7894 = vadd.f32 0.0, %v7893
        %v7895 = vpop.f32.mrf.mxu0
        %v7896 = vadd.f32 0.0, %v7895
        %7897 = vmatmul.bf16.gmra.mxu0 %v7825
        %v7898 = vpop.f32.mrf.mxu0
        %v7899 = vadd.f32 0.0, %v7898
        %v7900 = vpop.f32.mrf.mxu0
        %v7901 = vadd.f32 0.0, %v7900
        %7902 = vmatmul.bf16.gmra.mxu0 %v7826
        %v7903 = vpop.f32.mrf.mxu0
        %v7904 = vadd.f32 0.0, %v7903
        %v7905 = vpop.f32.mrf.mxu0
        %v7906 = vadd.f32 0.0, %v7905
        %7907 = vmatmul.bf16.gmra.mxu0 %v7827
        %v7908 = vpop.f32.mrf.mxu0
        %v7909 = vadd.f32 0.0, %v7908
        %v7910 = vpop.f32.mrf.mxu0
        %v7911 = vadd.f32 0.0, %v7910
        %7912 = vmatmul.bf16.gmra.mxu0 %v7828
        %v7913 = vpop.f32.mrf.mxu0
        %v7914 = vadd.f32 0.0, %v7913
        %v7915 = vpop.f32.mrf.mxu0
        %v7916 = vadd.f32 0.0, %v7915
        %7917 = vdwg.mxu0
        %v7918 = vpack.c.bf16 %v7492, %v7492
        %v7919 = vpack.c.bf16 %v7494, %v7494
        %v7920 = vpack.c.bf16 %v7497, %v7497
        %v7921 = vpack.c.bf16 %v7499, %v7499
        %v7922 = vpack.c.bf16 %v7502, %v7502
        %v7923 = vpack.c.bf16 %v7504, %v7504
        %v7924 = vpack.c.bf16 %v7507, %v7507
        %v7925 = vpack.c.bf16 %v7509, %v7509
        %v7926 = vpack.c.bf16 %v7512, %v7512
        %v7927 = vpack.c.bf16 %v7514, %v7514
        %v7928 = vpack.c.bf16 %v7517, %v7517
        %v7929 = vpack.c.bf16 %v7519, %v7519
        %v7930 = vpack.c.bf16 %v7522, %v7522
        %v7931 = vpack.c.bf16 %v7524, %v7524
        %v7932 = vpack.c.bf16 %v7527, %v7527
        %v7933 = vpack.c.bf16 %v7529, %v7529
        %v7934 = vpack.c.bf16 %v7621, %v7621
        %v7935 = vpack.c.bf16 %v7623, %v7623
        %v7936 = vpack.c.bf16 %v7626, %v7626
        %v7937 = vpack.c.bf16 %v7628, %v7628
        %v7938 = vpack.c.bf16 %v7631, %v7631
        %v7939 = vpack.c.bf16 %v7633, %v7633
        %v7940 = vpack.c.bf16 %v7636, %v7636
        %v7941 = vpack.c.bf16 %v7638, %v7638
        %v7942 = vpack.c.bf16 %v7641, %v7641
        %v7943 = vpack.c.bf16 %v7643, %v7643
        %v7944 = vpack.c.bf16 %v7646, %v7646
        %v7945 = vpack.c.bf16 %v7648, %v7648
        %v7946 = vpack.c.bf16 %v7651, %v7651
        %v7947 = vpack.c.bf16 %v7653, %v7653
        %v7948 = vpack.c.bf16 %v7656, %v7656
        %v7949 = vpack.c.bf16 %v7658, %v7658
        %v7950 = vpack.c.bf16 %v7750, %v7750
        %v7951 = vpack.c.bf16 %v7752, %v7752
        %v7952 = vpack.c.bf16 %v7755, %v7755
        %v7953 = vpack.c.bf16 %v7757, %v7757
        %v7954 = vpack.c.bf16 %v7760, %v7760
        %v7955 = vpack.c.bf16 %v7762, %v7762
        %v7956 = vpack.c.bf16 %v7765, %v7765
        %v7957 = vpack.c.bf16 %v7767, %v7767
        %v7958 = vpack.c.bf16 %v7770, %v7770
        %v7959 = vpack.c.bf16 %v7772, %v7772
        %v7960 = vpack.c.bf16 %v7775, %v7775
        %v7961 = vpack.c.bf16 %v7777, %v7777
        %v7962 = vpack.c.bf16 %v7780, %v7780
        %v7963 = vpack.c.bf16 %v7782, %v7782
        %v7964 = vpack.c.bf16 %v7785, %v7785
        %v7965 = vpack.c.bf16 %v7787, %v7787
        %v7966 = vpack.c.bf16 %v7879, %v7879
        %v7967 = vpack.c.bf16 %v7881, %v7881
        %v7968 = vpack.c.bf16 %v7884, %v7884
        %v7969 = vpack.c.bf16 %v7886, %v7886
        %v7970 = vpack.c.bf16 %v7889, %v7889
        %v7971 = vpack.c.bf16 %v7891, %v7891
        %v7972 = vpack.c.bf16 %v7894, %v7894
        %v7973 = vpack.c.bf16 %v7896, %v7896
        %v7974 = vpack.c.bf16 %v7899, %v7899
        %v7975 = vpack.c.bf16 %v7901, %v7901
        %v7976 = vpack.c.bf16 %v7904, %v7904
        %v7977 = vpack.c.bf16 %v7906, %v7906
        %v7978 = vpack.c.bf16 %v7909, %v7909
        %v7979 = vpack.c.bf16 %v7911, %v7911
        %v7980 = vpack.c.bf16 %v7914, %v7914
        %v7981 = vpack.c.bf16 %v7916, %v7916
        %v7982 = vld [vmem:[%s473] sm:$0xf]
        %v7983 = vld [vmem:[%s473 + $0x4] sm:$0xf]
        %v7984 = vld [vmem:[%s473 + $0x8] sm:$0xf]
        %v7985 = vld [vmem:[%s473 + $0xc] sm:$0xf]
        %s7986 = scalar_lea.vmem %s473, 16 [#allocation10]
        %v7987 = vld [vmem:[%s7986] sm:$0xf]
        %v7988 = vld [vmem:[%s7986 + $0x4] sm:$0xf]
        %v7989 = vld [vmem:[%s7986 + $0x8] sm:$0xf]
        %v7990 = vld [vmem:[%s7986 + $0xc] sm:$0xf]
        %v8007 = vunpack.c.l.b16 %v7934
        %v8008 = vunpack.c.l.b16 %v7935
        %v8009 = vunpack.c.l.b16 %v7936
        %v8010 = vunpack.c.l.b16 %v7937
        %v8011 = vunpack.c.l.b16 %v7938
        %v8012 = vunpack.c.l.b16 %v7939
        %v8013 = vunpack.c.l.b16 %v7940
        %v8014 = vunpack.c.l.b16 %v7941
        %v8015 = vunpack.c.l.b16 %v7942
        %v8016 = vunpack.c.l.b16 %v7943
        %v8017 = vunpack.c.l.b16 %v7944
        %v8018 = vunpack.c.l.b16 %v7945
        %v8019 = vunpack.c.l.b16 %v7946
        %v8020 = vunpack.c.l.b16 %v7947
        %v8021 = vunpack.c.l.b16 %v7948
        %v8022 = vunpack.c.l.b16 %v7949
        %v8023 = vpack.c.b16 %v8008, %v8007
        %v8024 = vpack.c.b16 %v8010, %v8009
        %v8025 = vpack.c.b16 %v8012, %v8011
        %v8026 = vpack.c.b16 %v8014, %v8013
        %v8027 = vpack.c.b16 %v8016, %v8015
        %v8028 = vpack.c.b16 %v8018, %v8017
        %v8029 = vpack.c.b16 %v8020, %v8019
        %v8030 = vpack.c.b16 %v8022, %v8021
        %v8035 = vunpack.c.l.b16 %v7987
        %v8036 = vunpack.c.l.b16 %v7988
        %v8037 = vunpack.c.l.b16 %v7989
        %v8038 = vunpack.c.l.b16 %v7990
        %v8039 = vpack.c.b16 %v8036, %v8035
        %v8040 = vpack.c.b16 %v8038, %v8037
        %v8044 = vsel %vm6162, %v8023, 0
        %v8047 = vsel %vm6162, %v8024, 0
        %v8050 = vsel %vm6162, %v8025, 0
        %v8053 = vsel %vm6162, %v8026, 0
        %v8056 = vsel %vm6162, %v8027, 0
        %v8059 = vsel %vm6162, %v8028, 0
        %v8062 = vsel %vm6162, %v8029, 0
        %v8065 = vsel %vm6162, %v8030, 0
        %8067 = vmatpush.bf16.msra.mxu0 0
        %8068 = vmatpush.bf16.msra.mxu0 0
        %8069 = vmatpush.bf16.msra.mxu0 0
        %8070 = vmatpush.bf16.msra.mxu0 0
        %8071 = vmatpush.bf16.msra.mxu0 0
        %8072 = vmatpush.bf16.msra.mxu0 0
        %8073 = vmatpush.bf16.msra.mxu0 %v8040
        %8074 = vmatpush.bf16.msra.mxu0 %v8039
        %8075 = vmatmul.bf16.gmra.mxu0 %v8044
        %v8076 = vpop.f32.mrf.mxu0
        %v8077 = vadd.f32 0.0, %v8076
        %v8078 = vpop.f32.mrf.mxu0
        %v8079 = vadd.f32 0.0, %v8078
        %8080 = vmatmul.bf16.gmra.mxu0 %v8047
        %v8081 = vpop.f32.mrf.mxu0
        %v8082 = vadd.f32 0.0, %v8081
        %v8083 = vpop.f32.mrf.mxu0
        %v8084 = vadd.f32 0.0, %v8083
        %8085 = vmatmul.bf16.gmra.mxu0 %v8050
        %v8086 = vpop.f32.mrf.mxu0
        %v8087 = vadd.f32 0.0, %v8086
        %v8088 = vpop.f32.mrf.mxu0
        %v8089 = vadd.f32 0.0, %v8088
        %8090 = vmatmul.bf16.gmra.mxu0 %v8053
        %v8091 = vpop.f32.mrf.mxu0
        %v8092 = vadd.f32 0.0, %v8091
        %v8093 = vpop.f32.mrf.mxu0
        %v8094 = vadd.f32 0.0, %v8093
        %8095 = vmatmul.bf16.gmra.mxu0 %v8056
        %v8096 = vpop.f32.mrf.mxu0
        %v8097 = vadd.f32 0.0, %v8096
        %v8098 = vpop.f32.mrf.mxu0
        %v8099 = vadd.f32 0.0, %v8098
        %8100 = vmatmul.bf16.gmra.mxu0 %v8059
        %v8101 = vpop.f32.mrf.mxu0
        %v8102 = vadd.f32 0.0, %v8101
        %v8103 = vpop.f32.mrf.mxu0
        %v8104 = vadd.f32 0.0, %v8103
        %8105 = vmatmul.bf16.gmra.mxu0 %v8062
        %v8106 = vpop.f32.mrf.mxu0
        %v8107 = vadd.f32 0.0, %v8106
        %v8108 = vpop.f32.mrf.mxu0
        %v8109 = vadd.f32 0.0, %v8108
        %8110 = vmatmul.bf16.gmra.mxu0 %v8065
        %v8111 = vpop.f32.mrf.mxu0
        %v8112 = vadd.f32 0.0, %v8111
        %v8113 = vpop.f32.mrf.mxu0
        %v8114 = vadd.f32 0.0, %v8113
        %8115 = vdwg.mxu0
        %v8132 = vunpack.c.l.b16 %v7918
        %v8133 = vunpack.c.l.b16 %v7919
        %v8134 = vunpack.c.l.b16 %v7920
        %v8135 = vunpack.c.l.b16 %v7921
        %v8136 = vunpack.c.l.b16 %v7922
        %v8137 = vunpack.c.l.b16 %v7923
        %v8138 = vunpack.c.l.b16 %v7924
        %v8139 = vunpack.c.l.b16 %v7925
        %v8140 = vunpack.c.l.b16 %v7926
        %v8141 = vunpack.c.l.b16 %v7927
        %v8142 = vunpack.c.l.b16 %v7928
        %v8143 = vunpack.c.l.b16 %v7929
        %v8144 = vunpack.c.l.b16 %v7930
        %v8145 = vunpack.c.l.b16 %v7931
        %v8146 = vunpack.c.l.b16 %v7932
        %v8147 = vunpack.c.l.b16 %v7933
        %v8148 = vpack.c.b16 %v8133, %v8132
        %v8149 = vpack.c.b16 %v8135, %v8134
        %v8150 = vpack.c.b16 %v8137, %v8136
        %v8151 = vpack.c.b16 %v8139, %v8138
        %v8152 = vpack.c.b16 %v8141, %v8140
        %v8153 = vpack.c.b16 %v8143, %v8142
        %v8154 = vpack.c.b16 %v8145, %v8144
        %v8155 = vpack.c.b16 %v8147, %v8146
        %v8160 = vunpack.c.l.b16 %v7982
        %v8161 = vunpack.c.l.b16 %v7983
        %v8162 = vunpack.c.l.b16 %v7984
        %v8163 = vunpack.c.l.b16 %v7985
        %v8164 = vpack.c.b16 %v8161, %v8160
        %v8165 = vpack.c.b16 %v8163, %v8162
        %v8169 = vsel %vm6162, %v8148, 0
        %v8172 = vsel %vm6162, %v8149, 0
        %v8175 = vsel %vm6162, %v8150, 0
        %v8178 = vsel %vm6162, %v8151, 0
        %v8181 = vsel %vm6162, %v8152, 0
        %v8184 = vsel %vm6162, %v8153, 0
        %v8187 = vsel %vm6162, %v8154, 0
        %v8190 = vsel %vm6162, %v8155, 0
        %8192 = vmatpush.bf16.msra.mxu0 0
        %8193 = vmatpush.bf16.msra.mxu0 0
        %8194 = vmatpush.bf16.msra.mxu0 0
        %8195 = vmatpush.bf16.msra.mxu0 0
        %8196 = vmatpush.bf16.msra.mxu0 0
        %8197 = vmatpush.bf16.msra.mxu0 0
        %8198 = vmatpush.bf16.msra.mxu0 %v8165
        %8199 = vmatpush.bf16.msra.mxu0 %v8164
        %8200 = vmatmul.bf16.gmra.mxu0 %v8169
        %v8201 = vpop.f32.mrf.mxu0
        %v8202 = vadd.f32 %v8077, %v8201
        %v8203 = vpop.f32.mrf.mxu0
        %v8204 = vadd.f32 %v8079, %v8203
        %8205 = vmatmul.bf16.gmra.mxu0 %v8172
        %v8206 = vpop.f32.mrf.mxu0
        %v8207 = vadd.f32 %v8082, %v8206
        %v8208 = vpop.f32.mrf.mxu0
        %v8209 = vadd.f32 %v8084, %v8208
        %8210 = vmatmul.bf16.gmra.mxu0 %v8175
        %v8211 = vpop.f32.mrf.mxu0
        %v8212 = vadd.f32 %v8087, %v8211
        %v8213 = vpop.f32.mrf.mxu0
        %v8214 = vadd.f32 %v8089, %v8213
        %8215 = vmatmul.bf16.gmra.mxu0 %v8178
        %v8216 = vpop.f32.mrf.mxu0
        %v8217 = vadd.f32 %v8092, %v8216
        %v8218 = vpop.f32.mrf.mxu0
        %v8219 = vadd.f32 %v8094, %v8218
        %8220 = vmatmul.bf16.gmra.mxu0 %v8181
        %v8221 = vpop.f32.mrf.mxu0
        %v8222 = vadd.f32 %v8097, %v8221
        %v8223 = vpop.f32.mrf.mxu0
        %v8224 = vadd.f32 %v8099, %v8223
        %8225 = vmatmul.bf16.gmra.mxu0 %v8184
        %v8226 = vpop.f32.mrf.mxu0
        %v8227 = vadd.f32 %v8102, %v8226
        %v8228 = vpop.f32.mrf.mxu0
        %v8229 = vadd.f32 %v8104, %v8228
        %8230 = vmatmul.bf16.gmra.mxu0 %v8187
        %v8231 = vpop.f32.mrf.mxu0
        %v8232 = vadd.f32 %v8107, %v8231
        %v8233 = vpop.f32.mrf.mxu0
        %v8234 = vadd.f32 %v8109, %v8233
        %8235 = vmatmul.bf16.gmra.mxu0 %v8190
        %v8236 = vpop.f32.mrf.mxu0
        %v8237 = vadd.f32 %v8112, %v8236
        %v8238 = vpop.f32.mrf.mxu0
        %v8239 = vadd.f32 %v8114, %v8238
        %8240 = vdwg.mxu0
        %s8241 = scalar_lea.vmem %s473, 32 [#allocation10]
        %v8242 = vld [vmem:[%s8241] sm:$0xf]
        %v8243 = vld [vmem:[%s8241 + $0x4] sm:$0xf]
        %v8244 = vld [vmem:[%s8241 + $0x8] sm:$0xf]
        %v8245 = vld [vmem:[%s8241 + $0xc] sm:$0xf]
        %v8262 = vunpack.c.l.b16 %v7950
        %v8263 = vunpack.c.l.b16 %v7951
        %v8264 = vunpack.c.l.b16 %v7952
        %v8265 = vunpack.c.l.b16 %v7953
        %v8266 = vunpack.c.l.b16 %v7954
        %v8267 = vunpack.c.l.b16 %v7955
        %v8268 = vunpack.c.l.b16 %v7956
        %v8269 = vunpack.c.l.b16 %v7957
        %v8270 = vunpack.c.l.b16 %v7958
        %v8271 = vunpack.c.l.b16 %v7959
        %v8272 = vunpack.c.l.b16 %v7960
        %v8273 = vunpack.c.l.b16 %v7961
        %v8274 = vunpack.c.l.b16 %v7962
        %v8275 = vunpack.c.l.b16 %v7963
        %v8276 = vunpack.c.l.b16 %v7964
        %v8277 = vunpack.c.l.b16 %v7965
        %v8278 = vpack.c.b16 %v8263, %v8262
        %v8279 = vpack.c.b16 %v8265, %v8264
        %v8280 = vpack.c.b16 %v8267, %v8266
        %v8281 = vpack.c.b16 %v8269, %v8268
        %v8282 = vpack.c.b16 %v8271, %v8270
        %v8283 = vpack.c.b16 %v8273, %v8272
        %v8284 = vpack.c.b16 %v8275, %v8274
        %v8285 = vpack.c.b16 %v8277, %v8276
        %v8290 = vunpack.c.l.b16 %v8242
        %v8291 = vunpack.c.l.b16 %v8243
        %v8292 = vunpack.c.l.b16 %v8244
        %v8293 = vunpack.c.l.b16 %v8245
        %v8294 = vpack.c.b16 %v8291, %v8290
        %v8295 = vpack.c.b16 %v8293, %v8292
        %v8299 = vsel %vm6162, %v8278, 0
        %v8302 = vsel %vm6162, %v8279, 0
        %v8305 = vsel %vm6162, %v8280, 0
        %v8308 = vsel %vm6162, %v8281, 0
        %v8311 = vsel %vm6162, %v8282, 0
        %v8314 = vsel %vm6162, %v8283, 0
        %v8317 = vsel %vm6162, %v8284, 0
        %v8320 = vsel %vm6162, %v8285, 0
        %8322 = vmatpush.bf16.msra.mxu0 0
        %8323 = vmatpush.bf16.msra.mxu0 0
        %8324 = vmatpush.bf16.msra.mxu0 0
        %8325 = vmatpush.bf16.msra.mxu0 0
        %8326 = vmatpush.bf16.msra.mxu0 0
        %8327 = vmatpush.bf16.msra.mxu0 0
        %8328 = vmatpush.bf16.msra.mxu0 %v8295
        %8329 = vmatpush.bf16.msra.mxu0 %v8294
        %8330 = vmatmul.bf16.gmra.mxu0 %v8299
        %v8331 = vpop.f32.mrf.mxu0
        %v8332 = vadd.f32 0.0, %v8331
        %v8333 = vpop.f32.mrf.mxu0
        %v8334 = vadd.f32 0.0, %v8333
        %8335 = vmatmul.bf16.gmra.mxu0 %v8302
        %v8336 = vpop.f32.mrf.mxu0
        %v8337 = vadd.f32 0.0, %v8336
        %v8338 = vpop.f32.mrf.mxu0
        %v8339 = vadd.f32 0.0, %v8338
        %8340 = vmatmul.bf16.gmra.mxu0 %v8305
        %v8341 = vpop.f32.mrf.mxu0
        %v8342 = vadd.f32 0.0, %v8341
        %v8343 = vpop.f32.mrf.mxu0
        %v8344 = vadd.f32 0.0, %v8343
        %8345 = vmatmul.bf16.gmra.mxu0 %v8308
        %v8346 = vpop.f32.mrf.mxu0
        %v8347 = vadd.f32 0.0, %v8346
        %v8348 = vpop.f32.mrf.mxu0
        %v8349 = vadd.f32 0.0, %v8348
        %8350 = vmatmul.bf16.gmra.mxu0 %v8311
        %v8351 = vpop.f32.mrf.mxu0
        %v8352 = vadd.f32 0.0, %v8351
        %v8353 = vpop.f32.mrf.mxu0
        %v8354 = vadd.f32 0.0, %v8353
        %8355 = vmatmul.bf16.gmra.mxu0 %v8314
        %v8356 = vpop.f32.mrf.mxu0
        %v8357 = vadd.f32 0.0, %v8356
        %v8358 = vpop.f32.mrf.mxu0
        %v8359 = vadd.f32 0.0, %v8358
        %8360 = vmatmul.bf16.gmra.mxu0 %v8317
        %v8361 = vpop.f32.mrf.mxu0
        %v8362 = vadd.f32 0.0, %v8361
        %v8363 = vpop.f32.mrf.mxu0
        %v8364 = vadd.f32 0.0, %v8363
        %8365 = vmatmul.bf16.gmra.mxu0 %v8320
        %v8366 = vpop.f32.mrf.mxu0
        %v8367 = vadd.f32 0.0, %v8366
        %v8368 = vpop.f32.mrf.mxu0
        %v8369 = vadd.f32 0.0, %v8368
        %8370 = vdwg.mxu0
        %v8371 = vadd.f32 %v8202, %v8332
        %v8372 = vadd.f32 %v8204, %v8334
        %v8373 = vadd.f32 %v8207, %v8337
        %v8374 = vadd.f32 %v8209, %v8339
        %v8375 = vadd.f32 %v8212, %v8342
        %v8376 = vadd.f32 %v8214, %v8344
        %v8377 = vadd.f32 %v8217, %v8347
        %v8378 = vadd.f32 %v8219, %v8349
        %v8379 = vadd.f32 %v8222, %v8352
        %v8380 = vadd.f32 %v8224, %v8354
        %v8381 = vadd.f32 %v8227, %v8357
        %v8382 = vadd.f32 %v8229, %v8359
        %v8383 = vadd.f32 %v8232, %v8362
        %v8384 = vadd.f32 %v8234, %v8364
        %v8385 = vadd.f32 %v8237, %v8367
        %v8386 = vadd.f32 %v8239, %v8369
        %s8387 = scalar_lea.vmem %s473, 48 [#allocation10]
        %v8388 = vld [vmem:[%s8387] sm:$0xf]
        %v8389 = vld [vmem:[%s8387 + $0x4] sm:$0xf]
        %v8390 = vld [vmem:[%s8387 + $0x8] sm:$0xf]
        %v8391 = vld [vmem:[%s8387 + $0xc] sm:$0xf]
        %v8408 = vunpack.c.l.b16 %v7966
        %v8409 = vunpack.c.l.b16 %v7967
        %v8410 = vunpack.c.l.b16 %v7968
        %v8411 = vunpack.c.l.b16 %v7969
        %v8412 = vunpack.c.l.b16 %v7970
        %v8413 = vunpack.c.l.b16 %v7971
        %v8414 = vunpack.c.l.b16 %v7972
        %v8415 = vunpack.c.l.b16 %v7973
        %v8416 = vunpack.c.l.b16 %v7974
        %v8417 = vunpack.c.l.b16 %v7975
        %v8418 = vunpack.c.l.b16 %v7976
        %v8419 = vunpack.c.l.b16 %v7977
        %v8420 = vunpack.c.l.b16 %v7978
        %v8421 = vunpack.c.l.b16 %v7979
        %v8422 = vunpack.c.l.b16 %v7980
        %v8423 = vunpack.c.l.b16 %v7981
        %v8424 = vpack.c.b16 %v8409, %v8408
        %v8425 = vpack.c.b16 %v8411, %v8410
        %v8426 = vpack.c.b16 %v8413, %v8412
        %v8427 = vpack.c.b16 %v8415, %v8414
        %v8428 = vpack.c.b16 %v8417, %v8416
        %v8429 = vpack.c.b16 %v8419, %v8418
        %v8430 = vpack.c.b16 %v8421, %v8420
        %v8431 = vpack.c.b16 %v8423, %v8422
        %v8436 = vunpack.c.l.b16 %v8388
        %v8437 = vunpack.c.l.b16 %v8389
        %v8438 = vunpack.c.l.b16 %v8390
        %v8439 = vunpack.c.l.b16 %v8391
        %v8440 = vpack.c.b16 %v8437, %v8436
        %v8441 = vpack.c.b16 %v8439, %v8438
        %v8445 = vsel %vm6162, %v8424, 0
        %v8448 = vsel %vm6162, %v8425, 0
        %v8451 = vsel %vm6162, %v8426, 0
        %v8454 = vsel %vm6162, %v8427, 0
        %v8457 = vsel %vm6162, %v8428, 0
        %v8460 = vsel %vm6162, %v8429, 0
        %v8463 = vsel %vm6162, %v8430, 0
        %v8466 = vsel %vm6162, %v8431, 0
        %8468 = vmatpush.bf16.msra.mxu0 0
        %8469 = vmatpush.bf16.msra.mxu0 0
        %8470 = vmatpush.bf16.msra.mxu0 0
        %8471 = vmatpush.bf16.msra.mxu0 0
        %8472 = vmatpush.bf16.msra.mxu0 0
        %8473 = vmatpush.bf16.msra.mxu0 0
        %8474 = vmatpush.bf16.msra.mxu0 %v8441
        %8475 = vmatpush.bf16.msra.mxu0 %v8440
        %8476 = vmatmul.bf16.gmra.mxu0 %v8445
        %v8477 = vpop.f32.mrf.mxu0
        %v8478 = vadd.f32 0.0, %v8477
        %v8479 = vpop.f32.mrf.mxu0
        %v8480 = vadd.f32 0.0, %v8479
        %8481 = vmatmul.bf16.gmra.mxu0 %v8448
        %v8482 = vpop.f32.mrf.mxu0
        %v8483 = vadd.f32 0.0, %v8482
        %v8484 = vpop.f32.mrf.mxu0
        %v8485 = vadd.f32 0.0, %v8484
        %8486 = vmatmul.bf16.gmra.mxu0 %v8451
        %v8487 = vpop.f32.mrf.mxu0
        %v8488 = vadd.f32 0.0, %v8487
        %v8489 = vpop.f32.mrf.mxu0
        %v8490 = vadd.f32 0.0, %v8489
        %8491 = vmatmul.bf16.gmra.mxu0 %v8454
        %v8492 = vpop.f32.mrf.mxu0
        %v8493 = vadd.f32 0.0, %v8492
        %v8494 = vpop.f32.mrf.mxu0
        %v8495 = vadd.f32 0.0, %v8494
        %8496 = vmatmul.bf16.gmra.mxu0 %v8457
        %v8497 = vpop.f32.mrf.mxu0
        %v8498 = vadd.f32 0.0, %v8497
        %v8499 = vpop.f32.mrf.mxu0
        %v8500 = vadd.f32 0.0, %v8499
        %8501 = vmatmul.bf16.gmra.mxu0 %v8460
        %v8502 = vpop.f32.mrf.mxu0
        %v8503 = vadd.f32 0.0, %v8502
        %v8504 = vpop.f32.mrf.mxu0
        %v8505 = vadd.f32 0.0, %v8504
        %8506 = vmatmul.bf16.gmra.mxu0 %v8463
        %v8507 = vpop.f32.mrf.mxu0
        %v8508 = vadd.f32 0.0, %v8507
        %v8509 = vpop.f32.mrf.mxu0
        %v8510 = vadd.f32 0.0, %v8509
        %8511 = vmatmul.bf16.gmra.mxu0 %v8466
        %v8512 = vpop.f32.mrf.mxu0
        %v8513 = vadd.f32 0.0, %v8512
        %v8514 = vpop.f32.mrf.mxu0
        %v8515 = vadd.f32 0.0, %v8514
        %8516 = vdwg.mxu0
        %v8517 = vadd.f32 %v8371, %v8478
        %v8518 = vadd.f32 %v8372, %v8480
        %v8519 = vadd.f32 %v8373, %v8483
        %v8520 = vadd.f32 %v8374, %v8485
        %v8521 = vadd.f32 %v8375, %v8488
        %v8522 = vadd.f32 %v8376, %v8490
        %v8523 = vadd.f32 %v8377, %v8493
        %v8524 = vadd.f32 %v8378, %v8495
        %v8525 = vadd.f32 %v8379, %v8498
        %v8526 = vadd.f32 %v8380, %v8500
        %v8527 = vadd.f32 %v8381, %v8503
        %v8528 = vadd.f32 %v8382, %v8505
        %v8529 = vadd.f32 %v8383, %v8508
        %v8530 = vadd.f32 %v8384, %v8510
        %v8531 = vadd.f32 %v8385, %v8513
        %v8532 = vadd.f32 %v8386, %v8515
        %v8533 = vadd.f32 %v588, %v8517
        %v8534 = vadd.f32 %v589, %v8518
        %v8535 = vadd.f32 %v590, %v8519
        %v8536 = vadd.f32 %v591, %v8520
        %v8537 = vadd.f32 %v592, %v8521
        %v8538 = vadd.f32 %v593, %v8522
        %v8539 = vadd.f32 %v594, %v8523
        %v8540 = vadd.f32 %v595, %v8524
        %v8541 = vadd.f32 %v596, %v8525
        %v8542 = vadd.f32 %v597, %v8526
        %v8543 = vadd.f32 %v598, %v8527
        %v8544 = vadd.f32 %v599, %v8528
        %v8545 = vadd.f32 %v600, %v8529
        %v8546 = vadd.f32 %v601, %v8530
        %v8547 = vadd.f32 %v602, %v8531
        %v8548 = vadd.f32 %v603, %v8532
        %v8549 = vmul.f32 %v8533, %v8533
        %v8550 = vmul.f32 %v8534, %v8534
        %v8551 = vmul.f32 %v8535, %v8535
        %v8552 = vmul.f32 %v8536, %v8536
        %v8553 = vmul.f32 %v8537, %v8537
        %v8554 = vmul.f32 %v8538, %v8538
        %v8555 = vmul.f32 %v8539, %v8539
        %v8556 = vmul.f32 %v8540, %v8540
        %v8557 = vmul.f32 %v8541, %v8541
        %v8558 = vmul.f32 %v8542, %v8542
        %v8559 = vmul.f32 %v8543, %v8543
        %v8560 = vmul.f32 %v8544, %v8544
        %v8561 = vmul.f32 %v8545, %v8545
        %v8562 = vmul.f32 %v8546, %v8546
        %v8563 = vmul.f32 %v8547, %v8547
        %v8564 = vmul.f32 %v8548, %v8548
        %8565 = vadd.xlane.f32.xlu0 %v8549
        %v8566 = vpop.xlane.xlu0 %8565
        %8567 = vadd.xlane.f32.xlu0 %v8550
        %v8568 = vpop.xlane.xlu0 %8567
        %8569 = vadd.xlane.f32.xlu0 %v8551
        %v8570 = vpop.xlane.xlu0 %8569
        %8571 = vadd.xlane.f32.xlu0 %v8552
        %v8572 = vpop.xlane.xlu0 %8571
        %8573 = vadd.xlane.f32.xlu0 %v8553
        %v8574 = vpop.xlane.xlu0 %8573
        %8575 = vadd.xlane.f32.xlu0 %v8554
        %v8576 = vpop.xlane.xlu0 %8575
        %8577 = vadd.xlane.f32.xlu0 %v8555
        %v8578 = vpop.xlane.xlu0 %8577
        %8579 = vadd.xlane.f32.xlu0 %v8556
        %v8580 = vpop.xlane.xlu0 %8579
        %8581 = vadd.xlane.f32.xlu0 %v8557
        %v8582 = vpop.xlane.xlu0 %8581
        %8583 = vadd.xlane.f32.xlu0 %v8558
        %v8584 = vpop.xlane.xlu0 %8583
        %8585 = vadd.xlane.f32.xlu0 %v8559
        %v8586 = vpop.xlane.xlu0 %8585
        %8587 = vadd.xlane.f32.xlu0 %v8560
        %v8588 = vpop.xlane.xlu0 %8587
        %8589 = vadd.xlane.f32.xlu0 %v8561
        %v8590 = vpop.xlane.xlu0 %8589
        %8591 = vadd.xlane.f32.xlu0 %v8562
        %v8592 = vpop.xlane.xlu0 %8591
        %8593 = vadd.xlane.f32.xlu0 %v8563
        %v8594 = vpop.xlane.xlu0 %8593
        %8595 = vadd.xlane.f32.xlu0 %v8564
        %v8596 = vpop.xlane.xlu0 %8595
        %v8597 = vmul.f32 %v8566, %v658
        %v8598 = vmul.f32 %v8568, %v658
        %v8599 = vmul.f32 %v8570, %v658
        %v8600 = vmul.f32 %v8572, %v658
        %v8601 = vmul.f32 %v8574, %v658
        %v8602 = vmul.f32 %v8576, %v658
        %v8603 = vmul.f32 %v8578, %v658
        %v8604 = vmul.f32 %v8580, %v658
        %v8605 = vmul.f32 %v8582, %v658
        %v8606 = vmul.f32 %v8584, %v658
        %v8607 = vmul.f32 %v8586, %v658
        %v8608 = vmul.f32 %v8588, %v658
        %v8609 = vmul.f32 %v8590, %v658
        %v8610 = vmul.f32 %v8592, %v658
        %v8611 = vmul.f32 %v8594, %v658
        %v8612 = vmul.f32 %v8596, %v658
        %v8613 = vadd.f32 %v8597, 1e-06
        %v8614 = vadd.f32 %v8598, 1e-06
        %v8615 = vadd.f32 %v8599, 1e-06
        %v8616 = vadd.f32 %v8600, 1e-06
        %v8617 = vadd.f32 %v8601, 1e-06
        %v8618 = vadd.f32 %v8602, 1e-06
        %v8619 = vadd.f32 %v8603, 1e-06
        %v8620 = vadd.f32 %v8604, 1e-06
        %v8621 = vadd.f32 %v8605, 1e-06
        %v8622 = vadd.f32 %v8606, 1e-06
        %v8623 = vadd.f32 %v8607, 1e-06
        %v8624 = vadd.f32 %v8608, 1e-06
        %v8625 = vadd.f32 %v8609, 1e-06
        %v8626 = vadd.f32 %v8610, 1e-06
        %v8627 = vadd.f32 %v8611, 1e-06
        %v8628 = vadd.f32 %v8612, 1e-06
        %v8629 = vrsqrt.pop %v8613
        %v8630 = vmul.f32 %v8629, %v8613
        %v8631 = vmul.f32 %v8630, %v8629
        %v8632 = vmul.f32 0.5, %v8631
        %v8633 = vsub.f32 1.5, %v8632
        %v8634 = vmul.f32 %v8629, %v8633
        %vm8635 = vweird.f32 %v8613
        %vm8636 = vweird.f32 %v8629
        %vm8637 = vmor %vm8635, %vm8636
        %v8638 = vsel %vm8637, %v8629, %v8634
        %v8639 = vrsqrt.pop %v8614
        %v8640 = vmul.f32 %v8639, %v8614
        %v8641 = vmul.f32 %v8640, %v8639
        %v8642 = vmul.f32 0.5, %v8641
        %v8643 = vsub.f32 1.5, %v8642
        %v8644 = vmul.f32 %v8639, %v8643
        %vm8645 = vweird.f32 %v8614
        %vm8646 = vweird.f32 %v8639
        %vm8647 = vmor %vm8645, %vm8646
        %v8648 = vsel %vm8647, %v8639, %v8644
        %v8649 = vrsqrt.pop %v8615
        %v8650 = vmul.f32 %v8649, %v8615
        %v8651 = vmul.f32 %v8650, %v8649
        %v8652 = vmul.f32 0.5, %v8651
        %v8653 = vsub.f32 1.5, %v8652
        %v8654 = vmul.f32 %v8649, %v8653
        %vm8655 = vweird.f32 %v8615
        %vm8656 = vweird.f32 %v8649
        %vm8657 = vmor %vm8655, %vm8656
        %v8658 = vsel %vm8657, %v8649, %v8654
        %v8659 = vrsqrt.pop %v8616
        %v8660 = vmul.f32 %v8659, %v8616
        %v8661 = vmul.f32 %v8660, %v8659
        %v8662 = vmul.f32 0.5, %v8661
        %v8663 = vsub.f32 1.5, %v8662
        %v8664 = vmul.f32 %v8659, %v8663
        %vm8665 = vweird.f32 %v8616
        %vm8666 = vweird.f32 %v8659
        %vm8667 = vmor %vm8665, %vm8666
        %v8668 = vsel %vm8667, %v8659, %v8664
        %v8669 = vrsqrt.pop %v8617
        %v8670 = vmul.f32 %v8669, %v8617
        %v8671 = vmul.f32 %v8670, %v8669
        %v8672 = vmul.f32 0.5, %v8671
        %v8673 = vsub.f32 1.5, %v8672
        %v8674 = vmul.f32 %v8669, %v8673
        %vm8675 = vweird.f32 %v8617
        %vm8676 = vweird.f32 %v8669
        %vm8677 = vmor %vm8675, %vm8676
        %v8678 = vsel %vm8677, %v8669, %v8674
        %v8679 = vrsqrt.pop %v8618
        %v8680 = vmul.f32 %v8679, %v8618
        %v8681 = vmul.f32 %v8680, %v8679
        %v8682 = vmul.f32 0.5, %v8681
        %v8683 = vsub.f32 1.5, %v8682
        %v8684 = vmul.f32 %v8679, %v8683
        %vm8685 = vweird.f32 %v8618
        %vm8686 = vweird.f32 %v8679
        %vm8687 = vmor %vm8685, %vm8686
        %v8688 = vsel %vm8687, %v8679, %v8684
        %v8689 = vrsqrt.pop %v8619
        %v8690 = vmul.f32 %v8689, %v8619
        %v8691 = vmul.f32 %v8690, %v8689
        %v8692 = vmul.f32 0.5, %v8691
        %v8693 = vsub.f32 1.5, %v8692
        %v8694 = vmul.f32 %v8689, %v8693
        %vm8695 = vweird.f32 %v8619
        %vm8696 = vweird.f32 %v8689
        %vm8697 = vmor %vm8695, %vm8696
        %v8698 = vsel %vm8697, %v8689, %v8694
        %v8699 = vrsqrt.pop %v8620
        %v8700 = vmul.f32 %v8699, %v8620
        %v8701 = vmul.f32 %v8700, %v8699
        %v8702 = vmul.f32 0.5, %v8701
        %v8703 = vsub.f32 1.5, %v8702
        %v8704 = vmul.f32 %v8699, %v8703
        %vm8705 = vweird.f32 %v8620
        %vm8706 = vweird.f32 %v8699
        %vm8707 = vmor %vm8705, %vm8706
        %v8708 = vsel %vm8707, %v8699, %v8704
        %v8709 = vrsqrt.pop %v8621
        %v8710 = vmul.f32 %v8709, %v8621
        %v8711 = vmul.f32 %v8710, %v8709
        %v8712 = vmul.f32 0.5, %v8711
        %v8713 = vsub.f32 1.5, %v8712
        %v8714 = vmul.f32 %v8709, %v8713
        %vm8715 = vweird.f32 %v8621
        %vm8716 = vweird.f32 %v8709
        %vm8717 = vmor %vm8715, %vm8716
        %v8718 = vsel %vm8717, %v8709, %v8714
        %v8719 = vrsqrt.pop %v8622
        %v8720 = vmul.f32 %v8719, %v8622
        %v8721 = vmul.f32 %v8720, %v8719
        %v8722 = vmul.f32 0.5, %v8721
        %v8723 = vsub.f32 1.5, %v8722
        %v8724 = vmul.f32 %v8719, %v8723
        %vm8725 = vweird.f32 %v8622
        %vm8726 = vweird.f32 %v8719
        %vm8727 = vmor %vm8725, %vm8726
        %v8728 = vsel %vm8727, %v8719, %v8724
        %v8729 = vrsqrt.pop %v8623
        %v8730 = vmul.f32 %v8729, %v8623
        %v8731 = vmul.f32 %v8730, %v8729
        %v8732 = vmul.f32 0.5, %v8731
        %v8733 = vsub.f32 1.5, %v8732
        %v8734 = vmul.f32 %v8729, %v8733
        %vm8735 = vweird.f32 %v8623
        %vm8736 = vweird.f32 %v8729
        %vm8737 = vmor %vm8735, %vm8736
        %v8738 = vsel %vm8737, %v8729, %v8734
        %v8739 = vrsqrt.pop %v8624
        %v8740 = vmul.f32 %v8739, %v8624
        %v8741 = vmul.f32 %v8740, %v8739
        %v8742 = vmul.f32 0.5, %v8741
        %v8743 = vsub.f32 1.5, %v8742
        %v8744 = vmul.f32 %v8739, %v8743
        %vm8745 = vweird.f32 %v8624
        %vm8746 = vweird.f32 %v8739
        %vm8747 = vmor %vm8745, %vm8746
        %v8748 = vsel %vm8747, %v8739, %v8744
        %v8749 = vrsqrt.pop %v8625
        %v8750 = vmul.f32 %v8749, %v8625
        %v8751 = vmul.f32 %v8750, %v8749
        %v8752 = vmul.f32 0.5, %v8751
        %v8753 = vsub.f32 1.5, %v8752
        %v8754 = vmul.f32 %v8749, %v8753
        %vm8755 = vweird.f32 %v8625
        %vm8756 = vweird.f32 %v8749
        %vm8757 = vmor %vm8755, %vm8756
        %v8758 = vsel %vm8757, %v8749, %v8754
        %v8759 = vrsqrt.pop %v8626
        %v8760 = vmul.f32 %v8759, %v8626
        %v8761 = vmul.f32 %v8760, %v8759
        %v8762 = vmul.f32 0.5, %v8761
        %v8763 = vsub.f32 1.5, %v8762
        %v8764 = vmul.f32 %v8759, %v8763
        %vm8765 = vweird.f32 %v8626
        %vm8766 = vweird.f32 %v8759
        %vm8767 = vmor %vm8765, %vm8766
        %v8768 = vsel %vm8767, %v8759, %v8764
        %v8769 = vrsqrt.pop %v8627
        %v8770 = vmul.f32 %v8769, %v8627
        %v8771 = vmul.f32 %v8770, %v8769
        %v8772 = vmul.f32 0.5, %v8771
        %v8773 = vsub.f32 1.5, %v8772
        %v8774 = vmul.f32 %v8769, %v8773
        %vm8775 = vweird.f32 %v8627
        %vm8776 = vweird.f32 %v8769
        %vm8777 = vmor %vm8775, %vm8776
        %v8778 = vsel %vm8777, %v8769, %v8774
        %v8779 = vrsqrt.pop %v8628
        %v8780 = vmul.f32 %v8779, %v8628
        %v8781 = vmul.f32 %v8780, %v8779
        %v8782 = vmul.f32 0.5, %v8781
        %v8783 = vsub.f32 1.5, %v8782
        %v8784 = vmul.f32 %v8779, %v8783
        %vm8785 = vweird.f32 %v8628
        %vm8786 = vweird.f32 %v8779
        %vm8787 = vmor %vm8785, %vm8786
        %v8788 = vsel %vm8787, %v8779, %v8784
        %v8789 = vmul.f32 %v8533, %v8638
        %v8790 = vmul.f32 %v8534, %v8648
        %v8791 = vmul.f32 %v8535, %v8658
        %v8792 = vmul.f32 %v8536, %v8668
        %v8793 = vmul.f32 %v8537, %v8678
        %v8794 = vmul.f32 %v8538, %v8688
        %v8795 = vmul.f32 %v8539, %v8698
        %v8796 = vmul.f32 %v8540, %v8708
        %v8797 = vmul.f32 %v8541, %v8718
        %v8798 = vmul.f32 %v8542, %v8728
        %v8799 = vmul.f32 %v8543, %v8738
        %v8800 = vmul.f32 %v8544, %v8748
        %v8801 = vmul.f32 %v8545, %v8758
        %v8802 = vmul.f32 %v8546, %v8768
        %v8803 = vmul.f32 %v8547, %v8778
        %v8804 = vmul.f32 %v8548, %v8788
        %v8805 = vpack.c.bf16 %v8790, %v8789
        %v8806 = vpack.c.bf16 %v8792, %v8791
        %v8807 = vpack.c.bf16 %v8794, %v8793
        %v8808 = vpack.c.bf16 %v8796, %v8795
        %v8809 = vpack.c.bf16 %v8798, %v8797
        %v8810 = vpack.c.bf16 %v8800, %v8799
        %v8811 = vpack.c.bf16 %v8802, %v8801
        %v8812 = vpack.c.bf16 %v8804, %v8803
        %v8813 = vld [vmem:[%s483] sm:$0xff]
        %v8814 = vld [vmem:[%s483 + $0x8] sm:$0xff]
        %v8815 = vld [vmem:[%s483 + $0x10] sm:$0xff]
        %v8816 = vld [vmem:[%s483 + $0x18] sm:$0xff]
        %v8817 = vld [vmem:[%s483 + $0x20] sm:$0xff]
        %v8818 = vld [vmem:[%s483 + $0x28] sm:$0xff]
        %v8819 = vld [vmem:[%s483 + $0x30] sm:$0xff]
        %v8820 = vld [vmem:[%s483 + $0x38] sm:$0xff]
        %v8821 = vld [vmem:[%s483 + $0x40] sm:$0xff]
        %v8822 = vld [vmem:[%s483 + $0x48] sm:$0xff]
        %v8823 = vld [vmem:[%s483 + $0x50] sm:$0xff]
        %v8824 = vld [vmem:[%s483 + $0x58] sm:$0xff]
        %v8825 = vld [vmem:[%s483 + $0x60] sm:$0xff]
        %v8826 = vld [vmem:[%s483 + $0x68] sm:$0xff]
        %v8827 = vld [vmem:[%s483 + $0x70] sm:$0xff]
        %v8828 = vld [vmem:[%s483 + $0x78] sm:$0xff]
        %v8845 = vunpack.c.l.b16 %v8813
        %v8846 = vunpack.c.h.b16 %v8813
        %v8847 = vunpack.c.l.b16 %v8814
        %v8848 = vunpack.c.h.b16 %v8814
        %v8849 = vunpack.c.l.b16 %v8815
        %v8850 = vunpack.c.h.b16 %v8815
        %v8851 = vunpack.c.l.b16 %v8816
        %v8852 = vunpack.c.h.b16 %v8816
        %v8853 = vunpack.c.l.b16 %v8817
        %v8854 = vunpack.c.h.b16 %v8817
        %v8855 = vunpack.c.l.b16 %v8818
        %v8856 = vunpack.c.h.b16 %v8818
        %v8857 = vunpack.c.l.b16 %v8819
        %v8858 = vunpack.c.h.b16 %v8819
        %v8859 = vunpack.c.l.b16 %v8820
        %v8860 = vunpack.c.h.b16 %v8820
        %v8861 = vunpack.c.l.b16 %v8821
        %v8862 = vunpack.c.h.b16 %v8821
        %v8863 = vunpack.c.l.b16 %v8822
        %v8864 = vunpack.c.h.b16 %v8822
        %v8865 = vunpack.c.l.b16 %v8823
        %v8866 = vunpack.c.h.b16 %v8823
        %v8867 = vunpack.c.l.b16 %v8824
        %v8868 = vunpack.c.h.b16 %v8824
        %v8869 = vunpack.c.l.b16 %v8825
        %v8870 = vunpack.c.h.b16 %v8825
        %v8871 = vunpack.c.l.b16 %v8826
        %v8872 = vunpack.c.h.b16 %v8826
        %v8873 = vunpack.c.l.b16 %v8827
        %v8874 = vunpack.c.h.b16 %v8827
        %v8875 = vunpack.c.l.b16 %v8828
        %v8876 = vunpack.c.h.b16 %v8828
        %v8877 = vpack.c.b16 %v8847, %v8845
        %v8878 = vpack.c.b16 %v8848, %v8846
        %v8879 = vpack.c.b16 %v8851, %v8849
        %v8880 = vpack.c.b16 %v8852, %v8850
        %v8881 = vpack.c.b16 %v8855, %v8853
        %v8882 = vpack.c.b16 %v8856, %v8854
        %v8883 = vpack.c.b16 %v8859, %v8857
        %v8884 = vpack.c.b16 %v8860, %v8858
        %v8885 = vpack.c.b16 %v8863, %v8861
        %v8886 = vpack.c.b16 %v8864, %v8862
        %v8887 = vpack.c.b16 %v8867, %v8865
        %v8888 = vpack.c.b16 %v8868, %v8866
        %v8889 = vpack.c.b16 %v8871, %v8869
        %v8890 = vpack.c.b16 %v8872, %v8870
        %v8891 = vpack.c.b16 %v8875, %v8873
        %v8892 = vpack.c.b16 %v8876, %v8874
        %8909 = vmatpush.bf16.msra.mxu0 %v8891
        %8910 = vmatpush.bf16.msra.mxu0 %v8889
        %8911 = vmatpush.bf16.msra.mxu0 %v8887
        %8912 = vmatpush.bf16.msra.mxu0 %v8885
        %8913 = vmatpush.bf16.msra.mxu0 %v8883
        %8914 = vmatpush.bf16.msra.mxu0 %v8881
        %8915 = vmatpush.bf16.msra.mxu0 %v8879
        %8916 = vmatpush.bf16.msra.mxu0 %v8877
        %8917 = vmatmul.bf16.gmra.mxu0 %v8805
        %v8918 = vpop.f32.mrf.mxu0
        %v8919 = vadd.f32 0.0, %v8918
        %v8920 = vpop.f32.mrf.mxu0
        %v8921 = vadd.f32 0.0, %v8920
        %8922 = vmatmul.bf16.gmra.mxu0 %v8806
        %v8923 = vpop.f32.mrf.mxu0
        %v8924 = vadd.f32 0.0, %v8923
        %v8925 = vpop.f32.mrf.mxu0
        %v8926 = vadd.f32 0.0, %v8925
        %8927 = vmatmul.bf16.gmra.mxu0 %v8807
        %v8928 = vpop.f32.mrf.mxu0
        %v8929 = vadd.f32 0.0, %v8928
        %v8930 = vpop.f32.mrf.mxu0
        %v8931 = vadd.f32 0.0, %v8930
        %8932 = vmatmul.bf16.gmra.mxu0 %v8808
        %v8933 = vpop.f32.mrf.mxu0
        %v8934 = vadd.f32 0.0, %v8933
        %v8935 = vpop.f32.mrf.mxu0
        %v8936 = vadd.f32 0.0, %v8935
        %8937 = vmatmul.bf16.gmra.mxu0 %v8809
        %v8938 = vpop.f32.mrf.mxu0
        %v8939 = vadd.f32 0.0, %v8938
        %v8940 = vpop.f32.mrf.mxu0
        %v8941 = vadd.f32 0.0, %v8940
        %8942 = vmatmul.bf16.gmra.mxu0 %v8810
        %v8943 = vpop.f32.mrf.mxu0
        %v8944 = vadd.f32 0.0, %v8943
        %v8945 = vpop.f32.mrf.mxu0
        %v8946 = vadd.f32 0.0, %v8945
        %8947 = vmatmul.bf16.gmra.mxu0 %v8811
        %v8948 = vpop.f32.mrf.mxu0
        %v8949 = vadd.f32 0.0, %v8948
        %v8950 = vpop.f32.mrf.mxu0
        %v8951 = vadd.f32 0.0, %v8950
        %8952 = vmatmul.bf16.gmra.mxu0 %v8812
        %v8953 = vpop.f32.mrf.mxu0
        %v8954 = vadd.f32 0.0, %v8953
        %v8955 = vpop.f32.mrf.mxu0
        %v8956 = vadd.f32 0.0, %v8955
        %8957 = vdwg.mxu0
        %8958 = vmatpush.bf16.msra.mxu0 %v8892
        %8959 = vmatpush.bf16.msra.mxu0 %v8890
        %8960 = vmatpush.bf16.msra.mxu0 %v8888
        %8961 = vmatpush.bf16.msra.mxu0 %v8886
        %8962 = vmatpush.bf16.msra.mxu0 %v8884
        %8963 = vmatpush.bf16.msra.mxu0 %v8882
        %8964 = vmatpush.bf16.msra.mxu0 %v8880
        %8965 = vmatpush.bf16.msra.mxu0 %v8878
        %8966 = vmatmul.bf16.gmra.mxu0 %v8805
        %v8967 = vpop.f32.mrf.mxu0
        %v8968 = vadd.f32 0.0, %v8967
        %v8969 = vpop.f32.mrf.mxu0
        %v8970 = vadd.f32 0.0, %v8969
        %8971 = vmatmul.bf16.gmra.mxu0 %v8806
        %v8972 = vpop.f32.mrf.mxu0
        %v8973 = vadd.f32 0.0, %v8972
        %v8974 = vpop.f32.mrf.mxu0
        %v8975 = vadd.f32 0.0, %v8974
        %8976 = vmatmul.bf16.gmra.mxu0 %v8807
        %v8977 = vpop.f32.mrf.mxu0
        %v8978 = vadd.f32 0.0, %v8977
        %v8979 = vpop.f32.mrf.mxu0
        %v8980 = vadd.f32 0.0, %v8979
        %8981 = vmatmul.bf16.gmra.mxu0 %v8808
        %v8982 = vpop.f32.mrf.mxu0
        %v8983 = vadd.f32 0.0, %v8982
        %v8984 = vpop.f32.mrf.mxu0
        %v8985 = vadd.f32 0.0, %v8984
        %8986 = vmatmul.bf16.gmra.mxu0 %v8809
        %v8987 = vpop.f32.mrf.mxu0
        %v8988 = vadd.f32 0.0, %v8987
        %v8989 = vpop.f32.mrf.mxu0
        %v8990 = vadd.f32 0.0, %v8989
        %8991 = vmatmul.bf16.gmra.mxu0 %v8810
        %v8992 = vpop.f32.mrf.mxu0
        %v8993 = vadd.f32 0.0, %v8992
        %v8994 = vpop.f32.mrf.mxu0
        %v8995 = vadd.f32 0.0, %v8994
        %8996 = vmatmul.bf16.gmra.mxu0 %v8811
        %v8997 = vpop.f32.mrf.mxu0
        %v8998 = vadd.f32 0.0, %v8997
        %v8999 = vpop.f32.mrf.mxu0
        %v9000 = vadd.f32 0.0, %v8999
        %9001 = vmatmul.bf16.gmra.mxu0 %v8812
        %v9002 = vpop.f32.mrf.mxu0
        %v9003 = vadd.f32 0.0, %v9002
        %v9004 = vpop.f32.mrf.mxu0
        %v9005 = vadd.f32 0.0, %v9004
        %9006 = vdwg.mxu0
        %v9007 = vmax.f32 %v8919, 0.0
        %v9008 = vmax.f32 %v8968, 0.0
        %v9009 = vmax.f32 %v8921, 0.0
        %v9010 = vmax.f32 %v8970, 0.0
        %v9011 = vmax.f32 %v8924, 0.0
        %v9012 = vmax.f32 %v8973, 0.0
        %v9013 = vmax.f32 %v8926, 0.0
        %v9014 = vmax.f32 %v8975, 0.0
        %v9015 = vmax.f32 %v8929, 0.0
        %v9016 = vmax.f32 %v8978, 0.0
        %v9017 = vmax.f32 %v8931, 0.0
        %v9018 = vmax.f32 %v8980, 0.0
        %v9019 = vmax.f32 %v8934, 0.0
        %v9020 = vmax.f32 %v8983, 0.0
        %v9021 = vmax.f32 %v8936, 0.0
        %v9022 = vmax.f32 %v8985, 0.0
        %v9023 = vmax.f32 %v8939, 0.0
        %v9024 = vmax.f32 %v8988, 0.0
        %v9025 = vmax.f32 %v8941, 0.0
        %v9026 = vmax.f32 %v8990, 0.0
        %v9027 = vmax.f32 %v8944, 0.0
        %v9028 = vmax.f32 %v8993, 0.0
        %v9029 = vmax.f32 %v8946, 0.0
        %v9030 = vmax.f32 %v8995, 0.0
        %v9031 = vmax.f32 %v8949, 0.0
        %v9032 = vmax.f32 %v8998, 0.0
        %v9033 = vmax.f32 %v8951, 0.0
        %v9034 = vmax.f32 %v9000, 0.0
        %v9035 = vmax.f32 %v8954, 0.0
        %v9036 = vmax.f32 %v9003, 0.0
        %v9037 = vmax.f32 %v8956, 0.0
        %v9038 = vmax.f32 %v9005, 0.0
        %v9039 = vpack.c.bf16 %v9009, %v9007
        %v9040 = vpack.c.bf16 %v9010, %v9008
        %v9041 = vpack.c.bf16 %v9013, %v9011
        %v9042 = vpack.c.bf16 %v9014, %v9012
        %v9043 = vpack.c.bf16 %v9017, %v9015
        %v9044 = vpack.c.bf16 %v9018, %v9016
        %v9045 = vpack.c.bf16 %v9021, %v9019
        %v9046 = vpack.c.bf16 %v9022, %v9020
        %v9047 = vpack.c.bf16 %v9025, %v9023
        %v9048 = vpack.c.bf16 %v9026, %v9024
        %v9049 = vpack.c.bf16 %v9029, %v9027
        %v9050 = vpack.c.bf16 %v9030, %v9028
        %v9051 = vpack.c.bf16 %v9033, %v9031
        %v9052 = vpack.c.bf16 %v9034, %v9032
        %v9053 = vpack.c.bf16 %v9037, %v9035
        %v9054 = vpack.c.bf16 %v9038, %v9036
        %v9055 = vld [vmem:[%s493] sm:$0xf]
        %v9056 = vld [vmem:[%s493 + $0x4] sm:$0xf]
        %v9057 = vld [vmem:[%s493 + $0x8] sm:$0xf]
        %v9058 = vld [vmem:[%s493 + $0xc] sm:$0xf]
        %v9059 = vld [vmem:[%s493 + $0x10] sm:$0xf]
        %v9060 = vld [vmem:[%s493 + $0x14] sm:$0xf]
        %v9061 = vld [vmem:[%s493 + $0x18] sm:$0xf]
        %v9062 = vld [vmem:[%s493 + $0x1c] sm:$0xf]
        %v9063 = vld [vmem:[%s493 + $0x20] sm:$0xf]
        %v9064 = vld [vmem:[%s493 + $0x24] sm:$0xf]
        %v9065 = vld [vmem:[%s493 + $0x28] sm:$0xf]
        %v9066 = vld [vmem:[%s493 + $0x2c] sm:$0xf]
        %v9067 = vld [vmem:[%s493 + $0x30] sm:$0xf]
        %v9068 = vld [vmem:[%s493 + $0x34] sm:$0xf]
        %v9069 = vld [vmem:[%s493 + $0x38] sm:$0xf]
        %v9070 = vld [vmem:[%s493 + $0x3c] sm:$0xf]
        %v9071 = vld [vmem:[%s493 + $0x40] sm:$0xf]
        %v9072 = vld [vmem:[%s493 + $0x44] sm:$0xf]
        %v9073 = vld [vmem:[%s493 + $0x48] sm:$0xf]
        %v9074 = vld [vmem:[%s493 + $0x4c] sm:$0xf]
        %v9075 = vld [vmem:[%s493 + $0x50] sm:$0xf]
        %v9076 = vld [vmem:[%s493 + $0x54] sm:$0xf]
        %v9077 = vld [vmem:[%s493 + $0x58] sm:$0xf]
        %v9078 = vld [vmem:[%s493 + $0x5c] sm:$0xf]
        %v9079 = vld [vmem:[%s493 + $0x60] sm:$0xf]
        %v9080 = vld [vmem:[%s493 + $0x64] sm:$0xf]
        %v9081 = vld [vmem:[%s493 + $0x68] sm:$0xf]
        %v9082 = vld [vmem:[%s493 + $0x6c] sm:$0xf]
        %v9083 = vld [vmem:[%s493 + $0x70] sm:$0xf]
        %v9084 = vld [vmem:[%s493 + $0x74] sm:$0xf]
        %v9085 = vld [vmem:[%s493 + $0x78] sm:$0xf]
        %v9086 = vld [vmem:[%s493 + $0x7c] sm:$0xf]
        %v9119 = vunpack.c.l.b16 %v9055
        %v9120 = vunpack.c.l.b16 %v9056
        %v9121 = vunpack.c.l.b16 %v9057
        %v9122 = vunpack.c.l.b16 %v9058
        %v9123 = vunpack.c.l.b16 %v9059
        %v9124 = vunpack.c.l.b16 %v9060
        %v9125 = vunpack.c.l.b16 %v9061
        %v9126 = vunpack.c.l.b16 %v9062
        %v9127 = vunpack.c.l.b16 %v9063
        %v9128 = vunpack.c.l.b16 %v9064
        %v9129 = vunpack.c.l.b16 %v9065
        %v9130 = vunpack.c.l.b16 %v9066
        %v9131 = vunpack.c.l.b16 %v9067
        %v9132 = vunpack.c.l.b16 %v9068
        %v9133 = vunpack.c.l.b16 %v9069
        %v9134 = vunpack.c.l.b16 %v9070
        %v9135 = vunpack.c.l.b16 %v9071
        %v9136 = vunpack.c.l.b16 %v9072
        %v9137 = vunpack.c.l.b16 %v9073
        %v9138 = vunpack.c.l.b16 %v9074
        %v9139 = vunpack.c.l.b16 %v9075
        %v9140 = vunpack.c.l.b16 %v9076
        %v9141 = vunpack.c.l.b16 %v9077
        %v9142 = vunpack.c.l.b16 %v9078
        %v9143 = vunpack.c.l.b16 %v9079
        %v9144 = vunpack.c.l.b16 %v9080
        %v9145 = vunpack.c.l.b16 %v9081
        %v9146 = vunpack.c.l.b16 %v9082
        %v9147 = vunpack.c.l.b16 %v9083
        %v9148 = vunpack.c.l.b16 %v9084
        %v9149 = vunpack.c.l.b16 %v9085
        %v9150 = vunpack.c.l.b16 %v9086
        %v9151 = vpack.c.b16 %v9120, %v9119
        %v9152 = vpack.c.b16 %v9122, %v9121
        %v9153 = vpack.c.b16 %v9124, %v9123
        %v9154 = vpack.c.b16 %v9126, %v9125
        %v9155 = vpack.c.b16 %v9128, %v9127
        %v9156 = vpack.c.b16 %v9130, %v9129
        %v9157 = vpack.c.b16 %v9132, %v9131
        %v9158 = vpack.c.b16 %v9134, %v9133
        %v9159 = vpack.c.b16 %v9136, %v9135
        %v9160 = vpack.c.b16 %v9138, %v9137
        %v9161 = vpack.c.b16 %v9140, %v9139
        %v9162 = vpack.c.b16 %v9142, %v9141
        %v9163 = vpack.c.b16 %v9144, %v9143
        %v9164 = vpack.c.b16 %v9146, %v9145
        %v9165 = vpack.c.b16 %v9148, %v9147
        %v9166 = vpack.c.b16 %v9150, %v9149
        %9183 = vmatpush.bf16.msra.mxu0 %v9158
        %9184 = vmatpush.bf16.msra.mxu0 %v9157
        %9185 = vmatpush.bf16.msra.mxu0 %v9156
        %9186 = vmatpush.bf16.msra.mxu0 %v9155
        %9187 = vmatpush.bf16.msra.mxu0 %v9154
        %9188 = vmatpush.bf16.msra.mxu0 %v9153
        %9189 = vmatpush.bf16.msra.mxu0 %v9152
        %9190 = vmatpush.bf16.msra.mxu0 %v9151
        %9191 = vmatmul.bf16.gmra.mxu0 %v9039
        %v9192 = vpop.f32.mrf.mxu0
        %v9193 = vadd.f32 0.0, %v9192
        %v9194 = vpop.f32.mrf.mxu0
        %v9195 = vadd.f32 0.0, %v9194
        %9196 = vmatmul.bf16.gmra.mxu0 %v9041
        %v9197 = vpop.f32.mrf.mxu0
        %v9198 = vadd.f32 0.0, %v9197
        %v9199 = vpop.f32.mrf.mxu0
        %v9200 = vadd.f32 0.0, %v9199
        %9201 = vmatmul.bf16.gmra.mxu0 %v9043
        %v9202 = vpop.f32.mrf.mxu0
        %v9203 = vadd.f32 0.0, %v9202
        %v9204 = vpop.f32.mrf.mxu0
        %v9205 = vadd.f32 0.0, %v9204
        %9206 = vmatmul.bf16.gmra.mxu0 %v9045
        %v9207 = vpop.f32.mrf.mxu0
        %v9208 = vadd.f32 0.0, %v9207
        %v9209 = vpop.f32.mrf.mxu0
        %v9210 = vadd.f32 0.0, %v9209
        %9211 = vmatmul.bf16.gmra.mxu0 %v9047
        %v9212 = vpop.f32.mrf.mxu0
        %v9213 = vadd.f32 0.0, %v9212
        %v9214 = vpop.f32.mrf.mxu0
        %v9215 = vadd.f32 0.0, %v9214
        %9216 = vmatmul.bf16.gmra.mxu0 %v9049
        %v9217 = vpop.f32.mrf.mxu0
        %v9218 = vadd.f32 0.0, %v9217
        %v9219 = vpop.f32.mrf.mxu0
        %v9220 = vadd.f32 0.0, %v9219
        %9221 = vmatmul.bf16.gmra.mxu0 %v9051
        %v9222 = vpop.f32.mrf.mxu0
        %v9223 = vadd.f32 0.0, %v9222
        %v9224 = vpop.f32.mrf.mxu0
        %v9225 = vadd.f32 0.0, %v9224
        %9226 = vmatmul.bf16.gmra.mxu0 %v9053
        %v9227 = vpop.f32.mrf.mxu0
        %v9228 = vadd.f32 0.0, %v9227
        %v9229 = vpop.f32.mrf.mxu0
        %v9230 = vadd.f32 0.0, %v9229
        %9231 = vdwg.mxu0
        %9232 = vmatpush.bf16.msra.mxu0 %v9166
        %9233 = vmatpush.bf16.msra.mxu0 %v9165
        %9234 = vmatpush.bf16.msra.mxu0 %v9164
        %9235 = vmatpush.bf16.msra.mxu0 %v9163
        %9236 = vmatpush.bf16.msra.mxu0 %v9162
        %9237 = vmatpush.bf16.msra.mxu0 %v9161
        %9238 = vmatpush.bf16.msra.mxu0 %v9160
        %9239 = vmatpush.bf16.msra.mxu0 %v9159
        %9240 = vmatmul.bf16.gmra.mxu0 %v9040
        %v9241 = vpop.f32.mrf.mxu0
        %v9242 = vadd.f32 %v9193, %v9241
        %v9243 = vpop.f32.mrf.mxu0
        %v9244 = vadd.f32 %v9195, %v9243
        %9245 = vmatmul.bf16.gmra.mxu0 %v9042
        %v9246 = vpop.f32.mrf.mxu0
        %v9247 = vadd.f32 %v9198, %v9246
        %v9248 = vpop.f32.mrf.mxu0
        %v9249 = vadd.f32 %v9200, %v9248
        %9250 = vmatmul.bf16.gmra.mxu0 %v9044
        %v9251 = vpop.f32.mrf.mxu0
        %v9252 = vadd.f32 %v9203, %v9251
        %v9253 = vpop.f32.mrf.mxu0
        %v9254 = vadd.f32 %v9205, %v9253
        %9255 = vmatmul.bf16.gmra.mxu0 %v9046
        %v9256 = vpop.f32.mrf.mxu0
        %v9257 = vadd.f32 %v9208, %v9256
        %v9258 = vpop.f32.mrf.mxu0
        %v9259 = vadd.f32 %v9210, %v9258
        %9260 = vmatmul.bf16.gmra.mxu0 %v9048
        %v9261 = vpop.f32.mrf.mxu0
        %v9262 = vadd.f32 %v9213, %v9261
        %v9263 = vpop.f32.mrf.mxu0
        %v9264 = vadd.f32 %v9215, %v9263
        %9265 = vmatmul.bf16.gmra.mxu0 %v9050
        %v9266 = vpop.f32.mrf.mxu0
        %v9267 = vadd.f32 %v9218, %v9266
        %v9268 = vpop.f32.mrf.mxu0
        %v9269 = vadd.f32 %v9220, %v9268
        %9270 = vmatmul.bf16.gmra.mxu0 %v9052
        %v9271 = vpop.f32.mrf.mxu0
        %v9272 = vadd.f32 %v9223, %v9271
        %v9273 = vpop.f32.mrf.mxu0
        %v9274 = vadd.f32 %v9225, %v9273
        %9275 = vmatmul.bf16.gmra.mxu0 %v9054
        %v9276 = vpop.f32.mrf.mxu0
        %v9277 = vadd.f32 %v9228, %v9276
        %v9278 = vpop.f32.mrf.mxu0
        %v9279 = vadd.f32 %v9230, %v9278
        %9280 = vdwg.mxu0
        %v9281 = vadd.f32 %v8533, %v9242
        %v9282 = vadd.f32 %v8534, %v9244
        %v9283 = vadd.f32 %v8535, %v9247
        %v9284 = vadd.f32 %v8536, %v9249
        %v9285 = vadd.f32 %v8537, %v9252
        %v9286 = vadd.f32 %v8538, %v9254
        %v9287 = vadd.f32 %v8539, %v9257
        %v9288 = vadd.f32 %v8540, %v9259
        %v9289 = vadd.f32 %v8541, %v9262
        %v9290 = vadd.f32 %v8542, %v9264
        %v9291 = vadd.f32 %v8543, %v9267
        %v9292 = vadd.f32 %v8544, %v9269
        %v9293 = vadd.f32 %v8545, %v9272
        %v9294 = vadd.f32 %v8546, %v9274
        %v9295 = vadd.f32 %v8547, %v9277
        %v9296 = vadd.f32 %v8548, %v9279
        %p9297 = scmp.lt.s32.totalorder %s39, 1
        // Predicated region
        $region85: #{tpu_custom_call.1} parent=51 // pred_check
          %p9298 = pneg %p9297
        $region86: #{tpu_custom_call.1} parent=51 // pred_check_branch
          %9300 = sbr.rel (%p9298) target = $region88
        $region87: #{tpu_custom_call.1} parent=51 // pred_region
          %9301 = vst [vmem:[%s550] sm:$0xff] %v9281
          %9302 = vst [vmem:[%s550 + $0x8] sm:$0xff] %v9282
          %9303 = vst [vmem:[%s550 + $0x10] sm:$0xff] %v9283
          %9304 = vst [vmem:[%s550 + $0x18] sm:$0xff] %v9284
          %9305 = vst [vmem:[%s550 + $0x20] sm:$0xff] %v9285
          %9306 = vst [vmem:[%s550 + $0x28] sm:$0xff] %v9286
          %9307 = vst [vmem:[%s550 + $0x30] sm:$0xff] %v9287
          %9308 = vst [vmem:[%s550 + $0x38] sm:$0xff] %v9288
          %9309 = vst [vmem:[%s550 + $0x40] sm:$0xff] %v9289
          %9310 = vst [vmem:[%s550 + $0x48] sm:$0xff] %v9290
          %9311 = vst [vmem:[%s550 + $0x50] sm:$0xff] %v9291
          %9312 = vst [vmem:[%s550 + $0x58] sm:$0xff] %v9292
          %9313 = vst [vmem:[%s550 + $0x60] sm:$0xff] %v9293
          %9314 = vst [vmem:[%s550 + $0x68] sm:$0xff] %v9294
          %9315 = vst [vmem:[%s550 + $0x70] sm:$0xff] %v9295
          %9316 = vst [vmem:[%s550 + $0x78] sm:$0xff] %v9296
        $region88: #{tpu_custom_call.1} parent=51 // pred_fallthru
          _
        %p9317 = scmp.eq.s32.totalorder %s39, 1
        // Predicated region
        $region89: #{tpu_custom_call.1} parent=51 // pred_check
          %p9318 = pneg %p9317
        $region90: #{tpu_custom_call.1} parent=51 // pred_check_branch
          %9320 = sbr.rel (%p9318) target = $region92
        $region91: #{tpu_custom_call.1} parent=51 // pred_region
          %v9321 = vmul.f32 %v9281, %v9281
          %v9322 = vmul.f32 %v9282, %v9282
          %v9323 = vmul.f32 %v9283, %v9283
          %v9324 = vmul.f32 %v9284, %v9284
          %v9325 = vmul.f32 %v9285, %v9285
          %v9326 = vmul.f32 %v9286, %v9286
          %v9327 = vmul.f32 %v9287, %v9287
          %v9328 = vmul.f32 %v9288, %v9288
          %v9329 = vmul.f32 %v9289, %v9289
          %v9330 = vmul.f32 %v9290, %v9290
          %v9331 = vmul.f32 %v9291, %v9291
          %v9332 = vmul.f32 %v9292, %v9292
          %v9333 = vmul.f32 %v9293, %v9293
          %v9334 = vmul.f32 %v9294, %v9294
          %v9335 = vmul.f32 %v9295, %v9295
          %v9336 = vmul.f32 %v9296, %v9296
          %9337 = vadd.xlane.f32.xlu0 %v9321
          %v9338 = vpop.xlane.xlu0 %9337
          %9339 = vadd.xlane.f32.xlu0 %v9322
          %v9340 = vpop.xlane.xlu0 %9339
          %9341 = vadd.xlane.f32.xlu0 %v9323
          %v9342 = vpop.xlane.xlu0 %9341
          %9343 = vadd.xlane.f32.xlu0 %v9324
          %v9344 = vpop.xlane.xlu0 %9343
          %9345 = vadd.xlane.f32.xlu0 %v9325
          %v9346 = vpop.xlane.xlu0 %9345
          %9347 = vadd.xlane.f32.xlu0 %v9326
          %v9348 = vpop.xlane.xlu0 %9347
          %9349 = vadd.xlane.f32.xlu0 %v9327
          %v9350 = vpop.xlane.xlu0 %9349
          %9351 = vadd.xlane.f32.xlu0 %v9328
          %v9352 = vpop.xlane.xlu0 %9351
          %9353 = vadd.xlane.f32.xlu0 %v9329
          %v9354 = vpop.xlane.xlu0 %9353
          %9355 = vadd.xlane.f32.xlu0 %v9330
          %v9356 = vpop.xlane.xlu0 %9355
          %9357 = vadd.xlane.f32.xlu0 %v9331
          %v9358 = vpop.xlane.xlu0 %9357
          %9359 = vadd.xlane.f32.xlu0 %v9332
          %v9360 = vpop.xlane.xlu0 %9359
          %9361 = vadd.xlane.f32.xlu0 %v9333
          %v9362 = vpop.xlane.xlu0 %9361
          %9363 = vadd.xlane.f32.xlu0 %v9334
          %v9364 = vpop.xlane.xlu0 %9363
          %9365 = vadd.xlane.f32.xlu0 %v9335
          %v9366 = vpop.xlane.xlu0 %9365
          %9367 = vadd.xlane.f32.xlu0 %v9336
          %v9368 = vpop.xlane.xlu0 %9367
          %v9369 = vmul.f32 %v9338, %v658
          %v9370 = vmul.f32 %v9340, %v658
          %v9371 = vmul.f32 %v9342, %v658
          %v9372 = vmul.f32 %v9344, %v658
          %v9373 = vmul.f32 %v9346, %v658
          %v9374 = vmul.f32 %v9348, %v658
          %v9375 = vmul.f32 %v9350, %v658
          %v9376 = vmul.f32 %v9352, %v658
          %v9377 = vmul.f32 %v9354, %v658
          %v9378 = vmul.f32 %v9356, %v658
          %v9379 = vmul.f32 %v9358, %v658
          %v9380 = vmul.f32 %v9360, %v658
          %v9381 = vmul.f32 %v9362, %v658
          %v9382 = vmul.f32 %v9364, %v658
          %v9383 = vmul.f32 %v9366, %v658
          %v9384 = vmul.f32 %v9368, %v658
          %v9385 = vadd.f32 %v9369, 1e-06
          %v9386 = vadd.f32 %v9370, 1e-06
          %v9387 = vadd.f32 %v9371, 1e-06
          %v9388 = vadd.f32 %v9372, 1e-06
          %v9389 = vadd.f32 %v9373, 1e-06
          %v9390 = vadd.f32 %v9374, 1e-06
          %v9391 = vadd.f32 %v9375, 1e-06
          %v9392 = vadd.f32 %v9376, 1e-06
          %v9393 = vadd.f32 %v9377, 1e-06
          %v9394 = vadd.f32 %v9378, 1e-06
          %v9395 = vadd.f32 %v9379, 1e-06
          %v9396 = vadd.f32 %v9380, 1e-06
          %v9397 = vadd.f32 %v9381, 1e-06
          %v9398 = vadd.f32 %v9382, 1e-06
          %v9399 = vadd.f32 %v9383, 1e-06
          %v9400 = vadd.f32 %v9384, 1e-06
          %v9401 = vrsqrt.pop %v9385
          %v9402 = vmul.f32 %v9401, %v9385
          %v9403 = vmul.f32 %v9402, %v9401
          %v9404 = vmul.f32 0.5, %v9403
          %v9405 = vsub.f32 1.5, %v9404
          %v9406 = vmul.f32 %v9401, %v9405
          %vm9407 = vweird.f32 %v9385
          %vm9408 = vweird.f32 %v9401
          %vm9409 = vmor %vm9407, %vm9408
          %v9410 = vsel %vm9409, %v9401, %v9406
          %v9411 = vrsqrt.pop %v9386
          %v9412 = vmul.f32 %v9411, %v9386
          %v9413 = vmul.f32 %v9412, %v9411
          %v9414 = vmul.f32 0.5, %v9413
          %v9415 = vsub.f32 1.5, %v9414
          %v9416 = vmul.f32 %v9411, %v9415
          %vm9417 = vweird.f32 %v9386
          %vm9418 = vweird.f32 %v9411
          %vm9419 = vmor %vm9417, %vm9418
          %v9420 = vsel %vm9419, %v9411, %v9416
          %v9421 = vrsqrt.pop %v9387
          %v9422 = vmul.f32 %v9421, %v9387
          %v9423 = vmul.f32 %v9422, %v9421
          %v9424 = vmul.f32 0.5, %v9423
          %v9425 = vsub.f32 1.5, %v9424
          %v9426 = vmul.f32 %v9421, %v9425
          %vm9427 = vweird.f32 %v9387
          %vm9428 = vweird.f32 %v9421
          %vm9429 = vmor %vm9427, %vm9428
          %v9430 = vsel %vm9429, %v9421, %v9426
          %v9431 = vrsqrt.pop %v9388
          %v9432 = vmul.f32 %v9431, %v9388
          %v9433 = vmul.f32 %v9432, %v9431
          %v9434 = vmul.f32 0.5, %v9433
          %v9435 = vsub.f32 1.5, %v9434
          %v9436 = vmul.f32 %v9431, %v9435
          %vm9437 = vweird.f32 %v9388
          %vm9438 = vweird.f32 %v9431
          %vm9439 = vmor %vm9437, %vm9438
          %v9440 = vsel %vm9439, %v9431, %v9436
          %v9441 = vrsqrt.pop %v9389
          %v9442 = vmul.f32 %v9441, %v9389
          %v9443 = vmul.f32 %v9442, %v9441
          %v9444 = vmul.f32 0.5, %v9443
          %v9445 = vsub.f32 1.5, %v9444
          %v9446 = vmul.f32 %v9441, %v9445
          %vm9447 = vweird.f32 %v9389
          %vm9448 = vweird.f32 %v9441
          %vm9449 = vmor %vm9447, %vm9448
          %v9450 = vsel %vm9449, %v9441, %v9446
          %v9451 = vrsqrt.pop %v9390
          %v9452 = vmul.f32 %v9451, %v9390
          %v9453 = vmul.f32 %v9452, %v9451
          %v9454 = vmul.f32 0.5, %v9453
          %v9455 = vsub.f32 1.5, %v9454
          %v9456 = vmul.f32 %v9451, %v9455
          %vm9457 = vweird.f32 %v9390
          %vm9458 = vweird.f32 %v9451
          %vm9459 = vmor %vm9457, %vm9458
          %v9460 = vsel %vm9459, %v9451, %v9456
          %v9461 = vrsqrt.pop %v9391
          %v9462 = vmul.f32 %v9461, %v9391
          %v9463 = vmul.f32 %v9462, %v9461
          %v9464 = vmul.f32 0.5, %v9463
          %v9465 = vsub.f32 1.5, %v9464
          %v9466 = vmul.f32 %v9461, %v9465
          %vm9467 = vweird.f32 %v9391
          %vm9468 = vweird.f32 %v9461
          %vm9469 = vmor %vm9467, %vm9468
          %v9470 = vsel %vm9469, %v9461, %v9466
          %v9471 = vrsqrt.pop %v9392
          %v9472 = vmul.f32 %v9471, %v9392
          %v9473 = vmul.f32 %v9472, %v9471
          %v9474 = vmul.f32 0.5, %v9473
          %v9475 = vsub.f32 1.5, %v9474
          %v9476 = vmul.f32 %v9471, %v9475
          %vm9477 = vweird.f32 %v9392
          %vm9478 = vweird.f32 %v9471
          %vm9479 = vmor %vm9477, %vm9478
          %v9480 = vsel %vm9479, %v9471, %v9476
          %v9481 = vrsqrt.pop %v9393
          %v9482 = vmul.f32 %v9481, %v9393
          %v9483 = vmul.f32 %v9482, %v9481
          %v9484 = vmul.f32 0.5, %v9483
          %v9485 = vsub.f32 1.5, %v9484
          %v9486 = vmul.f32 %v9481, %v9485
          %vm9487 = vweird.f32 %v9393
          %vm9488 = vweird.f32 %v9481
          %vm9489 = vmor %vm9487, %vm9488
          %v9490 = vsel %vm9489, %v9481, %v9486
          %v9491 = vrsqrt.pop %v9394
          %v9492 = vmul.f32 %v9491, %v9394
          %v9493 = vmul.f32 %v9492, %v9491
          %v9494 = vmul.f32 0.5, %v9493
          %v9495 = vsub.f32 1.5, %v9494
          %v9496 = vmul.f32 %v9491, %v9495
          %vm9497 = vweird.f32 %v9394
          %vm9498 = vweird.f32 %v9491
          %vm9499 = vmor %vm9497, %vm9498
          %v9500 = vsel %vm9499, %v9491, %v9496
          %v9501 = vrsqrt.pop %v9395
          %v9502 = vmul.f32 %v9501, %v9395
          %v9503 = vmul.f32 %v9502, %v9501
          %v9504 = vmul.f32 0.5, %v9503
          %v9505 = vsub.f32 1.5, %v9504
          %v9506 = vmul.f32 %v9501, %v9505
          %vm9507 = vweird.f32 %v9395
          %vm9508 = vweird.f32 %v9501
          %vm9509 = vmor %vm9507, %vm9508
          %v9510 = vsel %vm9509, %v9501, %v9506
          %v9511 = vrsqrt.pop %v9396
          %v9512 = vmul.f32 %v9511, %v9396
          %v9513 = vmul.f32 %v9512, %v9511
          %v9514 = vmul.f32 0.5, %v9513
          %v9515 = vsub.f32 1.5, %v9514
          %v9516 = vmul.f32 %v9511, %v9515
          %vm9517 = vweird.f32 %v9396
          %vm9518 = vweird.f32 %v9511
          %vm9519 = vmor %vm9517, %vm9518
          %v9520 = vsel %vm9519, %v9511, %v9516
          %v9521 = vrsqrt.pop %v9397
          %v9522 = vmul.f32 %v9521, %v9397
          %v9523 = vmul.f32 %v9522, %v9521
          %v9524 = vmul.f32 0.5, %v9523
          %v9525 = vsub.f32 1.5, %v9524
          %v9526 = vmul.f32 %v9521, %v9525
          %vm9527 = vweird.f32 %v9397
          %vm9528 = vweird.f32 %v9521
          %vm9529 = vmor %vm9527, %vm9528
          %v9530 = vsel %vm9529, %v9521, %v9526
          %v9531 = vrsqrt.pop %v9398
          %v9532 = vmul.f32 %v9531, %v9398
          %v9533 = vmul.f32 %v9532, %v9531
          %v9534 = vmul.f32 0.5, %v9533
          %v9535 = vsub.f32 1.5, %v9534
          %v9536 = vmul.f32 %v9531, %v9535
          %vm9537 = vweird.f32 %v9398
          %vm9538 = vweird.f32 %v9531
          %vm9539 = vmor %vm9537, %vm9538
          %v9540 = vsel %vm9539, %v9531, %v9536
          %v9541 = vrsqrt.pop %v9399
          %v9542 = vmul.f32 %v9541, %v9399
          %v9543 = vmul.f32 %v9542, %v9541
          %v9544 = vmul.f32 0.5, %v9543
          %v9545 = vsub.f32 1.5, %v9544
          %v9546 = vmul.f32 %v9541, %v9545
          %vm9547 = vweird.f32 %v9399
          %vm9548 = vweird.f32 %v9541
          %vm9549 = vmor %vm9547, %vm9548
          %v9550 = vsel %vm9549, %v9541, %v9546
          %v9551 = vrsqrt.pop %v9400
          %v9552 = vmul.f32 %v9551, %v9400
          %v9553 = vmul.f32 %v9552, %v9551
          %v9554 = vmul.f32 0.5, %v9553
          %v9555 = vsub.f32 1.5, %v9554
          %v9556 = vmul.f32 %v9551, %v9555
          %vm9557 = vweird.f32 %v9400
          %vm9558 = vweird.f32 %v9551
          %vm9559 = vmor %vm9557, %vm9558
          %v9560 = vsel %vm9559, %v9551, %v9556
          %v9561 = vmul.f32 %v9281, %v9410
          %v9562 = vmul.f32 %v9282, %v9420
          %v9563 = vmul.f32 %v9283, %v9430
          %v9564 = vmul.f32 %v9284, %v9440
          %v9565 = vmul.f32 %v9285, %v9450
          %v9566 = vmul.f32 %v9286, %v9460
          %v9567 = vmul.f32 %v9287, %v9470
          %v9568 = vmul.f32 %v9288, %v9480
          %v9569 = vmul.f32 %v9289, %v9490
          %v9570 = vmul.f32 %v9290, %v9500
          %v9571 = vmul.f32 %v9291, %v9510
          %v9572 = vmul.f32 %v9292, %v9520
          %v9573 = vmul.f32 %v9293, %v9530
          %v9574 = vmul.f32 %v9294, %v9540
          %v9575 = vmul.f32 %v9295, %v9550
          %v9576 = vmul.f32 %v9296, %v9560
          %v9577 = vld [vmem:[%s7] sm:$0x1]
          %v9579 = vperm.slane %v9577, 0
          %v9581 = vmul.f32 %v9561, %v9579
          %v9582 = vmul.f32 %v9562, %v9579
          %v9583 = vmul.f32 %v9563, %v9579
          %v9584 = vmul.f32 %v9564, %v9579
          %v9585 = vmul.f32 %v9565, %v9579
          %v9586 = vmul.f32 %v9566, %v9579
          %v9587 = vmul.f32 %v9567, %v9579
          %v9588 = vmul.f32 %v9568, %v9579
          %v9589 = vmul.f32 %v9569, %v9579
          %v9590 = vmul.f32 %v9570, %v9579
          %v9591 = vmul.f32 %v9571, %v9579
          %v9592 = vmul.f32 %v9572, %v9579
          %v9593 = vmul.f32 %v9573, %v9579
          %v9594 = vmul.f32 %v9574, %v9579
          %v9595 = vmul.f32 %v9575, %v9579
          %v9596 = vmul.f32 %v9576, %v9579
          %9597 = vst [vmem:[%s550] sm:$0xff] %v9581
          %9598 = vst [vmem:[%s550 + $0x8] sm:$0xff] %v9582
          %9599 = vst [vmem:[%s550 + $0x10] sm:$0xff] %v9583
          %9600 = vst [vmem:[%s550 + $0x18] sm:$0xff] %v9584
          %9601 = vst [vmem:[%s550 + $0x20] sm:$0xff] %v9585
          %9602 = vst [vmem:[%s550 + $0x28] sm:$0xff] %v9586
          %9603 = vst [vmem:[%s550 + $0x30] sm:$0xff] %v9587
          %9604 = vst [vmem:[%s550 + $0x38] sm:$0xff] %v9588
          %9605 = vst [vmem:[%s550 + $0x40] sm:$0xff] %v9589
          %9606 = vst [vmem:[%s550 + $0x48] sm:$0xff] %v9590
          %9607 = vst [vmem:[%s550 + $0x50] sm:$0xff] %v9591
          %9608 = vst [vmem:[%s550 + $0x58] sm:$0xff] %v9592
          %9609 = vst [vmem:[%s550 + $0x60] sm:$0xff] %v9593
          %9610 = vst [vmem:[%s550 + $0x68] sm:$0xff] %v9594
          %9611 = vst [vmem:[%s550 + $0x70] sm:$0xff] %v9595
          %9612 = vst [vmem:[%s550 + $0x78] sm:$0xff] %v9596
        $region92: #{tpu_custom_call.1} parent=51 // pred_fallthru
          _
        %s9613 = sand.u32 %s252, 1
        %s9614 = scalar_lea.sflag [#allocation4], %s9613
        %s9615 = sand.u32 %s252, 1
        %s9616 = smul.addr %s9615, 128
        %s9617 = scalar_lea.vmem [#allocation14], %s9616
        // Predicated region
        $region93: #{tpu_custom_call.1} parent=51 // pred_check
          %p9618 = pneg %p262
        $region94: #{tpu_custom_call.1} parent=51 // pred_check_branch
          %9620 = sbr.rel (%p9618) target = $region96
        $region95: #{tpu_custom_call.1} parent=51 // pred_region
          %9622 = vsyncadd %s9614, 0
          %s9623 = smul.addr %s38, 16
          %s9624 = smul.addr %s9623, 8
          %s9625 = scalar_lea.hbm %s8, %s9624
          %s9626 = sshll.u32 %s9617, 4
          %s9627 = int_to_ptr.vmem [resolvable:$true] %s9626
          %s9628 = sshll.u32 %s9625, 4
          %s9629 = int_to_ptr.hbm [resolvable:$true] %s9628
          %9634 = dma.vmem_to_hbm [thread:$0]  %s9627, 2048, %s9629, %s9614, 128, 128, 8
        $region96: #{tpu_custom_call.1} parent=51 // pred_fallthru
          _
      $region52: #{tpu_custom_call.1} parent=5 // pred_fallthru
        _
      %p9635 = scmp.le.s32.totalorder 2, %s29
      // Predicated region
      $region97: #{tpu_custom_call.1} parent=5 // pred_check
        %p9636 = pneg %p9635
      $region98: #{tpu_custom_call.1} parent=5 // pred_check_branch
        %9638 = sbr.rel (%p9636) target = $region100
      $region99: #{tpu_custom_call.1} parent=5 // pred_region
        %s9639 = ssub.s32 %s29, 2
        // Predicated region
        $region101: #{tpu_custom_call.1} parent=99 // pred_check
          %p9640 = pneg %p268
        $region102: #{tpu_custom_call.1} parent=99 // pred_check_branch
          %9642 = sbr.rel (%p9640) target = $region104
        $region103: #{tpu_custom_call.1} parent=99 // pred_region
          %s9643 = sand.u32 %s253, 1
          %s9644 = scalar_lea.sflag [#allocation4], %s9643
          %s9645 = sand.u32 %s253, 1
          %s9646 = smul.addr %s9645, 128
          %s9647 = scalar_lea.vmem [#allocation14], %s9646
          %9649 = dma.done %s9644, 2048
        $region104: #{tpu_custom_call.1} parent=99 // pred_fallthru
          _
      $region100: #{tpu_custom_call.1} parent=5 // pred_fallthru
        _
    $region6: #{tpu_custom_call.1} parent=1 // loop_footer
      %s33 = sadd.s32 1, %s29
    $region7: #{tpu_custom_call.1} parent=1 // loop_footer_branch
      %28 = sbr.rel target = $region3
    $region8: #{tpu_custom_call.1} parent=1 // loop_exit
      _
    %9650 = vsyncpa [#allocation3], 1
    %s9651 = scalar_lea.sflag [#allocation3], 1
    %9652 = vsyncpa %s9651, 1
    %9653 = vsyncpa [#allocation6], 1
    %s9654 = scalar_lea.sflag [#allocation6], 1
    %9655 = vsyncpa %s9654, 1
    %9656 = vsyncpa [#allocation9], 1
    %s9657 = scalar_lea.sflag [#allocation9], 1
    %9658 = vsyncpa %s9657, 1
    %9659 = vsyncpa [#allocation12], 1
    %s9660 = scalar_lea.sflag [#allocation12], 1
    %9661 = vsyncpa %s9660, 1
    %9662 = vsyncpa [#allocation4], 1
    %s9663 = scalar_lea.sflag [#allocation4], 1
    %9664 = vsyncpa %s9663, 1

</llo_original>
